<compile_context>
chip_gen: v5e
topology: v5e:2x2
jax: 0.10.0
libtpu: 0.0.40
codegen_flags: <defaults>
</compile_context>

<pallas_src>
import math
import numpy as np

import jax
import jax.numpy as jnp
from jax.experimental import pallas as pl
from jax.experimental.pallas import tpu as pltpu

# ---------------- static module config ----------------
N_FREQS = 4                       # PosEncoding(N_freqs=4, in_dim=3, append_xyz=False)
VIEW_DIM = 2 * N_FREQS * 3        # PosEncoding.get_out_dim()
WITH_SDF = True
OUTPUT_FEATURES = True


# ---------------- Pallas kernel ----------------
def _renderer_kernel(feat_ref, ray_ref, penc_ref, phase_ref, w1_ref, b1_ref,
                     wdir_ref, wh_ref, bh_ref, beta_ref, packed_ref):
    f32 = jnp.float32
    TR = ray_ref.shape[0]
    RN = feat_ref.shape[0]
    N = RN // TR
    W2 = w1_ref.shape[1]          # 2 * hidden_dim
    W = W2 // 2

    # ---- consolidated per-ray input slab: [dirs(3) | rays_d(3) | rays_o(3) | z(N) | dist(N)]
    ray = ray_ref[...]                                                       # (TR, 9+2N)
    dirs = ray[:, 0:3]
    rd = ray[:, 3:6]
    ro = ray[:, 6:9]
    z_ln = ray[:, 9:9 + N]                                                   # (TR, N)
    dist_ln = ray[:, 9 + N:9 + 2 * N]                                        # (TR, N)

    # ---- per-RAY view-direction positional encoding:  enc = sin(dirs @ P + phase) ----
    enc = jnp.sin(jnp.dot(dirs, penc_ref[...], preferred_element_type=f32)
                  + phase_ref[...])                                          # (TR, 24)
    # contribution of the view-dependent rows of views_linears[0] (zero-padded into 2W)
    dir_contrib = jnp.dot(enc, wdir_ref[...], preferred_element_type=f32)    # (TR, 2W)

    # ---- fused first layer: [sigma_linear[0] | views_linears[0]] + shared softplus ----
    x = jnp.dot(feat_ref[...], w1_ref[...], preferred_element_type=f32) + b1_ref[...]
    x = x.reshape(TR, N, W2) + dir_contrib[:, None, :]        # per-ray dirs, bcast over N
    act = jax.nn.softplus(x).reshape(RN, W2)                  # [h_sigma | h_views]

    # ---- fused block-diagonal heads: y = [out_features | rgb | sdf] ----
    y = (jnp.dot(act.astype(wh_ref.dtype), wh_ref[...], preferred_element_type=f32)
         + bh_ref[...])                                       # (RN, W + 4)
    out_feat = y[:, :W]                                       # views_linears[1]
    rgb = jax.nn.sigmoid(y[:, W:W + 3])                       # rgb_linear folded in
    sdf3 = y[:, W + 3:W + 4].reshape(TR, N, 1)                # sigma_linear[1]
    # relayout per-sample sdf to lanes once: (TR, N); keeps sigma/alpha math lane-dense
    # and lets sdf ride in the single packed per-ray store.
    sdf_ln = jnp.concatenate([sdf3[:, k, :] for k in range(N)], axis=-1)     # (TR, N)

    # ---- Render.volume_integration (StyleSDF sigmoid-beta), vectorized sigma/alpha ----
    beta = beta_ref[0, 0]
    if WITH_SDF:
        sigma_ln = jax.nn.sigmoid(-sdf_ln / beta) / beta
    else:
        sigma_ln = jax.nn.softplus(sdf_ln)
    alpha_ln = 1.0 - jnp.exp(-sigma_ln * dist_ln)             # (TR, N)

    of3 = out_feat.reshape(TR, N, W)
    rgb3 = rgb.reshape(TR, N, 3)

    # Exclusive-transmittance scan is inherently sequential over N; per-step work below
    # touches each (TR, C) slice exactly once, so the total vector-op count matches a
    # fully stacked weighted reduction.
    run = jnp.ones((TR, 1), f32)
    acc_feat = jnp.zeros((TR, W), f32)
    acc_rgb = jnp.zeros((TR, 3), f32)
    wsum = jnp.zeros((TR, 1), f32)
    wz = jnp.zeros((TR, 1), f32)
    w_k = jnp.zeros((TR, 1), f32)
    for k in range(N):                                        # N static, small
        a_k = alpha_ln[:, k:k + 1]
        w_k = a_k * run
        run = run * (1.0 - a_k + 1e-10)
        acc_rgb = acc_rgb + w_k * rgb3[:, k, :]
        acc_feat = acc_feat + w_k * of3[:, k, :]
        wsum = wsum + w_k
        wz = wz + w_k * z_ln[:, k:k + 1]

    xyz = ro * wsum + rd * wz                                 # == sum_k w_k * pts_k
    rgb_map = -1.0 + 2.0 * acc_rgb                            # switch to [-1, 1]
    mask = w_k                                                # weight of last sample

    # ---- single lane-dense packed per-ray store: [feature | rgb | xyz | mask | sdf | pad]
    pad = packed_ref.shape[1] - (W + 7 + N)
    pieces = [acc_feat, rgb_map, xyz, mask, sdf_ln]
    if pad > 0:
        pieces.append(jnp.zeros((TR, pad), f32))
    packed_ref[...] = jnp.concatenate(pieces, axis=-1)


# ---------------- plain-JAX glue ----------------
def _make_view_encoding_basis():
    # PyTorch PosEncoding order: [sin(pi x), ..., sin(8pi z), cos(pi x), ..., cos(8pi z)]
    # expressed as sin(dirs @ P + phase), with cos(t) = sin(t + pi/2).
    P = np.zeros((3, VIEW_DIM), np.float32)
    phase = np.zeros((1, VIEW_DIM), np.float32)
    col = 0
    for ph in (0.0, math.pi / 2.0):
        for k in range(N_FREQS):
            for c in range(3):
                P[c, col] = (2.0 ** k) * math.pi
                phase[0, col] = ph
                col += 1
    return jnp.asarray(P), jnp.asarray(phase)


def sample_from_planes(planes, coords):
    # planes: (B, 3, C, Hp, Wp); coords: (B, M, 3) in [-1, 1].
    # Returns (B, M, 3*C) channel-last, plane-major channel order (matches the
    # reference rearrange 'B N_plane M C -> B M (N_plane C)').
    # TODO(synk): the bilinear grid_sample gather is a data-dependent gather and stays
    # in XLA; a Pallas version would need manual per-texel DMA.
    B, n_planes, C, Hp, Wp = planes.shape
    planes_cl = planes.transpose(0, 1, 3, 4, 2).reshape(B, n_planes, Hp * Wp, C)

    def sample_one(tex, gx, gy):
        # tex: (Hp*Wp, C); gx, gy: (M,).  grid_sample bilinear, zeros padding,
        # align_corners=False.
        x = ((gx + 1.0) * Wp - 1.0) * 0.5
        y = ((gy + 1.0) * Hp - 1.0) * 0.5
        x0 = jnp.floor(x); y0 = jnp.floor(y)
        x1 = x0 + 1.0;     y1 = y0 + 1.0
        wx1 = x - x0; wx0 = 1.0 - wx1
        wy1 = y - y0; wy0 = 1.0 - wy1

        def gather(ix, iy):
            valid = ((ix >= 0) & (ix <= Wp - 1) & (iy >= 0) & (iy <= Hp - 1))
            ixc = jnp.clip(ix, 0, Wp - 1).astype(jnp.int32)
            iyc = jnp.clip(iy, 0, Hp - 1).astype(jnp.int32)
            return tex[iyc * Wp + ixc] * valid.astype(tex.dtype)[:, None]   # (M, C)

        return (gather(x0, y0) * (wx0 * wy0)[:, None]
                + gather(x1, y0) * (wx1 * wy0)[:, None]
                + gather(x0, y1) * (wx0 * wy1)[:, None]
                + gather(x1, y1) * (wx1 * wy1)[:, None])

    x, y, z = coords[..., 0], coords[..., 1], coords[..., 2]
    projections = ((x, y), (x, z), (y, z))          # 'xy_xz_yz' plane set
    feats = [jax.vmap(sample_one)(planes_cl[:, p], gx, gy)
             for p, (gx, gy) in enumerate(projections)]
    return jnp.concatenate(feats, axis=-1)          # (B, M, 3C)


def make_params(key, input_dim, hidden_dim):
    ks = jax.random.split(key, 10)
    W = hidden_dim
    Dv = VIEW_DIM

    def freq_init(k, i, o):
        lim = math.sqrt(6.0 / i) / 25.0
        return jax.random.uniform(k, (i, o), jnp.float32, -lim, lim)

    def kaiming(k, i, o):
        std = 0.25 * math.sqrt(2.0 / (1.0 + 0.2 ** 2) / i)
        return std * jax.random.normal(k, (i, o), jnp.float32)

    def bias(k, i, o):
        lim = math.sqrt(1.0 / i)
        return jax.random.uniform(k, (1, o), jnp.float32, -lim, lim)

    return dict(
        w1s=freq_init(ks[0], input_dim, W), b1s=bias(ks[1], input_dim, W),
        w2s=freq_init(ks[2], W, 1),         b2s=bias(ks[3], W, 1),
        wv1=kaiming(ks[4], input_dim + Dv, W), bv1=bias(ks[5], input_dim + Dv, W),
        wv2=kaiming(ks[6], W, W),           bv2=bias(ks[7], W, W),
        wrgb=freq_init(ks[8], W, 3),        brgb=bias(ks[9], W, 3),
        beta=jnp.full((1, 1), 0.1, jnp.float32),
    )


def _pick_tile_rays(R, tile_rays):
    best = 8
    for tr in range(8, min(tile_rays, R) + 1, 8):
        if R % tr == 0:
            best = tr
    # leave at least two grid steps so the parallel ray axis can shard across the
    # two TensorCores of a v7x chip
    if best == R and R >= 16 and (R // 2) % 8 == 0:
        best = R // 2
    return best


def triplane_renderer_forward(planes, pts, rays_d, viewdirs, z_vals, near, far,
                              params, hidden_dim, tile_rays=1024):
    B, H, Wimg, N, _ = pts.shape
    n_planes, C = planes.shape[1], planes.shape[2]
    D = n_planes * C
    W = hidden_dim
    R = B * H * Wimg
    assert R % 8 == 0

    # Render.normalize_points (StyleSDF convention): scale pts into [-1, 1] by depth range.
    normalized_pts = pts * (2.0 / (far - near))
    coords = normalized_pts.reshape(B, H * Wimg * N, 3)
    feat = sample_from_planes(planes, coords)                       # (B, M, 3C)
    feat_flat = feat.reshape(R * N, D).astype(jnp.bfloat16)         # MXU operand in bf16

    dirs = viewdirs.reshape(R, 3).astype(jnp.float32)               # per-RAY view dirs
    rd = rays_d.reshape(R, 3).astype(jnp.float32)
    zr = z_vals.reshape(R, N).astype(jnp.float32)
    # pts = rays_o + rays_d * z  =>  recover rays_o from the first sample (drops the
    # (R, N, 3) pts input entirely; xyz accumulation uses rays_o*Σw + rays_d*Σ(w z)).
    ro = (pts[:, :, :, 0, :].reshape(R, 3).astype(jnp.float32) - rd * zr[:, 0:1])

    ray_norm = jnp.sqrt(jnp.sum(rd * rd, axis=-1, keepdims=True))
    deltas = jnp.concatenate([zr[:, 1:] - zr[:, :-1],
                              jnp.full((R, 1), 1e10, jnp.float32)], axis=-1)
    dists = deltas * ray_norm                                       # (R, N)
    # one consolidated per-ray input slab: [dirs | rays_d | rays_o | z | dists]
    ray_slab = jnp.concatenate([dirs, rd, ro, zr, dists], axis=-1)  # (R, 9 + 2N)
    RAY_IN = 9 + 2 * N

    # ---- fused weights (precomputed once) ----
    p = params
    w1cat = jnp.concatenate([p['w1s'], p['wv1'][:D]], axis=1).astype(jnp.bfloat16)  # (D, 2W)
    b1cat = jnp.concatenate([p['b1s'], p['bv1']], axis=1)                           # (1, 2W)
    wdirs = jnp.concatenate([jnp.zeros((VIEW_DIM, W), jnp.float32),
                             p['wv1'][D:]], axis=1)                                 # (24, 2W)
    wrgb_f = p['wv2'] @ p['wrgb']                                                   # (W, 3)
    brgb_f = p['bv2'] @ p['wrgb'] + p['brgb']                                       # (1, 3)
    wheads = jnp.zeros((2 * W, W + 4), jnp.float32)
    wheads = wheads.at[W:, :W].set(p['wv2'])
    wheads = wheads.at[W:, W:W + 3].set(wrgb_f)
    wheads = wheads.at[:W, W + 3:].set(p['w2s'])
    wheads = wheads.astype(jnp.bfloat16)                                            # (2W, W+4)
    bheads = jnp.concatenate([p['bv2'], brgb_f, p['b2s']], axis=1)                  # (1, W+4)
    penc, phase = _make_view_encoding_basis()
    beta = p['beta']

    TR = _pick_tile_rays(R, tile_rays)
    assert R % TR == 0 and TR % 8 == 0
    grid = (R // TR,)
    PACK = ((W + 7 + N + 127) // 128) * 128      # lane-dense packed per-ray output

    def ray_block(last):
        return pl.BlockSpec((TR, last), lambda i: (i, 0))

    def samp_block(last):
        return pl.BlockSpec((TR * N, last), lambda i: (i, 0))

    def full_block(a):
        nd = a.ndim
        return pl.BlockSpec(a.shape, lambda i, _nd=nd: (0,) * _nd)

    weights = [penc, phase, w1cat, b1cat, wdirs, wheads, bheads, beta]
    in_specs = ([samp_block(D), ray_block(RAY_IN)]
                + [full_block(w) for w in weights])

    out_shape = jax.ShapeDtypeStruct((R, PACK), jnp.float32)         # packed per-ray slab
    out_specs = ray_block(PACK)

    packed = pl.pallas_call(
        _renderer_kernel,
        out_shape=out_shape,
        grid_spec=pl.GridSpec(grid=grid, in_specs=in_specs, out_specs=out_specs),
        compiler_params=pltpu.CompilerParams(
            dimension_semantics=("parallel",),
            vmem_limit_bytes=32 * 1024 * 1024),
    )(feat_flat, ray_slab, *weights)

    feature_map = packed[:, :W].reshape(B, H, Wimg, W)
    rgb_map = packed[:, W:W + 3].reshape(B, H, Wimg, 3)
    xyz = packed[:, W + 3:W + 6].reshape(B, H, Wimg, 3)
    mask = packed[:, W + 6:W + 7].reshape(B, H, Wimg, 1)
    sdf = packed[:, W + 7:W + 7 + N].reshape(B, H, Wimg, N, 1)
    eikonal_term = None
    # TODO(synk): return_eikonal=True needs autograd of sdf w.r.t. pts + a second network
    # pass; not implemented here (forward uses the return_eikonal=False path).
    return rgb_map, feature_map, sdf, mask, xyz, eikonal_term


if __name__ == "__main__":
    key = jax.random.PRNGKey(0)
    B, Himg, Wimg, N = 2, 8, 8, 8
    C_plane, Hp, Wp = 8, 16, 16
    hidden_dim = 32
    input_dim = 3 * C_plane
    near, far = 0.5, 1.5

    kp, k1, k2, k3 = jax.random.split(key, 4)
    params = make_params(kp, input_dim, hidden_dim)

    planes = 0.5 * jax.random.normal(k1, (B, 3, C_plane, Hp, Wp), jnp.float32)
    rays_o = 0.05 * jax.random.normal(k2, (B, Himg, Wimg, 3), jnp.float32)
    rays_d = jax.random.normal(k3, (B, Himg, Wimg, 3), jnp.float32)
    viewdirs = rays_d / jnp.linalg.norm(rays_d, axis=-1, keepdims=True)
    t = jnp.linspace(near, far, N, dtype=jnp.float32)
    z_vals = jnp.broadcast_to(t, (B, Himg, Wimg, N))
    pts = rays_o[:, :, :, None, :] + rays_d[:, :, :, None, :] * z_vals[..., None]

    rgb_map, feature_map, sdf, mask, xyz, eik = triplane_renderer_forward(
        planes, pts, rays_d, viewdirs, z_vals, near, far, params, hidden_dim)
    jax.block_until_ready((rgb_map, feature_map, sdf, mask, xyz))

    assert rgb_map.shape == (B, Himg, Wimg, 3)
    assert feature_map.shape == (B, Himg, Wimg, hidden_dim)
    assert sdf.shape == (B, Himg, Wimg, N, 1)
    assert mask.shape == (B, Himg, Wimg, 1)
    assert xyz.shape == (B, Himg, Wimg, 3)
    assert bool(jnp.all(jnp.isfinite(rgb_map)))
    assert bool(jnp.all(jnp.isfinite(feature_map)))
    assert bool(jnp.all(jnp.isfinite(sdf)))
    assert bool(jnp.all(jnp.isfinite(xyz)))
    print("KERNEL_OK")
</pallas_src>

<mosaic_0001>
module attributes {stable_mosaic.version = 11 : i64} {
  func.func @_renderer_kernel(%arg0: i32, %arg1: memref<512x24xbf16, #tpu.memory_space<vmem>>, %arg2: memref<64x25xf32, #tpu.memory_space<vmem>>, %arg3: memref<3x24xf32, #tpu.memory_space<vmem>>, %arg4: memref<1x24xf32, #tpu.memory_space<vmem>>, %arg5: memref<24x64xbf16, #tpu.memory_space<vmem>>, %arg6: memref<1x64xf32, #tpu.memory_space<vmem>>, %arg7: memref<24x64xf32, #tpu.memory_space<vmem>>, %arg8: memref<64x36xbf16, #tpu.memory_space<vmem>>, %arg9: memref<1x36xf32, #tpu.memory_space<vmem>>, %arg10: memref<1x1xf32, #tpu.memory_space<vmem>>, %arg11: memref<64x128xf32, #tpu.memory_space<vmem>>) attributes {dimension_semantics = [#tpu.dimension_semantics<parallel>], iteration_bounds = array<i64: 2>, scalar_prefetch = 0 : i64, scratch_operands = 0 : i64, tpu.core_type = #tpu.core_type<tc>, window_params = [{transform_indices = @transform_0, window_bounds = array<i64: 512, 24>}, {transform_indices = @transform_1, window_bounds = array<i64: 64, 25>}, {pipeline_mode = #tpu.pipeline_mode<synchronous>, transform_indices = @transform_2, window_bounds = array<i64: 3, 24>}, {pipeline_mode = #tpu.pipeline_mode<synchronous>, transform_indices = @transform_3, window_bounds = array<i64: 1, 24>}, {pipeline_mode = #tpu.pipeline_mode<synchronous>, transform_indices = @transform_4, window_bounds = array<i64: 24, 64>}, {pipeline_mode = #tpu.pipeline_mode<synchronous>, transform_indices = @transform_5, window_bounds = array<i64: 1, 64>}, {pipeline_mode = #tpu.pipeline_mode<synchronous>, transform_indices = @transform_6, window_bounds = array<i64: 24, 64>}, {pipeline_mode = #tpu.pipeline_mode<synchronous>, transform_indices = @transform_7, window_bounds = array<i64: 64, 36>}, {pipeline_mode = #tpu.pipeline_mode<synchronous>, transform_indices = @transform_8, window_bounds = array<i64: 1, 36>}, {pipeline_mode = #tpu.pipeline_mode<synchronous>, transform_indices = @transform_9, window_bounds = array<i64: 1, 1>}, {transform_indices = @transform_10, window_bounds = array<i64: 64, 128>}]} {
    %c0 = arith.constant 0 : index
    %c0_0 = arith.constant 0 : index
    %0 = vector.load %arg2[%c0, %c0_0] : memref<64x25xf32, #tpu.memory_space<vmem>>, vector<64x25xf32>
    %1 = vector.extract_strided_slice %0 {offsets = [0, 0], sizes = [64, 3], strides = [1, 1]} : vector<64x25xf32> to vector<64x3xf32>
    %2 = vector.extract_strided_slice %0 {offsets = [0, 3], sizes = [64, 3], strides = [1, 1]} : vector<64x25xf32> to vector<64x3xf32>
    %3 = vector.extract_strided_slice %0 {offsets = [0, 6], sizes = [64, 3], strides = [1, 1]} : vector<64x25xf32> to vector<64x3xf32>
    %4 = vector.extract_strided_slice %0 {offsets = [0, 9], sizes = [64, 8], strides = [1, 1]} : vector<64x25xf32> to vector<64x8xf32>
    %5 = vector.extract_strided_slice %0 {offsets = [0, 17], sizes = [64, 8], strides = [1, 1]} : vector<64x25xf32> to vector<64x8xf32>
    %c0_1 = arith.constant 0 : index
    %c0_2 = arith.constant 0 : index
    %6 = vector.load %arg3[%c0_1, %c0_2] : memref<3x24xf32, #tpu.memory_space<vmem>>, vector<3x24xf32>
    %cst = arith.constant dense<0.000000e+00> : vector<64x24xf32>
    %7 = tpu.matmul %1, %6, %cst {dimension_numbers = #tpu.dot_dimension_numbers<[1], [0], [0], [1], [0, 0, 1, 1], [], []>} : vector<64x3xf32>, vector<3x24xf32>, vector<64x24xf32> -> vector<64x24xf32>
    %c0_3 = arith.constant 0 : index
    %c0_4 = arith.constant 0 : index
    %8 = vector.load %arg4[%c0_3, %c0_4] : memref<1x24xf32, #tpu.memory_space<vmem>>, vector<1x24xf32>
    %9 = vector.broadcast %8 : vector<1x24xf32> to vector<64x24xf32>
    %10 = arith.addf %7, %9 : vector<64x24xf32>
    %11 = math.sin %10 : vector<64x24xf32>
    %c0_5 = arith.constant 0 : index
    %c0_6 = arith.constant 0 : index
    %12 = vector.load %arg7[%c0_5, %c0_6] : memref<24x64xf32, #tpu.memory_space<vmem>>, vector<24x64xf32>
    %cst_7 = arith.constant dense<0.000000e+00> : vector<64x64xf32>
    %13 = tpu.matmul %11, %12, %cst_7 {dimension_numbers = #tpu.dot_dimension_numbers<[1], [0], [0], [1], [0, 0, 1, 1], [], []>} : vector<64x24xf32>, vector<24x64xf32>, vector<64x64xf32> -> vector<64x64xf32>
    %c0_8 = arith.constant 0 : index
    %c0_9 = arith.constant 0 : index
    %14 = vector.load %arg1[%c0_8, %c0_9] : memref<512x24xbf16, #tpu.memory_space<vmem>>, vector<512x24xbf16>
    %c0_10 = arith.constant 0 : index
    %c0_11 = arith.constant 0 : index
    %15 = vector.load %arg5[%c0_10, %c0_11] : memref<24x64xbf16, #tpu.memory_space<vmem>>, vector<24x64xbf16>
    %cst_12 = arith.constant dense<0.000000e+00> : vector<512x64xf32>
    %16 = tpu.matmul %14, %15, %cst_12 {dimension_numbers = #tpu.dot_dimension_numbers<[1], [0], [0], [1], [0, 0, 1, 1], [], []>} : vector<512x24xbf16>, vector<24x64xbf16>, vector<512x64xf32> -> vector<512x64xf32>
    %c0_13 = arith.constant 0 : index
    %c0_14 = arith.constant 0 : index
    %17 = vector.load %arg6[%c0_13, %c0_14] : memref<1x64xf32, #tpu.memory_space<vmem>>, vector<1x64xf32>
    %18 = vector.broadcast %17 : vector<1x64xf32> to vector<512x64xf32>
    %19 = arith.addf %16, %18 : vector<512x64xf32>
    %20 = vector.shape_cast %19 : vector<512x64xf32> to vector<64x8x64xf32>
    %21 = vector.shape_cast %13 : vector<64x64xf32> to vector<64x1x64xf32>
    %22 = vector.broadcast %21 : vector<64x1x64xf32> to vector<64x8x64xf32>
    %23 = arith.addf %20, %22 : vector<64x8x64xf32>
    %cst_15 = arith.constant 0.000000e+00 : f32
    %24 = vector.broadcast %cst_15 : f32 to vector<64x8x64xf32>
    %25 = arith.maximumf %23, %24 : vector<64x8x64xf32>
    %26 = vector.broadcast %cst_15 : f32 to vector<64x8x64xf32>
    %27 = arith.subf %23, %26 : vector<64x8x64xf32>
    %28 = arith.cmpf one, %27, %27 : vector<64x8x64xf32>
    %29 = vector.broadcast %cst_15 : f32 to vector<64x8x64xf32>
    %30 = arith.addf %23, %29 : vector<64x8x64xf32>
    %31 = math.absf %27 : vector<64x8x64xf32>
    %cst_16 = arith.constant 0.000000e+00 : f32
    %32 = vector.broadcast %cst_16 : f32 to vector<64x8x64xf32>
    %33 = arith.subf %32, %31 : vector<64x8x64xf32>
    %34 = math.exp %33 : vector<64x8x64xf32>
    %35 = math.log1p %34 : vector<64x8x64xf32>
    %36 = arith.addf %25, %35 : vector<64x8x64xf32>
    %37 = arith.select %28, %30, %36 : vector<64x8x64xi1>, vector<64x8x64xf32>
    %38 = vector.shape_cast %37 : vector<64x8x64xf32> to vector<512x64xf32>
    %39 = arith.truncf %38 : vector<512x64xf32> to vector<512x64xbf16>
    %c0_17 = arith.constant 0 : index
    %c0_18 = arith.constant 0 : index
    %40 = vector.load %arg8[%c0_17, %c0_18] : memref<64x36xbf16, #tpu.memory_space<vmem>>, vector<64x36xbf16>
    %cst_19 = arith.constant dense<0.000000e+00> : vector<512x36xf32>
    %41 = tpu.matmul %39, %40, %cst_19 {dimension_numbers = #tpu.dot_dimension_numbers<[1], [0], [0], [1], [0, 0, 1, 1], [], []>} : vector<512x64xbf16>, vector<64x36xbf16>, vector<512x36xf32> -> vector<512x36xf32>
    %c0_20 = arith.constant 0 : index
    %c0_21 = arith.constant 0 : index
    %42 = vector.load %arg9[%c0_20, %c0_21] : memref<1x36xf32, #tpu.memory_space<vmem>>, vector<1x36xf32>
    %43 = vector.broadcast %42 : vector<1x36xf32> to vector<512x36xf32>
    %44 = arith.addf %41, %43 : vector<512x36xf32>
    %45 = vector.extract_strided_slice %44 {offsets = [0, 0], sizes = [512, 32], strides = [1, 1]} : vector<512x36xf32> to vector<512x32xf32>
    %46 = vector.extract_strided_slice %44 {offsets = [0, 32], sizes = [512, 3], strides = [1, 1]} : vector<512x36xf32> to vector<512x3xf32>
    %47 = arith.negf %46 : vector<512x3xf32>
    %48 = math.exp %47 : vector<512x3xf32>
    %cst_22 = arith.constant 1.000000e+00 : f32
    %49 = vector.broadcast %cst_22 : f32 to vector<512x3xf32>
    %50 = arith.addf %49, %48 : vector<512x3xf32>
    %51 = arith.divf %49, %50 : vector<512x3xf32>
    %52 = vector.extract_strided_slice %44 {offsets = [0, 35], sizes = [512, 1], strides = [1, 1]} : vector<512x36xf32> to vector<512x1xf32>
    %53 = vector.shape_cast %52 : vector<512x1xf32> to vector<64x8x1xf32>
    %54 = vector.extract_strided_slice %53 {offsets = [0, 0, 0], sizes = [64, 1, 1], strides = [1, 1, 1]} : vector<64x8x1xf32> to vector<64x1x1xf32>
    %55 = vector.shape_cast %54 : vector<64x1x1xf32> to vector<64x1xf32>
    %56 = vector.extract_strided_slice %53 {offsets = [0, 1, 0], sizes = [64, 1, 1], strides = [1, 1, 1]} : vector<64x8x1xf32> to vector<64x1x1xf32>
    %57 = vector.shape_cast %56 : vector<64x1x1xf32> to vector<64x1xf32>
    %58 = vector.extract_strided_slice %53 {offsets = [0, 2, 0], sizes = [64, 1, 1], strides = [1, 1, 1]} : vector<64x8x1xf32> to vector<64x1x1xf32>
    %59 = vector.shape_cast %58 : vector<64x1x1xf32> to vector<64x1xf32>
    %60 = vector.extract_strided_slice %53 {offsets = [0, 3, 0], sizes = [64, 1, 1], strides = [1, 1, 1]} : vector<64x8x1xf32> to vector<64x1x1xf32>
    %61 = vector.shape_cast %60 : vector<64x1x1xf32> to vector<64x1xf32>
    %62 = vector.extract_strided_slice %53 {offsets = [0, 4, 0], sizes = [64, 1, 1], strides = [1, 1, 1]} : vector<64x8x1xf32> to vector<64x1x1xf32>
    %63 = vector.shape_cast %62 : vector<64x1x1xf32> to vector<64x1xf32>
    %64 = vector.extract_strided_slice %53 {offsets = [0, 5, 0], sizes = [64, 1, 1], strides = [1, 1, 1]} : vector<64x8x1xf32> to vector<64x1x1xf32>
    %65 = vector.shape_cast %64 : vector<64x1x1xf32> to vector<64x1xf32>
    %66 = vector.extract_strided_slice %53 {offsets = [0, 6, 0], sizes = [64, 1, 1], strides = [1, 1, 1]} : vector<64x8x1xf32> to vector<64x1x1xf32>
    %67 = vector.shape_cast %66 : vector<64x1x1xf32> to vector<64x1xf32>
    %68 = vector.extract_strided_slice %53 {offsets = [0, 7, 0], sizes = [64, 1, 1], strides = [1, 1, 1]} : vector<64x8x1xf32> to vector<64x1x1xf32>
    %69 = vector.shape_cast %68 : vector<64x1x1xf32> to vector<64x1xf32>
    %70 = tpu.concatenate %55, %57, %59, %61, %63, %65, %67, %69 in 1 : vector<64x1xf32>, vector<64x1xf32>, vector<64x1xf32>, vector<64x1xf32>, vector<64x1xf32>, vector<64x1xf32>, vector<64x1xf32>, vector<64x1xf32> -> vector<64x8xf32>
    %c0_23 = arith.constant 0 : index
    %c0_24 = arith.constant 0 : index
    %71 = vector.load %arg10[%c0_23, %c0_24] : memref<1x1xf32, #tpu.memory_space<vmem>>, vector<1x1xf32>
    %72 = vector.extract %71[0, 0] : f32 from vector<1x1xf32>
    %cst_25 = arith.constant 0.000000e+00 : f32
    %73 = vector.broadcast %cst_25 : f32 to vector<64x8xf32>
    %74 = arith.subf %73, %70 : vector<64x8xf32>
    %75 = vector.broadcast %72 : f32 to vector<64x8xf32>
    %76 = arith.divf %74, %75 : vector<64x8xf32>
    %77 = arith.negf %76 : vector<64x8xf32>
    %78 = math.exp %77 : vector<64x8xf32>
    %cst_26 = arith.constant 1.000000e+00 : f32
    %79 = vector.broadcast %cst_26 : f32 to vector<64x8xf32>
    %80 = arith.addf %79, %78 : vector<64x8xf32>
    %81 = arith.divf %79, %80 : vector<64x8xf32>
    %82 = vector.broadcast %72 : f32 to vector<64x8xf32>
    %83 = arith.divf %81, %82 : vector<64x8xf32>
    %cst_27 = arith.constant 0.000000e+00 : f32
    %84 = vector.broadcast %cst_27 : f32 to vector<64x8xf32>
    %85 = arith.subf %84, %83 : vector<64x8xf32>
    %86 = arith.mulf %85, %5 : vector<64x8xf32>
    %87 = math.exp %86 : vector<64x8xf32>
    %cst_28 = arith.constant 1.000000e+00 : f32
    %88 = vector.broadcast %cst_28 : f32 to vector<64x8xf32>
    %89 = arith.subf %88, %87 : vector<64x8xf32>
    %90 = vector.shape_cast %45 : vector<512x32xf32> to vector<64x8x32xf32>
    %91 = vector.shape_cast %51 : vector<512x3xf32> to vector<64x8x3xf32>
    %cst_29 = arith.constant 1.000000e+00 : f32
    %92 = vector.broadcast %cst_29 : f32 to vector<64x1xf32>
    %cst_30 = arith.constant 0.000000e+00 : f32
    %93 = vector.broadcast %cst_30 : f32 to vector<64x32xf32>
    %cst_31 = arith.constant 0.000000e+00 : f32
    %94 = vector.broadcast %cst_31 : f32 to vector<64x3xf32>
    %cst_32 = arith.constant 0.000000e+00 : f32
    %95 = vector.broadcast %cst_32 : f32 to vector<64x1xf32>
    %cst_33 = arith.constant 0.000000e+00 : f32
    %96 = vector.broadcast %cst_33 : f32 to vector<64x1xf32>
    %97 = vector.extract_strided_slice %89 {offsets = [0, 0], sizes = [64, 1], strides = [1, 1]} : vector<64x8xf32> to vector<64x1xf32>
    %98 = arith.mulf %97, %92 : vector<64x1xf32>
    %cst_34 = arith.constant 1.000000e+00 : f32
    %99 = vector.broadcast %cst_34 : f32 to vector<64x1xf32>
    %100 = arith.subf %99, %97 : vector<64x1xf32>
    %cst_35 = arith.constant 1.000000e-10 : f32
    %101 = vector.broadcast %cst_35 : f32 to vector<64x1xf32>
    %102 = arith.addf %100, %101 : vector<64x1xf32>
    %103 = arith.mulf %92, %102 : vector<64x1xf32>
    %104 = vector.extract_strided_slice %91 {offsets = [0, 0, 0], sizes = [64, 1, 3], strides = [1, 1, 1]} : vector<64x8x3xf32> to vector<64x1x3xf32>
    %105 = vector.shape_cast %104 : vector<64x1x3xf32> to vector<64x3xf32>
    %106 = vector.broadcast %98 : vector<64x1xf32> to vector<64x3xf32>
    %107 = arith.mulf %106, %105 : vector<64x3xf32>
    %108 = arith.addf %94, %107 : vector<64x3xf32>
    %109 = vector.extract_strided_slice %90 {offsets = [0, 0, 0], sizes = [64, 1, 32], strides = [1, 1, 1]} : vector<64x8x32xf32> to vector<64x1x32xf32>
    %110 = vector.shape_cast %109 : vector<64x1x32xf32> to vector<64x32xf32>
    %111 = vector.broadcast %98 : vector<64x1xf32> to vector<64x32xf32>
    %112 = arith.mulf %111, %110 : vector<64x32xf32>
    %113 = arith.addf %93, %112 : vector<64x32xf32>
    %114 = arith.addf %95, %98 : vector<64x1xf32>
    %115 = vector.extract_strided_slice %4 {offsets = [0, 0], sizes = [64, 1], strides = [1, 1]} : vector<64x8xf32> to vector<64x1xf32>
    %116 = arith.mulf %98, %115 : vector<64x1xf32>
    %117 = arith.addf %96, %116 : vector<64x1xf32>
    %118 = vector.extract_strided_slice %89 {offsets = [0, 1], sizes = [64, 1], strides = [1, 1]} : vector<64x8xf32> to vector<64x1xf32>
    %119 = arith.mulf %118, %103 : vector<64x1xf32>
    %cst_36 = arith.constant 1.000000e+00 : f32
    %120 = vector.broadcast %cst_36 : f32 to vector<64x1xf32>
    %121 = arith.subf %120, %118 : vector<64x1xf32>
    %cst_37 = arith.constant 1.000000e-10 : f32
    %122 = vector.broadcast %cst_37 : f32 to vector<64x1xf32>
    %123 = arith.addf %121, %122 : vector<64x1xf32>
    %124 = arith.mulf %103, %123 : vector<64x1xf32>
    %125 = vector.extract_strided_slice %91 {offsets = [0, 1, 0], sizes = [64, 1, 3], strides = [1, 1, 1]} : vector<64x8x3xf32> to vector<64x1x3xf32>
    %126 = vector.shape_cast %125 : vector<64x1x3xf32> to vector<64x3xf32>
    %127 = vector.broadcast %119 : vector<64x1xf32> to vector<64x3xf32>
    %128 = arith.mulf %127, %126 : vector<64x3xf32>
    %129 = arith.addf %108, %128 : vector<64x3xf32>
    %130 = vector.extract_strided_slice %90 {offsets = [0, 1, 0], sizes = [64, 1, 32], strides = [1, 1, 1]} : vector<64x8x32xf32> to vector<64x1x32xf32>
    %131 = vector.shape_cast %130 : vector<64x1x32xf32> to vector<64x32xf32>
    %132 = vector.broadcast %119 : vector<64x1xf32> to vector<64x32xf32>
    %133 = arith.mulf %132, %131 : vector<64x32xf32>
    %134 = arith.addf %113, %133 : vector<64x32xf32>
    %135 = arith.addf %114, %119 : vector<64x1xf32>
    %136 = vector.extract_strided_slice %4 {offsets = [0, 1], sizes = [64, 1], strides = [1, 1]} : vector<64x8xf32> to vector<64x1xf32>
    %137 = arith.mulf %119, %136 : vector<64x1xf32>
    %138 = arith.addf %117, %137 : vector<64x1xf32>
    %139 = vector.extract_strided_slice %89 {offsets = [0, 2], sizes = [64, 1], strides = [1, 1]} : vector<64x8xf32> to vector<64x1xf32>
    %140 = arith.mulf %139, %124 : vector<64x1xf32>
    %cst_38 = arith.constant 1.000000e+00 : f32
    %141 = vector.broadcast %cst_38 : f32 to vector<64x1xf32>
    %142 = arith.subf %141, %139 : vector<64x1xf32>
    %cst_39 = arith.constant 1.000000e-10 : f32
    %143 = vector.broadcast %cst_39 : f32 to vector<64x1xf32>
    %144 = arith.addf %142, %143 : vector<64x1xf32>
    %145 = arith.mulf %124, %144 : vector<64x1xf32>
    %146 = vector.extract_strided_slice %91 {offsets = [0, 2, 0], sizes = [64, 1, 3], strides = [1, 1, 1]} : vector<64x8x3xf32> to vector<64x1x3xf32>
    %147 = vector.shape_cast %146 : vector<64x1x3xf32> to vector<64x3xf32>
    %148 = vector.broadcast %140 : vector<64x1xf32> to vector<64x3xf32>
    %149 = arith.mulf %148, %147 : vector<64x3xf32>
    %150 = arith.addf %129, %149 : vector<64x3xf32>
    %151 = vector.extract_strided_slice %90 {offsets = [0, 2, 0], sizes = [64, 1, 32], strides = [1, 1, 1]} : vector<64x8x32xf32> to vector<64x1x32xf32>
    %152 = vector.shape_cast %151 : vector<64x1x32xf32> to vector<64x32xf32>
    %153 = vector.broadcast %140 : vector<64x1xf32> to vector<64x32xf32>
    %154 = arith.mulf %153, %152 : vector<64x32xf32>
    %155 = arith.addf %134, %154 : vector<64x32xf32>
    %156 = arith.addf %135, %140 : vector<64x1xf32>
    %157 = vector.extract_strided_slice %4 {offsets = [0, 2], sizes = [64, 1], strides = [1, 1]} : vector<64x8xf32> to vector<64x1xf32>
    %158 = arith.mulf %140, %157 : vector<64x1xf32>
    %159 = arith.addf %138, %158 : vector<64x1xf32>
    %160 = vector.extract_strided_slice %89 {offsets = [0, 3], sizes = [64, 1], strides = [1, 1]} : vector<64x8xf32> to vector<64x1xf32>
    %161 = arith.mulf %160, %145 : vector<64x1xf32>
    %cst_40 = arith.constant 1.000000e+00 : f32
    %162 = vector.broadcast %cst_40 : f32 to vector<64x1xf32>
    %163 = arith.subf %162, %160 : vector<64x1xf32>
    %cst_41 = arith.constant 1.000000e-10 : f32
    %164 = vector.broadcast %cst_41 : f32 to vector<64x1xf32>
    %165 = arith.addf %163, %164 : vector<64x1xf32>
    %166 = arith.mulf %145, %165 : vector<64x1xf32>
    %167 = vector.extract_strided_slice %91 {offsets = [0, 3, 0], sizes = [64, 1, 3], strides = [1, 1, 1]} : vector<64x8x3xf32> to vector<64x1x3xf32>
    %168 = vector.shape_cast %167 : vector<64x1x3xf32> to vector<64x3xf32>
    %169 = vector.broadcast %161 : vector<64x1xf32> to vector<64x3xf32>
    %170 = arith.mulf %169, %168 : vector<64x3xf32>
    %171 = arith.addf %150, %170 : vector<64x3xf32>
    %172 = vector.extract_strided_slice %90 {offsets = [0, 3, 0], sizes = [64, 1, 32], strides = [1, 1, 1]} : vector<64x8x32xf32> to vector<64x1x32xf32>
    %173 = vector.shape_cast %172 : vector<64x1x32xf32> to vector<64x32xf32>
    %174 = vector.broadcast %161 : vector<64x1xf32> to vector<64x32xf32>
    %175 = arith.mulf %174, %173 : vector<64x32xf32>
    %176 = arith.addf %155, %175 : vector<64x32xf32>
    %177 = arith.addf %156, %161 : vector<64x1xf32>
    %178 = vector.extract_strided_slice %4 {offsets = [0, 3], sizes = [64, 1], strides = [1, 1]} : vector<64x8xf32> to vector<64x1xf32>
    %179 = arith.mulf %161, %178 : vector<64x1xf32>
    %180 = arith.addf %159, %179 : vector<64x1xf32>
    %181 = vector.extract_strided_slice %89 {offsets = [0, 4], sizes = [64, 1], strides = [1, 1]} : vector<64x8xf32> to vector<64x1xf32>
    %182 = arith.mulf %181, %166 : vector<64x1xf32>
    %cst_42 = arith.constant 1.000000e+00 : f32
    %183 = vector.broadcast %cst_42 : f32 to vector<64x1xf32>
    %184 = arith.subf %183, %181 : vector<64x1xf32>
    %cst_43 = arith.constant 1.000000e-10 : f32
    %185 = vector.broadcast %cst_43 : f32 to vector<64x1xf32>
    %186 = arith.addf %184, %185 : vector<64x1xf32>
    %187 = arith.mulf %166, %186 : vector<64x1xf32>
    %188 = vector.extract_strided_slice %91 {offsets = [0, 4, 0], sizes = [64, 1, 3], strides = [1, 1, 1]} : vector<64x8x3xf32> to vector<64x1x3xf32>
    %189 = vector.shape_cast %188 : vector<64x1x3xf32> to vector<64x3xf32>
    %190 = vector.broadcast %182 : vector<64x1xf32> to vector<64x3xf32>
    %191 = arith.mulf %190, %189 : vector<64x3xf32>
    %192 = arith.addf %171, %191 : vector<64x3xf32>
    %193 = vector.extract_strided_slice %90 {offsets = [0, 4, 0], sizes = [64, 1, 32], strides = [1, 1, 1]} : vector<64x8x32xf32> to vector<64x1x32xf32>
    %194 = vector.shape_cast %193 : vector<64x1x32xf32> to vector<64x32xf32>
    %195 = vector.broadcast %182 : vector<64x1xf32> to vector<64x32xf32>
    %196 = arith.mulf %195, %194 : vector<64x32xf32>
    %197 = arith.addf %176, %196 : vector<64x32xf32>
    %198 = arith.addf %177, %182 : vector<64x1xf32>
    %199 = vector.extract_strided_slice %4 {offsets = [0, 4], sizes = [64, 1], strides = [1, 1]} : vector<64x8xf32> to vector<64x1xf32>
    %200 = arith.mulf %182, %199 : vector<64x1xf32>
    %201 = arith.addf %180, %200 : vector<64x1xf32>
    %202 = vector.extract_strided_slice %89 {offsets = [0, 5], sizes = [64, 1], strides = [1, 1]} : vector<64x8xf32> to vector<64x1xf32>
    %203 = arith.mulf %202, %187 : vector<64x1xf32>
    %cst_44 = arith.constant 1.000000e+00 : f32
    %204 = vector.broadcast %cst_44 : f32 to vector<64x1xf32>
    %205 = arith.subf %204, %202 : vector<64x1xf32>
    %cst_45 = arith.constant 1.000000e-10 : f32
    %206 = vector.broadcast %cst_45 : f32 to vector<64x1xf32>
    %207 = arith.addf %205, %206 : vector<64x1xf32>
    %208 = arith.mulf %187, %207 : vector<64x1xf32>
    %209 = vector.extract_strided_slice %91 {offsets = [0, 5, 0], sizes = [64, 1, 3], strides = [1, 1, 1]} : vector<64x8x3xf32> to vector<64x1x3xf32>
    %210 = vector.shape_cast %209 : vector<64x1x3xf32> to vector<64x3xf32>
    %211 = vector.broadcast %203 : vector<64x1xf32> to vector<64x3xf32>
    %212 = arith.mulf %211, %210 : vector<64x3xf32>
    %213 = arith.addf %192, %212 : vector<64x3xf32>
    %214 = vector.extract_strided_slice %90 {offsets = [0, 5, 0], sizes = [64, 1, 32], strides = [1, 1, 1]} : vector<64x8x32xf32> to vector<64x1x32xf32>
    %215 = vector.shape_cast %214 : vector<64x1x32xf32> to vector<64x32xf32>
    %216 = vector.broadcast %203 : vector<64x1xf32> to vector<64x32xf32>
    %217 = arith.mulf %216, %215 : vector<64x32xf32>
    %218 = arith.addf %197, %217 : vector<64x32xf32>
    %219 = arith.addf %198, %203 : vector<64x1xf32>
    %220 = vector.extract_strided_slice %4 {offsets = [0, 5], sizes = [64, 1], strides = [1, 1]} : vector<64x8xf32> to vector<64x1xf32>
    %221 = arith.mulf %203, %220 : vector<64x1xf32>
    %222 = arith.addf %201, %221 : vector<64x1xf32>
    %223 = vector.extract_strided_slice %89 {offsets = [0, 6], sizes = [64, 1], strides = [1, 1]} : vector<64x8xf32> to vector<64x1xf32>
    %224 = arith.mulf %223, %208 : vector<64x1xf32>
    %cst_46 = arith.constant 1.000000e+00 : f32
    %225 = vector.broadcast %cst_46 : f32 to vector<64x1xf32>
    %226 = arith.subf %225, %223 : vector<64x1xf32>
    %cst_47 = arith.constant 1.000000e-10 : f32
    %227 = vector.broadcast %cst_47 : f32 to vector<64x1xf32>
    %228 = arith.addf %226, %227 : vector<64x1xf32>
    %229 = arith.mulf %208, %228 : vector<64x1xf32>
    %230 = vector.extract_strided_slice %91 {offsets = [0, 6, 0], sizes = [64, 1, 3], strides = [1, 1, 1]} : vector<64x8x3xf32> to vector<64x1x3xf32>
    %231 = vector.shape_cast %230 : vector<64x1x3xf32> to vector<64x3xf32>
    %232 = vector.broadcast %224 : vector<64x1xf32> to vector<64x3xf32>
    %233 = arith.mulf %232, %231 : vector<64x3xf32>
    %234 = arith.addf %213, %233 : vector<64x3xf32>
    %235 = vector.extract_strided_slice %90 {offsets = [0, 6, 0], sizes = [64, 1, 32], strides = [1, 1, 1]} : vector<64x8x32xf32> to vector<64x1x32xf32>
    %236 = vector.shape_cast %235 : vector<64x1x32xf32> to vector<64x32xf32>
    %237 = vector.broadcast %224 : vector<64x1xf32> to vector<64x32xf32>
    %238 = arith.mulf %237, %236 : vector<64x32xf32>
    %239 = arith.addf %218, %238 : vector<64x32xf32>
    %240 = arith.addf %219, %224 : vector<64x1xf32>
    %241 = vector.extract_strided_slice %4 {offsets = [0, 6], sizes = [64, 1], strides = [1, 1]} : vector<64x8xf32> to vector<64x1xf32>
    %242 = arith.mulf %224, %241 : vector<64x1xf32>
    %243 = arith.addf %222, %242 : vector<64x1xf32>
    %244 = vector.extract_strided_slice %89 {offsets = [0, 7], sizes = [64, 1], strides = [1, 1]} : vector<64x8xf32> to vector<64x1xf32>
    %245 = arith.mulf %244, %229 : vector<64x1xf32>
    %246 = vector.extract_strided_slice %91 {offsets = [0, 7, 0], sizes = [64, 1, 3], strides = [1, 1, 1]} : vector<64x8x3xf32> to vector<64x1x3xf32>
    %247 = vector.shape_cast %246 : vector<64x1x3xf32> to vector<64x3xf32>
    %248 = vector.broadcast %245 : vector<64x1xf32> to vector<64x3xf32>
    %249 = arith.mulf %248, %247 : vector<64x3xf32>
    %250 = arith.addf %234, %249 : vector<64x3xf32>
    %251 = vector.extract_strided_slice %90 {offsets = [0, 7, 0], sizes = [64, 1, 32], strides = [1, 1, 1]} : vector<64x8x32xf32> to vector<64x1x32xf32>
    %252 = vector.shape_cast %251 : vector<64x1x32xf32> to vector<64x32xf32>
    %253 = vector.broadcast %245 : vector<64x1xf32> to vector<64x32xf32>
    %254 = arith.mulf %253, %252 : vector<64x32xf32>
    %255 = arith.addf %239, %254 : vector<64x32xf32>
    %256 = arith.addf %240, %245 : vector<64x1xf32>
    %257 = vector.extract_strided_slice %4 {offsets = [0, 7], sizes = [64, 1], strides = [1, 1]} : vector<64x8xf32> to vector<64x1xf32>
    %258 = arith.mulf %245, %257 : vector<64x1xf32>
    %259 = arith.addf %243, %258 : vector<64x1xf32>
    %260 = vector.broadcast %256 : vector<64x1xf32> to vector<64x3xf32>
    %261 = arith.mulf %3, %260 : vector<64x3xf32>
    %262 = vector.broadcast %259 : vector<64x1xf32> to vector<64x3xf32>
    %263 = arith.mulf %2, %262 : vector<64x3xf32>
    %264 = arith.addf %261, %263 : vector<64x3xf32>
    %cst_48 = arith.constant 2.000000e+00 : f32
    %265 = vector.broadcast %cst_48 : f32 to vector<64x3xf32>
    %266 = arith.mulf %265, %250 : vector<64x3xf32>
    %cst_49 = arith.constant -1.000000e+00 : f32
    %267 = vector.broadcast %cst_49 : f32 to vector<64x3xf32>
    %268 = arith.addf %267, %266 : vector<64x3xf32>
    %cst_50 = arith.constant 0.000000e+00 : f32
    %269 = vector.broadcast %cst_50 : f32 to vector<64x81xf32>
    %270 = tpu.concatenate %255, %268, %264, %245, %70, %269 in 1 : vector<64x32xf32>, vector<64x3xf32>, vector<64x3xf32>, vector<64x1xf32>, vector<64x8xf32>, vector<64x81xf32> -> vector<64x128xf32>
    %c0_51 = arith.constant 0 : index
    %c0_52 = arith.constant 0 : index
    %271 = vector.load %arg11[%c0_51, %c0_52] : memref<64x128xf32, #tpu.memory_space<vmem>>, vector<64x128xf32>
    tpu.vector_store %arg11[%c0_51, %c0_52], %270 {strides = array<i32>} : memref<64x128xf32, #tpu.memory_space<vmem>>, vector<64x128xf32>,
    return
  }
  func.func @transform_0(%arg0: i32) -> (i32, i32) {
    %c0_i32 = arith.constant 0 : i32
    %c0_i32_0 = arith.constant 0 : i32
    return %arg0, %c0_i32 : i32, i32
  }
  func.func @transform_1(%arg0: i32) -> (i32, i32) {
    %c0_i32 = arith.constant 0 : i32
    %c0_i32_0 = arith.constant 0 : i32
    return %arg0, %c0_i32 : i32, i32
  }
  func.func @transform_2(%arg0: i32) -> (i32, i32) {
    %c0_i32 = arith.constant 0 : i32
    %c0_i32_0 = arith.constant 0 : i32
    %c0_i32_1 = arith.constant 0 : i32
    return %c0_i32, %c0_i32_0 : i32, i32
  }
  func.func @transform_3(%arg0: i32) -> (i32, i32) {
    %c0_i32 = arith.constant 0 : i32
    %c0_i32_0 = arith.constant 0 : i32
    %c0_i32_1 = arith.constant 0 : i32
    return %c0_i32, %c0_i32_0 : i32, i32
  }
  func.func @transform_4(%arg0: i32) -> (i32, i32) {
    %c0_i32 = arith.constant 0 : i32
    %c0_i32_0 = arith.constant 0 : i32
    %c0_i32_1 = arith.constant 0 : i32
    return %c0_i32, %c0_i32_0 : i32, i32
  }
  func.func @transform_5(%arg0: i32) -> (i32, i32) {
    %c0_i32 = arith.constant 0 : i32
    %c0_i32_0 = arith.constant 0 : i32
    %c0_i32_1 = arith.constant 0 : i32
    return %c0_i32, %c0_i32_0 : i32, i32
  }
  func.func @transform_6(%arg0: i32) -> (i32, i32) {
    %c0_i32 = arith.constant 0 : i32
    %c0_i32_0 = arith.constant 0 : i32
    %c0_i32_1 = arith.constant 0 : i32
    return %c0_i32, %c0_i32_0 : i32, i32
  }
  func.func @transform_7(%arg0: i32) -> (i32, i32) {
    %c0_i32 = arith.constant 0 : i32
    %c0_i32_0 = arith.constant 0 : i32
    %c0_i32_1 = arith.constant 0 : i32
    return %c0_i32, %c0_i32_0 : i32, i32
  }
  func.func @transform_8(%arg0: i32) -> (i32, i32) {
    %c0_i32 = arith.constant 0 : i32
    %c0_i32_0 = arith.constant 0 : i32
    %c0_i32_1 = arith.constant 0 : i32
    return %c0_i32, %c0_i32_0 : i32, i32
  }
  func.func @transform_9(%arg0: i32) -> (i32, i32) {
    %c0_i32 = arith.constant 0 : i32
    %c0_i32_0 = arith.constant 0 : i32
    %c0_i32_1 = arith.constant 0 : i32
    return %c0_i32, %c0_i32_0 : i32, i32
  }
  func.func @transform_10(%arg0: i32) -> (i32, i32) {
    %c0_i32 = arith.constant 0 : i32
    %c0_i32_0 = arith.constant 0 : i32
    return %arg0, %c0_i32 : i32, i32
  }
}

</mosaic_0001>

<llo_original>
// kernel: tpu_custom_call.1
$region0: #{tpu_custom_call.1}
  #allocation0 [shape = 'u32[]', space=smem, size = 0x4, offset = 0x4, fixed_abs, tag = 'smem constant byte address 0x4 - core index']
  #allocation1 [shape = 'u32[72,128]{1,0:T(1,128)}', space=vmem, size = 0x9000, scoped, tag = 'internal scratch']
  #allocation2 [shape = 'f32[1,1]{1,0:T(1,128)S(1)}', space=vmem, size = 0x200, scoped, tag = 'scoped memory for tpu_custom_call.1']
  %s0 = inlined_call_operand.vmem [shape: bf16[1024,24], index: 0, kind: input, shape index: {}]
  %s1 = inlined_call_operand.vmem [shape: f32[128,25], index: 1, kind: input, shape index: {}]
  %s2 = inlined_call_operand.vmem [shape: f32[3,24], index: 2, kind: input, shape index: {}]
  %s3 = inlined_call_operand.vmem [shape: f32[1,24], index: 3, kind: input, shape index: {}]
  %s4 = inlined_call_operand.vmem [shape: bf16[24,64], index: 4, kind: input, shape index: {}]
  %s5 = inlined_call_operand.vmem [shape: f32[1,64], index: 5, kind: input, shape index: {}]
  %s6 = inlined_call_operand.vmem [shape: f32[24,64], index: 6, kind: input, shape index: {}]
  %s7 = inlined_call_operand.vmem [shape: bf16[64,36], index: 7, kind: input, shape index: {}]
  %s8 = inlined_call_operand.vmem [shape: f32[1,36], index: 8, kind: input, shape index: {}]
  %s9 = inlined_call_operand.<no memory space> [shape: f32[1,1], index: 9, kind: input, shape index: {}]
  %s10 = inlined_call_operand.hbm [shape: f32[128,128], index: 10, kind: output, shape index: {}]
  %s11 = sld [smem:[#allocation0]]
  $region73: #{tpu_custom_call.1} parent=0
    _
  %s13 = ssub.s32 1, %s11
  %s14 = scalar_select 0, %s13, %s11
  %v15 = vstv %s9
  %16 = vst [vmem:[#allocation2] sm:$0x1] %v15
  $region1: #{tpu_custom_call.1} parent=0
    #allocation3 [shape = 'u8[65536]{0}', space=vmem, size = 0x10000, scoped, tag = 'output window, operand 0']
    #allocation4 [shape = 's32[2]{0}', space=sflag, size = 0x8, scoped, tag = 'scoped memory for tpu_custom_call.1']
    %17 = vsyncpa [#allocation4], 0
    %s18 = scalar_lea.sflag [#allocation4], 1
    %19 = vsyncpa %s18, 0
    loop: start=0, step=1, limit=4
    $region2: #{tpu_custom_call.1} parent=1 // loop_pre_header
      _
    $region3: #{tpu_custom_call.1} parent=1 // loop_header
      %s21 = sphi 0, %s25
      %p22 = scmp.ge.s32.totalorder %s21, 4
      %s31 = sphi 0, %s33
      %s34 = sphi 0, %s31
      %s35 = sphi 0, %s34
      %s51 = sphi 0, %s35
      %s57 = sphi 0, %s59
      %s60 = sphi 0, %s57
      %s61 = sphi 0, %s60
      %s77 = sphi 0, %s61
      %s81 = sphi 0, %s81
      %s83 = sphi 0, %s81
      %s84 = sphi 0, %s83
      %s98 = sphi 0, %s84
      %s102 = sphi 0, %s102
      %s104 = sphi 0, %s102
      %s105 = sphi 0, %s104
      %s119 = sphi 0, %s105
      %s123 = sphi 0, %s123
      %s125 = sphi 0, %s123
      %s126 = sphi 0, %s125
      %s140 = sphi 0, %s126
      %s144 = sphi 0, %s144
      %s146 = sphi 0, %s144
      %s147 = sphi 0, %s146
      %s161 = sphi 0, %s147
      %s165 = sphi 0, %s165
      %s167 = sphi 0, %s165
      %s168 = sphi 0, %s167
      %s182 = sphi 0, %s168
      %s186 = sphi 0, %s186
      %s188 = sphi 0, %s186
      %s189 = sphi 0, %s188
      %s203 = sphi 0, %s189
      %s207 = sphi 0, %s207
      %s209 = sphi 0, %s207
      %s210 = sphi 0, %s209
      %s224 = sphi 0, %s210
      %s228 = sphi 0, %s228
      %s230 = sphi 0, %s228
      %s231 = sphi 0, %s230
      %s245 = sphi 0, %s231
      %s251 = sphi 0, %s253
      %s254 = sphi 0, %s251
      %s255 = sphi 0, %s254
      %s271 = sphi 0, %s255
    $region4: #{tpu_custom_call.1} parent=1 // loop_header_branch
      %24 = sbr.rel (%p22) target = $region8
    $region5: #{tpu_custom_call.1} parent=1 // loop_body
      %s26 = ssub.s32 %s21, 1
      %s27 = ssub.s32 %s21, 2
      %s28 = sadd.s32 %s21, 1
      %s29 = ssub.s32 %s21, %s28
      %p30 = scmp.eq.s32.totalorder %s29, 0
      %s32 = sadd.s32 %s31, 1
      %s33 = scalar_select %p30, %s31, %s32
      %p36 = pneg %p30
      %p37 = scmp.eq.s32.totalorder %s21, 1
      %p38 = por %p36, %p37
      %p39 = scmp.ne.s32.totalorder %s31, %s34
      %p40 = scmp.eq.s32.totalorder %s21, 0
      %p41 = por %p39, %p40
      %p42 = scmp.ne.s32.totalorder %s31, %s34
      %p43 = scmp.eq.s32.totalorder %s26, 1
      %p44 = por %p42, %p43
      %p45 = scmp.ne.s32.totalorder %s34, %s35
      %p46 = scmp.eq.s32.totalorder %s26, 0
      %p47 = por %p45, %p46
      %p48 = scmp.ne.s32.totalorder %s34, %s35
      %p49 = scmp.eq.s32.totalorder %s27, 1
      %p50 = por %p48, %p49
      %p52 = scmp.ne.s32.totalorder %s35, %s51
      %p53 = scmp.eq.s32.totalorder %s27, 0
      %p54 = por %p52, %p53
      %s55 = ssub.s32 %s21, %s28
      %p56 = scmp.eq.s32.totalorder %s55, 0
      %s58 = sadd.s32 %s57, 1
      %s59 = scalar_select %p56, %s57, %s58
      %p62 = pneg %p56
      %p63 = scmp.eq.s32.totalorder %s21, 1
      %p64 = por %p62, %p63
      %p65 = scmp.ne.s32.totalorder %s57, %s60
      %p66 = scmp.eq.s32.totalorder %s21, 0
      %p67 = por %p65, %p66
      %p68 = scmp.ne.s32.totalorder %s57, %s60
      %p69 = scmp.eq.s32.totalorder %s26, 1
      %p70 = por %p68, %p69
      %p71 = scmp.ne.s32.totalorder %s60, %s61
      %p72 = scmp.eq.s32.totalorder %s26, 0
      %p73 = por %p71, %p72
      %p74 = scmp.ne.s32.totalorder %s60, %s61
      %p75 = scmp.eq.s32.totalorder %s27, 1
      %p76 = por %p74, %p75
      %p78 = scmp.ne.s32.totalorder %s61, %s77
      %p79 = scmp.eq.s32.totalorder %s27, 0
      %p80 = por %p78, %p79
      %s82 = sadd.s32 %s81, 1
      %p85 = scmp.eq.s32.totalorder %s21, 1
      %p86 = scmp.ne.s32.totalorder %s81, %s83
      %p87 = scmp.eq.s32.totalorder %s21, 0
      %p88 = por %p86, %p87
      %p89 = scmp.ne.s32.totalorder %s81, %s83
      %p90 = scmp.eq.s32.totalorder %s26, 1
      %p91 = por %p89, %p90
      %p92 = scmp.ne.s32.totalorder %s83, %s84
      %p93 = scmp.eq.s32.totalorder %s26, 0
      %p94 = por %p92, %p93
      %p95 = scmp.ne.s32.totalorder %s83, %s84
      %p96 = scmp.eq.s32.totalorder %s27, 1
      %p97 = por %p95, %p96
      %p99 = scmp.ne.s32.totalorder %s84, %s98
      %p100 = scmp.eq.s32.totalorder %s27, 0
      %p101 = por %p99, %p100
      %s103 = sadd.s32 %s102, 1
      %p106 = scmp.eq.s32.totalorder %s21, 1
      %p107 = scmp.ne.s32.totalorder %s102, %s104
      %p108 = scmp.eq.s32.totalorder %s21, 0
      %p109 = por %p107, %p108
      %p110 = scmp.ne.s32.totalorder %s102, %s104
      %p111 = scmp.eq.s32.totalorder %s26, 1
      %p112 = por %p110, %p111
      %p113 = scmp.ne.s32.totalorder %s104, %s105
      %p114 = scmp.eq.s32.totalorder %s26, 0
      %p115 = por %p113, %p114
      %p116 = scmp.ne.s32.totalorder %s104, %s105
      %p117 = scmp.eq.s32.totalorder %s27, 1
      %p118 = por %p116, %p117
      %p120 = scmp.ne.s32.totalorder %s105, %s119
      %p121 = scmp.eq.s32.totalorder %s27, 0
      %p122 = por %p120, %p121
      %s124 = sadd.s32 %s123, 1
      %p127 = scmp.eq.s32.totalorder %s21, 1
      %p128 = scmp.ne.s32.totalorder %s123, %s125
      %p129 = scmp.eq.s32.totalorder %s21, 0
      %p130 = por %p128, %p129
      %p131 = scmp.ne.s32.totalorder %s123, %s125
      %p132 = scmp.eq.s32.totalorder %s26, 1
      %p133 = por %p131, %p132
      %p134 = scmp.ne.s32.totalorder %s125, %s126
      %p135 = scmp.eq.s32.totalorder %s26, 0
      %p136 = por %p134, %p135
      %p137 = scmp.ne.s32.totalorder %s125, %s126
      %p138 = scmp.eq.s32.totalorder %s27, 1
      %p139 = por %p137, %p138
      %p141 = scmp.ne.s32.totalorder %s126, %s140
      %p142 = scmp.eq.s32.totalorder %s27, 0
      %p143 = por %p141, %p142
      %s145 = sadd.s32 %s144, 1
      %p148 = scmp.eq.s32.totalorder %s21, 1
      %p149 = scmp.ne.s32.totalorder %s144, %s146
      %p150 = scmp.eq.s32.totalorder %s21, 0
      %p151 = por %p149, %p150
      %p152 = scmp.ne.s32.totalorder %s144, %s146
      %p153 = scmp.eq.s32.totalorder %s26, 1
      %p154 = por %p152, %p153
      %p155 = scmp.ne.s32.totalorder %s146, %s147
      %p156 = scmp.eq.s32.totalorder %s26, 0
      %p157 = por %p155, %p156
      %p158 = scmp.ne.s32.totalorder %s146, %s147
      %p159 = scmp.eq.s32.totalorder %s27, 1
      %p160 = por %p158, %p159
      %p162 = scmp.ne.s32.totalorder %s147, %s161
      %p163 = scmp.eq.s32.totalorder %s27, 0
      %p164 = por %p162, %p163
      %s166 = sadd.s32 %s165, 1
      %p169 = scmp.eq.s32.totalorder %s21, 1
      %p170 = scmp.ne.s32.totalorder %s165, %s167
      %p171 = scmp.eq.s32.totalorder %s21, 0
      %p172 = por %p170, %p171
      %p173 = scmp.ne.s32.totalorder %s165, %s167
      %p174 = scmp.eq.s32.totalorder %s26, 1
      %p175 = por %p173, %p174
      %p176 = scmp.ne.s32.totalorder %s167, %s168
      %p177 = scmp.eq.s32.totalorder %s26, 0
      %p178 = por %p176, %p177
      %p179 = scmp.ne.s32.totalorder %s167, %s168
      %p180 = scmp.eq.s32.totalorder %s27, 1
      %p181 = por %p179, %p180
      %p183 = scmp.ne.s32.totalorder %s168, %s182
      %p184 = scmp.eq.s32.totalorder %s27, 0
      %p185 = por %p183, %p184
      %s187 = sadd.s32 %s186, 1
      %p190 = scmp.eq.s32.totalorder %s21, 1
      %p191 = scmp.ne.s32.totalorder %s186, %s188
      %p192 = scmp.eq.s32.totalorder %s21, 0
      %p193 = por %p191, %p192
      %p194 = scmp.ne.s32.totalorder %s186, %s188
      %p195 = scmp.eq.s32.totalorder %s26, 1
      %p196 = por %p194, %p195
      %p197 = scmp.ne.s32.totalorder %s188, %s189
      %p198 = scmp.eq.s32.totalorder %s26, 0
      %p199 = por %p197, %p198
      %p200 = scmp.ne.s32.totalorder %s188, %s189
      %p201 = scmp.eq.s32.totalorder %s27, 1
      %p202 = por %p200, %p201
      %p204 = scmp.ne.s32.totalorder %s189, %s203
      %p205 = scmp.eq.s32.totalorder %s27, 0
      %p206 = por %p204, %p205
      %s208 = sadd.s32 %s207, 1
      %p211 = scmp.eq.s32.totalorder %s21, 1
      %p212 = scmp.ne.s32.totalorder %s207, %s209
      %p213 = scmp.eq.s32.totalorder %s21, 0
      %p214 = por %p212, %p213
      %p215 = scmp.ne.s32.totalorder %s207, %s209
      %p216 = scmp.eq.s32.totalorder %s26, 1
      %p217 = por %p215, %p216
      %p218 = scmp.ne.s32.totalorder %s209, %s210
      %p219 = scmp.eq.s32.totalorder %s26, 0
      %p220 = por %p218, %p219
      %p221 = scmp.ne.s32.totalorder %s209, %s210
      %p222 = scmp.eq.s32.totalorder %s27, 1
      %p223 = por %p221, %p222
      %p225 = scmp.ne.s32.totalorder %s210, %s224
      %p226 = scmp.eq.s32.totalorder %s27, 0
      %p227 = por %p225, %p226
      %s229 = sadd.s32 %s228, 1
      %p232 = scmp.eq.s32.totalorder %s21, 1
      %p233 = scmp.ne.s32.totalorder %s228, %s230
      %p234 = scmp.eq.s32.totalorder %s21, 0
      %p235 = por %p233, %p234
      %p236 = scmp.ne.s32.totalorder %s228, %s230
      %p237 = scmp.eq.s32.totalorder %s26, 1
      %p238 = por %p236, %p237
      %p239 = scmp.ne.s32.totalorder %s230, %s231
      %p240 = scmp.eq.s32.totalorder %s26, 0
      %p241 = por %p239, %p240
      %p242 = scmp.ne.s32.totalorder %s230, %s231
      %p243 = scmp.eq.s32.totalorder %s27, 1
      %p244 = por %p242, %p243
      %p246 = scmp.ne.s32.totalorder %s231, %s245
      %p247 = scmp.eq.s32.totalorder %s27, 0
      %p248 = por %p246, %p247
      %s249 = ssub.s32 %s21, %s28
      %p250 = scmp.eq.s32.totalorder %s249, 0
      %s252 = sadd.s32 %s251, 1
      %s253 = scalar_select %p250, %s251, %s252
      %p256 = pneg %p250
      %p257 = scmp.eq.s32.totalorder %s21, 1
      %p258 = por %p256, %p257
      %p259 = scmp.ne.s32.totalorder %s251, %s254
      %p260 = scmp.eq.s32.totalorder %s21, 0
      %p261 = por %p259, %p260
      %p262 = scmp.ne.s32.totalorder %s251, %s254
      %p263 = scmp.eq.s32.totalorder %s26, 1
      %p264 = por %p262, %p263
      %p265 = scmp.ne.s32.totalorder %s254, %s255
      %p266 = scmp.eq.s32.totalorder %s26, 0
      %p267 = por %p265, %p266
      %p268 = scmp.ne.s32.totalorder %s254, %s255
      %p269 = scmp.eq.s32.totalorder %s27, 1
      %p270 = por %p268, %p269
      %p272 = scmp.ne.s32.totalorder %s255, %s271
      %p273 = scmp.eq.s32.totalorder %s27, 0
      %p274 = por %p272, %p273
      %p275 = scmp.le.s32.totalorder 1, %s21
      %p276 = scmp.lt.s32.totalorder %s21, 3
      %p277 = pnand %p275, %p276
      %p278 = pneg %p277
      // Predicated region
      $region9: #{tpu_custom_call.1} parent=5 // pred_check
        _
      $region10: #{tpu_custom_call.1} parent=5 // pred_check_branch
        %280 = sbr.rel (%p277) target = $region12
      $region11: #{tpu_custom_call.1} parent=5 // pred_region
        %s281 = ssub.s32 %s21, 1
        // Predicated region
        $region13: #{tpu_custom_call.1} parent=11 // pred_check
          %p282 = pneg %p94
        $region14: #{tpu_custom_call.1} parent=11 // pred_check_branch
          %284 = sbr.rel (%p282) target = $region16
        $region15: #{tpu_custom_call.1} parent=11 // pred_region
          _
        $region16: #{tpu_custom_call.1} parent=11 // pred_fallthru
          _
        // Predicated region
        $region17: #{tpu_custom_call.1} parent=11 // pred_check
          %p285 = pneg %p115
        $region18: #{tpu_custom_call.1} parent=11 // pred_check_branch
          %287 = sbr.rel (%p285) target = $region20
        $region19: #{tpu_custom_call.1} parent=11 // pred_region
          _
        $region20: #{tpu_custom_call.1} parent=11 // pred_fallthru
          _
        // Predicated region
        $region21: #{tpu_custom_call.1} parent=11 // pred_check
          %p288 = pneg %p136
        $region22: #{tpu_custom_call.1} parent=11 // pred_check_branch
          %290 = sbr.rel (%p288) target = $region24
        $region23: #{tpu_custom_call.1} parent=11 // pred_region
          _
        $region24: #{tpu_custom_call.1} parent=11 // pred_fallthru
          _
        // Predicated region
        $region25: #{tpu_custom_call.1} parent=11 // pred_check
          %p291 = pneg %p157
        $region26: #{tpu_custom_call.1} parent=11 // pred_check_branch
          %293 = sbr.rel (%p291) target = $region28
        $region27: #{tpu_custom_call.1} parent=11 // pred_region
          _
        $region28: #{tpu_custom_call.1} parent=11 // pred_fallthru
          _
        // Predicated region
        $region29: #{tpu_custom_call.1} parent=11 // pred_check
          %p294 = pneg %p178
        $region30: #{tpu_custom_call.1} parent=11 // pred_check_branch
          %296 = sbr.rel (%p294) target = $region32
        $region31: #{tpu_custom_call.1} parent=11 // pred_region
          _
        $region32: #{tpu_custom_call.1} parent=11 // pred_fallthru
          _
        // Predicated region
        $region33: #{tpu_custom_call.1} parent=11 // pred_check
          %p297 = pneg %p199
        $region34: #{tpu_custom_call.1} parent=11 // pred_check_branch
          %299 = sbr.rel (%p297) target = $region36
        $region35: #{tpu_custom_call.1} parent=11 // pred_region
          _
        $region36: #{tpu_custom_call.1} parent=11 // pred_fallthru
          _
        // Predicated region
        $region37: #{tpu_custom_call.1} parent=11 // pred_check
          %p300 = pneg %p220
        $region38: #{tpu_custom_call.1} parent=11 // pred_check_branch
          %302 = sbr.rel (%p300) target = $region40
        $region39: #{tpu_custom_call.1} parent=11 // pred_region
          _
        $region40: #{tpu_custom_call.1} parent=11 // pred_fallthru
          _
        // Predicated region
        $region41: #{tpu_custom_call.1} parent=11 // pred_check
          %p303 = pneg %p241
        $region42: #{tpu_custom_call.1} parent=11 // pred_check_branch
          %305 = sbr.rel (%p303) target = $region44
        $region43: #{tpu_custom_call.1} parent=11 // pred_region
          _
        $region44: #{tpu_custom_call.1} parent=11 // pred_fallthru
          _
      $region12: #{tpu_custom_call.1} parent=5 // pred_fallthru
        _
      %p306 = scmp.lt.s32.totalorder %s21, 2
      // Predicated region
      $region45: #{tpu_custom_call.1} parent=5 // pred_check
        %p307 = pneg %p306
      $region46: #{tpu_custom_call.1} parent=5 // pred_check_branch
        %309 = sbr.rel (%p307) target = $region48
      $region47: #{tpu_custom_call.1} parent=5 // pred_region
        // Predicated region
        $region49: #{tpu_custom_call.1} parent=47 // pred_check
          %p310 = pneg %p41
        $region50: #{tpu_custom_call.1} parent=47 // pred_check_branch
          %312 = sbr.rel (%p310) target = $region52
        $region51: #{tpu_custom_call.1} parent=47 // pred_region
          %s313 = smul.u32 64, %s21
          %p314 = scmp.lt.s32.totalorder %s313, 127
          %s315 = scalar_select %p314, %s313, 127
          %s316 = smul.addr %s315, 4
          %s317 = scalar_lea.vmem %s0, %s316
          %s318 = smul.u32 64, %s21
        $region52: #{tpu_custom_call.1} parent=47 // pred_fallthru
          _
        // Predicated region
        $region53: #{tpu_custom_call.1} parent=47 // pred_check
          %p319 = pneg %p67
        $region54: #{tpu_custom_call.1} parent=47 // pred_check_branch
          %321 = sbr.rel (%p319) target = $region56
        $region55: #{tpu_custom_call.1} parent=47 // pred_region
          %s322 = smul.u32 8, %s21
          %p323 = scmp.lt.s32.totalorder %s322, 15
          %s324 = scalar_select %p323, %s322, 15
          %s325 = smul.addr %s324, 8
          %s326 = scalar_lea.vmem %s1, %s325
          %s327 = smul.u32 8, %s21
        $region56: #{tpu_custom_call.1} parent=47 // pred_fallthru
          _
      $region48: #{tpu_custom_call.1} parent=5 // pred_fallthru
        _
      %p328 = scmp.le.s32.totalorder 1, %s21
      %p329 = scmp.lt.s32.totalorder %s21, 3
      %p330 = pnand %p328, %p329
      %p331 = pneg %p330
      // Predicated region
      $region57: #{tpu_custom_call.1} parent=5 // pred_check
        _
      $region58: #{tpu_custom_call.1} parent=5 // pred_check_branch
        %333 = sbr.rel (%p330) target = $region60
      $region59: #{tpu_custom_call.1} parent=5 // pred_region
        %s334 = ssub.s32 %s21, 1
        %s335 = smul.u32 64, %s26
        %p336 = scmp.lt.s32.totalorder %s335, 127
        %s337 = scalar_select %p336, %s335, 127
        %s338 = smul.addr %s337, 4
        %s339 = scalar_lea.vmem %s0, %s338
        %p340 = pneg %p47
        %p341 = pneg %p44
        %s342 = smul.u32 8, %s26
        %p343 = scmp.lt.s32.totalorder %s342, 15
        %s344 = scalar_select %p343, %s342, 15
        %s345 = smul.addr %s344, 8
        %s346 = scalar_lea.vmem %s1, %s345
        %p347 = pneg %p73
        %p348 = pneg %p70
        %p349 = pneg %p94
        %p350 = pneg %p91
        %p351 = pneg %p115
        %p352 = pneg %p112
        %p353 = pneg %p136
        %p354 = pneg %p133
        %p355 = pneg %p157
        %p356 = pneg %p154
        %p357 = pneg %p178
        %p358 = pneg %p175
        %p359 = pneg %p199
        %p360 = pneg %p196
        %p361 = pneg %p220
        %p362 = pneg %p217
        %p363 = pneg %p241
        %p364 = pneg %p238
        %p365 = pneg %p267
        %p366 = pneg %p264
        %s367 = sand.u32 %s254, 1
        %s368 = scalar_lea.sflag [#allocation4], %s367
        %s369 = sand.u32 %s254, 1
        %s370 = smul.addr %s369, 64
        %s371 = scalar_lea.vmem [#allocation3], %s370
        %s372 = smul.u32 64, %s26
        %p373 = scmp.lt.s32.totalorder %s372, 127
        %s374 = scalar_select %p373, %s372, 127
        %s375 = smul.addr %s374, 4
        %s376 = scalar_lea.vmem %s0, %s375
        %s377 = smul.u32 64, %s26
        %s378 = smul.u32 8, %s26
        %p379 = scmp.lt.s32.totalorder %s378, 15
        %s380 = scalar_select %p379, %s378, 15
        %s381 = smul.addr %s380, 8
        %s382 = scalar_lea.vmem %s1, %s381
        %s383 = smul.u32 8, %s26
        %s384 = smul.u32 8, %s26
        %v386 = vld [vmem:[%s382] sm:$0xff]
        %v387 = vld [vmem:[%s382 + $0x8] sm:$0xff]
        %v388 = vld [vmem:[%s382 + $0x10] sm:$0xff]
        %v389 = vld [vmem:[%s382 + $0x18] sm:$0xff]
        %v390 = vld [vmem:[%s382 + $0x20] sm:$0xff]
        %v391 = vld [vmem:[%s382 + $0x28] sm:$0xff]
        %v392 = vld [vmem:[%s382 + $0x30] sm:$0xff]
        %v393 = vld [vmem:[%s382 + $0x38] sm:$0xff]
        %v394 = vld [vmem:[%s2] sm:$0x7]
        %v395 = vld [vmem:[%s3] sm:$0x1]
        %v397 = vperm.slane %v395, 0
        %vm399 = vcmask 23552
        %v401 = vsel %vm399, %v386, 0
        %v404 = vsel %vm399, %v387, 0
        %v407 = vsel %vm399, %v388, 0
        %v410 = vsel %vm399, %v389, 0
        %v413 = vsel %vm399, %v390, 0
        %v416 = vsel %vm399, %v391, 0
        %v419 = vsel %vm399, %v392, 0
        %v422 = vsel %vm399, %v393, 0
        %vm424 = vcmask 1042432
        %v426 = vsel %vm424, %v394, 0
        %428 = vmatpush.msra.mxu0 0.0
        %429 = vmatpush.msra.mxu0 0.0
        %430 = vmatpush.msra.mxu0 0.0
        %431 = vmatpush.msra.mxu0 0.0
        %432 = vmatpush.msra.mxu0 0.0
        %433 = vmatpush.msra.mxu0 0.0
        %434 = vmatpush.msra.mxu0 0.0
        %435 = vmatpush.msra.mxu0 0.0
        %436 = vmatpush.msra.mxu0 0.0
        %437 = vmatpush.msra.mxu0 0.0
        %438 = vmatpush.msra.mxu0 0.0
        %439 = vmatpush.msra.mxu0 0.0
        %440 = vmatpush.msra.mxu0 0.0
        %441 = vmatpush.msra.mxu0 0.0
        %442 = vmatpush.msra.mxu0 0.0
        %443 = vmatpush.msra.mxu0 %v426
        %444 = vmatmul.f32.gmra.mxu0 %v401
        %v445 = vpop.f32.mrf.mxu0
        %v446 = vadd.f32 %v397, %v445
        %447 = vmatmul.f32.gmra.mxu0 %v404
        %v448 = vpop.f32.mrf.mxu0
        %v449 = vadd.f32 %v397, %v448
        %450 = vmatmul.f32.gmra.mxu0 %v407
        %v451 = vpop.f32.mrf.mxu0
        %v452 = vadd.f32 %v397, %v451
        %453 = vmatmul.f32.gmra.mxu0 %v410
        %v454 = vpop.f32.mrf.mxu0
        %v455 = vadd.f32 %v397, %v454
        %456 = vmatmul.f32.gmra.mxu0 %v413
        %v457 = vpop.f32.mrf.mxu0
        %v458 = vadd.f32 %v397, %v457
        %459 = vmatmul.f32.gmra.mxu0 %v416
        %v460 = vpop.f32.mrf.mxu0
        %v461 = vadd.f32 %v397, %v460
        %462 = vmatmul.f32.gmra.mxu0 %v419
        %v463 = vpop.f32.mrf.mxu0
        %v464 = vadd.f32 %v397, %v463
        %465 = vmatmul.f32.gmra.mxu0 %v422
        %v466 = vpop.f32.mrf.mxu0
        %v467 = vadd.f32 %v397, %v466
        %468 = vdwg.mxu0
        %v469 = vand.u32 2147483647, %v446
        %vm470 = vcmp.le.f32.partialorder %v469, 0.7853982
        %vm471 = vcmp.lt.s32.totalorder %v446, 0
        %v472 = vand.u32 %v446, 2139095040
        %v473 = vshrl.u32 %v472, 23
        %v474 = vsub.s32 %v473, 127
        %v475 = vand.u32 2147483647, %v446
        %v476 = vand.u32 %v475, 8388607
        %v477 = vor.u32 %v476, 8388608
        %v478 = vsub.s32 0, %v477
        %v479 = vadd.s32 %v474, 1
        %vm480 = vcmp.gt.s32.totalorder %v479, 0
        %v481 = vsel %vm480, %v479, 0
        %v482 = vshrl.u32 %v481, 5
        %v483 = vand.u32 %v481, 31
        %v484 = vsub.s32 32, %v483
        %v485 = vshrl.u32 683565275, %v484
        %v486 = vshll.u32 683565275, %v483
        %v487 = vshrl.u32 2475754826, %v484
        %v488 = vor.u32 %v486, %v487
        %v489 = vshll.u32 2475754826, %v483
        %v490 = vshrl.u32 2131351028, %v484
        %v491 = vor.u32 %v489, %v490
        %v492 = vshll.u32 2131351028, %v483
        %v493 = vshrl.u32 2102212464, %v484
        %v494 = vor.u32 %v492, %v493
        %v495 = vshll.u32 2102212464, %v483
        %v496 = vshrl.u32 920167782, %v484
        %v497 = vor.u32 %v495, %v496
        %v498 = vshll.u32 920167782, %v483
        %v499 = vshrl.u32 1326507024, %v484
        %v500 = vor.u32 %v498, %v499
        %vm501 = vcmp.lt.s32.totalorder %v482, 1
        %vm502 = vcmp.lt.s32.totalorder %v482, 2
        %vm503 = vcmp.lt.s32.totalorder %v482, 3
        %vm504 = vcmp.lt.s32.totalorder %v482, 4
        %v505 = vsel %vm501, %v485, %v488
        %v506 = vsel %vm504, %v494, 2102212464
        %v507 = vsel %vm503, %v491, %v506
        %v508 = vsel %vm502, %v505, %v507
        %v509 = vsel %vm501, %v488, %v491
        %v510 = vsel %vm504, %v497, 920167782
        %v511 = vsel %vm503, %v494, %v510
        %v512 = vsel %vm502, %v509, %v511
        %v513 = vsel %vm501, %v491, %v494
        %v514 = vsel %vm504, %v500, 1326507024
        %v515 = vsel %vm503, %v497, %v514
        %v516 = vsel %vm502, %v513, %v515
        %v517 = vshll.u32 %v477, 8
        %v518 = vand.u32 %v517, 65535
        %v519 = vshrl.u32 %v517, 16
        %v520 = vand.u32 %v516, 65535
        %v521 = vshrl.u32 %v516, 16
        %v522 = vmul.u32 %v518, %v520
        %v523 = vmul.u32 %v518, %v521
        %v524 = vmul.u32 %v519, %v520
        %v525 = vmul.u32 %v519, %v521
        %v526 = vshll.u32 %v523, 16
        %v527 = vshrl.u32 %v523, 16
        %v528 = vshll.u32 %v524, 16
        %v529 = vshrl.u32 %v524, 16
        %vm530 = vc.u32 %v522, %v526
        %v531 = vsel %vm530, 1, 0
        %v532 = vadd.s32 %v522, %v526
        %v533 = vadd.s32 %v525, %v531
        %vm534 = vc.u32 %v532, %v528
        %v535 = vsel %vm534, 1, 0
        %v536 = vadd.s32 %v532, %v528
        %v537 = vadd.s32 %v533, %v535
        %v538 = vadd.s32 %v537, %v527
        %v539 = vadd.s32 %v538, %v529
        %v540 = vand.u32 %v517, 65535
        %v541 = vshrl.u32 %v517, 16
        %v542 = vand.u32 %v512, 65535
        %v543 = vshrl.u32 %v512, 16
        %v544 = vmul.u32 %v540, %v542
        %v545 = vmul.u32 %v540, %v543
        %v546 = vmul.u32 %v541, %v542
        %v547 = vmul.u32 %v541, %v543
        %v548 = vshll.u32 %v545, 16
        %v549 = vshrl.u32 %v545, 16
        %v550 = vshll.u32 %v546, 16
        %v551 = vshrl.u32 %v546, 16
        %vm552 = vc.u32 %v544, %v548
        %v553 = vsel %vm552, 1, 0
        %v554 = vadd.s32 %v544, %v548
        %v555 = vadd.s32 %v547, %v553
        %vm556 = vc.u32 %v554, %v550
        %v557 = vsel %vm556, 1, 0
        %v558 = vadd.s32 %v554, %v550
        %v559 = vadd.s32 %v555, %v557
        %v560 = vadd.s32 %v559, %v549
        %v561 = vadd.s32 %v560, %v551
        %v562 = vmul.u32 %v517, %v508
        %v563 = vadd.s32 %v539, %v558
        %vm564 = vc.u32 %v539, %v558
        %v565 = vadd.s32 %v561, 1
        %v566 = vsel %vm564, %v565, %v561
        %v567 = vadd.s32 %v562, %v566
        %v568 = vadd.s32 %v567, 536870912
        %v569 = vshrl.u32 %v568, 30
        %v570 = vshll.u32 %v569, 30
        %v571 = vsub.s32 %v567, %v570
        %vm572 = vcmp.lt.s32.totalorder %v571, 0
        %v573 = vsub.s32 0, %v571
        %v574 = vsel %vm572, %v573, %v571
        %v575 = vclz %v574
        %v576 = vsub.s32 %v575, 2
        %vm577 = vcmp.gt.s32.totalorder 0, %v576
        %v578 = vsel %vm577, 0, %v576
        %v579 = vsub.s32 32, %v578
        %v580 = vshll.u32 %v571, %v578
        %v581 = vshrl.u32 %v563, %v579
        %v582 = vor.u32 %v580, %v581
        %v583 = vsub.s32 4294967266, %v578
        %v584 = vadd.s32 %v583, 127
        %v585 = vshll.u32 %v584, 23
        %v586 = vor.u32 4788187, %v585
        %v587 = vand.u32 2147483647, %v586
        %v589 = vcvt.s32.f32 %v582
        %v590 = vmul.f32 %v589, %v587
        %v591 = vxor.u32 %v590, 2147483648
        %v592 = vsel %vm471, %v591, %v590
        %v593 = vsub.s32 4, %v569
        %v594 = vsel %vm471, %v593, %v569
        %v595 = vsel %vm470, %v446, %v592
        %v596 = vsel %vm470, 0, %v594
        %v597 = vmul.f32 %v595, %v595
        %v598 = vmul.f32 %v597, -0.001358992
        %v599 = vadd.f32 %v598, 0.041655596
        %v600 = vmul.f32 %v597, %v599
        %v601 = vadd.f32 %v600, -0.4999988
        %v602 = vmul.f32 %v597, %v601
        %v603 = vadd.f32 1.0, %v602
        %v604 = vmul.f32 %v595, %v595
        %v605 = vmul.f32 %v604, -0.00019511016
        %v606 = vadd.f32 %v605, 0.008332121
        %v607 = vmul.f32 %v604, %v606
        %v608 = vadd.f32 %v607, -0.16666654
        %v609 = vmul.f32 %v604, %v608
        %v610 = vadd.f32 %v609, 1.0
        %v611 = vmul.f32 %v610, %v595
        %vm612 = vweird.f32 %v446
        %v613 = vadd.s32 %v596, 3
        %v614 = vand.u32 %v613, 3
        %vm615 = vcmp.lt.s32.totalorder %v614, 2
        %vm616 = vcmp.eq.s32.totalorder %v614, 0
        %v617 = vxor.u32 %v611, 2147483648
        %v618 = vsel %vm616, %v603, %v617
        %vm619 = vcmp.eq.s32.totalorder %v614, 2
        %v620 = vxor.u32 %v603, 2147483648
        %v621 = vsel %vm619, %v620, %v611
        %v622 = vsel %vm615, %v618, %v621
        %v623 = vsel %vm612, nan, %v622
        %v624 = vand.u32 2147483647, %v449
        %vm625 = vcmp.le.f32.partialorder %v624, 0.7853982
        %vm626 = vcmp.lt.s32.totalorder %v449, 0
        %v627 = vand.u32 %v449, 2139095040
        %v628 = vshrl.u32 %v627, 23
        %v629 = vsub.s32 %v628, 127
        %v630 = vand.u32 2147483647, %v449
        %v631 = vand.u32 %v630, 8388607
        %v632 = vor.u32 %v631, 8388608
        %v633 = vsub.s32 0, %v632
        %v634 = vadd.s32 %v629, 1
        %vm635 = vcmp.gt.s32.totalorder %v634, 0
        %v636 = vsel %vm635, %v634, 0
        %v637 = vshrl.u32 %v636, 5
        %v638 = vand.u32 %v636, 31
        %v639 = vsub.s32 32, %v638
        %v640 = vshrl.u32 683565275, %v639
        %v641 = vshll.u32 683565275, %v638
        %v642 = vshrl.u32 2475754826, %v639
        %v643 = vor.u32 %v641, %v642
        %v644 = vshll.u32 2475754826, %v638
        %v645 = vshrl.u32 2131351028, %v639
        %v646 = vor.u32 %v644, %v645
        %v647 = vshll.u32 2131351028, %v638
        %v648 = vshrl.u32 2102212464, %v639
        %v649 = vor.u32 %v647, %v648
        %v650 = vshll.u32 2102212464, %v638
        %v651 = vshrl.u32 920167782, %v639
        %v652 = vor.u32 %v650, %v651
        %v653 = vshll.u32 920167782, %v638
        %v654 = vshrl.u32 1326507024, %v639
        %v655 = vor.u32 %v653, %v654
        %vm656 = vcmp.lt.s32.totalorder %v637, 1
        %vm657 = vcmp.lt.s32.totalorder %v637, 2
        %vm658 = vcmp.lt.s32.totalorder %v637, 3
        %vm659 = vcmp.lt.s32.totalorder %v637, 4
        %v660 = vsel %vm656, %v640, %v643
        %v661 = vsel %vm659, %v649, 2102212464
        %v662 = vsel %vm658, %v646, %v661
        %v663 = vsel %vm657, %v660, %v662
        %v664 = vsel %vm656, %v643, %v646
        %v665 = vsel %vm659, %v652, 920167782
        %v666 = vsel %vm658, %v649, %v665
        %v667 = vsel %vm657, %v664, %v666
        %v668 = vsel %vm656, %v646, %v649
        %v669 = vsel %vm659, %v655, 1326507024
        %v670 = vsel %vm658, %v652, %v669
        %v671 = vsel %vm657, %v668, %v670
        %v672 = vshll.u32 %v632, 8
        %v673 = vand.u32 %v672, 65535
        %v674 = vshrl.u32 %v672, 16
        %v675 = vand.u32 %v671, 65535
        %v676 = vshrl.u32 %v671, 16
        %v677 = vmul.u32 %v673, %v675
        %v678 = vmul.u32 %v673, %v676
        %v679 = vmul.u32 %v674, %v675
        %v680 = vmul.u32 %v674, %v676
        %v681 = vshll.u32 %v678, 16
        %v682 = vshrl.u32 %v678, 16
        %v683 = vshll.u32 %v679, 16
        %v684 = vshrl.u32 %v679, 16
        %vm685 = vc.u32 %v677, %v681
        %v686 = vsel %vm685, 1, 0
        %v687 = vadd.s32 %v677, %v681
        %v688 = vadd.s32 %v680, %v686
        %vm689 = vc.u32 %v687, %v683
        %v690 = vsel %vm689, 1, 0
        %v691 = vadd.s32 %v687, %v683
        %v692 = vadd.s32 %v688, %v690
        %v693 = vadd.s32 %v692, %v682
        %v694 = vadd.s32 %v693, %v684
        %v695 = vand.u32 %v672, 65535
        %v696 = vshrl.u32 %v672, 16
        %v697 = vand.u32 %v667, 65535
        %v698 = vshrl.u32 %v667, 16
        %v699 = vmul.u32 %v695, %v697
        %v700 = vmul.u32 %v695, %v698
        %v701 = vmul.u32 %v696, %v697
        %v702 = vmul.u32 %v696, %v698
        %v703 = vshll.u32 %v700, 16
        %v704 = vshrl.u32 %v700, 16
        %v705 = vshll.u32 %v701, 16
        %v706 = vshrl.u32 %v701, 16
        %vm707 = vc.u32 %v699, %v703
        %v708 = vsel %vm707, 1, 0
        %v709 = vadd.s32 %v699, %v703
        %v710 = vadd.s32 %v702, %v708
        %vm711 = vc.u32 %v709, %v705
        %v712 = vsel %vm711, 1, 0
        %v713 = vadd.s32 %v709, %v705
        %v714 = vadd.s32 %v710, %v712
        %v715 = vadd.s32 %v714, %v704
        %v716 = vadd.s32 %v715, %v706
        %v717 = vmul.u32 %v672, %v663
        %v718 = vadd.s32 %v694, %v713
        %vm719 = vc.u32 %v694, %v713
        %v720 = vadd.s32 %v716, 1
        %v721 = vsel %vm719, %v720, %v716
        %v722 = vadd.s32 %v717, %v721
        %v723 = vadd.s32 %v722, 536870912
        %v724 = vshrl.u32 %v723, 30
        %v725 = vshll.u32 %v724, 30
        %v726 = vsub.s32 %v722, %v725
        %vm727 = vcmp.lt.s32.totalorder %v726, 0
        %v728 = vsub.s32 0, %v726
        %v729 = vsel %vm727, %v728, %v726
        %v730 = vclz %v729
        %v731 = vsub.s32 %v730, 2
        %vm732 = vcmp.gt.s32.totalorder 0, %v731
        %v733 = vsel %vm732, 0, %v731
        %v734 = vsub.s32 32, %v733
        %v735 = vshll.u32 %v726, %v733
        %v736 = vshrl.u32 %v718, %v734
        %v737 = vor.u32 %v735, %v736
        %v738 = vsub.s32 4294967266, %v733
        %v739 = vadd.s32 %v738, 127
        %v740 = vshll.u32 %v739, 23
        %v741 = vor.u32 4788187, %v740
        %v742 = vand.u32 2147483647, %v741
        %v744 = vcvt.s32.f32 %v737
        %v745 = vmul.f32 %v744, %v742
        %v746 = vxor.u32 %v745, 2147483648
        %v747 = vsel %vm626, %v746, %v745
        %v748 = vsub.s32 4, %v724
        %v749 = vsel %vm626, %v748, %v724
        %v750 = vsel %vm625, %v449, %v747
        %v751 = vsel %vm625, 0, %v749
        %v752 = vmul.f32 %v750, %v750
        %v753 = vmul.f32 %v752, -0.001358992
        %v754 = vadd.f32 %v753, 0.041655596
        %v755 = vmul.f32 %v752, %v754
        %v756 = vadd.f32 %v755, -0.4999988
        %v757 = vmul.f32 %v752, %v756
        %v758 = vadd.f32 1.0, %v757
        %v759 = vmul.f32 %v750, %v750
        %v760 = vmul.f32 %v759, -0.00019511016
        %v761 = vadd.f32 %v760, 0.008332121
        %v762 = vmul.f32 %v759, %v761
        %v763 = vadd.f32 %v762, -0.16666654
        %v764 = vmul.f32 %v759, %v763
        %v765 = vadd.f32 %v764, 1.0
        %v766 = vmul.f32 %v765, %v750
        %vm767 = vweird.f32 %v449
        %v768 = vadd.s32 %v751, 3
        %v769 = vand.u32 %v768, 3
        %vm770 = vcmp.lt.s32.totalorder %v769, 2
        %vm771 = vcmp.eq.s32.totalorder %v769, 0
        %v772 = vxor.u32 %v766, 2147483648
        %v773 = vsel %vm771, %v758, %v772
        %vm774 = vcmp.eq.s32.totalorder %v769, 2
        %v775 = vxor.u32 %v758, 2147483648
        %v776 = vsel %vm774, %v775, %v766
        %v777 = vsel %vm770, %v773, %v776
        %v778 = vsel %vm767, nan, %v777
        %v779 = vand.u32 2147483647, %v452
        %vm780 = vcmp.le.f32.partialorder %v779, 0.7853982
        %vm781 = vcmp.lt.s32.totalorder %v452, 0
        %v782 = vand.u32 %v452, 2139095040
        %v783 = vshrl.u32 %v782, 23
        %v784 = vsub.s32 %v783, 127
        %v785 = vand.u32 2147483647, %v452
        %v786 = vand.u32 %v785, 8388607
        %v787 = vor.u32 %v786, 8388608
        %v788 = vsub.s32 0, %v787
        %v789 = vadd.s32 %v784, 1
        %vm790 = vcmp.gt.s32.totalorder %v789, 0
        %v791 = vsel %vm790, %v789, 0
        %v792 = vshrl.u32 %v791, 5
        %v793 = vand.u32 %v791, 31
        %v794 = vsub.s32 32, %v793
        %v795 = vshrl.u32 683565275, %v794
        %v796 = vshll.u32 683565275, %v793
        %v797 = vshrl.u32 2475754826, %v794
        %v798 = vor.u32 %v796, %v797
        %v799 = vshll.u32 2475754826, %v793
        %v800 = vshrl.u32 2131351028, %v794
        %v801 = vor.u32 %v799, %v800
        %v802 = vshll.u32 2131351028, %v793
        %v803 = vshrl.u32 2102212464, %v794
        %v804 = vor.u32 %v802, %v803
        %v805 = vshll.u32 2102212464, %v793
        %v806 = vshrl.u32 920167782, %v794
        %v807 = vor.u32 %v805, %v806
        %v808 = vshll.u32 920167782, %v793
        %v809 = vshrl.u32 1326507024, %v794
        %v810 = vor.u32 %v808, %v809
        %vm811 = vcmp.lt.s32.totalorder %v792, 1
        %vm812 = vcmp.lt.s32.totalorder %v792, 2
        %vm813 = vcmp.lt.s32.totalorder %v792, 3
        %vm814 = vcmp.lt.s32.totalorder %v792, 4
        %v815 = vsel %vm811, %v795, %v798
        %v816 = vsel %vm814, %v804, 2102212464
        %v817 = vsel %vm813, %v801, %v816
        %v818 = vsel %vm812, %v815, %v817
        %v819 = vsel %vm811, %v798, %v801
        %v820 = vsel %vm814, %v807, 920167782
        %v821 = vsel %vm813, %v804, %v820
        %v822 = vsel %vm812, %v819, %v821
        %v823 = vsel %vm811, %v801, %v804
        %v824 = vsel %vm814, %v810, 1326507024
        %v825 = vsel %vm813, %v807, %v824
        %v826 = vsel %vm812, %v823, %v825
        %v827 = vshll.u32 %v787, 8
        %v828 = vand.u32 %v827, 65535
        %v829 = vshrl.u32 %v827, 16
        %v830 = vand.u32 %v826, 65535
        %v831 = vshrl.u32 %v826, 16
        %v832 = vmul.u32 %v828, %v830
        %v833 = vmul.u32 %v828, %v831
        %v834 = vmul.u32 %v829, %v830
        %v835 = vmul.u32 %v829, %v831
        %v836 = vshll.u32 %v833, 16
        %v837 = vshrl.u32 %v833, 16
        %v838 = vshll.u32 %v834, 16
        %v839 = vshrl.u32 %v834, 16
        %vm840 = vc.u32 %v832, %v836
        %v841 = vsel %vm840, 1, 0
        %v842 = vadd.s32 %v832, %v836
        %v843 = vadd.s32 %v835, %v841
        %vm844 = vc.u32 %v842, %v838
        %v845 = vsel %vm844, 1, 0
        %v846 = vadd.s32 %v842, %v838
        %v847 = vadd.s32 %v843, %v845
        %v848 = vadd.s32 %v847, %v837
        %v849 = vadd.s32 %v848, %v839
        %v850 = vand.u32 %v827, 65535
        %v851 = vshrl.u32 %v827, 16
        %v852 = vand.u32 %v822, 65535
        %v853 = vshrl.u32 %v822, 16
        %v854 = vmul.u32 %v850, %v852
        %v855 = vmul.u32 %v850, %v853
        %v856 = vmul.u32 %v851, %v852
        %v857 = vmul.u32 %v851, %v853
        %v858 = vshll.u32 %v855, 16
        %v859 = vshrl.u32 %v855, 16
        %v860 = vshll.u32 %v856, 16
        %v861 = vshrl.u32 %v856, 16
        %vm862 = vc.u32 %v854, %v858
        %v863 = vsel %vm862, 1, 0
        %v864 = vadd.s32 %v854, %v858
        %v865 = vadd.s32 %v857, %v863
        %vm866 = vc.u32 %v864, %v860
        %v867 = vsel %vm866, 1, 0
        %v868 = vadd.s32 %v864, %v860
        %v869 = vadd.s32 %v865, %v867
        %v870 = vadd.s32 %v869, %v859
        %v871 = vadd.s32 %v870, %v861
        %v872 = vmul.u32 %v827, %v818
        %v873 = vadd.s32 %v849, %v868
        %vm874 = vc.u32 %v849, %v868
        %v875 = vadd.s32 %v871, 1
        %v876 = vsel %vm874, %v875, %v871
        %v877 = vadd.s32 %v872, %v876
        %v878 = vadd.s32 %v877, 536870912
        %v879 = vshrl.u32 %v878, 30
        %v880 = vshll.u32 %v879, 30
        %v881 = vsub.s32 %v877, %v880
        %vm882 = vcmp.lt.s32.totalorder %v881, 0
        %v883 = vsub.s32 0, %v881
        %v884 = vsel %vm882, %v883, %v881
        %v885 = vclz %v884
        %v886 = vsub.s32 %v885, 2
        %vm887 = vcmp.gt.s32.totalorder 0, %v886
        %v888 = vsel %vm887, 0, %v886
        %v889 = vsub.s32 32, %v888
        %v890 = vshll.u32 %v881, %v888
        %v891 = vshrl.u32 %v873, %v889
        %v892 = vor.u32 %v890, %v891
        %v893 = vsub.s32 4294967266, %v888
        %v894 = vadd.s32 %v893, 127
        %v895 = vshll.u32 %v894, 23
        %v896 = vor.u32 4788187, %v895
        %v897 = vand.u32 2147483647, %v896
        %v899 = vcvt.s32.f32 %v892
        %v900 = vmul.f32 %v899, %v897
        %v901 = vxor.u32 %v900, 2147483648
        %v902 = vsel %vm781, %v901, %v900
        %v903 = vsub.s32 4, %v879
        %v904 = vsel %vm781, %v903, %v879
        %v905 = vsel %vm780, %v452, %v902
        %v906 = vsel %vm780, 0, %v904
        %v907 = vmul.f32 %v905, %v905
        %v908 = vmul.f32 %v907, -0.001358992
        %v909 = vadd.f32 %v908, 0.041655596
        %v910 = vmul.f32 %v907, %v909
        %v911 = vadd.f32 %v910, -0.4999988
        %v912 = vmul.f32 %v907, %v911
        %v913 = vadd.f32 1.0, %v912
        %v914 = vmul.f32 %v905, %v905
        %v915 = vmul.f32 %v914, -0.00019511016
        %v916 = vadd.f32 %v915, 0.008332121
        %v917 = vmul.f32 %v914, %v916
        %v918 = vadd.f32 %v917, -0.16666654
        %v919 = vmul.f32 %v914, %v918
        %v920 = vadd.f32 %v919, 1.0
        %v921 = vmul.f32 %v920, %v905
        %vm922 = vweird.f32 %v452
        %v923 = vadd.s32 %v906, 3
        %v924 = vand.u32 %v923, 3
        %vm925 = vcmp.lt.s32.totalorder %v924, 2
        %vm926 = vcmp.eq.s32.totalorder %v924, 0
        %v927 = vxor.u32 %v921, 2147483648
        %v928 = vsel %vm926, %v913, %v927
        %vm929 = vcmp.eq.s32.totalorder %v924, 2
        %v930 = vxor.u32 %v913, 2147483648
        %v931 = vsel %vm929, %v930, %v921
        %v932 = vsel %vm925, %v928, %v931
        %v933 = vsel %vm922, nan, %v932
        %v934 = vand.u32 2147483647, %v455
        %vm935 = vcmp.le.f32.partialorder %v934, 0.7853982
        %vm936 = vcmp.lt.s32.totalorder %v455, 0
        %v937 = vand.u32 %v455, 2139095040
        %v938 = vshrl.u32 %v937, 23
        %v939 = vsub.s32 %v938, 127
        %v940 = vand.u32 2147483647, %v455
        %v941 = vand.u32 %v940, 8388607
        %v942 = vor.u32 %v941, 8388608
        %v943 = vsub.s32 0, %v942
        %v944 = vadd.s32 %v939, 1
        %vm945 = vcmp.gt.s32.totalorder %v944, 0
        %v946 = vsel %vm945, %v944, 0
        %v947 = vshrl.u32 %v946, 5
        %v948 = vand.u32 %v946, 31
        %v949 = vsub.s32 32, %v948
        %v950 = vshrl.u32 683565275, %v949
        %v951 = vshll.u32 683565275, %v948
        %v952 = vshrl.u32 2475754826, %v949
        %v953 = vor.u32 %v951, %v952
        %v954 = vshll.u32 2475754826, %v948
        %v955 = vshrl.u32 2131351028, %v949
        %v956 = vor.u32 %v954, %v955
        %v957 = vshll.u32 2131351028, %v948
        %v958 = vshrl.u32 2102212464, %v949
        %v959 = vor.u32 %v957, %v958
        %v960 = vshll.u32 2102212464, %v948
        %v961 = vshrl.u32 920167782, %v949
        %v962 = vor.u32 %v960, %v961
        %v963 = vshll.u32 920167782, %v948
        %v964 = vshrl.u32 1326507024, %v949
        %v965 = vor.u32 %v963, %v964
        %vm966 = vcmp.lt.s32.totalorder %v947, 1
        %vm967 = vcmp.lt.s32.totalorder %v947, 2
        %vm968 = vcmp.lt.s32.totalorder %v947, 3
        %vm969 = vcmp.lt.s32.totalorder %v947, 4
        %v970 = vsel %vm966, %v950, %v953
        %v971 = vsel %vm969, %v959, 2102212464
        %v972 = vsel %vm968, %v956, %v971
        %v973 = vsel %vm967, %v970, %v972
        %v974 = vsel %vm966, %v953, %v956
        %v975 = vsel %vm969, %v962, 920167782
        %v976 = vsel %vm968, %v959, %v975
        %v977 = vsel %vm967, %v974, %v976
        %v978 = vsel %vm966, %v956, %v959
        %v979 = vsel %vm969, %v965, 1326507024
        %v980 = vsel %vm968, %v962, %v979
        %v981 = vsel %vm967, %v978, %v980
        %v982 = vshll.u32 %v942, 8
        %v983 = vand.u32 %v982, 65535
        %v984 = vshrl.u32 %v982, 16
        %v985 = vand.u32 %v981, 65535
        %v986 = vshrl.u32 %v981, 16
        %v987 = vmul.u32 %v983, %v985
        %v988 = vmul.u32 %v983, %v986
        %v989 = vmul.u32 %v984, %v985
        %v990 = vmul.u32 %v984, %v986
        %v991 = vshll.u32 %v988, 16
        %v992 = vshrl.u32 %v988, 16
        %v993 = vshll.u32 %v989, 16
        %v994 = vshrl.u32 %v989, 16
        %vm995 = vc.u32 %v987, %v991
        %v996 = vsel %vm995, 1, 0
        %v997 = vadd.s32 %v987, %v991
        %v998 = vadd.s32 %v990, %v996
        %vm999 = vc.u32 %v997, %v993
        %v1000 = vsel %vm999, 1, 0
        %v1001 = vadd.s32 %v997, %v993
        %v1002 = vadd.s32 %v998, %v1000
        %v1003 = vadd.s32 %v1002, %v992
        %v1004 = vadd.s32 %v1003, %v994
        %v1005 = vand.u32 %v982, 65535
        %v1006 = vshrl.u32 %v982, 16
        %v1007 = vand.u32 %v977, 65535
        %v1008 = vshrl.u32 %v977, 16
        %v1009 = vmul.u32 %v1005, %v1007
        %v1010 = vmul.u32 %v1005, %v1008
        %v1011 = vmul.u32 %v1006, %v1007
        %v1012 = vmul.u32 %v1006, %v1008
        %v1013 = vshll.u32 %v1010, 16
        %v1014 = vshrl.u32 %v1010, 16
        %v1015 = vshll.u32 %v1011, 16
        %v1016 = vshrl.u32 %v1011, 16
        %vm1017 = vc.u32 %v1009, %v1013
        %v1018 = vsel %vm1017, 1, 0
        %v1019 = vadd.s32 %v1009, %v1013
        %v1020 = vadd.s32 %v1012, %v1018
        %vm1021 = vc.u32 %v1019, %v1015
        %v1022 = vsel %vm1021, 1, 0
        %v1023 = vadd.s32 %v1019, %v1015
        %v1024 = vadd.s32 %v1020, %v1022
        %v1025 = vadd.s32 %v1024, %v1014
        %v1026 = vadd.s32 %v1025, %v1016
        %v1027 = vmul.u32 %v982, %v973
        %v1028 = vadd.s32 %v1004, %v1023
        %vm1029 = vc.u32 %v1004, %v1023
        %v1030 = vadd.s32 %v1026, 1
        %v1031 = vsel %vm1029, %v1030, %v1026
        %v1032 = vadd.s32 %v1027, %v1031
        %v1033 = vadd.s32 %v1032, 536870912
        %v1034 = vshrl.u32 %v1033, 30
        %v1035 = vshll.u32 %v1034, 30
        %v1036 = vsub.s32 %v1032, %v1035
        %vm1037 = vcmp.lt.s32.totalorder %v1036, 0
        %v1038 = vsub.s32 0, %v1036
        %v1039 = vsel %vm1037, %v1038, %v1036
        %v1040 = vclz %v1039
        %v1041 = vsub.s32 %v1040, 2
        %vm1042 = vcmp.gt.s32.totalorder 0, %v1041
        %v1043 = vsel %vm1042, 0, %v1041
        %v1044 = vsub.s32 32, %v1043
        %v1045 = vshll.u32 %v1036, %v1043
        %v1046 = vshrl.u32 %v1028, %v1044
        %v1047 = vor.u32 %v1045, %v1046
        %v1048 = vsub.s32 4294967266, %v1043
        %v1049 = vadd.s32 %v1048, 127
        %v1050 = vshll.u32 %v1049, 23
        %v1051 = vor.u32 4788187, %v1050
        %v1052 = vand.u32 2147483647, %v1051
        %v1054 = vcvt.s32.f32 %v1047
        %v1055 = vmul.f32 %v1054, %v1052
        %v1056 = vxor.u32 %v1055, 2147483648
        %v1057 = vsel %vm936, %v1056, %v1055
        %v1058 = vsub.s32 4, %v1034
        %v1059 = vsel %vm936, %v1058, %v1034
        %v1060 = vsel %vm935, %v455, %v1057
        %v1061 = vsel %vm935, 0, %v1059
        %v1062 = vmul.f32 %v1060, %v1060
        %v1063 = vmul.f32 %v1062, -0.001358992
        %v1064 = vadd.f32 %v1063, 0.041655596
        %v1065 = vmul.f32 %v1062, %v1064
        %v1066 = vadd.f32 %v1065, -0.4999988
        %v1067 = vmul.f32 %v1062, %v1066
        %v1068 = vadd.f32 1.0, %v1067
        %v1069 = vmul.f32 %v1060, %v1060
        %v1070 = vmul.f32 %v1069, -0.00019511016
        %v1071 = vadd.f32 %v1070, 0.008332121
        %v1072 = vmul.f32 %v1069, %v1071
        %v1073 = vadd.f32 %v1072, -0.16666654
        %v1074 = vmul.f32 %v1069, %v1073
        %v1075 = vadd.f32 %v1074, 1.0
        %v1076 = vmul.f32 %v1075, %v1060
        %vm1077 = vweird.f32 %v455
        %v1078 = vadd.s32 %v1061, 3
        %v1079 = vand.u32 %v1078, 3
        %vm1080 = vcmp.lt.s32.totalorder %v1079, 2
        %vm1081 = vcmp.eq.s32.totalorder %v1079, 0
        %v1082 = vxor.u32 %v1076, 2147483648
        %v1083 = vsel %vm1081, %v1068, %v1082
        %vm1084 = vcmp.eq.s32.totalorder %v1079, 2
        %v1085 = vxor.u32 %v1068, 2147483648
        %v1086 = vsel %vm1084, %v1085, %v1076
        %v1087 = vsel %vm1080, %v1083, %v1086
        %v1088 = vsel %vm1077, nan, %v1087
        %v1089 = vand.u32 2147483647, %v458
        %vm1090 = vcmp.le.f32.partialorder %v1089, 0.7853982
        %vm1091 = vcmp.lt.s32.totalorder %v458, 0
        %v1092 = vand.u32 %v458, 2139095040
        %v1093 = vshrl.u32 %v1092, 23
        %v1094 = vsub.s32 %v1093, 127
        %v1095 = vand.u32 2147483647, %v458
        %v1096 = vand.u32 %v1095, 8388607
        %v1097 = vor.u32 %v1096, 8388608
        %v1098 = vsub.s32 0, %v1097
        %v1099 = vadd.s32 %v1094, 1
        %vm1100 = vcmp.gt.s32.totalorder %v1099, 0
        %v1101 = vsel %vm1100, %v1099, 0
        %v1102 = vshrl.u32 %v1101, 5
        %v1103 = vand.u32 %v1101, 31
        %v1104 = vsub.s32 32, %v1103
        %v1105 = vshrl.u32 683565275, %v1104
        %v1106 = vshll.u32 683565275, %v1103
        %v1107 = vshrl.u32 2475754826, %v1104
        %v1108 = vor.u32 %v1106, %v1107
        %v1109 = vshll.u32 2475754826, %v1103
        %v1110 = vshrl.u32 2131351028, %v1104
        %v1111 = vor.u32 %v1109, %v1110
        %v1112 = vshll.u32 2131351028, %v1103
        %v1113 = vshrl.u32 2102212464, %v1104
        %v1114 = vor.u32 %v1112, %v1113
        %v1115 = vshll.u32 2102212464, %v1103
        %v1116 = vshrl.u32 920167782, %v1104
        %v1117 = vor.u32 %v1115, %v1116
        %v1118 = vshll.u32 920167782, %v1103
        %v1119 = vshrl.u32 1326507024, %v1104
        %v1120 = vor.u32 %v1118, %v1119
        %vm1121 = vcmp.lt.s32.totalorder %v1102, 1
        %vm1122 = vcmp.lt.s32.totalorder %v1102, 2
        %vm1123 = vcmp.lt.s32.totalorder %v1102, 3
        %vm1124 = vcmp.lt.s32.totalorder %v1102, 4
        %v1125 = vsel %vm1121, %v1105, %v1108
        %v1126 = vsel %vm1124, %v1114, 2102212464
        %v1127 = vsel %vm1123, %v1111, %v1126
        %v1128 = vsel %vm1122, %v1125, %v1127
        %v1129 = vsel %vm1121, %v1108, %v1111
        %v1130 = vsel %vm1124, %v1117, 920167782
        %v1131 = vsel %vm1123, %v1114, %v1130
        %v1132 = vsel %vm1122, %v1129, %v1131
        %v1133 = vsel %vm1121, %v1111, %v1114
        %v1134 = vsel %vm1124, %v1120, 1326507024
        %v1135 = vsel %vm1123, %v1117, %v1134
        %v1136 = vsel %vm1122, %v1133, %v1135
        %v1137 = vshll.u32 %v1097, 8
        %v1138 = vand.u32 %v1137, 65535
        %v1139 = vshrl.u32 %v1137, 16
        %v1140 = vand.u32 %v1136, 65535
        %v1141 = vshrl.u32 %v1136, 16
        %v1142 = vmul.u32 %v1138, %v1140
        %v1143 = vmul.u32 %v1138, %v1141
        %v1144 = vmul.u32 %v1139, %v1140
        %v1145 = vmul.u32 %v1139, %v1141
        %v1146 = vshll.u32 %v1143, 16
        %v1147 = vshrl.u32 %v1143, 16
        %v1148 = vshll.u32 %v1144, 16
        %v1149 = vshrl.u32 %v1144, 16
        %vm1150 = vc.u32 %v1142, %v1146
        %v1151 = vsel %vm1150, 1, 0
        %v1152 = vadd.s32 %v1142, %v1146
        %v1153 = vadd.s32 %v1145, %v1151
        %vm1154 = vc.u32 %v1152, %v1148
        %v1155 = vsel %vm1154, 1, 0
        %v1156 = vadd.s32 %v1152, %v1148
        %v1157 = vadd.s32 %v1153, %v1155
        %v1158 = vadd.s32 %v1157, %v1147
        %v1159 = vadd.s32 %v1158, %v1149
        %v1160 = vand.u32 %v1137, 65535
        %v1161 = vshrl.u32 %v1137, 16
        %v1162 = vand.u32 %v1132, 65535
        %v1163 = vshrl.u32 %v1132, 16
        %v1164 = vmul.u32 %v1160, %v1162
        %v1165 = vmul.u32 %v1160, %v1163
        %v1166 = vmul.u32 %v1161, %v1162
        %v1167 = vmul.u32 %v1161, %v1163
        %v1168 = vshll.u32 %v1165, 16
        %v1169 = vshrl.u32 %v1165, 16
        %v1170 = vshll.u32 %v1166, 16
        %v1171 = vshrl.u32 %v1166, 16
        %vm1172 = vc.u32 %v1164, %v1168
        %v1173 = vsel %vm1172, 1, 0
        %v1174 = vadd.s32 %v1164, %v1168
        %v1175 = vadd.s32 %v1167, %v1173
        %vm1176 = vc.u32 %v1174, %v1170
        %v1177 = vsel %vm1176, 1, 0
        %v1178 = vadd.s32 %v1174, %v1170
        %v1179 = vadd.s32 %v1175, %v1177
        %v1180 = vadd.s32 %v1179, %v1169
        %v1181 = vadd.s32 %v1180, %v1171
        %v1182 = vmul.u32 %v1137, %v1128
        %v1183 = vadd.s32 %v1159, %v1178
        %vm1184 = vc.u32 %v1159, %v1178
        %v1185 = vadd.s32 %v1181, 1
        %v1186 = vsel %vm1184, %v1185, %v1181
        %v1187 = vadd.s32 %v1182, %v1186
        %v1188 = vadd.s32 %v1187, 536870912
        %v1189 = vshrl.u32 %v1188, 30
        %v1190 = vshll.u32 %v1189, 30
        %v1191 = vsub.s32 %v1187, %v1190
        %vm1192 = vcmp.lt.s32.totalorder %v1191, 0
        %v1193 = vsub.s32 0, %v1191
        %v1194 = vsel %vm1192, %v1193, %v1191
        %v1195 = vclz %v1194
        %v1196 = vsub.s32 %v1195, 2
        %vm1197 = vcmp.gt.s32.totalorder 0, %v1196
        %v1198 = vsel %vm1197, 0, %v1196
        %v1199 = vsub.s32 32, %v1198
        %v1200 = vshll.u32 %v1191, %v1198
        %v1201 = vshrl.u32 %v1183, %v1199
        %v1202 = vor.u32 %v1200, %v1201
        %v1203 = vsub.s32 4294967266, %v1198
        %v1204 = vadd.s32 %v1203, 127
        %v1205 = vshll.u32 %v1204, 23
        %v1206 = vor.u32 4788187, %v1205
        %v1207 = vand.u32 2147483647, %v1206
        %v1209 = vcvt.s32.f32 %v1202
        %v1210 = vmul.f32 %v1209, %v1207
        %v1211 = vxor.u32 %v1210, 2147483648
        %v1212 = vsel %vm1091, %v1211, %v1210
        %v1213 = vsub.s32 4, %v1189
        %v1214 = vsel %vm1091, %v1213, %v1189
        %v1215 = vsel %vm1090, %v458, %v1212
        %v1216 = vsel %vm1090, 0, %v1214
        %v1217 = vmul.f32 %v1215, %v1215
        %v1218 = vmul.f32 %v1217, -0.001358992
        %v1219 = vadd.f32 %v1218, 0.041655596
        %v1220 = vmul.f32 %v1217, %v1219
        %v1221 = vadd.f32 %v1220, -0.4999988
        %v1222 = vmul.f32 %v1217, %v1221
        %v1223 = vadd.f32 1.0, %v1222
        %v1224 = vmul.f32 %v1215, %v1215
        %v1225 = vmul.f32 %v1224, -0.00019511016
        %v1226 = vadd.f32 %v1225, 0.008332121
        %v1227 = vmul.f32 %v1224, %v1226
        %v1228 = vadd.f32 %v1227, -0.16666654
        %v1229 = vmul.f32 %v1224, %v1228
        %v1230 = vadd.f32 %v1229, 1.0
        %v1231 = vmul.f32 %v1230, %v1215
        %vm1232 = vweird.f32 %v458
        %v1233 = vadd.s32 %v1216, 3
        %v1234 = vand.u32 %v1233, 3
        %vm1235 = vcmp.lt.s32.totalorder %v1234, 2
        %vm1236 = vcmp.eq.s32.totalorder %v1234, 0
        %v1237 = vxor.u32 %v1231, 2147483648
        %v1238 = vsel %vm1236, %v1223, %v1237
        %vm1239 = vcmp.eq.s32.totalorder %v1234, 2
        %v1240 = vxor.u32 %v1223, 2147483648
        %v1241 = vsel %vm1239, %v1240, %v1231
        %v1242 = vsel %vm1235, %v1238, %v1241
        %v1243 = vsel %vm1232, nan, %v1242
        %v1244 = vand.u32 2147483647, %v461
        %vm1245 = vcmp.le.f32.partialorder %v1244, 0.7853982
        %vm1246 = vcmp.lt.s32.totalorder %v461, 0
        %v1247 = vand.u32 %v461, 2139095040
        %v1248 = vshrl.u32 %v1247, 23
        %v1249 = vsub.s32 %v1248, 127
        %v1250 = vand.u32 2147483647, %v461
        %v1251 = vand.u32 %v1250, 8388607
        %v1252 = vor.u32 %v1251, 8388608
        %v1253 = vsub.s32 0, %v1252
        %v1254 = vadd.s32 %v1249, 1
        %vm1255 = vcmp.gt.s32.totalorder %v1254, 0
        %v1256 = vsel %vm1255, %v1254, 0
        %v1257 = vshrl.u32 %v1256, 5
        %v1258 = vand.u32 %v1256, 31
        %v1259 = vsub.s32 32, %v1258
        %v1260 = vshrl.u32 683565275, %v1259
        %v1261 = vshll.u32 683565275, %v1258
        %v1262 = vshrl.u32 2475754826, %v1259
        %v1263 = vor.u32 %v1261, %v1262
        %v1264 = vshll.u32 2475754826, %v1258
        %v1265 = vshrl.u32 2131351028, %v1259
        %v1266 = vor.u32 %v1264, %v1265
        %v1267 = vshll.u32 2131351028, %v1258
        %v1268 = vshrl.u32 2102212464, %v1259
        %v1269 = vor.u32 %v1267, %v1268
        %v1270 = vshll.u32 2102212464, %v1258
        %v1271 = vshrl.u32 920167782, %v1259
        %v1272 = vor.u32 %v1270, %v1271
        %v1273 = vshll.u32 920167782, %v1258
        %v1274 = vshrl.u32 1326507024, %v1259
        %v1275 = vor.u32 %v1273, %v1274
        %vm1276 = vcmp.lt.s32.totalorder %v1257, 1
        %vm1277 = vcmp.lt.s32.totalorder %v1257, 2
        %vm1278 = vcmp.lt.s32.totalorder %v1257, 3
        %vm1279 = vcmp.lt.s32.totalorder %v1257, 4
        %v1280 = vsel %vm1276, %v1260, %v1263
        %v1281 = vsel %vm1279, %v1269, 2102212464
        %v1282 = vsel %vm1278, %v1266, %v1281
        %v1283 = vsel %vm1277, %v1280, %v1282
        %v1284 = vsel %vm1276, %v1263, %v1266
        %v1285 = vsel %vm1279, %v1272, 920167782
        %v1286 = vsel %vm1278, %v1269, %v1285
        %v1287 = vsel %vm1277, %v1284, %v1286
        %v1288 = vsel %vm1276, %v1266, %v1269
        %v1289 = vsel %vm1279, %v1275, 1326507024
        %v1290 = vsel %vm1278, %v1272, %v1289
        %v1291 = vsel %vm1277, %v1288, %v1290
        %v1292 = vshll.u32 %v1252, 8
        %v1293 = vand.u32 %v1292, 65535
        %v1294 = vshrl.u32 %v1292, 16
        %v1295 = vand.u32 %v1291, 65535
        %v1296 = vshrl.u32 %v1291, 16
        %v1297 = vmul.u32 %v1293, %v1295
        %v1298 = vmul.u32 %v1293, %v1296
        %v1299 = vmul.u32 %v1294, %v1295
        %v1300 = vmul.u32 %v1294, %v1296
        %v1301 = vshll.u32 %v1298, 16
        %v1302 = vshrl.u32 %v1298, 16
        %v1303 = vshll.u32 %v1299, 16
        %v1304 = vshrl.u32 %v1299, 16
        %vm1305 = vc.u32 %v1297, %v1301
        %v1306 = vsel %vm1305, 1, 0
        %v1307 = vadd.s32 %v1297, %v1301
        %v1308 = vadd.s32 %v1300, %v1306
        %vm1309 = vc.u32 %v1307, %v1303
        %v1310 = vsel %vm1309, 1, 0
        %v1311 = vadd.s32 %v1307, %v1303
        %v1312 = vadd.s32 %v1308, %v1310
        %v1313 = vadd.s32 %v1312, %v1302
        %v1314 = vadd.s32 %v1313, %v1304
        %v1315 = vand.u32 %v1292, 65535
        %v1316 = vshrl.u32 %v1292, 16
        %v1317 = vand.u32 %v1287, 65535
        %v1318 = vshrl.u32 %v1287, 16
        %v1319 = vmul.u32 %v1315, %v1317
        %v1320 = vmul.u32 %v1315, %v1318
        %v1321 = vmul.u32 %v1316, %v1317
        %v1322 = vmul.u32 %v1316, %v1318
        %v1323 = vshll.u32 %v1320, 16
        %v1324 = vshrl.u32 %v1320, 16
        %v1325 = vshll.u32 %v1321, 16
        %v1326 = vshrl.u32 %v1321, 16
        %vm1327 = vc.u32 %v1319, %v1323
        %v1328 = vsel %vm1327, 1, 0
        %v1329 = vadd.s32 %v1319, %v1323
        %v1330 = vadd.s32 %v1322, %v1328
        %vm1331 = vc.u32 %v1329, %v1325
        %v1332 = vsel %vm1331, 1, 0
        %v1333 = vadd.s32 %v1329, %v1325
        %v1334 = vadd.s32 %v1330, %v1332
        %v1335 = vadd.s32 %v1334, %v1324
        %v1336 = vadd.s32 %v1335, %v1326
        %v1337 = vmul.u32 %v1292, %v1283
        %v1338 = vadd.s32 %v1314, %v1333
        %vm1339 = vc.u32 %v1314, %v1333
        %v1340 = vadd.s32 %v1336, 1
        %v1341 = vsel %vm1339, %v1340, %v1336
        %v1342 = vadd.s32 %v1337, %v1341
        %v1343 = vadd.s32 %v1342, 536870912
        %v1344 = vshrl.u32 %v1343, 30
        %v1345 = vshll.u32 %v1344, 30
        %v1346 = vsub.s32 %v1342, %v1345
        %vm1347 = vcmp.lt.s32.totalorder %v1346, 0
        %v1348 = vsub.s32 0, %v1346
        %v1349 = vsel %vm1347, %v1348, %v1346
        %v1350 = vclz %v1349
        %v1351 = vsub.s32 %v1350, 2
        %vm1352 = vcmp.gt.s32.totalorder 0, %v1351
        %v1353 = vsel %vm1352, 0, %v1351
        %v1354 = vsub.s32 32, %v1353
        %v1355 = vshll.u32 %v1346, %v1353
        %v1356 = vshrl.u32 %v1338, %v1354
        %v1357 = vor.u32 %v1355, %v1356
        %v1358 = vsub.s32 4294967266, %v1353
        %v1359 = vadd.s32 %v1358, 127
        %v1360 = vshll.u32 %v1359, 23
        %v1361 = vor.u32 4788187, %v1360
        %v1362 = vand.u32 2147483647, %v1361
        %v1364 = vcvt.s32.f32 %v1357
        %v1365 = vmul.f32 %v1364, %v1362
        %v1366 = vxor.u32 %v1365, 2147483648
        %v1367 = vsel %vm1246, %v1366, %v1365
        %v1368 = vsub.s32 4, %v1344
        %v1369 = vsel %vm1246, %v1368, %v1344
        %v1370 = vsel %vm1245, %v461, %v1367
        %v1371 = vsel %vm1245, 0, %v1369
        %v1372 = vmul.f32 %v1370, %v1370
        %v1373 = vmul.f32 %v1372, -0.001358992
        %v1374 = vadd.f32 %v1373, 0.041655596
        %v1375 = vmul.f32 %v1372, %v1374
        %v1376 = vadd.f32 %v1375, -0.4999988
        %v1377 = vmul.f32 %v1372, %v1376
        %v1378 = vadd.f32 1.0, %v1377
        %v1379 = vmul.f32 %v1370, %v1370
        %v1380 = vmul.f32 %v1379, -0.00019511016
        %v1381 = vadd.f32 %v1380, 0.008332121
        %v1382 = vmul.f32 %v1379, %v1381
        %v1383 = vadd.f32 %v1382, -0.16666654
        %v1384 = vmul.f32 %v1379, %v1383
        %v1385 = vadd.f32 %v1384, 1.0
        %v1386 = vmul.f32 %v1385, %v1370
        %vm1387 = vweird.f32 %v461
        %v1388 = vadd.s32 %v1371, 3
        %v1389 = vand.u32 %v1388, 3
        %vm1390 = vcmp.lt.s32.totalorder %v1389, 2
        %vm1391 = vcmp.eq.s32.totalorder %v1389, 0
        %v1392 = vxor.u32 %v1386, 2147483648
        %v1393 = vsel %vm1391, %v1378, %v1392
        %vm1394 = vcmp.eq.s32.totalorder %v1389, 2
        %v1395 = vxor.u32 %v1378, 2147483648
        %v1396 = vsel %vm1394, %v1395, %v1386
        %v1397 = vsel %vm1390, %v1393, %v1396
        %v1398 = vsel %vm1387, nan, %v1397
        %v1399 = vand.u32 2147483647, %v464
        %vm1400 = vcmp.le.f32.partialorder %v1399, 0.7853982
        %vm1401 = vcmp.lt.s32.totalorder %v464, 0
        %v1402 = vand.u32 %v464, 2139095040
        %v1403 = vshrl.u32 %v1402, 23
        %v1404 = vsub.s32 %v1403, 127
        %v1405 = vand.u32 2147483647, %v464
        %v1406 = vand.u32 %v1405, 8388607
        %v1407 = vor.u32 %v1406, 8388608
        %v1408 = vsub.s32 0, %v1407
        %v1409 = vadd.s32 %v1404, 1
        %vm1410 = vcmp.gt.s32.totalorder %v1409, 0
        %v1411 = vsel %vm1410, %v1409, 0
        %v1412 = vshrl.u32 %v1411, 5
        %v1413 = vand.u32 %v1411, 31
        %v1414 = vsub.s32 32, %v1413
        %v1415 = vshrl.u32 683565275, %v1414
        %v1416 = vshll.u32 683565275, %v1413
        %v1417 = vshrl.u32 2475754826, %v1414
        %v1418 = vor.u32 %v1416, %v1417
        %v1419 = vshll.u32 2475754826, %v1413
        %v1420 = vshrl.u32 2131351028, %v1414
        %v1421 = vor.u32 %v1419, %v1420
        %v1422 = vshll.u32 2131351028, %v1413
        %v1423 = vshrl.u32 2102212464, %v1414
        %v1424 = vor.u32 %v1422, %v1423
        %v1425 = vshll.u32 2102212464, %v1413
        %v1426 = vshrl.u32 920167782, %v1414
        %v1427 = vor.u32 %v1425, %v1426
        %v1428 = vshll.u32 920167782, %v1413
        %v1429 = vshrl.u32 1326507024, %v1414
        %v1430 = vor.u32 %v1428, %v1429
        %vm1431 = vcmp.lt.s32.totalorder %v1412, 1
        %vm1432 = vcmp.lt.s32.totalorder %v1412, 2
        %vm1433 = vcmp.lt.s32.totalorder %v1412, 3
        %vm1434 = vcmp.lt.s32.totalorder %v1412, 4
        %v1435 = vsel %vm1431, %v1415, %v1418
        %v1436 = vsel %vm1434, %v1424, 2102212464
        %v1437 = vsel %vm1433, %v1421, %v1436
        %v1438 = vsel %vm1432, %v1435, %v1437
        %v1439 = vsel %vm1431, %v1418, %v1421
        %v1440 = vsel %vm1434, %v1427, 920167782
        %v1441 = vsel %vm1433, %v1424, %v1440
        %v1442 = vsel %vm1432, %v1439, %v1441
        %v1443 = vsel %vm1431, %v1421, %v1424
        %v1444 = vsel %vm1434, %v1430, 1326507024
        %v1445 = vsel %vm1433, %v1427, %v1444
        %v1446 = vsel %vm1432, %v1443, %v1445
        %v1447 = vshll.u32 %v1407, 8
        %v1448 = vand.u32 %v1447, 65535
        %v1449 = vshrl.u32 %v1447, 16
        %v1450 = vand.u32 %v1446, 65535
        %v1451 = vshrl.u32 %v1446, 16
        %v1452 = vmul.u32 %v1448, %v1450
        %v1453 = vmul.u32 %v1448, %v1451
        %v1454 = vmul.u32 %v1449, %v1450
        %v1455 = vmul.u32 %v1449, %v1451
        %v1456 = vshll.u32 %v1453, 16
        %v1457 = vshrl.u32 %v1453, 16
        %v1458 = vshll.u32 %v1454, 16
        %v1459 = vshrl.u32 %v1454, 16
        %vm1460 = vc.u32 %v1452, %v1456
        %v1461 = vsel %vm1460, 1, 0
        %v1462 = vadd.s32 %v1452, %v1456
        %v1463 = vadd.s32 %v1455, %v1461
        %vm1464 = vc.u32 %v1462, %v1458
        %v1465 = vsel %vm1464, 1, 0
        %v1466 = vadd.s32 %v1462, %v1458
        %v1467 = vadd.s32 %v1463, %v1465
        %v1468 = vadd.s32 %v1467, %v1457
        %v1469 = vadd.s32 %v1468, %v1459
        %v1470 = vand.u32 %v1447, 65535
        %v1471 = vshrl.u32 %v1447, 16
        %v1472 = vand.u32 %v1442, 65535
        %v1473 = vshrl.u32 %v1442, 16
        %v1474 = vmul.u32 %v1470, %v1472
        %v1475 = vmul.u32 %v1470, %v1473
        %v1476 = vmul.u32 %v1471, %v1472
        %v1477 = vmul.u32 %v1471, %v1473
        %v1478 = vshll.u32 %v1475, 16
        %v1479 = vshrl.u32 %v1475, 16
        %v1480 = vshll.u32 %v1476, 16
        %v1481 = vshrl.u32 %v1476, 16
        %vm1482 = vc.u32 %v1474, %v1478
        %v1483 = vsel %vm1482, 1, 0
        %v1484 = vadd.s32 %v1474, %v1478
        %v1485 = vadd.s32 %v1477, %v1483
        %vm1486 = vc.u32 %v1484, %v1480
        %v1487 = vsel %vm1486, 1, 0
        %v1488 = vadd.s32 %v1484, %v1480
        %v1489 = vadd.s32 %v1485, %v1487
        %v1490 = vadd.s32 %v1489, %v1479
        %v1491 = vadd.s32 %v1490, %v1481
        %v1492 = vmul.u32 %v1447, %v1438
        %v1493 = vadd.s32 %v1469, %v1488
        %vm1494 = vc.u32 %v1469, %v1488
        %v1495 = vadd.s32 %v1491, 1
        %v1496 = vsel %vm1494, %v1495, %v1491
        %v1497 = vadd.s32 %v1492, %v1496
        %v1498 = vadd.s32 %v1497, 536870912
        %v1499 = vshrl.u32 %v1498, 30
        %v1500 = vshll.u32 %v1499, 30
        %v1501 = vsub.s32 %v1497, %v1500
        %vm1502 = vcmp.lt.s32.totalorder %v1501, 0
        %v1503 = vsub.s32 0, %v1501
        %v1504 = vsel %vm1502, %v1503, %v1501
        %v1505 = vclz %v1504
        %v1506 = vsub.s32 %v1505, 2
        %vm1507 = vcmp.gt.s32.totalorder 0, %v1506
        %v1508 = vsel %vm1507, 0, %v1506
        %v1509 = vsub.s32 32, %v1508
        %v1510 = vshll.u32 %v1501, %v1508
        %v1511 = vshrl.u32 %v1493, %v1509
        %v1512 = vor.u32 %v1510, %v1511
        %v1513 = vsub.s32 4294967266, %v1508
        %v1514 = vadd.s32 %v1513, 127
        %v1515 = vshll.u32 %v1514, 23
        %v1516 = vor.u32 4788187, %v1515
        %v1517 = vand.u32 2147483647, %v1516
        %v1519 = vcvt.s32.f32 %v1512
        %v1520 = vmul.f32 %v1519, %v1517
        %v1521 = vxor.u32 %v1520, 2147483648
        %v1522 = vsel %vm1401, %v1521, %v1520
        %v1523 = vsub.s32 4, %v1499
        %v1524 = vsel %vm1401, %v1523, %v1499
        %v1525 = vsel %vm1400, %v464, %v1522
        %v1526 = vsel %vm1400, 0, %v1524
        %v1527 = vmul.f32 %v1525, %v1525
        %v1528 = vmul.f32 %v1527, -0.001358992
        %v1529 = vadd.f32 %v1528, 0.041655596
        %v1530 = vmul.f32 %v1527, %v1529
        %v1531 = vadd.f32 %v1530, -0.4999988
        %v1532 = vmul.f32 %v1527, %v1531
        %v1533 = vadd.f32 1.0, %v1532
        %v1534 = vmul.f32 %v1525, %v1525
        %v1535 = vmul.f32 %v1534, -0.00019511016
        %v1536 = vadd.f32 %v1535, 0.008332121
        %v1537 = vmul.f32 %v1534, %v1536
        %v1538 = vadd.f32 %v1537, -0.16666654
        %v1539 = vmul.f32 %v1534, %v1538
        %v1540 = vadd.f32 %v1539, 1.0
        %v1541 = vmul.f32 %v1540, %v1525
        %vm1542 = vweird.f32 %v464
        %v1543 = vadd.s32 %v1526, 3
        %v1544 = vand.u32 %v1543, 3
        %vm1545 = vcmp.lt.s32.totalorder %v1544, 2
        %vm1546 = vcmp.eq.s32.totalorder %v1544, 0
        %v1547 = vxor.u32 %v1541, 2147483648
        %v1548 = vsel %vm1546, %v1533, %v1547
        %vm1549 = vcmp.eq.s32.totalorder %v1544, 2
        %v1550 = vxor.u32 %v1533, 2147483648
        %v1551 = vsel %vm1549, %v1550, %v1541
        %v1552 = vsel %vm1545, %v1548, %v1551
        %v1553 = vsel %vm1542, nan, %v1552
        %v1554 = vand.u32 2147483647, %v467
        %vm1555 = vcmp.le.f32.partialorder %v1554, 0.7853982
        %vm1556 = vcmp.lt.s32.totalorder %v467, 0
        %v1557 = vand.u32 %v467, 2139095040
        %v1558 = vshrl.u32 %v1557, 23
        %v1559 = vsub.s32 %v1558, 127
        %v1560 = vand.u32 2147483647, %v467
        %v1561 = vand.u32 %v1560, 8388607
        %v1562 = vor.u32 %v1561, 8388608
        %v1563 = vsub.s32 0, %v1562
        %v1564 = vadd.s32 %v1559, 1
        %vm1565 = vcmp.gt.s32.totalorder %v1564, 0
        %v1566 = vsel %vm1565, %v1564, 0
        %v1567 = vshrl.u32 %v1566, 5
        %v1568 = vand.u32 %v1566, 31
        %v1569 = vsub.s32 32, %v1568
        %v1570 = vshrl.u32 683565275, %v1569
        %v1571 = vshll.u32 683565275, %v1568
        %v1572 = vshrl.u32 2475754826, %v1569
        %v1573 = vor.u32 %v1571, %v1572
        %v1574 = vshll.u32 2475754826, %v1568
        %v1575 = vshrl.u32 2131351028, %v1569
        %v1576 = vor.u32 %v1574, %v1575
        %v1577 = vshll.u32 2131351028, %v1568
        %v1578 = vshrl.u32 2102212464, %v1569
        %v1579 = vor.u32 %v1577, %v1578
        %v1580 = vshll.u32 2102212464, %v1568
        %v1581 = vshrl.u32 920167782, %v1569
        %v1582 = vor.u32 %v1580, %v1581
        %v1583 = vshll.u32 920167782, %v1568
        %v1584 = vshrl.u32 1326507024, %v1569
        %v1585 = vor.u32 %v1583, %v1584
        %vm1586 = vcmp.lt.s32.totalorder %v1567, 1
        %vm1587 = vcmp.lt.s32.totalorder %v1567, 2
        %vm1588 = vcmp.lt.s32.totalorder %v1567, 3
        %vm1589 = vcmp.lt.s32.totalorder %v1567, 4
        %v1590 = vsel %vm1586, %v1570, %v1573
        %v1591 = vsel %vm1589, %v1579, 2102212464
        %v1592 = vsel %vm1588, %v1576, %v1591
        %v1593 = vsel %vm1587, %v1590, %v1592
        %v1594 = vsel %vm1586, %v1573, %v1576
        %v1595 = vsel %vm1589, %v1582, 920167782
        %v1596 = vsel %vm1588, %v1579, %v1595
        %v1597 = vsel %vm1587, %v1594, %v1596
        %v1598 = vsel %vm1586, %v1576, %v1579
        %v1599 = vsel %vm1589, %v1585, 1326507024
        %v1600 = vsel %vm1588, %v1582, %v1599
        %v1601 = vsel %vm1587, %v1598, %v1600
        %v1602 = vshll.u32 %v1562, 8
        %v1603 = vand.u32 %v1602, 65535
        %v1604 = vshrl.u32 %v1602, 16
        %v1605 = vand.u32 %v1601, 65535
        %v1606 = vshrl.u32 %v1601, 16
        %v1607 = vmul.u32 %v1603, %v1605
        %v1608 = vmul.u32 %v1603, %v1606
        %v1609 = vmul.u32 %v1604, %v1605
        %v1610 = vmul.u32 %v1604, %v1606
        %v1611 = vshll.u32 %v1608, 16
        %v1612 = vshrl.u32 %v1608, 16
        %v1613 = vshll.u32 %v1609, 16
        %v1614 = vshrl.u32 %v1609, 16
        %vm1615 = vc.u32 %v1607, %v1611
        %v1616 = vsel %vm1615, 1, 0
        %v1617 = vadd.s32 %v1607, %v1611
        %v1618 = vadd.s32 %v1610, %v1616
        %vm1619 = vc.u32 %v1617, %v1613
        %v1620 = vsel %vm1619, 1, 0
        %v1621 = vadd.s32 %v1617, %v1613
        %v1622 = vadd.s32 %v1618, %v1620
        %v1623 = vadd.s32 %v1622, %v1612
        %v1624 = vadd.s32 %v1623, %v1614
        %v1625 = vand.u32 %v1602, 65535
        %v1626 = vshrl.u32 %v1602, 16
        %v1627 = vand.u32 %v1597, 65535
        %v1628 = vshrl.u32 %v1597, 16
        %v1629 = vmul.u32 %v1625, %v1627
        %v1630 = vmul.u32 %v1625, %v1628
        %v1631 = vmul.u32 %v1626, %v1627
        %v1632 = vmul.u32 %v1626, %v1628
        %v1633 = vshll.u32 %v1630, 16
        %v1634 = vshrl.u32 %v1630, 16
        %v1635 = vshll.u32 %v1631, 16
        %v1636 = vshrl.u32 %v1631, 16
        %vm1637 = vc.u32 %v1629, %v1633
        %v1638 = vsel %vm1637, 1, 0
        %v1639 = vadd.s32 %v1629, %v1633
        %v1640 = vadd.s32 %v1632, %v1638
        %vm1641 = vc.u32 %v1639, %v1635
        %v1642 = vsel %vm1641, 1, 0
        %v1643 = vadd.s32 %v1639, %v1635
        %v1644 = vadd.s32 %v1640, %v1642
        %v1645 = vadd.s32 %v1644, %v1634
        %v1646 = vadd.s32 %v1645, %v1636
        %v1647 = vmul.u32 %v1602, %v1593
        %v1648 = vadd.s32 %v1624, %v1643
        %vm1649 = vc.u32 %v1624, %v1643
        %v1650 = vadd.s32 %v1646, 1
        %v1651 = vsel %vm1649, %v1650, %v1646
        %v1652 = vadd.s32 %v1647, %v1651
        %v1653 = vadd.s32 %v1652, 536870912
        %v1654 = vshrl.u32 %v1653, 30
        %v1655 = vshll.u32 %v1654, 30
        %v1656 = vsub.s32 %v1652, %v1655
        %vm1657 = vcmp.lt.s32.totalorder %v1656, 0
        %v1658 = vsub.s32 0, %v1656
        %v1659 = vsel %vm1657, %v1658, %v1656
        %v1660 = vclz %v1659
        %v1661 = vsub.s32 %v1660, 2
        %vm1662 = vcmp.gt.s32.totalorder 0, %v1661
        %v1663 = vsel %vm1662, 0, %v1661
        %v1664 = vsub.s32 32, %v1663
        %v1665 = vshll.u32 %v1656, %v1663
        %v1666 = vshrl.u32 %v1648, %v1664
        %v1667 = vor.u32 %v1665, %v1666
        %v1668 = vsub.s32 4294967266, %v1663
        %v1669 = vadd.s32 %v1668, 127
        %v1670 = vshll.u32 %v1669, 23
        %v1671 = vor.u32 4788187, %v1670
        %v1672 = vand.u32 2147483647, %v1671
        %v1674 = vcvt.s32.f32 %v1667
        %v1675 = vmul.f32 %v1674, %v1672
        %v1676 = vxor.u32 %v1675, 2147483648
        %v1677 = vsel %vm1556, %v1676, %v1675
        %v1678 = vsub.s32 4, %v1654
        %v1679 = vsel %vm1556, %v1678, %v1654
        %v1680 = vsel %vm1555, %v467, %v1677
        %v1681 = vsel %vm1555, 0, %v1679
        %v1682 = vmul.f32 %v1680, %v1680
        %v1683 = vmul.f32 %v1682, -0.001358992
        %v1684 = vadd.f32 %v1683, 0.041655596
        %v1685 = vmul.f32 %v1682, %v1684
        %v1686 = vadd.f32 %v1685, -0.4999988
        %v1687 = vmul.f32 %v1682, %v1686
        %v1688 = vadd.f32 1.0, %v1687
        %v1689 = vmul.f32 %v1680, %v1680
        %v1690 = vmul.f32 %v1689, -0.00019511016
        %v1691 = vadd.f32 %v1690, 0.008332121
        %v1692 = vmul.f32 %v1689, %v1691
        %v1693 = vadd.f32 %v1692, -0.16666654
        %v1694 = vmul.f32 %v1689, %v1693
        %v1695 = vadd.f32 %v1694, 1.0
        %v1696 = vmul.f32 %v1695, %v1680
        %vm1697 = vweird.f32 %v467
        %v1698 = vadd.s32 %v1681, 3
        %v1699 = vand.u32 %v1698, 3
        %vm1700 = vcmp.lt.s32.totalorder %v1699, 2
        %vm1701 = vcmp.eq.s32.totalorder %v1699, 0
        %v1702 = vxor.u32 %v1696, 2147483648
        %v1703 = vsel %vm1701, %v1688, %v1702
        %vm1704 = vcmp.eq.s32.totalorder %v1699, 2
        %v1705 = vxor.u32 %v1688, 2147483648
        %v1706 = vsel %vm1704, %v1705, %v1696
        %v1707 = vsel %vm1700, %v1703, %v1706
        %v1708 = vsel %vm1697, nan, %v1707
        %v1709 = vld [vmem:[%s6] sm:$0xff]
        %v1710 = vld [vmem:[%s6 + $0x8] sm:$0xff]
        %v1711 = vld [vmem:[%s6 + $0x10] sm:$0xff]
        %vm1712 = vcmask 195584
        %v1714 = vsel %vm1712, %v623, 0
        %v1717 = vsel %vm1712, %v778, 0
        %v1720 = vsel %vm1712, %v933, 0
        %v1723 = vsel %vm1712, %v1088, 0
        %v1726 = vsel %vm1712, %v1243, 0
        %v1729 = vsel %vm1712, %v1398, 0
        %v1732 = vsel %vm1712, %v1553, 0
        %v1735 = vsel %vm1712, %v1708, 0
        %1737 = vmatpush.msra.mxu0 0.0
        %1738 = vmatpush.msra.mxu0 0.0
        %1739 = vmatpush.msra.mxu0 0.0
        %1740 = vmatpush.msra.mxu0 0.0
        %1741 = vmatpush.msra.mxu0 0.0
        %1742 = vmatpush.msra.mxu0 0.0
        %1743 = vmatpush.msra.mxu0 0.0
        %1744 = vmatpush.msra.mxu0 0.0
        %1745 = vmatpush.msra.mxu0 0.0
        %1746 = vmatpush.msra.mxu0 0.0
        %1747 = vmatpush.msra.mxu0 0.0
        %1748 = vmatpush.msra.mxu0 0.0
        %1749 = vmatpush.msra.mxu0 0.0
        %1750 = vmatpush.msra.mxu0 %v1711
        %1751 = vmatpush.msra.mxu0 %v1710
        %1752 = vmatpush.msra.mxu0 %v1709
        %1753 = vmatmul.f32.gmra.mxu0 %v1714
        %v1754 = vpop.f32.mrf.mxu0
        %v1755 = vadd.f32 0.0, %v1754
        %1756 = vmatmul.f32.gmra.mxu0 %v1717
        %v1757 = vpop.f32.mrf.mxu0
        %v1758 = vadd.f32 0.0, %v1757
        %1759 = vmatmul.f32.gmra.mxu0 %v1720
        %v1760 = vpop.f32.mrf.mxu0
        %v1761 = vadd.f32 0.0, %v1760
        %1762 = vmatmul.f32.gmra.mxu0 %v1723
        %v1763 = vpop.f32.mrf.mxu0
        %v1764 = vadd.f32 0.0, %v1763
        %1765 = vmatmul.f32.gmra.mxu0 %v1726
        %v1766 = vpop.f32.mrf.mxu0
        %v1767 = vadd.f32 0.0, %v1766
        %1768 = vmatmul.f32.gmra.mxu0 %v1729
        %v1769 = vpop.f32.mrf.mxu0
        %v1770 = vadd.f32 0.0, %v1769
        %1771 = vmatmul.f32.gmra.mxu0 %v1732
        %v1772 = vpop.f32.mrf.mxu0
        %v1773 = vadd.f32 0.0, %v1772
        %1774 = vmatmul.f32.gmra.mxu0 %v1735
        %v1775 = vpop.f32.mrf.mxu0
        %v1776 = vadd.f32 0.0, %v1775
        %1777 = vdwg.mxu0
        %v1778 = vld [vmem:[%s376] sm:$0xf]
        %v1779 = vld [vmem:[%s376 + $0x4] sm:$0xf]
        %v1780 = vld [vmem:[%s376 + $0x8] sm:$0xf]
        %v1781 = vld [vmem:[%s376 + $0xc] sm:$0xf]
        %v1782 = vld [vmem:[%s376 + $0x10] sm:$0xf]
        %v1783 = vld [vmem:[%s376 + $0x14] sm:$0xf]
        %v1784 = vld [vmem:[%s376 + $0x18] sm:$0xf]
        %v1785 = vld [vmem:[%s376 + $0x1c] sm:$0xf]
        %v1786 = vld [vmem:[%s376 + $0x20] sm:$0xf]
        %v1787 = vld [vmem:[%s376 + $0x24] sm:$0xf]
        %v1788 = vld [vmem:[%s376 + $0x28] sm:$0xf]
        %v1789 = vld [vmem:[%s376 + $0x2c] sm:$0xf]
        %v1790 = vld [vmem:[%s376 + $0x30] sm:$0xf]
        %v1791 = vld [vmem:[%s376 + $0x34] sm:$0xf]
        %v1792 = vld [vmem:[%s376 + $0x38] sm:$0xf]
        %v1793 = vld [vmem:[%s376 + $0x3c] sm:$0xf]
        %v1794 = vld [vmem:[%s376 + $0x40] sm:$0xf]
        %v1795 = vld [vmem:[%s376 + $0x44] sm:$0xf]
        %v1796 = vld [vmem:[%s376 + $0x48] sm:$0xf]
        %v1797 = vld [vmem:[%s376 + $0x4c] sm:$0xf]
        %v1798 = vld [vmem:[%s376 + $0x50] sm:$0xf]
        %v1799 = vld [vmem:[%s376 + $0x54] sm:$0xf]
        %v1800 = vld [vmem:[%s376 + $0x58] sm:$0xf]
        %v1801 = vld [vmem:[%s376 + $0x5c] sm:$0xf]
        %v1802 = vld [vmem:[%s376 + $0x60] sm:$0xf]
        %v1803 = vld [vmem:[%s376 + $0x64] sm:$0xf]
        %v1804 = vld [vmem:[%s376 + $0x68] sm:$0xf]
        %v1805 = vld [vmem:[%s376 + $0x6c] sm:$0xf]
        %v1806 = vld [vmem:[%s376 + $0x70] sm:$0xf]
        %v1807 = vld [vmem:[%s376 + $0x74] sm:$0xf]
        %v1808 = vld [vmem:[%s376 + $0x78] sm:$0xf]
        %v1809 = vld [vmem:[%s376 + $0x7c] sm:$0xf]
        %v1810 = vld [vmem:[%s376 + $0x80] sm:$0xf]
        %v1811 = vld [vmem:[%s376 + $0x84] sm:$0xf]
        %v1812 = vld [vmem:[%s376 + $0x88] sm:$0xf]
        %v1813 = vld [vmem:[%s376 + $0x8c] sm:$0xf]
        %v1814 = vld [vmem:[%s376 + $0x90] sm:$0xf]
        %v1815 = vld [vmem:[%s376 + $0x94] sm:$0xf]
        %v1816 = vld [vmem:[%s376 + $0x98] sm:$0xf]
        %v1817 = vld [vmem:[%s376 + $0x9c] sm:$0xf]
        %v1818 = vld [vmem:[%s376 + $0xa0] sm:$0xf]
        %v1819 = vld [vmem:[%s376 + $0xa4] sm:$0xf]
        %v1820 = vld [vmem:[%s376 + $0xa8] sm:$0xf]
        %v1821 = vld [vmem:[%s376 + $0xac] sm:$0xf]
        %v1822 = vld [vmem:[%s376 + $0xb0] sm:$0xf]
        %v1823 = vld [vmem:[%s376 + $0xb4] sm:$0xf]
        %v1824 = vld [vmem:[%s376 + $0xb8] sm:$0xf]
        %v1825 = vld [vmem:[%s376 + $0xbc] sm:$0xf]
        %v1826 = vld [vmem:[%s376 + $0xc0] sm:$0xf]
        %v1827 = vld [vmem:[%s376 + $0xc4] sm:$0xf]
        %v1828 = vld [vmem:[%s376 + $0xc8] sm:$0xf]
        %v1829 = vld [vmem:[%s376 + $0xcc] sm:$0xf]
        %v1830 = vld [vmem:[%s376 + $0xd0] sm:$0xf]
        %v1831 = vld [vmem:[%s376 + $0xd4] sm:$0xf]
        %v1832 = vld [vmem:[%s376 + $0xd8] sm:$0xf]
        %v1833 = vld [vmem:[%s376 + $0xdc] sm:$0xf]
        %v1834 = vld [vmem:[%s376 + $0xe0] sm:$0xf]
        %v1835 = vld [vmem:[%s376 + $0xe4] sm:$0xf]
        %v1836 = vld [vmem:[%s376 + $0xe8] sm:$0xf]
        %v1837 = vld [vmem:[%s376 + $0xec] sm:$0xf]
        %v1838 = vld [vmem:[%s376 + $0xf0] sm:$0xf]
        %v1839 = vld [vmem:[%s376 + $0xf4] sm:$0xf]
        %v1840 = vld [vmem:[%s376 + $0xf8] sm:$0xf]
        %v1841 = vld [vmem:[%s376 + $0xfc] sm:$0xf]
        %v1842 = vld [vmem:[%s4] sm:$0xf]
        %v1843 = vld [vmem:[%s4 + $0x4] sm:$0xf]
        %v1844 = vld [vmem:[%s4 + $0x8] sm:$0xf]
        %v1845 = vld [vmem:[%s5] sm:$0x1]
        %v1847 = vperm.slane %v1845, 0
        %v1913 = vunpack.c.l.b16 %v1778
        %v1914 = vunpack.c.l.b16 %v1779
        %v1915 = vunpack.c.l.b16 %v1780
        %v1916 = vunpack.c.l.b16 %v1781
        %v1917 = vunpack.c.l.b16 %v1782
        %v1918 = vunpack.c.l.b16 %v1783
        %v1919 = vunpack.c.l.b16 %v1784
        %v1920 = vunpack.c.l.b16 %v1785
        %v1921 = vunpack.c.l.b16 %v1786
        %v1922 = vunpack.c.l.b16 %v1787
        %v1923 = vunpack.c.l.b16 %v1788
        %v1924 = vunpack.c.l.b16 %v1789
        %v1925 = vunpack.c.l.b16 %v1790
        %v1926 = vunpack.c.l.b16 %v1791
        %v1927 = vunpack.c.l.b16 %v1792
        %v1928 = vunpack.c.l.b16 %v1793
        %v1929 = vunpack.c.l.b16 %v1794
        %v1930 = vunpack.c.l.b16 %v1795
        %v1931 = vunpack.c.l.b16 %v1796
        %v1932 = vunpack.c.l.b16 %v1797
        %v1933 = vunpack.c.l.b16 %v1798
        %v1934 = vunpack.c.l.b16 %v1799
        %v1935 = vunpack.c.l.b16 %v1800
        %v1936 = vunpack.c.l.b16 %v1801
        %v1937 = vunpack.c.l.b16 %v1802
        %v1938 = vunpack.c.l.b16 %v1803
        %v1939 = vunpack.c.l.b16 %v1804
        %v1940 = vunpack.c.l.b16 %v1805
        %v1941 = vunpack.c.l.b16 %v1806
        %v1942 = vunpack.c.l.b16 %v1807
        %v1943 = vunpack.c.l.b16 %v1808
        %v1944 = vunpack.c.l.b16 %v1809
        %v1945 = vunpack.c.l.b16 %v1810
        %v1946 = vunpack.c.l.b16 %v1811
        %v1947 = vunpack.c.l.b16 %v1812
        %v1948 = vunpack.c.l.b16 %v1813
        %v1949 = vunpack.c.l.b16 %v1814
        %v1950 = vunpack.c.l.b16 %v1815
        %v1951 = vunpack.c.l.b16 %v1816
        %v1952 = vunpack.c.l.b16 %v1817
        %v1953 = vunpack.c.l.b16 %v1818
        %v1954 = vunpack.c.l.b16 %v1819
        %v1955 = vunpack.c.l.b16 %v1820
        %v1956 = vunpack.c.l.b16 %v1821
        %v1957 = vunpack.c.l.b16 %v1822
        %v1958 = vunpack.c.l.b16 %v1823
        %v1959 = vunpack.c.l.b16 %v1824
        %v1960 = vunpack.c.l.b16 %v1825
        %v1961 = vunpack.c.l.b16 %v1826
        %v1962 = vunpack.c.l.b16 %v1827
        %v1963 = vunpack.c.l.b16 %v1828
        %v1964 = vunpack.c.l.b16 %v1829
        %v1965 = vunpack.c.l.b16 %v1830
        %v1966 = vunpack.c.l.b16 %v1831
        %v1967 = vunpack.c.l.b16 %v1832
        %v1968 = vunpack.c.l.b16 %v1833
        %v1969 = vunpack.c.l.b16 %v1834
        %v1970 = vunpack.c.l.b16 %v1835
        %v1971 = vunpack.c.l.b16 %v1836
        %v1972 = vunpack.c.l.b16 %v1837
        %v1973 = vunpack.c.l.b16 %v1838
        %v1974 = vunpack.c.l.b16 %v1839
        %v1975 = vunpack.c.l.b16 %v1840
        %v1976 = vunpack.c.l.b16 %v1841
        %v1977 = vpack.c.b16 %v1914, %v1913
        %v1978 = vpack.c.b16 %v1916, %v1915
        %v1979 = vpack.c.b16 %v1918, %v1917
        %v1980 = vpack.c.b16 %v1920, %v1919
        %v1981 = vpack.c.b16 %v1922, %v1921
        %v1982 = vpack.c.b16 %v1924, %v1923
        %v1983 = vpack.c.b16 %v1926, %v1925
        %v1984 = vpack.c.b16 %v1928, %v1927
        %v1985 = vpack.c.b16 %v1930, %v1929
        %v1986 = vpack.c.b16 %v1932, %v1931
        %v1987 = vpack.c.b16 %v1934, %v1933
        %v1988 = vpack.c.b16 %v1936, %v1935
        %v1989 = vpack.c.b16 %v1938, %v1937
        %v1990 = vpack.c.b16 %v1940, %v1939
        %v1991 = vpack.c.b16 %v1942, %v1941
        %v1992 = vpack.c.b16 %v1944, %v1943
        %v1993 = vpack.c.b16 %v1946, %v1945
        %v1994 = vpack.c.b16 %v1948, %v1947
        %v1995 = vpack.c.b16 %v1950, %v1949
        %v1996 = vpack.c.b16 %v1952, %v1951
        %v1997 = vpack.c.b16 %v1954, %v1953
        %v1998 = vpack.c.b16 %v1956, %v1955
        %v1999 = vpack.c.b16 %v1958, %v1957
        %v2000 = vpack.c.b16 %v1960, %v1959
        %v2001 = vpack.c.b16 %v1962, %v1961
        %v2002 = vpack.c.b16 %v1964, %v1963
        %v2003 = vpack.c.b16 %v1966, %v1965
        %v2004 = vpack.c.b16 %v1968, %v1967
        %v2005 = vpack.c.b16 %v1970, %v1969
        %v2006 = vpack.c.b16 %v1972, %v1971
        %v2007 = vpack.c.b16 %v1974, %v1973
        %v2008 = vpack.c.b16 %v1976, %v1975
        %v2012 = vunpack.c.l.b16 %v1842
        %v2013 = vunpack.c.l.b16 %v1843
        %v2014 = vunpack.c.l.b16 %v1844
        %v2015 = vpack.c.b16 %v2013, %v2012
        %v2016 = vpack.c.b16 %v2014, %v2014
        %v2019 = vsel %vm1712, %v1977, 0
        %v2022 = vsel %vm1712, %v1978, 0
        %v2025 = vsel %vm1712, %v1979, 0
        %v2028 = vsel %vm1712, %v1980, 0
        %v2031 = vsel %vm1712, %v1981, 0
        %v2034 = vsel %vm1712, %v1982, 0
        %v2037 = vsel %vm1712, %v1983, 0
        %v2040 = vsel %vm1712, %v1984, 0
        %v2043 = vsel %vm1712, %v1985, 0
        %v2046 = vsel %vm1712, %v1986, 0
        %v2049 = vsel %vm1712, %v1987, 0
        %v2052 = vsel %vm1712, %v1988, 0
        %v2055 = vsel %vm1712, %v1989, 0
        %v2058 = vsel %vm1712, %v1990, 0
        %v2061 = vsel %vm1712, %v1991, 0
        %v2064 = vsel %vm1712, %v1992, 0
        %v2067 = vsel %vm1712, %v1993, 0
        %v2070 = vsel %vm1712, %v1994, 0
        %v2073 = vsel %vm1712, %v1995, 0
        %v2076 = vsel %vm1712, %v1996, 0
        %v2079 = vsel %vm1712, %v1997, 0
        %v2082 = vsel %vm1712, %v1998, 0
        %v2085 = vsel %vm1712, %v1999, 0
        %v2088 = vsel %vm1712, %v2000, 0
        %v2091 = vsel %vm1712, %v2001, 0
        %v2094 = vsel %vm1712, %v2002, 0
        %v2097 = vsel %vm1712, %v2003, 0
        %v2100 = vsel %vm1712, %v2004, 0
        %v2103 = vsel %vm1712, %v2005, 0
        %v2106 = vsel %vm1712, %v2006, 0
        %v2109 = vsel %vm1712, %v2007, 0
        %v2112 = vsel %vm1712, %v2008, 0
        %vm2114 = vcmask 1043456
        %v2116 = vsel %vm2114, %v2016, 0
        %2118 = vmatpush.bf16.msra.mxu0 0
        %2119 = vmatpush.bf16.msra.mxu0 0
        %2120 = vmatpush.bf16.msra.mxu0 0
        %2121 = vmatpush.bf16.msra.mxu0 0
        %2122 = vmatpush.bf16.msra.mxu0 0
        %2123 = vmatpush.bf16.msra.mxu0 0
        %2124 = vmatpush.bf16.msra.mxu0 %v2116
        %2125 = vmatpush.bf16.msra.mxu0 %v2015
        %2126 = vmatmul.bf16.gmra.mxu0 %v2019
        %v2127 = vpop.f32.mrf.mxu0
        %v2128 = vadd.f32 %v1847, %v2127
        %v2129 = vpop.f32.mrf.mxu0
        %v2130 = vadd.f32 %v1847, %v2129
        %2131 = vmatmul.bf16.gmra.mxu0 %v2022
        %v2132 = vpop.f32.mrf.mxu0
        %v2133 = vadd.f32 %v1847, %v2132
        %v2134 = vpop.f32.mrf.mxu0
        %v2135 = vadd.f32 %v1847, %v2134
        %2136 = vmatmul.bf16.gmra.mxu0 %v2025
        %v2137 = vpop.f32.mrf.mxu0
        %v2138 = vadd.f32 %v1847, %v2137
        %v2139 = vpop.f32.mrf.mxu0
        %v2140 = vadd.f32 %v1847, %v2139
        %2141 = vmatmul.bf16.gmra.mxu0 %v2028
        %v2142 = vpop.f32.mrf.mxu0
        %v2143 = vadd.f32 %v1847, %v2142
        %v2144 = vpop.f32.mrf.mxu0
        %v2145 = vadd.f32 %v1847, %v2144
        %2146 = vmatmul.bf16.gmra.mxu0 %v2031
        %v2147 = vpop.f32.mrf.mxu0
        %v2148 = vadd.f32 %v1847, %v2147
        %v2149 = vpop.f32.mrf.mxu0
        %v2150 = vadd.f32 %v1847, %v2149
        %2151 = vmatmul.bf16.gmra.mxu0 %v2034
        %v2152 = vpop.f32.mrf.mxu0
        %v2153 = vadd.f32 %v1847, %v2152
        %v2154 = vpop.f32.mrf.mxu0
        %v2155 = vadd.f32 %v1847, %v2154
        %2156 = vmatmul.bf16.gmra.mxu0 %v2037
        %v2157 = vpop.f32.mrf.mxu0
        %v2158 = vadd.f32 %v1847, %v2157
        %v2159 = vpop.f32.mrf.mxu0
        %v2160 = vadd.f32 %v1847, %v2159
        %2161 = vmatmul.bf16.gmra.mxu0 %v2040
        %v2162 = vpop.f32.mrf.mxu0
        %v2163 = vadd.f32 %v1847, %v2162
        %v2164 = vpop.f32.mrf.mxu0
        %v2165 = vadd.f32 %v1847, %v2164
        %2166 = vmatmul.bf16.gmra.mxu0 %v2043
        %v2167 = vpop.f32.mrf.mxu0
        %v2168 = vadd.f32 %v1847, %v2167
        %v2169 = vpop.f32.mrf.mxu0
        %v2170 = vadd.f32 %v1847, %v2169
        %2171 = vmatmul.bf16.gmra.mxu0 %v2046
        %v2172 = vpop.f32.mrf.mxu0
        %v2173 = vadd.f32 %v1847, %v2172
        %v2174 = vpop.f32.mrf.mxu0
        %v2175 = vadd.f32 %v1847, %v2174
        %2176 = vmatmul.bf16.gmra.mxu0 %v2049
        %v2177 = vpop.f32.mrf.mxu0
        %v2178 = vadd.f32 %v1847, %v2177
        %v2179 = vpop.f32.mrf.mxu0
        %v2180 = vadd.f32 %v1847, %v2179
        %2181 = vmatmul.bf16.gmra.mxu0 %v2052
        %v2182 = vpop.f32.mrf.mxu0
        %v2183 = vadd.f32 %v1847, %v2182
        %v2184 = vpop.f32.mrf.mxu0
        %v2185 = vadd.f32 %v1847, %v2184
        %2186 = vmatmul.bf16.gmra.mxu0 %v2055
        %v2187 = vpop.f32.mrf.mxu0
        %v2188 = vadd.f32 %v1847, %v2187
        %v2189 = vpop.f32.mrf.mxu0
        %v2190 = vadd.f32 %v1847, %v2189
        %2191 = vmatmul.bf16.gmra.mxu0 %v2058
        %v2192 = vpop.f32.mrf.mxu0
        %v2193 = vadd.f32 %v1847, %v2192
        %v2194 = vpop.f32.mrf.mxu0
        %v2195 = vadd.f32 %v1847, %v2194
        %2196 = vmatmul.bf16.gmra.mxu0 %v2061
        %v2197 = vpop.f32.mrf.mxu0
        %v2198 = vadd.f32 %v1847, %v2197
        %v2199 = vpop.f32.mrf.mxu0
        %v2200 = vadd.f32 %v1847, %v2199
        %2201 = vmatmul.bf16.gmra.mxu0 %v2064
        %v2202 = vpop.f32.mrf.mxu0
        %v2203 = vadd.f32 %v1847, %v2202
        %v2204 = vpop.f32.mrf.mxu0
        %v2205 = vadd.f32 %v1847, %v2204
        %2206 = vmatmul.bf16.gmra.mxu0 %v2067
        %v2207 = vpop.f32.mrf.mxu0
        %v2208 = vadd.f32 %v1847, %v2207
        %v2209 = vpop.f32.mrf.mxu0
        %v2210 = vadd.f32 %v1847, %v2209
        %2211 = vmatmul.bf16.gmra.mxu0 %v2070
        %v2212 = vpop.f32.mrf.mxu0
        %v2213 = vadd.f32 %v1847, %v2212
        %v2214 = vpop.f32.mrf.mxu0
        %v2215 = vadd.f32 %v1847, %v2214
        %2216 = vmatmul.bf16.gmra.mxu0 %v2073
        %v2217 = vpop.f32.mrf.mxu0
        %v2218 = vadd.f32 %v1847, %v2217
        %v2219 = vpop.f32.mrf.mxu0
        %v2220 = vadd.f32 %v1847, %v2219
        %2221 = vmatmul.bf16.gmra.mxu0 %v2076
        %v2222 = vpop.f32.mrf.mxu0
        %v2223 = vadd.f32 %v1847, %v2222
        %v2224 = vpop.f32.mrf.mxu0
        %v2225 = vadd.f32 %v1847, %v2224
        %2226 = vmatmul.bf16.gmra.mxu0 %v2079
        %v2227 = vpop.f32.mrf.mxu0
        %v2228 = vadd.f32 %v1847, %v2227
        %v2229 = vpop.f32.mrf.mxu0
        %v2230 = vadd.f32 %v1847, %v2229
        %2231 = vmatmul.bf16.gmra.mxu0 %v2082
        %v2232 = vpop.f32.mrf.mxu0
        %v2233 = vadd.f32 %v1847, %v2232
        %v2234 = vpop.f32.mrf.mxu0
        %v2235 = vadd.f32 %v1847, %v2234
        %2236 = vmatmul.bf16.gmra.mxu0 %v2085
        %v2237 = vpop.f32.mrf.mxu0
        %v2238 = vadd.f32 %v1847, %v2237
        %v2239 = vpop.f32.mrf.mxu0
        %v2240 = vadd.f32 %v1847, %v2239
        %2241 = vmatmul.bf16.gmra.mxu0 %v2088
        %v2242 = vpop.f32.mrf.mxu0
        %v2243 = vadd.f32 %v1847, %v2242
        %v2244 = vpop.f32.mrf.mxu0
        %v2245 = vadd.f32 %v1847, %v2244
        %2246 = vmatmul.bf16.gmra.mxu0 %v2091
        %v2247 = vpop.f32.mrf.mxu0
        %v2248 = vadd.f32 %v1847, %v2247
        %v2249 = vpop.f32.mrf.mxu0
        %v2250 = vadd.f32 %v1847, %v2249
        %2251 = vmatmul.bf16.gmra.mxu0 %v2094
        %v2252 = vpop.f32.mrf.mxu0
        %v2253 = vadd.f32 %v1847, %v2252
        %v2254 = vpop.f32.mrf.mxu0
        %v2255 = vadd.f32 %v1847, %v2254
        %2256 = vmatmul.bf16.gmra.mxu0 %v2097
        %v2257 = vpop.f32.mrf.mxu0
        %v2258 = vadd.f32 %v1847, %v2257
        %v2259 = vpop.f32.mrf.mxu0
        %v2260 = vadd.f32 %v1847, %v2259
        %2261 = vmatmul.bf16.gmra.mxu0 %v2100
        %v2262 = vpop.f32.mrf.mxu0
        %v2263 = vadd.f32 %v1847, %v2262
        %v2264 = vpop.f32.mrf.mxu0
        %v2265 = vadd.f32 %v1847, %v2264
        %2266 = vmatmul.bf16.gmra.mxu0 %v2103
        %v2267 = vpop.f32.mrf.mxu0
        %v2268 = vadd.f32 %v1847, %v2267
        %v2269 = vpop.f32.mrf.mxu0
        %v2270 = vadd.f32 %v1847, %v2269
        %2271 = vmatmul.bf16.gmra.mxu0 %v2106
        %v2272 = vpop.f32.mrf.mxu0
        %v2273 = vadd.f32 %v1847, %v2272
        %v2274 = vpop.f32.mrf.mxu0
        %v2275 = vadd.f32 %v1847, %v2274
        %2276 = vmatmul.bf16.gmra.mxu0 %v2109
        %v2277 = vpop.f32.mrf.mxu0
        %v2278 = vadd.f32 %v1847, %v2277
        %v2279 = vpop.f32.mrf.mxu0
        %v2280 = vadd.f32 %v1847, %v2279
        %2281 = vmatmul.bf16.gmra.mxu0 %v2112
        %v2282 = vpop.f32.mrf.mxu0
        %v2283 = vadd.f32 %v1847, %v2282
        %v2284 = vpop.f32.mrf.mxu0
        %v2285 = vadd.f32 %v1847, %v2284
        %2286 = vdwg.mxu0
        %v2295 = vrot.slane %v1755, 1
        %v2296 = vrot.slane %v1755, 2
        %v2297 = vrot.slane %v1755, 3
        %v2298 = vrot.slane %v1755, 4
        %v2299 = vrot.slane %v1755, 5
        %v2300 = vrot.slane %v1755, 6
        %v2301 = vrot.slane %v1755, 7
        %v2302 = vrot.slane %v1758, 1
        %v2303 = vrot.slane %v1758, 2
        %v2304 = vrot.slane %v1758, 3
        %v2305 = vrot.slane %v1758, 4
        %v2306 = vrot.slane %v1758, 5
        %v2307 = vrot.slane %v1758, 6
        %v2308 = vrot.slane %v1758, 7
        %v2309 = vrot.slane %v1761, 1
        %v2310 = vrot.slane %v1761, 2
        %v2311 = vrot.slane %v1761, 3
        %v2312 = vrot.slane %v1761, 4
        %v2313 = vrot.slane %v1761, 5
        %v2314 = vrot.slane %v1761, 6
        %v2315 = vrot.slane %v1761, 7
        %v2316 = vrot.slane %v1764, 1
        %v2317 = vrot.slane %v1764, 2
        %v2318 = vrot.slane %v1764, 3
        %v2319 = vrot.slane %v1764, 4
        %v2320 = vrot.slane %v1764, 5
        %v2321 = vrot.slane %v1764, 6
        %v2322 = vrot.slane %v1764, 7
        %v2323 = vrot.slane %v1767, 1
        %v2324 = vrot.slane %v1767, 2
        %v2325 = vrot.slane %v1767, 3
        %v2326 = vrot.slane %v1767, 4
        %v2327 = vrot.slane %v1767, 5
        %v2328 = vrot.slane %v1767, 6
        %v2329 = vrot.slane %v1767, 7
        %v2330 = vrot.slane %v1770, 1
        %v2331 = vrot.slane %v1770, 2
        %v2332 = vrot.slane %v1770, 3
        %v2333 = vrot.slane %v1770, 4
        %v2334 = vrot.slane %v1770, 5
        %v2335 = vrot.slane %v1770, 6
        %v2336 = vrot.slane %v1770, 7
        %v2337 = vrot.slane %v1773, 1
        %v2338 = vrot.slane %v1773, 2
        %v2339 = vrot.slane %v1773, 3
        %v2340 = vrot.slane %v1773, 4
        %v2341 = vrot.slane %v1773, 5
        %v2342 = vrot.slane %v1773, 6
        %v2343 = vrot.slane %v1773, 7
        %v2344 = vrot.slane %v1776, 1
        %v2345 = vrot.slane %v1776, 2
        %v2346 = vrot.slane %v1776, 3
        %v2347 = vrot.slane %v1776, 4
        %v2348 = vrot.slane %v1776, 5
        %v2349 = vrot.slane %v1776, 6
        %v2350 = vrot.slane %v1776, 7
        %v2351 = vperm.slane %v1755, 0
        %v2352 = vperm.slane %v2295, 0
        %v2353 = vperm.slane %v2296, 0
        %v2354 = vperm.slane %v2297, 0
        %v2355 = vperm.slane %v2298, 0
        %v2356 = vperm.slane %v2299, 0
        %v2357 = vperm.slane %v2300, 0
        %v2358 = vperm.slane %v2301, 0
        %v2359 = vperm.slane %v1758, 0
        %v2360 = vperm.slane %v2302, 0
        %v2361 = vperm.slane %v2303, 0
        %v2362 = vperm.slane %v2304, 0
        %v2363 = vperm.slane %v2305, 0
        %v2364 = vperm.slane %v2306, 0
        %v2365 = vperm.slane %v2307, 0
        %v2366 = vperm.slane %v2308, 0
        %v2367 = vperm.slane %v1761, 0
        %v2368 = vperm.slane %v2309, 0
        %v2369 = vperm.slane %v2310, 0
        %v2370 = vperm.slane %v2311, 0
        %v2371 = vperm.slane %v2312, 0
        %v2372 = vperm.slane %v2313, 0
        %v2373 = vperm.slane %v2314, 0
        %v2374 = vperm.slane %v2315, 0
        %v2375 = vperm.slane %v1764, 0
        %v2376 = vperm.slane %v2316, 0
        %v2377 = vperm.slane %v2317, 0
        %v2378 = vperm.slane %v2318, 0
        %v2379 = vperm.slane %v2319, 0
        %v2380 = vperm.slane %v2320, 0
        %v2381 = vperm.slane %v2321, 0
        %v2382 = vperm.slane %v2322, 0
        %v2383 = vperm.slane %v1767, 0
        %v2384 = vperm.slane %v2323, 0
        %v2385 = vperm.slane %v2324, 0
        %v2386 = vperm.slane %v2325, 0
        %v2387 = vperm.slane %v2326, 0
        %v2388 = vperm.slane %v2327, 0
        %v2389 = vperm.slane %v2328, 0
        %v2390 = vperm.slane %v2329, 0
        %v2391 = vperm.slane %v1770, 0
        %v2392 = vperm.slane %v2330, 0
        %v2393 = vperm.slane %v2331, 0
        %v2394 = vperm.slane %v2332, 0
        %v2395 = vperm.slane %v2333, 0
        %v2396 = vperm.slane %v2334, 0
        %v2397 = vperm.slane %v2335, 0
        %v2398 = vperm.slane %v2336, 0
        %v2399 = vperm.slane %v1773, 0
        %v2400 = vperm.slane %v2337, 0
        %v2401 = vperm.slane %v2338, 0
        %v2402 = vperm.slane %v2339, 0
        %v2403 = vperm.slane %v2340, 0
        %v2404 = vperm.slane %v2341, 0
        %v2405 = vperm.slane %v2342, 0
        %v2406 = vperm.slane %v2343, 0
        %v2407 = vperm.slane %v1776, 0
        %v2408 = vperm.slane %v2344, 0
        %v2409 = vperm.slane %v2345, 0
        %v2410 = vperm.slane %v2346, 0
        %v2411 = vperm.slane %v2347, 0
        %v2412 = vperm.slane %v2348, 0
        %v2413 = vperm.slane %v2349, 0
        %v2414 = vperm.slane %v2350, 0
        %v2479 = vadd.f32 %v2128, %v2351
        %v2480 = vadd.f32 %v2130, %v2352
        %v2481 = vadd.f32 %v2133, %v2353
        %v2482 = vadd.f32 %v2135, %v2354
        %v2483 = vadd.f32 %v2138, %v2355
        %v2484 = vadd.f32 %v2140, %v2356
        %v2485 = vadd.f32 %v2143, %v2357
        %v2486 = vadd.f32 %v2145, %v2358
        %v2487 = vadd.f32 %v2148, %v2359
        %v2488 = vadd.f32 %v2150, %v2360
        %v2489 = vadd.f32 %v2153, %v2361
        %v2490 = vadd.f32 %v2155, %v2362
        %v2491 = vadd.f32 %v2158, %v2363
        %v2492 = vadd.f32 %v2160, %v2364
        %v2493 = vadd.f32 %v2163, %v2365
        %v2494 = vadd.f32 %v2165, %v2366
        %v2495 = vadd.f32 %v2168, %v2367
        %v2496 = vadd.f32 %v2170, %v2368
        %v2497 = vadd.f32 %v2173, %v2369
        %v2498 = vadd.f32 %v2175, %v2370
        %v2499 = vadd.f32 %v2178, %v2371
        %v2500 = vadd.f32 %v2180, %v2372
        %v2501 = vadd.f32 %v2183, %v2373
        %v2502 = vadd.f32 %v2185, %v2374
        %v2503 = vadd.f32 %v2188, %v2375
        %v2504 = vadd.f32 %v2190, %v2376
        %v2505 = vadd.f32 %v2193, %v2377
        %v2506 = vadd.f32 %v2195, %v2378
        %v2507 = vadd.f32 %v2198, %v2379
        %v2508 = vadd.f32 %v2200, %v2380
        %v2509 = vadd.f32 %v2203, %v2381
        %v2510 = vadd.f32 %v2205, %v2382
        %v2511 = vadd.f32 %v2208, %v2383
        %v2512 = vadd.f32 %v2210, %v2384
        %v2513 = vadd.f32 %v2213, %v2385
        %v2514 = vadd.f32 %v2215, %v2386
        %v2515 = vadd.f32 %v2218, %v2387
        %v2516 = vadd.f32 %v2220, %v2388
        %v2517 = vadd.f32 %v2223, %v2389
        %v2518 = vadd.f32 %v2225, %v2390
        %v2519 = vadd.f32 %v2228, %v2391
        %v2520 = vadd.f32 %v2230, %v2392
        %v2521 = vadd.f32 %v2233, %v2393
        %v2522 = vadd.f32 %v2235, %v2394
        %v2523 = vadd.f32 %v2238, %v2395
        %v2524 = vadd.f32 %v2240, %v2396
        %v2525 = vadd.f32 %v2243, %v2397
        %v2526 = vadd.f32 %v2245, %v2398
        %v2527 = vadd.f32 %v2248, %v2399
        %v2528 = vadd.f32 %v2250, %v2400
        %v2529 = vadd.f32 %v2253, %v2401
        %v2530 = vadd.f32 %v2255, %v2402
        %v2531 = vadd.f32 %v2258, %v2403
        %v2532 = vadd.f32 %v2260, %v2404
        %v2533 = vadd.f32 %v2263, %v2405
        %v2534 = vadd.f32 %v2265, %v2406
        %v2535 = vadd.f32 %v2268, %v2407
        %v2536 = vadd.f32 %v2270, %v2408
        %v2537 = vadd.f32 %v2273, %v2409
        %v2538 = vadd.f32 %v2275, %v2410
        %v2539 = vadd.f32 %v2278, %v2411
        %v2540 = vadd.f32 %v2280, %v2412
        %v2541 = vadd.f32 %v2283, %v2413
        %v2542 = vadd.f32 %v2285, %v2414
        %v2543 = vmax.f32 %v2479, 0.0
        %v2544 = vmax.f32 %v2480, 0.0
        %v2545 = vmax.f32 %v2481, 0.0
        %v2546 = vmax.f32 %v2482, 0.0
        %v2547 = vmax.f32 %v2483, 0.0
        %v2548 = vmax.f32 %v2484, 0.0
        %v2549 = vmax.f32 %v2485, 0.0
        %v2550 = vmax.f32 %v2486, 0.0
        %v2551 = vmax.f32 %v2487, 0.0
        %v2552 = vmax.f32 %v2488, 0.0
        %v2553 = vmax.f32 %v2489, 0.0
        %v2554 = vmax.f32 %v2490, 0.0
        %v2555 = vmax.f32 %v2491, 0.0
        %v2556 = vmax.f32 %v2492, 0.0
        %v2557 = vmax.f32 %v2493, 0.0
        %v2558 = vmax.f32 %v2494, 0.0
        %v2559 = vmax.f32 %v2495, 0.0
        %v2560 = vmax.f32 %v2496, 0.0
        %v2561 = vmax.f32 %v2497, 0.0
        %v2562 = vmax.f32 %v2498, 0.0
        %v2563 = vmax.f32 %v2499, 0.0
        %v2564 = vmax.f32 %v2500, 0.0
        %v2565 = vmax.f32 %v2501, 0.0
        %v2566 = vmax.f32 %v2502, 0.0
        %v2567 = vmax.f32 %v2503, 0.0
        %v2568 = vmax.f32 %v2504, 0.0
        %v2569 = vmax.f32 %v2505, 0.0
        %v2570 = vmax.f32 %v2506, 0.0
        %v2571 = vmax.f32 %v2507, 0.0
        %v2572 = vmax.f32 %v2508, 0.0
        %v2573 = vmax.f32 %v2509, 0.0
        %v2574 = vmax.f32 %v2510, 0.0
        %v2575 = vmax.f32 %v2511, 0.0
        %v2576 = vmax.f32 %v2512, 0.0
        %v2577 = vmax.f32 %v2513, 0.0
        %v2578 = vmax.f32 %v2514, 0.0
        %v2579 = vmax.f32 %v2515, 0.0
        %v2580 = vmax.f32 %v2516, 0.0
        %v2581 = vmax.f32 %v2517, 0.0
        %v2582 = vmax.f32 %v2518, 0.0
        %v2583 = vmax.f32 %v2519, 0.0
        %v2584 = vmax.f32 %v2520, 0.0
        %v2585 = vmax.f32 %v2521, 0.0
        %v2586 = vmax.f32 %v2522, 0.0
        %v2587 = vmax.f32 %v2523, 0.0
        %v2588 = vmax.f32 %v2524, 0.0
        %v2589 = vmax.f32 %v2525, 0.0
        %v2590 = vmax.f32 %v2526, 0.0
        %v2591 = vmax.f32 %v2527, 0.0
        %v2592 = vmax.f32 %v2528, 0.0
        %v2593 = vmax.f32 %v2529, 0.0
        %v2594 = vmax.f32 %v2530, 0.0
        %v2595 = vmax.f32 %v2531, 0.0
        %v2596 = vmax.f32 %v2532, 0.0
        %v2597 = vmax.f32 %v2533, 0.0
        %v2598 = vmax.f32 %v2534, 0.0
        %v2599 = vmax.f32 %v2535, 0.0
        %v2600 = vmax.f32 %v2536, 0.0
        %v2601 = vmax.f32 %v2537, 0.0
        %v2602 = vmax.f32 %v2538, 0.0
        %v2603 = vmax.f32 %v2539, 0.0
        %v2604 = vmax.f32 %v2540, 0.0
        %v2605 = vmax.f32 %v2541, 0.0
        %v2606 = vmax.f32 %v2542, 0.0
        %vm2607 = vcmp.ne.f32.partialorder %v2479, %v2479
        %vm2608 = vcmp.ne.f32.partialorder %v2480, %v2480
        %vm2609 = vcmp.ne.f32.partialorder %v2481, %v2481
        %vm2610 = vcmp.ne.f32.partialorder %v2482, %v2482
        %vm2611 = vcmp.ne.f32.partialorder %v2483, %v2483
        %vm2612 = vcmp.ne.f32.partialorder %v2484, %v2484
        %vm2613 = vcmp.ne.f32.partialorder %v2485, %v2485
        %vm2614 = vcmp.ne.f32.partialorder %v2486, %v2486
        %vm2615 = vcmp.ne.f32.partialorder %v2487, %v2487
        %vm2616 = vcmp.ne.f32.partialorder %v2488, %v2488
        %vm2617 = vcmp.ne.f32.partialorder %v2489, %v2489
        %vm2618 = vcmp.ne.f32.partialorder %v2490, %v2490
        %vm2619 = vcmp.ne.f32.partialorder %v2491, %v2491
        %vm2620 = vcmp.ne.f32.partialorder %v2492, %v2492
        %vm2621 = vcmp.ne.f32.partialorder %v2493, %v2493
        %vm2622 = vcmp.ne.f32.partialorder %v2494, %v2494
        %vm2623 = vcmp.ne.f32.partialorder %v2495, %v2495
        %vm2624 = vcmp.ne.f32.partialorder %v2496, %v2496
        %vm2625 = vcmp.ne.f32.partialorder %v2497, %v2497
        %vm2626 = vcmp.ne.f32.partialorder %v2498, %v2498
        %vm2627 = vcmp.ne.f32.partialorder %v2499, %v2499
        %vm2628 = vcmp.ne.f32.partialorder %v2500, %v2500
        %vm2629 = vcmp.ne.f32.partialorder %v2501, %v2501
        %vm2630 = vcmp.ne.f32.partialorder %v2502, %v2502
        %vm2631 = vcmp.ne.f32.partialorder %v2503, %v2503
        %vm2632 = vcmp.ne.f32.partialorder %v2504, %v2504
        %vm2633 = vcmp.ne.f32.partialorder %v2505, %v2505
        %vm2634 = vcmp.ne.f32.partialorder %v2506, %v2506
        %vm2635 = vcmp.ne.f32.partialorder %v2507, %v2507
        %vm2636 = vcmp.ne.f32.partialorder %v2508, %v2508
        %vm2637 = vcmp.ne.f32.partialorder %v2509, %v2509
        %vm2638 = vcmp.ne.f32.partialorder %v2510, %v2510
        %vm2639 = vcmp.ne.f32.partialorder %v2511, %v2511
        %vm2640 = vcmp.ne.f32.partialorder %v2512, %v2512
        %vm2641 = vcmp.ne.f32.partialorder %v2513, %v2513
        %vm2642 = vcmp.ne.f32.partialorder %v2514, %v2514
        %vm2643 = vcmp.ne.f32.partialorder %v2515, %v2515
        %vm2644 = vcmp.ne.f32.partialorder %v2516, %v2516
        %vm2645 = vcmp.ne.f32.partialorder %v2517, %v2517
        %vm2646 = vcmp.ne.f32.partialorder %v2518, %v2518
        %vm2647 = vcmp.ne.f32.partialorder %v2519, %v2519
        %vm2648 = vcmp.ne.f32.partialorder %v2520, %v2520
        %vm2649 = vcmp.ne.f32.partialorder %v2521, %v2521
        %vm2650 = vcmp.ne.f32.partialorder %v2522, %v2522
        %vm2651 = vcmp.ne.f32.partialorder %v2523, %v2523
        %vm2652 = vcmp.ne.f32.partialorder %v2524, %v2524
        %vm2653 = vcmp.ne.f32.partialorder %v2525, %v2525
        %vm2654 = vcmp.ne.f32.partialorder %v2526, %v2526
        %vm2655 = vcmp.ne.f32.partialorder %v2527, %v2527
        %vm2656 = vcmp.ne.f32.partialorder %v2528, %v2528
        %vm2657 = vcmp.ne.f32.partialorder %v2529, %v2529
        %vm2658 = vcmp.ne.f32.partialorder %v2530, %v2530
        %vm2659 = vcmp.ne.f32.partialorder %v2531, %v2531
        %vm2660 = vcmp.ne.f32.partialorder %v2532, %v2532
        %vm2661 = vcmp.ne.f32.partialorder %v2533, %v2533
        %vm2662 = vcmp.ne.f32.partialorder %v2534, %v2534
        %vm2663 = vcmp.ne.f32.partialorder %v2535, %v2535
        %vm2664 = vcmp.ne.f32.partialorder %v2536, %v2536
        %vm2665 = vcmp.ne.f32.partialorder %v2537, %v2537
        %vm2666 = vcmp.ne.f32.partialorder %v2538, %v2538
        %vm2667 = vcmp.ne.f32.partialorder %v2539, %v2539
        %vm2668 = vcmp.ne.f32.partialorder %v2540, %v2540
        %vm2669 = vcmp.ne.f32.partialorder %v2541, %v2541
        %vm2670 = vcmp.ne.f32.partialorder %v2542, %v2542
        %v2671 = vadd.f32 %v2479, 0.0
        %v2672 = vadd.f32 %v2480, 0.0
        %v2673 = vadd.f32 %v2481, 0.0
        %v2674 = vadd.f32 %v2482, 0.0
        %v2675 = vadd.f32 %v2483, 0.0
        %v2676 = vadd.f32 %v2484, 0.0
        %v2677 = vadd.f32 %v2485, 0.0
        %v2678 = vadd.f32 %v2486, 0.0
        %v2679 = vadd.f32 %v2487, 0.0
        %v2680 = vadd.f32 %v2488, 0.0
        %v2681 = vadd.f32 %v2489, 0.0
        %v2682 = vadd.f32 %v2490, 0.0
        %v2683 = vadd.f32 %v2491, 0.0
        %v2684 = vadd.f32 %v2492, 0.0
        %v2685 = vadd.f32 %v2493, 0.0
        %v2686 = vadd.f32 %v2494, 0.0
        %v2687 = vadd.f32 %v2495, 0.0
        %v2688 = vadd.f32 %v2496, 0.0
        %v2689 = vadd.f32 %v2497, 0.0
        %v2690 = vadd.f32 %v2498, 0.0
        %v2691 = vadd.f32 %v2499, 0.0
        %v2692 = vadd.f32 %v2500, 0.0
        %v2693 = vadd.f32 %v2501, 0.0
        %v2694 = vadd.f32 %v2502, 0.0
        %v2695 = vadd.f32 %v2503, 0.0
        %v2696 = vadd.f32 %v2504, 0.0
        %v2697 = vadd.f32 %v2505, 0.0
        %v2698 = vadd.f32 %v2506, 0.0
        %v2699 = vadd.f32 %v2507, 0.0
        %v2700 = vadd.f32 %v2508, 0.0
        %v2701 = vadd.f32 %v2509, 0.0
        %v2702 = vadd.f32 %v2510, 0.0
        %v2703 = vadd.f32 %v2511, 0.0
        %v2704 = vadd.f32 %v2512, 0.0
        %v2705 = vadd.f32 %v2513, 0.0
        %v2706 = vadd.f32 %v2514, 0.0
        %v2707 = vadd.f32 %v2515, 0.0
        %v2708 = vadd.f32 %v2516, 0.0
        %v2709 = vadd.f32 %v2517, 0.0
        %v2710 = vadd.f32 %v2518, 0.0
        %v2711 = vadd.f32 %v2519, 0.0
        %v2712 = vadd.f32 %v2520, 0.0
        %v2713 = vadd.f32 %v2521, 0.0
        %v2714 = vadd.f32 %v2522, 0.0
        %v2715 = vadd.f32 %v2523, 0.0
        %v2716 = vadd.f32 %v2524, 0.0
        %v2717 = vadd.f32 %v2525, 0.0
        %v2718 = vadd.f32 %v2526, 0.0
        %v2719 = vadd.f32 %v2527, 0.0
        %v2720 = vadd.f32 %v2528, 0.0
        %v2721 = vadd.f32 %v2529, 0.0
        %v2722 = vadd.f32 %v2530, 0.0
        %v2723 = vadd.f32 %v2531, 0.0
        %v2724 = vadd.f32 %v2532, 0.0
        %v2725 = vadd.f32 %v2533, 0.0
        %v2726 = vadd.f32 %v2534, 0.0
        %v2727 = vadd.f32 %v2535, 0.0
        %v2728 = vadd.f32 %v2536, 0.0
        %v2729 = vadd.f32 %v2537, 0.0
        %v2730 = vadd.f32 %v2538, 0.0
        %v2731 = vadd.f32 %v2539, 0.0
        %v2732 = vadd.f32 %v2540, 0.0
        %v2733 = vadd.f32 %v2541, 0.0
        %v2734 = vadd.f32 %v2542, 0.0
        %v2735 = vand.u32 2147483647, %v2479
        %v2736 = vand.u32 2147483647, %v2480
        %v2737 = vand.u32 2147483647, %v2481
        %v2738 = vand.u32 2147483647, %v2482
        %v2739 = vand.u32 2147483647, %v2483
        %v2740 = vand.u32 2147483647, %v2484
        %v2741 = vand.u32 2147483647, %v2485
        %v2742 = vand.u32 2147483647, %v2486
        %v2743 = vand.u32 2147483647, %v2487
        %v2744 = vand.u32 2147483647, %v2488
        %v2745 = vand.u32 2147483647, %v2489
        %v2746 = vand.u32 2147483647, %v2490
        %v2747 = vand.u32 2147483647, %v2491
        %v2748 = vand.u32 2147483647, %v2492
        %v2749 = vand.u32 2147483647, %v2493
        %v2750 = vand.u32 2147483647, %v2494
        %v2751 = vand.u32 2147483647, %v2495
        %v2752 = vand.u32 2147483647, %v2496
        %v2753 = vand.u32 2147483647, %v2497
        %v2754 = vand.u32 2147483647, %v2498
        %v2755 = vand.u32 2147483647, %v2499
        %v2756 = vand.u32 2147483647, %v2500
        %v2757 = vand.u32 2147483647, %v2501
        %v2758 = vand.u32 2147483647, %v2502
        %v2759 = vand.u32 2147483647, %v2503
        %v2760 = vand.u32 2147483647, %v2504
        %v2761 = vand.u32 2147483647, %v2505
        %v2762 = vand.u32 2147483647, %v2506
        %v2763 = vand.u32 2147483647, %v2507
        %v2764 = vand.u32 2147483647, %v2508
        %v2765 = vand.u32 2147483647, %v2509
        %v2766 = vand.u32 2147483647, %v2510
        %v2767 = vand.u32 2147483647, %v2511
        %v2768 = vand.u32 2147483647, %v2512
        %v2769 = vand.u32 2147483647, %v2513
        %v2770 = vand.u32 2147483647, %v2514
        %v2771 = vand.u32 2147483647, %v2515
        %v2772 = vand.u32 2147483647, %v2516
        %v2773 = vand.u32 2147483647, %v2517
        %v2774 = vand.u32 2147483647, %v2518
        %v2775 = vand.u32 2147483647, %v2519
        %v2776 = vand.u32 2147483647, %v2520
        %v2777 = vand.u32 2147483647, %v2521
        %v2778 = vand.u32 2147483647, %v2522
        %v2779 = vand.u32 2147483647, %v2523
        %v2780 = vand.u32 2147483647, %v2524
        %v2781 = vand.u32 2147483647, %v2525
        %v2782 = vand.u32 2147483647, %v2526
        %v2783 = vand.u32 2147483647, %v2527
        %v2784 = vand.u32 2147483647, %v2528
        %v2785 = vand.u32 2147483647, %v2529
        %v2786 = vand.u32 2147483647, %v2530
        %v2787 = vand.u32 2147483647, %v2531
        %v2788 = vand.u32 2147483647, %v2532
        %v2789 = vand.u32 2147483647, %v2533
        %v2790 = vand.u32 2147483647, %v2534
        %v2791 = vand.u32 2147483647, %v2535
        %v2792 = vand.u32 2147483647, %v2536
        %v2793 = vand.u32 2147483647, %v2537
        %v2794 = vand.u32 2147483647, %v2538
        %v2795 = vand.u32 2147483647, %v2539
        %v2796 = vand.u32 2147483647, %v2540
        %v2797 = vand.u32 2147483647, %v2541
        %v2798 = vand.u32 2147483647, %v2542
        %v2799 = vsub.f32 0.0, %v2735
        %v2800 = vsub.f32 0.0, %v2736
        %v2801 = vsub.f32 0.0, %v2737
        %v2802 = vsub.f32 0.0, %v2738
        %v2803 = vsub.f32 0.0, %v2739
        %v2804 = vsub.f32 0.0, %v2740
        %v2805 = vsub.f32 0.0, %v2741
        %v2806 = vsub.f32 0.0, %v2742
        %v2807 = vsub.f32 0.0, %v2743
        %v2808 = vsub.f32 0.0, %v2744
        %v2809 = vsub.f32 0.0, %v2745
        %v2810 = vsub.f32 0.0, %v2746
        %v2811 = vsub.f32 0.0, %v2747
        %v2812 = vsub.f32 0.0, %v2748
        %v2813 = vsub.f32 0.0, %v2749
        %v2814 = vsub.f32 0.0, %v2750
        %v2815 = vsub.f32 0.0, %v2751
        %v2816 = vsub.f32 0.0, %v2752
        %v2817 = vsub.f32 0.0, %v2753
        %v2818 = vsub.f32 0.0, %v2754
        %v2819 = vsub.f32 0.0, %v2755
        %v2820 = vsub.f32 0.0, %v2756
        %v2821 = vsub.f32 0.0, %v2757
        %v2822 = vsub.f32 0.0, %v2758
        %v2823 = vsub.f32 0.0, %v2759
        %v2824 = vsub.f32 0.0, %v2760
        %v2825 = vsub.f32 0.0, %v2761
        %v2826 = vsub.f32 0.0, %v2762
        %v2827 = vsub.f32 0.0, %v2763
        %v2828 = vsub.f32 0.0, %v2764
        %v2829 = vsub.f32 0.0, %v2765
        %v2830 = vsub.f32 0.0, %v2766
        %v2831 = vsub.f32 0.0, %v2767
        %v2832 = vsub.f32 0.0, %v2768
        %v2833 = vsub.f32 0.0, %v2769
        %v2834 = vsub.f32 0.0, %v2770
        %v2835 = vsub.f32 0.0, %v2771
        %v2836 = vsub.f32 0.0, %v2772
        %v2837 = vsub.f32 0.0, %v2773
        %v2838 = vsub.f32 0.0, %v2774
        %v2839 = vsub.f32 0.0, %v2775
        %v2840 = vsub.f32 0.0, %v2776
        %v2841 = vsub.f32 0.0, %v2777
        %v2842 = vsub.f32 0.0, %v2778
        %v2843 = vsub.f32 0.0, %v2779
        %v2844 = vsub.f32 0.0, %v2780
        %v2845 = vsub.f32 0.0, %v2781
        %v2846 = vsub.f32 0.0, %v2782
        %v2847 = vsub.f32 0.0, %v2783
        %v2848 = vsub.f32 0.0, %v2784
        %v2849 = vsub.f32 0.0, %v2785
        %v2850 = vsub.f32 0.0, %v2786
        %v2851 = vsub.f32 0.0, %v2787
        %v2852 = vsub.f32 0.0, %v2788
        %v2853 = vsub.f32 0.0, %v2789
        %v2854 = vsub.f32 0.0, %v2790
        %v2855 = vsub.f32 0.0, %v2791
        %v2856 = vsub.f32 0.0, %v2792
        %v2857 = vsub.f32 0.0, %v2793
        %v2858 = vsub.f32 0.0, %v2794
        %v2859 = vsub.f32 0.0, %v2795
        %v2860 = vsub.f32 0.0, %v2796
        %v2861 = vsub.f32 0.0, %v2797
        %v2862 = vsub.f32 0.0, %v2798
        %v2863 = vmul.f32 %v2799, 1.442695
        %v2864 = vpow.pop %v2863
        %v2865 = vmul.f32 %v2800, 1.442695
        %v2866 = vpow.pop %v2865
        %v2867 = vmul.f32 %v2801, 1.442695
        %v2868 = vpow.pop %v2867
        %v2869 = vmul.f32 %v2802, 1.442695
        %v2870 = vpow.pop %v2869
        %v2871 = vmul.f32 %v2803, 1.442695
        %v2872 = vpow.pop %v2871
        %v2873 = vmul.f32 %v2804, 1.442695
        %v2874 = vpow.pop %v2873
        %v2875 = vmul.f32 %v2805, 1.442695
        %v2876 = vpow.pop %v2875
        %v2877 = vmul.f32 %v2806, 1.442695
        %v2878 = vpow.pop %v2877
        %v2879 = vmul.f32 %v2807, 1.442695
        %v2880 = vpow.pop %v2879
        %v2881 = vmul.f32 %v2808, 1.442695
        %v2882 = vpow.pop %v2881
        %v2883 = vmul.f32 %v2809, 1.442695
        %v2884 = vpow.pop %v2883
        %v2885 = vmul.f32 %v2810, 1.442695
        %v2886 = vpow.pop %v2885
        %v2887 = vmul.f32 %v2811, 1.442695
        %v2888 = vpow.pop %v2887
        %v2889 = vmul.f32 %v2812, 1.442695
        %v2890 = vpow.pop %v2889
        %v2891 = vmul.f32 %v2813, 1.442695
        %v2892 = vpow.pop %v2891
        %v2893 = vmul.f32 %v2814, 1.442695
        %v2894 = vpow.pop %v2893
        %v2895 = vmul.f32 %v2815, 1.442695
        %v2896 = vpow.pop %v2895
        %v2897 = vmul.f32 %v2816, 1.442695
        %v2898 = vpow.pop %v2897
        %v2899 = vmul.f32 %v2817, 1.442695
        %v2900 = vpow.pop %v2899
        %v2901 = vmul.f32 %v2818, 1.442695
        %v2902 = vpow.pop %v2901
        %v2903 = vmul.f32 %v2819, 1.442695
        %v2904 = vpow.pop %v2903
        %v2905 = vmul.f32 %v2820, 1.442695
        %v2906 = vpow.pop %v2905
        %v2907 = vmul.f32 %v2821, 1.442695
        %v2908 = vpow.pop %v2907
        %v2909 = vmul.f32 %v2822, 1.442695
        %v2910 = vpow.pop %v2909
        %v2911 = vmul.f32 %v2823, 1.442695
        %v2912 = vpow.pop %v2911
        %v2913 = vmul.f32 %v2824, 1.442695
        %v2914 = vpow.pop %v2913
        %v2915 = vmul.f32 %v2825, 1.442695
        %v2916 = vpow.pop %v2915
        %v2917 = vmul.f32 %v2826, 1.442695
        %v2918 = vpow.pop %v2917
        %v2919 = vmul.f32 %v2827, 1.442695
        %v2920 = vpow.pop %v2919
        %v2921 = vmul.f32 %v2828, 1.442695
        %v2922 = vpow.pop %v2921
        %v2923 = vmul.f32 %v2829, 1.442695
        %v2924 = vpow.pop %v2923
        %v2925 = vmul.f32 %v2830, 1.442695
        %v2926 = vpow.pop %v2925
        %v2927 = vmul.f32 %v2831, 1.442695
        %v2928 = vpow.pop %v2927
        %v2929 = vmul.f32 %v2832, 1.442695
        %v2930 = vpow.pop %v2929
        %v2931 = vmul.f32 %v2833, 1.442695
        %v2932 = vpow.pop %v2931
        %v2933 = vmul.f32 %v2834, 1.442695
        %v2934 = vpow.pop %v2933
        %v2935 = vmul.f32 %v2835, 1.442695
        %v2936 = vpow.pop %v2935
        %v2937 = vmul.f32 %v2836, 1.442695
        %v2938 = vpow.pop %v2937
        %v2939 = vmul.f32 %v2837, 1.442695
        %v2940 = vpow.pop %v2939
        %v2941 = vmul.f32 %v2838, 1.442695
        %v2942 = vpow.pop %v2941
        %v2943 = vmul.f32 %v2839, 1.442695
        %v2944 = vpow.pop %v2943
        %v2945 = vmul.f32 %v2840, 1.442695
        %v2946 = vpow.pop %v2945
        %v2947 = vmul.f32 %v2841, 1.442695
        %v2948 = vpow.pop %v2947
        %v2949 = vmul.f32 %v2842, 1.442695
        %v2950 = vpow.pop %v2949
        %v2951 = vmul.f32 %v2843, 1.442695
        %v2952 = vpow.pop %v2951
        %v2953 = vmul.f32 %v2844, 1.442695
        %v2954 = vpow.pop %v2953
        %v2955 = vmul.f32 %v2845, 1.442695
        %v2956 = vpow.pop %v2955
        %v2957 = vmul.f32 %v2846, 1.442695
        %v2958 = vpow.pop %v2957
        %v2959 = vmul.f32 %v2847, 1.442695
        %v2960 = vpow.pop %v2959
        %v2961 = vmul.f32 %v2848, 1.442695
        %v2962 = vpow.pop %v2961
        %v2963 = vmul.f32 %v2849, 1.442695
        %v2964 = vpow.pop %v2963
        %v2965 = vmul.f32 %v2850, 1.442695
        %v2966 = vpow.pop %v2965
        %v2967 = vmul.f32 %v2851, 1.442695
        %v2968 = vpow.pop %v2967
        %v2969 = vmul.f32 %v2852, 1.442695
        %v2970 = vpow.pop %v2969
        %v2971 = vmul.f32 %v2853, 1.442695
        %v2972 = vpow.pop %v2971
        %v2973 = vmul.f32 %v2854, 1.442695
        %v2974 = vpow.pop %v2973
        %v2975 = vmul.f32 %v2855, 1.442695
        %v2976 = vpow.pop %v2975
        %v2977 = vmul.f32 %v2856, 1.442695
        %v2978 = vpow.pop %v2977
        %v2979 = vmul.f32 %v2857, 1.442695
        %v2980 = vpow.pop %v2979
        %v2981 = vmul.f32 %v2858, 1.442695
        %v2982 = vpow.pop %v2981
        %v2983 = vmul.f32 %v2859, 1.442695
        %v2984 = vpow.pop %v2983
        %v2985 = vmul.f32 %v2860, 1.442695
        %v2986 = vpow.pop %v2985
        %v2987 = vmul.f32 %v2861, 1.442695
        %v2988 = vpow.pop %v2987
        %v2989 = vmul.f32 %v2862, 1.442695
        %v2990 = vpow.pop %v2989
        %v2991 = vadd.f32 %v2864, 1.0
        %v2992 = vlog2.pop %v2991
        %v2993 = vmul.f32 %v2992, 0.6931472
        %v2994 = vmul.f32 -0.5, %v2864
        %v2995 = vadd.f32 %v2994, 1.0
        %v2996 = vmul.f32 %v2995, %v2864
        %v2997 = vand.u32 2147483647, %v2864
        %vm2998 = vcmp.lt.f32.partialorder %v2997, 0.0004427343
        %v2999 = vsel %vm2998, %v2996, %v2993
        %v3000 = vadd.f32 %v2866, 1.0
        %v3001 = vlog2.pop %v3000
        %v3002 = vmul.f32 %v3001, 0.6931472
        %v3003 = vmul.f32 -0.5, %v2866
        %v3004 = vadd.f32 %v3003, 1.0
        %v3005 = vmul.f32 %v3004, %v2866
        %v3006 = vand.u32 2147483647, %v2866
        %vm3007 = vcmp.lt.f32.partialorder %v3006, 0.0004427343
        %v3008 = vsel %vm3007, %v3005, %v3002
        %v3009 = vadd.f32 %v2868, 1.0
        %v3010 = vlog2.pop %v3009
        %v3011 = vmul.f32 %v3010, 0.6931472
        %v3012 = vmul.f32 -0.5, %v2868
        %v3013 = vadd.f32 %v3012, 1.0
        %v3014 = vmul.f32 %v3013, %v2868
        %v3015 = vand.u32 2147483647, %v2868
        %vm3016 = vcmp.lt.f32.partialorder %v3015, 0.0004427343
        %v3017 = vsel %vm3016, %v3014, %v3011
        %v3018 = vadd.f32 %v2870, 1.0
        %v3019 = vlog2.pop %v3018
        %v3020 = vmul.f32 %v3019, 0.6931472
        %v3021 = vmul.f32 -0.5, %v2870
        %v3022 = vadd.f32 %v3021, 1.0
        %v3023 = vmul.f32 %v3022, %v2870
        %v3024 = vand.u32 2147483647, %v2870
        %vm3025 = vcmp.lt.f32.partialorder %v3024, 0.0004427343
        %v3026 = vsel %vm3025, %v3023, %v3020
        %v3027 = vadd.f32 %v2872, 1.0
        %v3028 = vlog2.pop %v3027
        %v3029 = vmul.f32 %v3028, 0.6931472
        %v3030 = vmul.f32 -0.5, %v2872
        %v3031 = vadd.f32 %v3030, 1.0
        %v3032 = vmul.f32 %v3031, %v2872
        %v3033 = vand.u32 2147483647, %v2872
        %vm3034 = vcmp.lt.f32.partialorder %v3033, 0.0004427343
        %v3035 = vsel %vm3034, %v3032, %v3029
        %v3036 = vadd.f32 %v2874, 1.0
        %v3037 = vlog2.pop %v3036
        %v3038 = vmul.f32 %v3037, 0.6931472
        %v3039 = vmul.f32 -0.5, %v2874
        %v3040 = vadd.f32 %v3039, 1.0
        %v3041 = vmul.f32 %v3040, %v2874
        %v3042 = vand.u32 2147483647, %v2874
        %vm3043 = vcmp.lt.f32.partialorder %v3042, 0.0004427343
        %v3044 = vsel %vm3043, %v3041, %v3038
        %v3045 = vadd.f32 %v2876, 1.0
        %v3046 = vlog2.pop %v3045
        %v3047 = vmul.f32 %v3046, 0.6931472
        %v3048 = vmul.f32 -0.5, %v2876
        %v3049 = vadd.f32 %v3048, 1.0
        %v3050 = vmul.f32 %v3049, %v2876
        %v3051 = vand.u32 2147483647, %v2876
        %vm3052 = vcmp.lt.f32.partialorder %v3051, 0.0004427343
        %v3053 = vsel %vm3052, %v3050, %v3047
        %v3054 = vadd.f32 %v2878, 1.0
        %v3055 = vlog2.pop %v3054
        %v3056 = vmul.f32 %v3055, 0.6931472
        %v3057 = vmul.f32 -0.5, %v2878
        %v3058 = vadd.f32 %v3057, 1.0
        %v3059 = vmul.f32 %v3058, %v2878
        %v3060 = vand.u32 2147483647, %v2878
        %vm3061 = vcmp.lt.f32.partialorder %v3060, 0.0004427343
        %v3062 = vsel %vm3061, %v3059, %v3056
        %v3063 = vadd.f32 %v2880, 1.0
        %v3064 = vlog2.pop %v3063
        %v3065 = vmul.f32 %v3064, 0.6931472
        %v3066 = vmul.f32 -0.5, %v2880
        %v3067 = vadd.f32 %v3066, 1.0
        %v3068 = vmul.f32 %v3067, %v2880
        %v3069 = vand.u32 2147483647, %v2880
        %vm3070 = vcmp.lt.f32.partialorder %v3069, 0.0004427343
        %v3071 = vsel %vm3070, %v3068, %v3065
        %v3072 = vadd.f32 %v2882, 1.0
        %v3073 = vlog2.pop %v3072
        %v3074 = vmul.f32 %v3073, 0.6931472
        %v3075 = vmul.f32 -0.5, %v2882
        %v3076 = vadd.f32 %v3075, 1.0
        %v3077 = vmul.f32 %v3076, %v2882
        %v3078 = vand.u32 2147483647, %v2882
        %vm3079 = vcmp.lt.f32.partialorder %v3078, 0.0004427343
        %v3080 = vsel %vm3079, %v3077, %v3074
        %v3081 = vadd.f32 %v2884, 1.0
        %v3082 = vlog2.pop %v3081
        %v3083 = vmul.f32 %v3082, 0.6931472
        %v3084 = vmul.f32 -0.5, %v2884
        %v3085 = vadd.f32 %v3084, 1.0
        %v3086 = vmul.f32 %v3085, %v2884
        %v3087 = vand.u32 2147483647, %v2884
        %vm3088 = vcmp.lt.f32.partialorder %v3087, 0.0004427343
        %v3089 = vsel %vm3088, %v3086, %v3083
        %v3090 = vadd.f32 %v2886, 1.0
        %v3091 = vlog2.pop %v3090
        %v3092 = vmul.f32 %v3091, 0.6931472
        %v3093 = vmul.f32 -0.5, %v2886
        %v3094 = vadd.f32 %v3093, 1.0
        %v3095 = vmul.f32 %v3094, %v2886
        %v3096 = vand.u32 2147483647, %v2886
        %vm3097 = vcmp.lt.f32.partialorder %v3096, 0.0004427343
        %v3098 = vsel %vm3097, %v3095, %v3092
        %v3099 = vadd.f32 %v2888, 1.0
        %v3100 = vlog2.pop %v3099
        %v3101 = vmul.f32 %v3100, 0.6931472
        %v3102 = vmul.f32 -0.5, %v2888
        %v3103 = vadd.f32 %v3102, 1.0
        %v3104 = vmul.f32 %v3103, %v2888
        %v3105 = vand.u32 2147483647, %v2888
        %vm3106 = vcmp.lt.f32.partialorder %v3105, 0.0004427343
        %v3107 = vsel %vm3106, %v3104, %v3101
        %v3108 = vadd.f32 %v2890, 1.0
        %v3109 = vlog2.pop %v3108
        %v3110 = vmul.f32 %v3109, 0.6931472
        %v3111 = vmul.f32 -0.5, %v2890
        %v3112 = vadd.f32 %v3111, 1.0
        %v3113 = vmul.f32 %v3112, %v2890
        %v3114 = vand.u32 2147483647, %v2890
        %vm3115 = vcmp.lt.f32.partialorder %v3114, 0.0004427343
        %v3116 = vsel %vm3115, %v3113, %v3110
        %v3117 = vadd.f32 %v2892, 1.0
        %v3118 = vlog2.pop %v3117
        %v3119 = vmul.f32 %v3118, 0.6931472
        %v3120 = vmul.f32 -0.5, %v2892
        %v3121 = vadd.f32 %v3120, 1.0
        %v3122 = vmul.f32 %v3121, %v2892
        %v3123 = vand.u32 2147483647, %v2892
        %vm3124 = vcmp.lt.f32.partialorder %v3123, 0.0004427343
        %v3125 = vsel %vm3124, %v3122, %v3119
        %v3126 = vadd.f32 %v2894, 1.0
        %v3127 = vlog2.pop %v3126
        %v3128 = vmul.f32 %v3127, 0.6931472
        %v3129 = vmul.f32 -0.5, %v2894
        %v3130 = vadd.f32 %v3129, 1.0
        %v3131 = vmul.f32 %v3130, %v2894
        %v3132 = vand.u32 2147483647, %v2894
        %vm3133 = vcmp.lt.f32.partialorder %v3132, 0.0004427343
        %v3134 = vsel %vm3133, %v3131, %v3128
        %v3135 = vadd.f32 %v2896, 1.0
        %v3136 = vlog2.pop %v3135
        %v3137 = vmul.f32 %v3136, 0.6931472
        %v3138 = vmul.f32 -0.5, %v2896
        %v3139 = vadd.f32 %v3138, 1.0
        %v3140 = vmul.f32 %v3139, %v2896
        %v3141 = vand.u32 2147483647, %v2896
        %vm3142 = vcmp.lt.f32.partialorder %v3141, 0.0004427343
        %v3143 = vsel %vm3142, %v3140, %v3137
        %v3144 = vadd.f32 %v2898, 1.0
        %v3145 = vlog2.pop %v3144
        %v3146 = vmul.f32 %v3145, 0.6931472
        %v3147 = vmul.f32 -0.5, %v2898
        %v3148 = vadd.f32 %v3147, 1.0
        %v3149 = vmul.f32 %v3148, %v2898
        %v3150 = vand.u32 2147483647, %v2898
        %vm3151 = vcmp.lt.f32.partialorder %v3150, 0.0004427343
        %v3152 = vsel %vm3151, %v3149, %v3146
        %v3153 = vadd.f32 %v2900, 1.0
        %v3154 = vlog2.pop %v3153
        %v3155 = vmul.f32 %v3154, 0.6931472
        %v3156 = vmul.f32 -0.5, %v2900
        %v3157 = vadd.f32 %v3156, 1.0
        %v3158 = vmul.f32 %v3157, %v2900
        %v3159 = vand.u32 2147483647, %v2900
        %vm3160 = vcmp.lt.f32.partialorder %v3159, 0.0004427343
        %v3161 = vsel %vm3160, %v3158, %v3155
        %v3162 = vadd.f32 %v2902, 1.0
        %v3163 = vlog2.pop %v3162
        %v3164 = vmul.f32 %v3163, 0.6931472
        %v3165 = vmul.f32 -0.5, %v2902
        %v3166 = vadd.f32 %v3165, 1.0
        %v3167 = vmul.f32 %v3166, %v2902
        %v3168 = vand.u32 2147483647, %v2902
        %vm3169 = vcmp.lt.f32.partialorder %v3168, 0.0004427343
        %v3170 = vsel %vm3169, %v3167, %v3164
        %v3171 = vadd.f32 %v2904, 1.0
        %v3172 = vlog2.pop %v3171
        %v3173 = vmul.f32 %v3172, 0.6931472
        %v3174 = vmul.f32 -0.5, %v2904
        %v3175 = vadd.f32 %v3174, 1.0
        %v3176 = vmul.f32 %v3175, %v2904
        %v3177 = vand.u32 2147483647, %v2904
        %vm3178 = vcmp.lt.f32.partialorder %v3177, 0.0004427343
        %v3179 = vsel %vm3178, %v3176, %v3173
        %v3180 = vadd.f32 %v2906, 1.0
        %v3181 = vlog2.pop %v3180
        %v3182 = vmul.f32 %v3181, 0.6931472
        %v3183 = vmul.f32 -0.5, %v2906
        %v3184 = vadd.f32 %v3183, 1.0
        %v3185 = vmul.f32 %v3184, %v2906
        %v3186 = vand.u32 2147483647, %v2906
        %vm3187 = vcmp.lt.f32.partialorder %v3186, 0.0004427343
        %v3188 = vsel %vm3187, %v3185, %v3182
        %v3189 = vadd.f32 %v2908, 1.0
        %v3190 = vlog2.pop %v3189
        %v3191 = vmul.f32 %v3190, 0.6931472
        %v3192 = vmul.f32 -0.5, %v2908
        %v3193 = vadd.f32 %v3192, 1.0
        %v3194 = vmul.f32 %v3193, %v2908
        %v3195 = vand.u32 2147483647, %v2908
        %vm3196 = vcmp.lt.f32.partialorder %v3195, 0.0004427343
        %v3197 = vsel %vm3196, %v3194, %v3191
        %v3198 = vadd.f32 %v2910, 1.0
        %v3199 = vlog2.pop %v3198
        %v3200 = vmul.f32 %v3199, 0.6931472
        %v3201 = vmul.f32 -0.5, %v2910
        %v3202 = vadd.f32 %v3201, 1.0
        %v3203 = vmul.f32 %v3202, %v2910
        %v3204 = vand.u32 2147483647, %v2910
        %vm3205 = vcmp.lt.f32.partialorder %v3204, 0.0004427343
        %v3206 = vsel %vm3205, %v3203, %v3200
        %v3207 = vadd.f32 %v2912, 1.0
        %v3208 = vlog2.pop %v3207
        %v3209 = vmul.f32 %v3208, 0.6931472
        %v3210 = vmul.f32 -0.5, %v2912
        %v3211 = vadd.f32 %v3210, 1.0
        %v3212 = vmul.f32 %v3211, %v2912
        %v3213 = vand.u32 2147483647, %v2912
        %vm3214 = vcmp.lt.f32.partialorder %v3213, 0.0004427343
        %v3215 = vsel %vm3214, %v3212, %v3209
        %v3216 = vadd.f32 %v2914, 1.0
        %v3217 = vlog2.pop %v3216
        %v3218 = vmul.f32 %v3217, 0.6931472
        %v3219 = vmul.f32 -0.5, %v2914
        %v3220 = vadd.f32 %v3219, 1.0
        %v3221 = vmul.f32 %v3220, %v2914
        %v3222 = vand.u32 2147483647, %v2914
        %vm3223 = vcmp.lt.f32.partialorder %v3222, 0.0004427343
        %v3224 = vsel %vm3223, %v3221, %v3218
        %v3225 = vadd.f32 %v2916, 1.0
        %v3226 = vlog2.pop %v3225
        %v3227 = vmul.f32 %v3226, 0.6931472
        %v3228 = vmul.f32 -0.5, %v2916
        %v3229 = vadd.f32 %v3228, 1.0
        %v3230 = vmul.f32 %v3229, %v2916
        %v3231 = vand.u32 2147483647, %v2916
        %vm3232 = vcmp.lt.f32.partialorder %v3231, 0.0004427343
        %v3233 = vsel %vm3232, %v3230, %v3227
        %v3234 = vadd.f32 %v2918, 1.0
        %v3235 = vlog2.pop %v3234
        %v3236 = vmul.f32 %v3235, 0.6931472
        %v3237 = vmul.f32 -0.5, %v2918
        %v3238 = vadd.f32 %v3237, 1.0
        %v3239 = vmul.f32 %v3238, %v2918
        %v3240 = vand.u32 2147483647, %v2918
        %vm3241 = vcmp.lt.f32.partialorder %v3240, 0.0004427343
        %v3242 = vsel %vm3241, %v3239, %v3236
        %v3243 = vadd.f32 %v2920, 1.0
        %v3244 = vlog2.pop %v3243
        %v3245 = vmul.f32 %v3244, 0.6931472
        %v3246 = vmul.f32 -0.5, %v2920
        %v3247 = vadd.f32 %v3246, 1.0
        %v3248 = vmul.f32 %v3247, %v2920
        %v3249 = vand.u32 2147483647, %v2920
        %vm3250 = vcmp.lt.f32.partialorder %v3249, 0.0004427343
        %v3251 = vsel %vm3250, %v3248, %v3245
        %v3252 = vadd.f32 %v2922, 1.0
        %v3253 = vlog2.pop %v3252
        %v3254 = vmul.f32 %v3253, 0.6931472
        %v3255 = vmul.f32 -0.5, %v2922
        %v3256 = vadd.f32 %v3255, 1.0
        %v3257 = vmul.f32 %v3256, %v2922
        %v3258 = vand.u32 2147483647, %v2922
        %vm3259 = vcmp.lt.f32.partialorder %v3258, 0.0004427343
        %v3260 = vsel %vm3259, %v3257, %v3254
        %v3261 = vadd.f32 %v2924, 1.0
        %v3262 = vlog2.pop %v3261
        %v3263 = vmul.f32 %v3262, 0.6931472
        %v3264 = vmul.f32 -0.5, %v2924
        %v3265 = vadd.f32 %v3264, 1.0
        %v3266 = vmul.f32 %v3265, %v2924
        %v3267 = vand.u32 2147483647, %v2924
        %vm3268 = vcmp.lt.f32.partialorder %v3267, 0.0004427343
        %v3269 = vsel %vm3268, %v3266, %v3263
        %v3270 = vadd.f32 %v2926, 1.0
        %v3271 = vlog2.pop %v3270
        %v3272 = vmul.f32 %v3271, 0.6931472
        %v3273 = vmul.f32 -0.5, %v2926
        %v3274 = vadd.f32 %v3273, 1.0
        %v3275 = vmul.f32 %v3274, %v2926
        %v3276 = vand.u32 2147483647, %v2926
        %vm3277 = vcmp.lt.f32.partialorder %v3276, 0.0004427343
        %v3278 = vsel %vm3277, %v3275, %v3272
        %v3279 = vadd.f32 %v2928, 1.0
        %v3280 = vlog2.pop %v3279
        %v3281 = vmul.f32 %v3280, 0.6931472
        %v3282 = vmul.f32 -0.5, %v2928
        %v3283 = vadd.f32 %v3282, 1.0
        %v3284 = vmul.f32 %v3283, %v2928
        %v3285 = vand.u32 2147483647, %v2928
        %vm3286 = vcmp.lt.f32.partialorder %v3285, 0.0004427343
        %v3287 = vsel %vm3286, %v3284, %v3281
        %v3288 = vadd.f32 %v2930, 1.0
        %v3289 = vlog2.pop %v3288
        %v3290 = vmul.f32 %v3289, 0.6931472
        %v3291 = vmul.f32 -0.5, %v2930
        %v3292 = vadd.f32 %v3291, 1.0
        %v3293 = vmul.f32 %v3292, %v2930
        %v3294 = vand.u32 2147483647, %v2930
        %vm3295 = vcmp.lt.f32.partialorder %v3294, 0.0004427343
        %v3296 = vsel %vm3295, %v3293, %v3290
        %v3297 = vadd.f32 %v2932, 1.0
        %v3298 = vlog2.pop %v3297
        %v3299 = vmul.f32 %v3298, 0.6931472
        %v3300 = vmul.f32 -0.5, %v2932
        %v3301 = vadd.f32 %v3300, 1.0
        %v3302 = vmul.f32 %v3301, %v2932
        %v3303 = vand.u32 2147483647, %v2932
        %vm3304 = vcmp.lt.f32.partialorder %v3303, 0.0004427343
        %v3305 = vsel %vm3304, %v3302, %v3299
        %v3306 = vadd.f32 %v2934, 1.0
        %v3307 = vlog2.pop %v3306
        %v3308 = vmul.f32 %v3307, 0.6931472
        %v3309 = vmul.f32 -0.5, %v2934
        %v3310 = vadd.f32 %v3309, 1.0
        %v3311 = vmul.f32 %v3310, %v2934
        %v3312 = vand.u32 2147483647, %v2934
        %vm3313 = vcmp.lt.f32.partialorder %v3312, 0.0004427343
        %v3314 = vsel %vm3313, %v3311, %v3308
        %v3315 = vadd.f32 %v2936, 1.0
        %v3316 = vlog2.pop %v3315
        %v3317 = vmul.f32 %v3316, 0.6931472
        %v3318 = vmul.f32 -0.5, %v2936
        %v3319 = vadd.f32 %v3318, 1.0
        %v3320 = vmul.f32 %v3319, %v2936
        %v3321 = vand.u32 2147483647, %v2936
        %vm3322 = vcmp.lt.f32.partialorder %v3321, 0.0004427343
        %v3323 = vsel %vm3322, %v3320, %v3317
        %v3324 = vadd.f32 %v2938, 1.0
        %v3325 = vlog2.pop %v3324
        %v3326 = vmul.f32 %v3325, 0.6931472
        %v3327 = vmul.f32 -0.5, %v2938
        %v3328 = vadd.f32 %v3327, 1.0
        %v3329 = vmul.f32 %v3328, %v2938
        %v3330 = vand.u32 2147483647, %v2938
        %vm3331 = vcmp.lt.f32.partialorder %v3330, 0.0004427343
        %v3332 = vsel %vm3331, %v3329, %v3326
        %v3333 = vadd.f32 %v2940, 1.0
        %v3334 = vlog2.pop %v3333
        %v3335 = vmul.f32 %v3334, 0.6931472
        %v3336 = vmul.f32 -0.5, %v2940
        %v3337 = vadd.f32 %v3336, 1.0
        %v3338 = vmul.f32 %v3337, %v2940
        %v3339 = vand.u32 2147483647, %v2940
        %vm3340 = vcmp.lt.f32.partialorder %v3339, 0.0004427343
        %v3341 = vsel %vm3340, %v3338, %v3335
        %v3342 = vadd.f32 %v2942, 1.0
        %v3343 = vlog2.pop %v3342
        %v3344 = vmul.f32 %v3343, 0.6931472
        %v3345 = vmul.f32 -0.5, %v2942
        %v3346 = vadd.f32 %v3345, 1.0
        %v3347 = vmul.f32 %v3346, %v2942
        %v3348 = vand.u32 2147483647, %v2942
        %vm3349 = vcmp.lt.f32.partialorder %v3348, 0.0004427343
        %v3350 = vsel %vm3349, %v3347, %v3344
        %v3351 = vadd.f32 %v2944, 1.0
        %v3352 = vlog2.pop %v3351
        %v3353 = vmul.f32 %v3352, 0.6931472
        %v3354 = vmul.f32 -0.5, %v2944
        %v3355 = vadd.f32 %v3354, 1.0
        %v3356 = vmul.f32 %v3355, %v2944
        %v3357 = vand.u32 2147483647, %v2944
        %vm3358 = vcmp.lt.f32.partialorder %v3357, 0.0004427343
        %v3359 = vsel %vm3358, %v3356, %v3353
        %v3360 = vadd.f32 %v2946, 1.0
        %v3361 = vlog2.pop %v3360
        %v3362 = vmul.f32 %v3361, 0.6931472
        %v3363 = vmul.f32 -0.5, %v2946
        %v3364 = vadd.f32 %v3363, 1.0
        %v3365 = vmul.f32 %v3364, %v2946
        %v3366 = vand.u32 2147483647, %v2946
        %vm3367 = vcmp.lt.f32.partialorder %v3366, 0.0004427343
        %v3368 = vsel %vm3367, %v3365, %v3362
        %v3369 = vadd.f32 %v2948, 1.0
        %v3370 = vlog2.pop %v3369
        %v3371 = vmul.f32 %v3370, 0.6931472
        %v3372 = vmul.f32 -0.5, %v2948
        %v3373 = vadd.f32 %v3372, 1.0
        %v3374 = vmul.f32 %v3373, %v2948
        %v3375 = vand.u32 2147483647, %v2948
        %vm3376 = vcmp.lt.f32.partialorder %v3375, 0.0004427343
        %v3377 = vsel %vm3376, %v3374, %v3371
        %v3378 = vadd.f32 %v2950, 1.0
        %v3379 = vlog2.pop %v3378
        %v3380 = vmul.f32 %v3379, 0.6931472
        %v3381 = vmul.f32 -0.5, %v2950
        %v3382 = vadd.f32 %v3381, 1.0
        %v3383 = vmul.f32 %v3382, %v2950
        %v3384 = vand.u32 2147483647, %v2950
        %vm3385 = vcmp.lt.f32.partialorder %v3384, 0.0004427343
        %v3386 = vsel %vm3385, %v3383, %v3380
        %v3387 = vadd.f32 %v2952, 1.0
        %v3388 = vlog2.pop %v3387
        %v3389 = vmul.f32 %v3388, 0.6931472
        %v3390 = vmul.f32 -0.5, %v2952
        %v3391 = vadd.f32 %v3390, 1.0
        %v3392 = vmul.f32 %v3391, %v2952
        %v3393 = vand.u32 2147483647, %v2952
        %vm3394 = vcmp.lt.f32.partialorder %v3393, 0.0004427343
        %v3395 = vsel %vm3394, %v3392, %v3389
        %v3396 = vadd.f32 %v2954, 1.0
        %v3397 = vlog2.pop %v3396
        %v3398 = vmul.f32 %v3397, 0.6931472
        %v3399 = vmul.f32 -0.5, %v2954
        %v3400 = vadd.f32 %v3399, 1.0
        %v3401 = vmul.f32 %v3400, %v2954
        %v3402 = vand.u32 2147483647, %v2954
        %vm3403 = vcmp.lt.f32.partialorder %v3402, 0.0004427343
        %v3404 = vsel %vm3403, %v3401, %v3398
        %v3405 = vadd.f32 %v2956, 1.0
        %v3406 = vlog2.pop %v3405
        %v3407 = vmul.f32 %v3406, 0.6931472
        %v3408 = vmul.f32 -0.5, %v2956
        %v3409 = vadd.f32 %v3408, 1.0
        %v3410 = vmul.f32 %v3409, %v2956
        %v3411 = vand.u32 2147483647, %v2956
        %vm3412 = vcmp.lt.f32.partialorder %v3411, 0.0004427343
        %v3413 = vsel %vm3412, %v3410, %v3407
        %v3414 = vadd.f32 %v2958, 1.0
        %v3415 = vlog2.pop %v3414
        %v3416 = vmul.f32 %v3415, 0.6931472
        %v3417 = vmul.f32 -0.5, %v2958
        %v3418 = vadd.f32 %v3417, 1.0
        %v3419 = vmul.f32 %v3418, %v2958
        %v3420 = vand.u32 2147483647, %v2958
        %vm3421 = vcmp.lt.f32.partialorder %v3420, 0.0004427343
        %v3422 = vsel %vm3421, %v3419, %v3416
        %v3423 = vadd.f32 %v2960, 1.0
        %v3424 = vlog2.pop %v3423
        %v3425 = vmul.f32 %v3424, 0.6931472
        %v3426 = vmul.f32 -0.5, %v2960
        %v3427 = vadd.f32 %v3426, 1.0
        %v3428 = vmul.f32 %v3427, %v2960
        %v3429 = vand.u32 2147483647, %v2960
        %vm3430 = vcmp.lt.f32.partialorder %v3429, 0.0004427343
        %v3431 = vsel %vm3430, %v3428, %v3425
        %v3432 = vadd.f32 %v2962, 1.0
        %v3433 = vlog2.pop %v3432
        %v3434 = vmul.f32 %v3433, 0.6931472
        %v3435 = vmul.f32 -0.5, %v2962
        %v3436 = vadd.f32 %v3435, 1.0
        %v3437 = vmul.f32 %v3436, %v2962
        %v3438 = vand.u32 2147483647, %v2962
        %vm3439 = vcmp.lt.f32.partialorder %v3438, 0.0004427343
        %v3440 = vsel %vm3439, %v3437, %v3434
        %v3441 = vadd.f32 %v2964, 1.0
        %v3442 = vlog2.pop %v3441
        %v3443 = vmul.f32 %v3442, 0.6931472
        %v3444 = vmul.f32 -0.5, %v2964
        %v3445 = vadd.f32 %v3444, 1.0
        %v3446 = vmul.f32 %v3445, %v2964
        %v3447 = vand.u32 2147483647, %v2964
        %vm3448 = vcmp.lt.f32.partialorder %v3447, 0.0004427343
        %v3449 = vsel %vm3448, %v3446, %v3443
        %v3450 = vadd.f32 %v2966, 1.0
        %v3451 = vlog2.pop %v3450
        %v3452 = vmul.f32 %v3451, 0.6931472
        %v3453 = vmul.f32 -0.5, %v2966
        %v3454 = vadd.f32 %v3453, 1.0
        %v3455 = vmul.f32 %v3454, %v2966
        %v3456 = vand.u32 2147483647, %v2966
        %vm3457 = vcmp.lt.f32.partialorder %v3456, 0.0004427343
        %v3458 = vsel %vm3457, %v3455, %v3452
        %v3459 = vadd.f32 %v2968, 1.0
        %v3460 = vlog2.pop %v3459
        %v3461 = vmul.f32 %v3460, 0.6931472
        %v3462 = vmul.f32 -0.5, %v2968
        %v3463 = vadd.f32 %v3462, 1.0
        %v3464 = vmul.f32 %v3463, %v2968
        %v3465 = vand.u32 2147483647, %v2968
        %vm3466 = vcmp.lt.f32.partialorder %v3465, 0.0004427343
        %v3467 = vsel %vm3466, %v3464, %v3461
        %v3468 = vadd.f32 %v2970, 1.0
        %v3469 = vlog2.pop %v3468
        %v3470 = vmul.f32 %v3469, 0.6931472
        %v3471 = vmul.f32 -0.5, %v2970
        %v3472 = vadd.f32 %v3471, 1.0
        %v3473 = vmul.f32 %v3472, %v2970
        %v3474 = vand.u32 2147483647, %v2970
        %vm3475 = vcmp.lt.f32.partialorder %v3474, 0.0004427343
        %v3476 = vsel %vm3475, %v3473, %v3470
        %v3477 = vadd.f32 %v2972, 1.0
        %v3478 = vlog2.pop %v3477
        %v3479 = vmul.f32 %v3478, 0.6931472
        %v3480 = vmul.f32 -0.5, %v2972
        %v3481 = vadd.f32 %v3480, 1.0
        %v3482 = vmul.f32 %v3481, %v2972
        %v3483 = vand.u32 2147483647, %v2972
        %vm3484 = vcmp.lt.f32.partialorder %v3483, 0.0004427343
        %v3485 = vsel %vm3484, %v3482, %v3479
        %v3486 = vadd.f32 %v2974, 1.0
        %v3487 = vlog2.pop %v3486
        %v3488 = vmul.f32 %v3487, 0.6931472
        %v3489 = vmul.f32 -0.5, %v2974
        %v3490 = vadd.f32 %v3489, 1.0
        %v3491 = vmul.f32 %v3490, %v2974
        %v3492 = vand.u32 2147483647, %v2974
        %vm3493 = vcmp.lt.f32.partialorder %v3492, 0.0004427343
        %v3494 = vsel %vm3493, %v3491, %v3488
        %v3495 = vadd.f32 %v2976, 1.0
        %v3496 = vlog2.pop %v3495
        %v3497 = vmul.f32 %v3496, 0.6931472
        %v3498 = vmul.f32 -0.5, %v2976
        %v3499 = vadd.f32 %v3498, 1.0
        %v3500 = vmul.f32 %v3499, %v2976
        %v3501 = vand.u32 2147483647, %v2976
        %vm3502 = vcmp.lt.f32.partialorder %v3501, 0.0004427343
        %v3503 = vsel %vm3502, %v3500, %v3497
        %v3504 = vadd.f32 %v2978, 1.0
        %v3505 = vlog2.pop %v3504
        %v3506 = vmul.f32 %v3505, 0.6931472
        %v3507 = vmul.f32 -0.5, %v2978
        %v3508 = vadd.f32 %v3507, 1.0
        %v3509 = vmul.f32 %v3508, %v2978
        %v3510 = vand.u32 2147483647, %v2978
        %vm3511 = vcmp.lt.f32.partialorder %v3510, 0.0004427343
        %v3512 = vsel %vm3511, %v3509, %v3506
        %v3513 = vadd.f32 %v2980, 1.0
        %v3514 = vlog2.pop %v3513
        %v3515 = vmul.f32 %v3514, 0.6931472
        %v3516 = vmul.f32 -0.5, %v2980
        %v3517 = vadd.f32 %v3516, 1.0
        %v3518 = vmul.f32 %v3517, %v2980
        %v3519 = vand.u32 2147483647, %v2980
        %vm3520 = vcmp.lt.f32.partialorder %v3519, 0.0004427343
        %v3521 = vsel %vm3520, %v3518, %v3515
        %v3522 = vadd.f32 %v2982, 1.0
        %v3523 = vlog2.pop %v3522
        %v3524 = vmul.f32 %v3523, 0.6931472
        %v3525 = vmul.f32 -0.5, %v2982
        %v3526 = vadd.f32 %v3525, 1.0
        %v3527 = vmul.f32 %v3526, %v2982
        %v3528 = vand.u32 2147483647, %v2982
        %vm3529 = vcmp.lt.f32.partialorder %v3528, 0.0004427343
        %v3530 = vsel %vm3529, %v3527, %v3524
        %v3531 = vadd.f32 %v2984, 1.0
        %v3532 = vlog2.pop %v3531
        %v3533 = vmul.f32 %v3532, 0.6931472
        %v3534 = vmul.f32 -0.5, %v2984
        %v3535 = vadd.f32 %v3534, 1.0
        %v3536 = vmul.f32 %v3535, %v2984
        %v3537 = vand.u32 2147483647, %v2984
        %vm3538 = vcmp.lt.f32.partialorder %v3537, 0.0004427343
        %v3539 = vsel %vm3538, %v3536, %v3533
        %v3540 = vadd.f32 %v2986, 1.0
        %v3541 = vlog2.pop %v3540
        %v3542 = vmul.f32 %v3541, 0.6931472
        %v3543 = vmul.f32 -0.5, %v2986
        %v3544 = vadd.f32 %v3543, 1.0
        %v3545 = vmul.f32 %v3544, %v2986
        %v3546 = vand.u32 2147483647, %v2986
        %vm3547 = vcmp.lt.f32.partialorder %v3546, 0.0004427343
        %v3548 = vsel %vm3547, %v3545, %v3542
        %v3549 = vadd.f32 %v2988, 1.0
        %v3550 = vlog2.pop %v3549
        %v3551 = vmul.f32 %v3550, 0.6931472
        %v3552 = vmul.f32 -0.5, %v2988
        %v3553 = vadd.f32 %v3552, 1.0
        %v3554 = vmul.f32 %v3553, %v2988
        %v3555 = vand.u32 2147483647, %v2988
        %vm3556 = vcmp.lt.f32.partialorder %v3555, 0.0004427343
        %v3557 = vsel %vm3556, %v3554, %v3551
        %v3558 = vadd.f32 %v2990, 1.0
        %v3559 = vlog2.pop %v3558
        %v3560 = vmul.f32 %v3559, 0.6931472
        %v3561 = vmul.f32 -0.5, %v2990
        %v3562 = vadd.f32 %v3561, 1.0
        %v3563 = vmul.f32 %v3562, %v2990
        %v3564 = vand.u32 2147483647, %v2990
        %vm3565 = vcmp.lt.f32.partialorder %v3564, 0.0004427343
        %v3566 = vsel %vm3565, %v3563, %v3560
        %v3567 = vadd.f32 %v2543, %v2999
        %v3568 = vadd.f32 %v2544, %v3008
        %v3569 = vadd.f32 %v2545, %v3017
        %v3570 = vadd.f32 %v2546, %v3026
        %v3571 = vadd.f32 %v2547, %v3035
        %v3572 = vadd.f32 %v2548, %v3044
        %v3573 = vadd.f32 %v2549, %v3053
        %v3574 = vadd.f32 %v2550, %v3062
        %v3575 = vadd.f32 %v2551, %v3071
        %v3576 = vadd.f32 %v2552, %v3080
        %v3577 = vadd.f32 %v2553, %v3089
        %v3578 = vadd.f32 %v2554, %v3098
        %v3579 = vadd.f32 %v2555, %v3107
        %v3580 = vadd.f32 %v2556, %v3116
        %v3581 = vadd.f32 %v2557, %v3125
        %v3582 = vadd.f32 %v2558, %v3134
        %v3583 = vadd.f32 %v2559, %v3143
        %v3584 = vadd.f32 %v2560, %v3152
        %v3585 = vadd.f32 %v2561, %v3161
        %v3586 = vadd.f32 %v2562, %v3170
        %v3587 = vadd.f32 %v2563, %v3179
        %v3588 = vadd.f32 %v2564, %v3188
        %v3589 = vadd.f32 %v2565, %v3197
        %v3590 = vadd.f32 %v2566, %v3206
        %v3591 = vadd.f32 %v2567, %v3215
        %v3592 = vadd.f32 %v2568, %v3224
        %v3593 = vadd.f32 %v2569, %v3233
        %v3594 = vadd.f32 %v2570, %v3242
        %v3595 = vadd.f32 %v2571, %v3251
        %v3596 = vadd.f32 %v2572, %v3260
        %v3597 = vadd.f32 %v2573, %v3269
        %v3598 = vadd.f32 %v2574, %v3278
        %v3599 = vadd.f32 %v2575, %v3287
        %v3600 = vadd.f32 %v2576, %v3296
        %v3601 = vadd.f32 %v2577, %v3305
        %v3602 = vadd.f32 %v2578, %v3314
        %v3603 = vadd.f32 %v2579, %v3323
        %v3604 = vadd.f32 %v2580, %v3332
        %v3605 = vadd.f32 %v2581, %v3341
        %v3606 = vadd.f32 %v2582, %v3350
        %v3607 = vadd.f32 %v2583, %v3359
        %v3608 = vadd.f32 %v2584, %v3368
        %v3609 = vadd.f32 %v2585, %v3377
        %v3610 = vadd.f32 %v2586, %v3386
        %v3611 = vadd.f32 %v2587, %v3395
        %v3612 = vadd.f32 %v2588, %v3404
        %v3613 = vadd.f32 %v2589, %v3413
        %v3614 = vadd.f32 %v2590, %v3422
        %v3615 = vadd.f32 %v2591, %v3431
        %v3616 = vadd.f32 %v2592, %v3440
        %v3617 = vadd.f32 %v2593, %v3449
        %v3618 = vadd.f32 %v2594, %v3458
        %v3619 = vadd.f32 %v2595, %v3467
        %v3620 = vadd.f32 %v2596, %v3476
        %v3621 = vadd.f32 %v2597, %v3485
        %v3622 = vadd.f32 %v2598, %v3494
        %v3623 = vadd.f32 %v2599, %v3503
        %v3624 = vadd.f32 %v2600, %v3512
        %v3625 = vadd.f32 %v2601, %v3521
        %v3626 = vadd.f32 %v2602, %v3530
        %v3627 = vadd.f32 %v2603, %v3539
        %v3628 = vadd.f32 %v2604, %v3548
        %v3629 = vadd.f32 %v2605, %v3557
        %v3630 = vadd.f32 %v2606, %v3566
        %v3631 = vsel %vm2607, %v2671, %v3567
        %v3632 = vsel %vm2608, %v2672, %v3568
        %v3633 = vsel %vm2609, %v2673, %v3569
        %v3634 = vsel %vm2610, %v2674, %v3570
        %v3635 = vsel %vm2611, %v2675, %v3571
        %v3636 = vsel %vm2612, %v2676, %v3572
        %v3637 = vsel %vm2613, %v2677, %v3573
        %v3638 = vsel %vm2614, %v2678, %v3574
        %v3639 = vsel %vm2615, %v2679, %v3575
        %v3640 = vsel %vm2616, %v2680, %v3576
        %v3641 = vsel %vm2617, %v2681, %v3577
        %v3642 = vsel %vm2618, %v2682, %v3578
        %v3643 = vsel %vm2619, %v2683, %v3579
        %v3644 = vsel %vm2620, %v2684, %v3580
        %v3645 = vsel %vm2621, %v2685, %v3581
        %v3646 = vsel %vm2622, %v2686, %v3582
        %v3647 = vsel %vm2623, %v2687, %v3583
        %v3648 = vsel %vm2624, %v2688, %v3584
        %v3649 = vsel %vm2625, %v2689, %v3585
        %v3650 = vsel %vm2626, %v2690, %v3586
        %v3651 = vsel %vm2627, %v2691, %v3587
        %v3652 = vsel %vm2628, %v2692, %v3588
        %v3653 = vsel %vm2629, %v2693, %v3589
        %v3654 = vsel %vm2630, %v2694, %v3590
        %v3655 = vsel %vm2631, %v2695, %v3591
        %v3656 = vsel %vm2632, %v2696, %v3592
        %v3657 = vsel %vm2633, %v2697, %v3593
        %v3658 = vsel %vm2634, %v2698, %v3594
        %v3659 = vsel %vm2635, %v2699, %v3595
        %v3660 = vsel %vm2636, %v2700, %v3596
        %v3661 = vsel %vm2637, %v2701, %v3597
        %v3662 = vsel %vm2638, %v2702, %v3598
        %v3663 = vsel %vm2639, %v2703, %v3599
        %v3664 = vsel %vm2640, %v2704, %v3600
        %v3665 = vsel %vm2641, %v2705, %v3601
        %v3666 = vsel %vm2642, %v2706, %v3602
        %v3667 = vsel %vm2643, %v2707, %v3603
        %v3668 = vsel %vm2644, %v2708, %v3604
        %v3669 = vsel %vm2645, %v2709, %v3605
        %v3670 = vsel %vm2646, %v2710, %v3606
        %v3671 = vsel %vm2647, %v2711, %v3607
        %v3672 = vsel %vm2648, %v2712, %v3608
        %v3673 = vsel %vm2649, %v2713, %v3609
        %v3674 = vsel %vm2650, %v2714, %v3610
        %v3675 = vsel %vm2651, %v2715, %v3611
        %v3676 = vsel %vm2652, %v2716, %v3612
        %v3677 = vsel %vm2653, %v2717, %v3613
        %v3678 = vsel %vm2654, %v2718, %v3614
        %v3679 = vsel %vm2655, %v2719, %v3615
        %v3680 = vsel %vm2656, %v2720, %v3616
        %v3681 = vsel %vm2657, %v2721, %v3617
        %v3682 = vsel %vm2658, %v2722, %v3618
        %v3683 = vsel %vm2659, %v2723, %v3619
        %v3684 = vsel %vm2660, %v2724, %v3620
        %v3685 = vsel %vm2661, %v2725, %v3621
        %v3686 = vsel %vm2662, %v2726, %v3622
        %v3687 = vsel %vm2663, %v2727, %v3623
        %v3688 = vsel %vm2664, %v2728, %v3624
        %v3689 = vsel %vm2665, %v2729, %v3625
        %v3690 = vsel %vm2666, %v2730, %v3626
        %v3691 = vsel %vm2667, %v2731, %v3627
        %v3692 = vsel %vm2668, %v2732, %v3628
        %v3693 = vsel %vm2669, %v2733, %v3629
        %v3694 = vsel %vm2670, %v2734, %v3630
        %v3695 = vpack.c.bf16 %v3632, %v3631
        %v3696 = vpack.c.bf16 %v3634, %v3633
        %v3697 = vpack.c.bf16 %v3636, %v3635
        %v3698 = vpack.c.bf16 %v3638, %v3637
        %v3699 = vpack.c.bf16 %v3640, %v3639
        %v3700 = vpack.c.bf16 %v3642, %v3641
        %v3701 = vpack.c.bf16 %v3644, %v3643
        %v3702 = vpack.c.bf16 %v3646, %v3645
        %v3703 = vpack.c.bf16 %v3648, %v3647
        %v3704 = vpack.c.bf16 %v3650, %v3649
        %v3705 = vpack.c.bf16 %v3652, %v3651
        %v3706 = vpack.c.bf16 %v3654, %v3653
        %v3707 = vpack.c.bf16 %v3656, %v3655
        %v3708 = vpack.c.bf16 %v3658, %v3657
        %v3709 = vpack.c.bf16 %v3660, %v3659
        %v3710 = vpack.c.bf16 %v3662, %v3661
        %v3711 = vpack.c.bf16 %v3664, %v3663
        %v3712 = vpack.c.bf16 %v3666, %v3665
        %v3713 = vpack.c.bf16 %v3668, %v3667
        %v3714 = vpack.c.bf16 %v3670, %v3669
        %v3715 = vpack.c.bf16 %v3672, %v3671
        %v3716 = vpack.c.bf16 %v3674, %v3673
        %v3717 = vpack.c.bf16 %v3676, %v3675
        %v3718 = vpack.c.bf16 %v3678, %v3677
        %v3719 = vpack.c.bf16 %v3680, %v3679
        %v3720 = vpack.c.bf16 %v3682, %v3681
        %v3721 = vpack.c.bf16 %v3684, %v3683
        %v3722 = vpack.c.bf16 %v3686, %v3685
        %v3723 = vpack.c.bf16 %v3688, %v3687
        %v3724 = vpack.c.bf16 %v3690, %v3689
        %v3725 = vpack.c.bf16 %v3692, %v3691
        %v3726 = vpack.c.bf16 %v3694, %v3693
        %v3727 = vld [vmem:[%s7] sm:$0xf]
        %v3728 = vld [vmem:[%s7 + $0x4] sm:$0xf]
        %v3729 = vld [vmem:[%s7 + $0x8] sm:$0xf]
        %v3730 = vld [vmem:[%s7 + $0xc] sm:$0xf]
        %v3731 = vld [vmem:[%s7 + $0x10] sm:$0xf]
        %v3732 = vld [vmem:[%s7 + $0x14] sm:$0xf]
        %v3733 = vld [vmem:[%s7 + $0x18] sm:$0xf]
        %v3734 = vld [vmem:[%s7 + $0x1c] sm:$0xf]
        %v3735 = vld [vmem:[%s8] sm:$0x1]
        %v3737 = vperm.slane %v3735, 0
        %v3747 = vunpack.c.l.b16 %v3727
        %v3748 = vunpack.c.l.b16 %v3728
        %v3749 = vunpack.c.l.b16 %v3729
        %v3750 = vunpack.c.l.b16 %v3730
        %v3751 = vunpack.c.l.b16 %v3731
        %v3752 = vunpack.c.l.b16 %v3732
        %v3753 = vunpack.c.l.b16 %v3733
        %v3754 = vunpack.c.l.b16 %v3734
        %v3755 = vpack.c.b16 %v3748, %v3747
        %v3756 = vpack.c.b16 %v3750, %v3749
        %v3757 = vpack.c.b16 %v3752, %v3751
        %v3758 = vpack.c.b16 %v3754, %v3753
        %vm3763 = vcmask 523264
        %v3765 = vsel %vm3763, %v3695, 0
        %v3768 = vsel %vm3763, %v3696, 0
        %v3771 = vsel %vm3763, %v3697, 0
        %v3774 = vsel %vm3763, %v3698, 0
        %v3777 = vsel %vm3763, %v3699, 0
        %v3780 = vsel %vm3763, %v3700, 0
        %v3783 = vsel %vm3763, %v3701, 0
        %v3786 = vsel %vm3763, %v3702, 0
        %v3789 = vsel %vm3763, %v3703, 0
        %v3792 = vsel %vm3763, %v3704, 0
        %v3795 = vsel %vm3763, %v3705, 0
        %v3798 = vsel %vm3763, %v3706, 0
        %v3801 = vsel %vm3763, %v3707, 0
        %v3804 = vsel %vm3763, %v3708, 0
        %v3807 = vsel %vm3763, %v3709, 0
        %v3810 = vsel %vm3763, %v3710, 0
        %v3813 = vsel %vm3763, %v3711, 0
        %v3816 = vsel %vm3763, %v3712, 0
        %v3819 = vsel %vm3763, %v3713, 0
        %v3822 = vsel %vm3763, %v3714, 0
        %v3825 = vsel %vm3763, %v3715, 0
        %v3828 = vsel %vm3763, %v3716, 0
        %v3831 = vsel %vm3763, %v3717, 0
        %v3834 = vsel %vm3763, %v3718, 0
        %v3837 = vsel %vm3763, %v3719, 0
        %v3840 = vsel %vm3763, %v3720, 0
        %v3843 = vsel %vm3763, %v3721, 0
        %v3846 = vsel %vm3763, %v3722, 0
        %v3849 = vsel %vm3763, %v3723, 0
        %v3852 = vsel %vm3763, %v3724, 0
        %v3855 = vsel %vm3763, %v3725, 0
        %v3858 = vsel %vm3763, %v3726, 0
        %3860 = vmatpush.bf16.msra.mxu0 0
        %3861 = vmatpush.bf16.msra.mxu0 0
        %3862 = vmatpush.bf16.msra.mxu0 0
        %3863 = vmatpush.bf16.msra.mxu0 0
        %3864 = vmatpush.bf16.msra.mxu0 %v3758
        %3865 = vmatpush.bf16.msra.mxu0 %v3757
        %3866 = vmatpush.bf16.msra.mxu0 %v3756
        %3867 = vmatpush.bf16.msra.mxu0 %v3755
        %3868 = vmatmul.bf16.gmra.mxu0 %v3765
        %v3869 = vpop.f32.mrf.mxu0
        %v3870 = vadd.f32 %v3737, %v3869
        %v3871 = vpop.f32.mrf.mxu0
        %v3872 = vadd.f32 %v3737, %v3871
        %3873 = vmatmul.bf16.gmra.mxu0 %v3768
        %v3874 = vpop.f32.mrf.mxu0
        %v3875 = vadd.f32 %v3737, %v3874
        %v3876 = vpop.f32.mrf.mxu0
        %v3877 = vadd.f32 %v3737, %v3876
        %3878 = vmatmul.bf16.gmra.mxu0 %v3771
        %v3879 = vpop.f32.mrf.mxu0
        %v3880 = vadd.f32 %v3737, %v3879
        %v3881 = vpop.f32.mrf.mxu0
        %v3882 = vadd.f32 %v3737, %v3881
        %3883 = vmatmul.bf16.gmra.mxu0 %v3774
        %v3884 = vpop.f32.mrf.mxu0
        %v3885 = vadd.f32 %v3737, %v3884
        %v3886 = vpop.f32.mrf.mxu0
        %v3887 = vadd.f32 %v3737, %v3886
        %3888 = vmatmul.bf16.gmra.mxu0 %v3777
        %v3889 = vpop.f32.mrf.mxu0
        %v3890 = vadd.f32 %v3737, %v3889
        %v3891 = vpop.f32.mrf.mxu0
        %v3892 = vadd.f32 %v3737, %v3891
        %3893 = vmatmul.bf16.gmra.mxu0 %v3780
        %v3894 = vpop.f32.mrf.mxu0
        %v3895 = vadd.f32 %v3737, %v3894
        %v3896 = vpop.f32.mrf.mxu0
        %v3897 = vadd.f32 %v3737, %v3896
        %3898 = vmatmul.bf16.gmra.mxu0 %v3783
        %v3899 = vpop.f32.mrf.mxu0
        %v3900 = vadd.f32 %v3737, %v3899
        %v3901 = vpop.f32.mrf.mxu0
        %v3902 = vadd.f32 %v3737, %v3901
        %3903 = vmatmul.bf16.gmra.mxu0 %v3786
        %v3904 = vpop.f32.mrf.mxu0
        %v3905 = vadd.f32 %v3737, %v3904
        %v3906 = vpop.f32.mrf.mxu0
        %v3907 = vadd.f32 %v3737, %v3906
        %3908 = vmatmul.bf16.gmra.mxu0 %v3789
        %v3909 = vpop.f32.mrf.mxu0
        %v3910 = vadd.f32 %v3737, %v3909
        %v3911 = vpop.f32.mrf.mxu0
        %v3912 = vadd.f32 %v3737, %v3911
        %3913 = vmatmul.bf16.gmra.mxu0 %v3792
        %v3914 = vpop.f32.mrf.mxu0
        %v3915 = vadd.f32 %v3737, %v3914
        %v3916 = vpop.f32.mrf.mxu0
        %v3917 = vadd.f32 %v3737, %v3916
        %3918 = vmatmul.bf16.gmra.mxu0 %v3795
        %v3919 = vpop.f32.mrf.mxu0
        %v3920 = vadd.f32 %v3737, %v3919
        %v3921 = vpop.f32.mrf.mxu0
        %v3922 = vadd.f32 %v3737, %v3921
        %3923 = vmatmul.bf16.gmra.mxu0 %v3798
        %v3924 = vpop.f32.mrf.mxu0
        %v3925 = vadd.f32 %v3737, %v3924
        %v3926 = vpop.f32.mrf.mxu0
        %v3927 = vadd.f32 %v3737, %v3926
        %3928 = vmatmul.bf16.gmra.mxu0 %v3801
        %v3929 = vpop.f32.mrf.mxu0
        %v3930 = vadd.f32 %v3737, %v3929
        %v3931 = vpop.f32.mrf.mxu0
        %v3932 = vadd.f32 %v3737, %v3931
        %3933 = vmatmul.bf16.gmra.mxu0 %v3804
        %v3934 = vpop.f32.mrf.mxu0
        %v3935 = vadd.f32 %v3737, %v3934
        %v3936 = vpop.f32.mrf.mxu0
        %v3937 = vadd.f32 %v3737, %v3936
        %3938 = vmatmul.bf16.gmra.mxu0 %v3807
        %v3939 = vpop.f32.mrf.mxu0
        %v3940 = vadd.f32 %v3737, %v3939
        %v3941 = vpop.f32.mrf.mxu0
        %v3942 = vadd.f32 %v3737, %v3941
        %3943 = vmatmul.bf16.gmra.mxu0 %v3810
        %v3944 = vpop.f32.mrf.mxu0
        %v3945 = vadd.f32 %v3737, %v3944
        %v3946 = vpop.f32.mrf.mxu0
        %v3947 = vadd.f32 %v3737, %v3946
        %3948 = vmatmul.bf16.gmra.mxu0 %v3813
        %v3949 = vpop.f32.mrf.mxu0
        %v3950 = vadd.f32 %v3737, %v3949
        %v3951 = vpop.f32.mrf.mxu0
        %v3952 = vadd.f32 %v3737, %v3951
        %3953 = vmatmul.bf16.gmra.mxu0 %v3816
        %v3954 = vpop.f32.mrf.mxu0
        %v3955 = vadd.f32 %v3737, %v3954
        %v3956 = vpop.f32.mrf.mxu0
        %v3957 = vadd.f32 %v3737, %v3956
        %3958 = vmatmul.bf16.gmra.mxu0 %v3819
        %v3959 = vpop.f32.mrf.mxu0
        %v3960 = vadd.f32 %v3737, %v3959
        %v3961 = vpop.f32.mrf.mxu0
        %v3962 = vadd.f32 %v3737, %v3961
        %3963 = vmatmul.bf16.gmra.mxu0 %v3822
        %v3964 = vpop.f32.mrf.mxu0
        %v3965 = vadd.f32 %v3737, %v3964
        %v3966 = vpop.f32.mrf.mxu0
        %v3967 = vadd.f32 %v3737, %v3966
        %3968 = vmatmul.bf16.gmra.mxu0 %v3825
        %v3969 = vpop.f32.mrf.mxu0
        %v3970 = vadd.f32 %v3737, %v3969
        %v3971 = vpop.f32.mrf.mxu0
        %v3972 = vadd.f32 %v3737, %v3971
        %3973 = vmatmul.bf16.gmra.mxu0 %v3828
        %v3974 = vpop.f32.mrf.mxu0
        %v3975 = vadd.f32 %v3737, %v3974
        %v3976 = vpop.f32.mrf.mxu0
        %v3977 = vadd.f32 %v3737, %v3976
        %3978 = vmatmul.bf16.gmra.mxu0 %v3831
        %v3979 = vpop.f32.mrf.mxu0
        %v3980 = vadd.f32 %v3737, %v3979
        %v3981 = vpop.f32.mrf.mxu0
        %v3982 = vadd.f32 %v3737, %v3981
        %3983 = vmatmul.bf16.gmra.mxu0 %v3834
        %v3984 = vpop.f32.mrf.mxu0
        %v3985 = vadd.f32 %v3737, %v3984
        %v3986 = vpop.f32.mrf.mxu0
        %v3987 = vadd.f32 %v3737, %v3986
        %3988 = vmatmul.bf16.gmra.mxu0 %v3837
        %v3989 = vpop.f32.mrf.mxu0
        %v3990 = vadd.f32 %v3737, %v3989
        %v3991 = vpop.f32.mrf.mxu0
        %v3992 = vadd.f32 %v3737, %v3991
        %3993 = vmatmul.bf16.gmra.mxu0 %v3840
        %v3994 = vpop.f32.mrf.mxu0
        %v3995 = vadd.f32 %v3737, %v3994
        %v3996 = vpop.f32.mrf.mxu0
        %v3997 = vadd.f32 %v3737, %v3996
        %3998 = vmatmul.bf16.gmra.mxu0 %v3843
        %v3999 = vpop.f32.mrf.mxu0
        %v4000 = vadd.f32 %v3737, %v3999
        %v4001 = vpop.f32.mrf.mxu0
        %v4002 = vadd.f32 %v3737, %v4001
        %4003 = vmatmul.bf16.gmra.mxu0 %v3846
        %v4004 = vpop.f32.mrf.mxu0
        %v4005 = vadd.f32 %v3737, %v4004
        %v4006 = vpop.f32.mrf.mxu0
        %v4007 = vadd.f32 %v3737, %v4006
        %4008 = vmatmul.bf16.gmra.mxu0 %v3849
        %v4009 = vpop.f32.mrf.mxu0
        %v4010 = vadd.f32 %v3737, %v4009
        %v4011 = vpop.f32.mrf.mxu0
        %v4012 = vadd.f32 %v3737, %v4011
        %4013 = vmatmul.bf16.gmra.mxu0 %v3852
        %v4014 = vpop.f32.mrf.mxu0
        %v4015 = vadd.f32 %v3737, %v4014
        %v4016 = vpop.f32.mrf.mxu0
        %v4017 = vadd.f32 %v3737, %v4016
        %4018 = vmatmul.bf16.gmra.mxu0 %v3855
        %v4019 = vpop.f32.mrf.mxu0
        %v4020 = vadd.f32 %v3737, %v4019
        %v4021 = vpop.f32.mrf.mxu0
        %v4022 = vadd.f32 %v3737, %v4021
        %4023 = vmatmul.bf16.gmra.mxu0 %v3858
        %v4024 = vpop.f32.mrf.mxu0
        %v4025 = vadd.f32 %v3737, %v4024
        %v4026 = vpop.f32.mrf.mxu0
        %v4027 = vadd.f32 %v3737, %v4026
        %4028 = vdwg.mxu0
        %v4029 = vxor.u32 %v3870, 2147483648
        %v4030 = vxor.u32 %v3872, 2147483648
        %v4031 = vxor.u32 %v3875, 2147483648
        %v4032 = vxor.u32 %v3877, 2147483648
        %v4033 = vxor.u32 %v3880, 2147483648
        %v4034 = vxor.u32 %v3882, 2147483648
        %v4035 = vxor.u32 %v3885, 2147483648
        %v4036 = vxor.u32 %v3887, 2147483648
        %v4037 = vxor.u32 %v3890, 2147483648
        %v4038 = vxor.u32 %v3892, 2147483648
        %v4039 = vxor.u32 %v3895, 2147483648
        %v4040 = vxor.u32 %v3897, 2147483648
        %v4041 = vxor.u32 %v3900, 2147483648
        %v4042 = vxor.u32 %v3902, 2147483648
        %v4043 = vxor.u32 %v3905, 2147483648
        %v4044 = vxor.u32 %v3907, 2147483648
        %v4045 = vxor.u32 %v3910, 2147483648
        %v4046 = vxor.u32 %v3912, 2147483648
        %v4047 = vxor.u32 %v3915, 2147483648
        %v4048 = vxor.u32 %v3917, 2147483648
        %v4049 = vxor.u32 %v3920, 2147483648
        %v4050 = vxor.u32 %v3922, 2147483648
        %v4051 = vxor.u32 %v3925, 2147483648
        %v4052 = vxor.u32 %v3927, 2147483648
        %v4053 = vxor.u32 %v3930, 2147483648
        %v4054 = vxor.u32 %v3932, 2147483648
        %v4055 = vxor.u32 %v3935, 2147483648
        %v4056 = vxor.u32 %v3937, 2147483648
        %v4057 = vxor.u32 %v3940, 2147483648
        %v4058 = vxor.u32 %v3942, 2147483648
        %v4059 = vxor.u32 %v3945, 2147483648
        %v4060 = vxor.u32 %v3947, 2147483648
        %v4061 = vxor.u32 %v3950, 2147483648
        %v4062 = vxor.u32 %v3952, 2147483648
        %v4063 = vxor.u32 %v3955, 2147483648
        %v4064 = vxor.u32 %v3957, 2147483648
        %v4065 = vxor.u32 %v3960, 2147483648
        %v4066 = vxor.u32 %v3962, 2147483648
        %v4067 = vxor.u32 %v3965, 2147483648
        %v4068 = vxor.u32 %v3967, 2147483648
        %v4069 = vxor.u32 %v3970, 2147483648
        %v4070 = vxor.u32 %v3972, 2147483648
        %v4071 = vxor.u32 %v3975, 2147483648
        %v4072 = vxor.u32 %v3977, 2147483648
        %v4073 = vxor.u32 %v3980, 2147483648
        %v4074 = vxor.u32 %v3982, 2147483648
        %v4075 = vxor.u32 %v3985, 2147483648
        %v4076 = vxor.u32 %v3987, 2147483648
        %v4077 = vxor.u32 %v3990, 2147483648
        %v4078 = vxor.u32 %v3992, 2147483648
        %v4079 = vxor.u32 %v3995, 2147483648
        %v4080 = vxor.u32 %v3997, 2147483648
        %v4081 = vxor.u32 %v4000, 2147483648
        %v4082 = vxor.u32 %v4002, 2147483648
        %v4083 = vxor.u32 %v4005, 2147483648
        %v4084 = vxor.u32 %v4007, 2147483648
        %v4085 = vxor.u32 %v4010, 2147483648
        %v4086 = vxor.u32 %v4012, 2147483648
        %v4087 = vxor.u32 %v4015, 2147483648
        %v4088 = vxor.u32 %v4017, 2147483648
        %v4089 = vxor.u32 %v4020, 2147483648
        %v4090 = vxor.u32 %v4022, 2147483648
        %v4091 = vxor.u32 %v4025, 2147483648
        %v4092 = vxor.u32 %v4027, 2147483648
        %v4093 = vmul.f32 %v4029, 1.442695
        %v4094 = vpow.pop %v4093
        %v4095 = vmul.f32 %v4030, 1.442695
        %v4096 = vpow.pop %v4095
        %v4097 = vmul.f32 %v4031, 1.442695
        %v4098 = vpow.pop %v4097
        %v4099 = vmul.f32 %v4032, 1.442695
        %v4100 = vpow.pop %v4099
        %v4101 = vmul.f32 %v4033, 1.442695
        %v4102 = vpow.pop %v4101
        %v4103 = vmul.f32 %v4034, 1.442695
        %v4104 = vpow.pop %v4103
        %v4105 = vmul.f32 %v4035, 1.442695
        %v4106 = vpow.pop %v4105
        %v4107 = vmul.f32 %v4036, 1.442695
        %v4108 = vpow.pop %v4107
        %v4109 = vmul.f32 %v4037, 1.442695
        %v4110 = vpow.pop %v4109
        %v4111 = vmul.f32 %v4038, 1.442695
        %v4112 = vpow.pop %v4111
        %v4113 = vmul.f32 %v4039, 1.442695
        %v4114 = vpow.pop %v4113
        %v4115 = vmul.f32 %v4040, 1.442695
        %v4116 = vpow.pop %v4115
        %v4117 = vmul.f32 %v4041, 1.442695
        %v4118 = vpow.pop %v4117
        %v4119 = vmul.f32 %v4042, 1.442695
        %v4120 = vpow.pop %v4119
        %v4121 = vmul.f32 %v4043, 1.442695
        %v4122 = vpow.pop %v4121
        %v4123 = vmul.f32 %v4044, 1.442695
        %v4124 = vpow.pop %v4123
        %v4125 = vmul.f32 %v4045, 1.442695
        %v4126 = vpow.pop %v4125
        %v4127 = vmul.f32 %v4046, 1.442695
        %v4128 = vpow.pop %v4127
        %v4129 = vmul.f32 %v4047, 1.442695
        %v4130 = vpow.pop %v4129
        %v4131 = vmul.f32 %v4048, 1.442695
        %v4132 = vpow.pop %v4131
        %v4133 = vmul.f32 %v4049, 1.442695
        %v4134 = vpow.pop %v4133
        %v4135 = vmul.f32 %v4050, 1.442695
        %v4136 = vpow.pop %v4135
        %v4137 = vmul.f32 %v4051, 1.442695
        %v4138 = vpow.pop %v4137
        %v4139 = vmul.f32 %v4052, 1.442695
        %v4140 = vpow.pop %v4139
        %v4141 = vmul.f32 %v4053, 1.442695
        %v4142 = vpow.pop %v4141
        %v4143 = vmul.f32 %v4054, 1.442695
        %v4144 = vpow.pop %v4143
        %v4145 = vmul.f32 %v4055, 1.442695
        %v4146 = vpow.pop %v4145
        %v4147 = vmul.f32 %v4056, 1.442695
        %v4148 = vpow.pop %v4147
        %v4149 = vmul.f32 %v4057, 1.442695
        %v4150 = vpow.pop %v4149
        %v4151 = vmul.f32 %v4058, 1.442695
        %v4152 = vpow.pop %v4151
        %v4153 = vmul.f32 %v4059, 1.442695
        %v4154 = vpow.pop %v4153
        %v4155 = vmul.f32 %v4060, 1.442695
        %v4156 = vpow.pop %v4155
        %v4157 = vmul.f32 %v4061, 1.442695
        %v4158 = vpow.pop %v4157
        %v4159 = vmul.f32 %v4062, 1.442695
        %v4160 = vpow.pop %v4159
        %v4161 = vmul.f32 %v4063, 1.442695
        %v4162 = vpow.pop %v4161
        %v4163 = vmul.f32 %v4064, 1.442695
        %v4164 = vpow.pop %v4163
        %v4165 = vmul.f32 %v4065, 1.442695
        %v4166 = vpow.pop %v4165
        %v4167 = vmul.f32 %v4066, 1.442695
        %v4168 = vpow.pop %v4167
        %v4169 = vmul.f32 %v4067, 1.442695
        %v4170 = vpow.pop %v4169
        %v4171 = vmul.f32 %v4068, 1.442695
        %v4172 = vpow.pop %v4171
        %v4173 = vmul.f32 %v4069, 1.442695
        %v4174 = vpow.pop %v4173
        %v4175 = vmul.f32 %v4070, 1.442695
        %v4176 = vpow.pop %v4175
        %v4177 = vmul.f32 %v4071, 1.442695
        %v4178 = vpow.pop %v4177
        %v4179 = vmul.f32 %v4072, 1.442695
        %v4180 = vpow.pop %v4179
        %v4181 = vmul.f32 %v4073, 1.442695
        %v4182 = vpow.pop %v4181
        %v4183 = vmul.f32 %v4074, 1.442695
        %v4184 = vpow.pop %v4183
        %v4185 = vmul.f32 %v4075, 1.442695
        %v4186 = vpow.pop %v4185
        %v4187 = vmul.f32 %v4076, 1.442695
        %v4188 = vpow.pop %v4187
        %v4189 = vmul.f32 %v4077, 1.442695
        %v4190 = vpow.pop %v4189
        %v4191 = vmul.f32 %v4078, 1.442695
        %v4192 = vpow.pop %v4191
        %v4193 = vmul.f32 %v4079, 1.442695
        %v4194 = vpow.pop %v4193
        %v4195 = vmul.f32 %v4080, 1.442695
        %v4196 = vpow.pop %v4195
        %v4197 = vmul.f32 %v4081, 1.442695
        %v4198 = vpow.pop %v4197
        %v4199 = vmul.f32 %v4082, 1.442695
        %v4200 = vpow.pop %v4199
        %v4201 = vmul.f32 %v4083, 1.442695
        %v4202 = vpow.pop %v4201
        %v4203 = vmul.f32 %v4084, 1.442695
        %v4204 = vpow.pop %v4203
        %v4205 = vmul.f32 %v4085, 1.442695
        %v4206 = vpow.pop %v4205
        %v4207 = vmul.f32 %v4086, 1.442695
        %v4208 = vpow.pop %v4207
        %v4209 = vmul.f32 %v4087, 1.442695
        %v4210 = vpow.pop %v4209
        %v4211 = vmul.f32 %v4088, 1.442695
        %v4212 = vpow.pop %v4211
        %v4213 = vmul.f32 %v4089, 1.442695
        %v4214 = vpow.pop %v4213
        %v4215 = vmul.f32 %v4090, 1.442695
        %v4216 = vpow.pop %v4215
        %v4217 = vmul.f32 %v4091, 1.442695
        %v4218 = vpow.pop %v4217
        %v4219 = vmul.f32 %v4092, 1.442695
        %v4220 = vpow.pop %v4219
        %v4221 = vadd.f32 %v4094, 1.0
        %v4222 = vadd.f32 %v4096, 1.0
        %v4223 = vadd.f32 %v4098, 1.0
        %v4224 = vadd.f32 %v4100, 1.0
        %v4225 = vadd.f32 %v4102, 1.0
        %v4226 = vadd.f32 %v4104, 1.0
        %v4227 = vadd.f32 %v4106, 1.0
        %v4228 = vadd.f32 %v4108, 1.0
        %v4229 = vadd.f32 %v4110, 1.0
        %v4230 = vadd.f32 %v4112, 1.0
        %v4231 = vadd.f32 %v4114, 1.0
        %v4232 = vadd.f32 %v4116, 1.0
        %v4233 = vadd.f32 %v4118, 1.0
        %v4234 = vadd.f32 %v4120, 1.0
        %v4235 = vadd.f32 %v4122, 1.0
        %v4236 = vadd.f32 %v4124, 1.0
        %v4237 = vadd.f32 %v4126, 1.0
        %v4238 = vadd.f32 %v4128, 1.0
        %v4239 = vadd.f32 %v4130, 1.0
        %v4240 = vadd.f32 %v4132, 1.0
        %v4241 = vadd.f32 %v4134, 1.0
        %v4242 = vadd.f32 %v4136, 1.0
        %v4243 = vadd.f32 %v4138, 1.0
        %v4244 = vadd.f32 %v4140, 1.0
        %v4245 = vadd.f32 %v4142, 1.0
        %v4246 = vadd.f32 %v4144, 1.0
        %v4247 = vadd.f32 %v4146, 1.0
        %v4248 = vadd.f32 %v4148, 1.0
        %v4249 = vadd.f32 %v4150, 1.0
        %v4250 = vadd.f32 %v4152, 1.0
        %v4251 = vadd.f32 %v4154, 1.0
        %v4252 = vadd.f32 %v4156, 1.0
        %v4253 = vadd.f32 %v4158, 1.0
        %v4254 = vadd.f32 %v4160, 1.0
        %v4255 = vadd.f32 %v4162, 1.0
        %v4256 = vadd.f32 %v4164, 1.0
        %v4257 = vadd.f32 %v4166, 1.0
        %v4258 = vadd.f32 %v4168, 1.0
        %v4259 = vadd.f32 %v4170, 1.0
        %v4260 = vadd.f32 %v4172, 1.0
        %v4261 = vadd.f32 %v4174, 1.0
        %v4262 = vadd.f32 %v4176, 1.0
        %v4263 = vadd.f32 %v4178, 1.0
        %v4264 = vadd.f32 %v4180, 1.0
        %v4265 = vadd.f32 %v4182, 1.0
        %v4266 = vadd.f32 %v4184, 1.0
        %v4267 = vadd.f32 %v4186, 1.0
        %v4268 = vadd.f32 %v4188, 1.0
        %v4269 = vadd.f32 %v4190, 1.0
        %v4270 = vadd.f32 %v4192, 1.0
        %v4271 = vadd.f32 %v4194, 1.0
        %v4272 = vadd.f32 %v4196, 1.0
        %v4273 = vadd.f32 %v4198, 1.0
        %v4274 = vadd.f32 %v4200, 1.0
        %v4275 = vadd.f32 %v4202, 1.0
        %v4276 = vadd.f32 %v4204, 1.0
        %v4277 = vadd.f32 %v4206, 1.0
        %v4278 = vadd.f32 %v4208, 1.0
        %v4279 = vadd.f32 %v4210, 1.0
        %v4280 = vadd.f32 %v4212, 1.0
        %v4281 = vadd.f32 %v4214, 1.0
        %v4282 = vadd.f32 %v4216, 1.0
        %v4283 = vadd.f32 %v4218, 1.0
        %v4284 = vadd.f32 %v4220, 1.0
        %v4285 = vrcp.pop %v4221
        %v4286 = vmul.f32 %v4221, %v4285
        %v4287 = vsub.f32 1.0, %v4286
        %v4288 = vmul.f32 %v4285, %v4287
        %v4289 = vadd.f32 %v4285, %v4288
        %vm4290 = vweird.f32 %v4221
        %vm4291 = vweird.f32 %v4285
        %vm4292 = vmor %vm4290, %vm4291
        %v4293 = vsel %vm4292, %v4285, %v4289
        %v4294 = vand.u32 2147483647, %v4221
        %vm4295 = vcmp.eq.f32.partialorder %v4294, 8.507059e+37
        %v4296 = vand.u32 %v4221, 2147483648
        %v4297 = vor.u32 1.1754944e-38, %v4296
        %v4298 = vsel %vm4295, %v4297, %v4293
        %v4299 = vmul.f32 1.0, %v4298
        %v4300 = vrcp.pop %v4222
        %v4301 = vmul.f32 %v4222, %v4300
        %v4302 = vsub.f32 1.0, %v4301
        %v4303 = vmul.f32 %v4300, %v4302
        %v4304 = vadd.f32 %v4300, %v4303
        %vm4305 = vweird.f32 %v4222
        %vm4306 = vweird.f32 %v4300
        %vm4307 = vmor %vm4305, %vm4306
        %v4308 = vsel %vm4307, %v4300, %v4304
        %v4309 = vand.u32 2147483647, %v4222
        %vm4310 = vcmp.eq.f32.partialorder %v4309, 8.507059e+37
        %v4311 = vand.u32 %v4222, 2147483648
        %v4312 = vor.u32 1.1754944e-38, %v4311
        %v4313 = vsel %vm4310, %v4312, %v4308
        %v4314 = vmul.f32 1.0, %v4313
        %v4315 = vrcp.pop %v4223
        %v4316 = vmul.f32 %v4223, %v4315
        %v4317 = vsub.f32 1.0, %v4316
        %v4318 = vmul.f32 %v4315, %v4317
        %v4319 = vadd.f32 %v4315, %v4318
        %vm4320 = vweird.f32 %v4223
        %vm4321 = vweird.f32 %v4315
        %vm4322 = vmor %vm4320, %vm4321
        %v4323 = vsel %vm4322, %v4315, %v4319
        %v4324 = vand.u32 2147483647, %v4223
        %vm4325 = vcmp.eq.f32.partialorder %v4324, 8.507059e+37
        %v4326 = vand.u32 %v4223, 2147483648
        %v4327 = vor.u32 1.1754944e-38, %v4326
        %v4328 = vsel %vm4325, %v4327, %v4323
        %v4329 = vmul.f32 1.0, %v4328
        %v4330 = vrcp.pop %v4224
        %v4331 = vmul.f32 %v4224, %v4330
        %v4332 = vsub.f32 1.0, %v4331
        %v4333 = vmul.f32 %v4330, %v4332
        %v4334 = vadd.f32 %v4330, %v4333
        %vm4335 = vweird.f32 %v4224
        %vm4336 = vweird.f32 %v4330
        %vm4337 = vmor %vm4335, %vm4336
        %v4338 = vsel %vm4337, %v4330, %v4334
        %v4339 = vand.u32 2147483647, %v4224
        %vm4340 = vcmp.eq.f32.partialorder %v4339, 8.507059e+37
        %v4341 = vand.u32 %v4224, 2147483648
        %v4342 = vor.u32 1.1754944e-38, %v4341
        %v4343 = vsel %vm4340, %v4342, %v4338
        %v4344 = vmul.f32 1.0, %v4343
        %v4345 = vrcp.pop %v4225
        %v4346 = vmul.f32 %v4225, %v4345
        %v4347 = vsub.f32 1.0, %v4346
        %v4348 = vmul.f32 %v4345, %v4347
        %v4349 = vadd.f32 %v4345, %v4348
        %vm4350 = vweird.f32 %v4225
        %vm4351 = vweird.f32 %v4345
        %vm4352 = vmor %vm4350, %vm4351
        %v4353 = vsel %vm4352, %v4345, %v4349
        %v4354 = vand.u32 2147483647, %v4225
        %vm4355 = vcmp.eq.f32.partialorder %v4354, 8.507059e+37
        %v4356 = vand.u32 %v4225, 2147483648
        %v4357 = vor.u32 1.1754944e-38, %v4356
        %v4358 = vsel %vm4355, %v4357, %v4353
        %v4359 = vmul.f32 1.0, %v4358
        %v4360 = vrcp.pop %v4226
        %v4361 = vmul.f32 %v4226, %v4360
        %v4362 = vsub.f32 1.0, %v4361
        %v4363 = vmul.f32 %v4360, %v4362
        %v4364 = vadd.f32 %v4360, %v4363
        %vm4365 = vweird.f32 %v4226
        %vm4366 = vweird.f32 %v4360
        %vm4367 = vmor %vm4365, %vm4366
        %v4368 = vsel %vm4367, %v4360, %v4364
        %v4369 = vand.u32 2147483647, %v4226
        %vm4370 = vcmp.eq.f32.partialorder %v4369, 8.507059e+37
        %v4371 = vand.u32 %v4226, 2147483648
        %v4372 = vor.u32 1.1754944e-38, %v4371
        %v4373 = vsel %vm4370, %v4372, %v4368
        %v4374 = vmul.f32 1.0, %v4373
        %v4375 = vrcp.pop %v4227
        %v4376 = vmul.f32 %v4227, %v4375
        %v4377 = vsub.f32 1.0, %v4376
        %v4378 = vmul.f32 %v4375, %v4377
        %v4379 = vadd.f32 %v4375, %v4378
        %vm4380 = vweird.f32 %v4227
        %vm4381 = vweird.f32 %v4375
        %vm4382 = vmor %vm4380, %vm4381
        %v4383 = vsel %vm4382, %v4375, %v4379
        %v4384 = vand.u32 2147483647, %v4227
        %vm4385 = vcmp.eq.f32.partialorder %v4384, 8.507059e+37
        %v4386 = vand.u32 %v4227, 2147483648
        %v4387 = vor.u32 1.1754944e-38, %v4386
        %v4388 = vsel %vm4385, %v4387, %v4383
        %v4389 = vmul.f32 1.0, %v4388
        %v4390 = vrcp.pop %v4228
        %v4391 = vmul.f32 %v4228, %v4390
        %v4392 = vsub.f32 1.0, %v4391
        %v4393 = vmul.f32 %v4390, %v4392
        %v4394 = vadd.f32 %v4390, %v4393
        %vm4395 = vweird.f32 %v4228
        %vm4396 = vweird.f32 %v4390
        %vm4397 = vmor %vm4395, %vm4396
        %v4398 = vsel %vm4397, %v4390, %v4394
        %v4399 = vand.u32 2147483647, %v4228
        %vm4400 = vcmp.eq.f32.partialorder %v4399, 8.507059e+37
        %v4401 = vand.u32 %v4228, 2147483648
        %v4402 = vor.u32 1.1754944e-38, %v4401
        %v4403 = vsel %vm4400, %v4402, %v4398
        %v4404 = vmul.f32 1.0, %v4403
        %v4405 = vrcp.pop %v4229
        %v4406 = vmul.f32 %v4229, %v4405
        %v4407 = vsub.f32 1.0, %v4406
        %v4408 = vmul.f32 %v4405, %v4407
        %v4409 = vadd.f32 %v4405, %v4408
        %vm4410 = vweird.f32 %v4229
        %vm4411 = vweird.f32 %v4405
        %vm4412 = vmor %vm4410, %vm4411
        %v4413 = vsel %vm4412, %v4405, %v4409
        %v4414 = vand.u32 2147483647, %v4229
        %vm4415 = vcmp.eq.f32.partialorder %v4414, 8.507059e+37
        %v4416 = vand.u32 %v4229, 2147483648
        %v4417 = vor.u32 1.1754944e-38, %v4416
        %v4418 = vsel %vm4415, %v4417, %v4413
        %v4419 = vmul.f32 1.0, %v4418
        %v4420 = vrcp.pop %v4230
        %v4421 = vmul.f32 %v4230, %v4420
        %v4422 = vsub.f32 1.0, %v4421
        %v4423 = vmul.f32 %v4420, %v4422
        %v4424 = vadd.f32 %v4420, %v4423
        %vm4425 = vweird.f32 %v4230
        %vm4426 = vweird.f32 %v4420
        %vm4427 = vmor %vm4425, %vm4426
        %v4428 = vsel %vm4427, %v4420, %v4424
        %v4429 = vand.u32 2147483647, %v4230
        %vm4430 = vcmp.eq.f32.partialorder %v4429, 8.507059e+37
        %v4431 = vand.u32 %v4230, 2147483648
        %v4432 = vor.u32 1.1754944e-38, %v4431
        %v4433 = vsel %vm4430, %v4432, %v4428
        %v4434 = vmul.f32 1.0, %v4433
        %v4435 = vrcp.pop %v4231
        %v4436 = vmul.f32 %v4231, %v4435
        %v4437 = vsub.f32 1.0, %v4436
        %v4438 = vmul.f32 %v4435, %v4437
        %v4439 = vadd.f32 %v4435, %v4438
        %vm4440 = vweird.f32 %v4231
        %vm4441 = vweird.f32 %v4435
        %vm4442 = vmor %vm4440, %vm4441
        %v4443 = vsel %vm4442, %v4435, %v4439
        %v4444 = vand.u32 2147483647, %v4231
        %vm4445 = vcmp.eq.f32.partialorder %v4444, 8.507059e+37
        %v4446 = vand.u32 %v4231, 2147483648
        %v4447 = vor.u32 1.1754944e-38, %v4446
        %v4448 = vsel %vm4445, %v4447, %v4443
        %v4449 = vmul.f32 1.0, %v4448
        %v4450 = vrcp.pop %v4232
        %v4451 = vmul.f32 %v4232, %v4450
        %v4452 = vsub.f32 1.0, %v4451
        %v4453 = vmul.f32 %v4450, %v4452
        %v4454 = vadd.f32 %v4450, %v4453
        %vm4455 = vweird.f32 %v4232
        %vm4456 = vweird.f32 %v4450
        %vm4457 = vmor %vm4455, %vm4456
        %v4458 = vsel %vm4457, %v4450, %v4454
        %v4459 = vand.u32 2147483647, %v4232
        %vm4460 = vcmp.eq.f32.partialorder %v4459, 8.507059e+37
        %v4461 = vand.u32 %v4232, 2147483648
        %v4462 = vor.u32 1.1754944e-38, %v4461
        %v4463 = vsel %vm4460, %v4462, %v4458
        %v4464 = vmul.f32 1.0, %v4463
        %v4465 = vrcp.pop %v4233
        %v4466 = vmul.f32 %v4233, %v4465
        %v4467 = vsub.f32 1.0, %v4466
        %v4468 = vmul.f32 %v4465, %v4467
        %v4469 = vadd.f32 %v4465, %v4468
        %vm4470 = vweird.f32 %v4233
        %vm4471 = vweird.f32 %v4465
        %vm4472 = vmor %vm4470, %vm4471
        %v4473 = vsel %vm4472, %v4465, %v4469
        %v4474 = vand.u32 2147483647, %v4233
        %vm4475 = vcmp.eq.f32.partialorder %v4474, 8.507059e+37
        %v4476 = vand.u32 %v4233, 2147483648
        %v4477 = vor.u32 1.1754944e-38, %v4476
        %v4478 = vsel %vm4475, %v4477, %v4473
        %v4479 = vmul.f32 1.0, %v4478
        %v4480 = vrcp.pop %v4234
        %v4481 = vmul.f32 %v4234, %v4480
        %v4482 = vsub.f32 1.0, %v4481
        %v4483 = vmul.f32 %v4480, %v4482
        %v4484 = vadd.f32 %v4480, %v4483
        %vm4485 = vweird.f32 %v4234
        %vm4486 = vweird.f32 %v4480
        %vm4487 = vmor %vm4485, %vm4486
        %v4488 = vsel %vm4487, %v4480, %v4484
        %v4489 = vand.u32 2147483647, %v4234
        %vm4490 = vcmp.eq.f32.partialorder %v4489, 8.507059e+37
        %v4491 = vand.u32 %v4234, 2147483648
        %v4492 = vor.u32 1.1754944e-38, %v4491
        %v4493 = vsel %vm4490, %v4492, %v4488
        %v4494 = vmul.f32 1.0, %v4493
        %v4495 = vrcp.pop %v4235
        %v4496 = vmul.f32 %v4235, %v4495
        %v4497 = vsub.f32 1.0, %v4496
        %v4498 = vmul.f32 %v4495, %v4497
        %v4499 = vadd.f32 %v4495, %v4498
        %vm4500 = vweird.f32 %v4235
        %vm4501 = vweird.f32 %v4495
        %vm4502 = vmor %vm4500, %vm4501
        %v4503 = vsel %vm4502, %v4495, %v4499
        %v4504 = vand.u32 2147483647, %v4235
        %vm4505 = vcmp.eq.f32.partialorder %v4504, 8.507059e+37
        %v4506 = vand.u32 %v4235, 2147483648
        %v4507 = vor.u32 1.1754944e-38, %v4506
        %v4508 = vsel %vm4505, %v4507, %v4503
        %v4509 = vmul.f32 1.0, %v4508
        %v4510 = vrcp.pop %v4236
        %v4511 = vmul.f32 %v4236, %v4510
        %v4512 = vsub.f32 1.0, %v4511
        %v4513 = vmul.f32 %v4510, %v4512
        %v4514 = vadd.f32 %v4510, %v4513
        %vm4515 = vweird.f32 %v4236
        %vm4516 = vweird.f32 %v4510
        %vm4517 = vmor %vm4515, %vm4516
        %v4518 = vsel %vm4517, %v4510, %v4514
        %v4519 = vand.u32 2147483647, %v4236
        %vm4520 = vcmp.eq.f32.partialorder %v4519, 8.507059e+37
        %v4521 = vand.u32 %v4236, 2147483648
        %v4522 = vor.u32 1.1754944e-38, %v4521
        %v4523 = vsel %vm4520, %v4522, %v4518
        %v4524 = vmul.f32 1.0, %v4523
        %v4525 = vrcp.pop %v4237
        %v4526 = vmul.f32 %v4237, %v4525
        %v4527 = vsub.f32 1.0, %v4526
        %v4528 = vmul.f32 %v4525, %v4527
        %v4529 = vadd.f32 %v4525, %v4528
        %vm4530 = vweird.f32 %v4237
        %vm4531 = vweird.f32 %v4525
        %vm4532 = vmor %vm4530, %vm4531
        %v4533 = vsel %vm4532, %v4525, %v4529
        %v4534 = vand.u32 2147483647, %v4237
        %vm4535 = vcmp.eq.f32.partialorder %v4534, 8.507059e+37
        %v4536 = vand.u32 %v4237, 2147483648
        %v4537 = vor.u32 1.1754944e-38, %v4536
        %v4538 = vsel %vm4535, %v4537, %v4533
        %v4539 = vmul.f32 1.0, %v4538
        %v4540 = vrcp.pop %v4238
        %v4541 = vmul.f32 %v4238, %v4540
        %v4542 = vsub.f32 1.0, %v4541
        %v4543 = vmul.f32 %v4540, %v4542
        %v4544 = vadd.f32 %v4540, %v4543
        %vm4545 = vweird.f32 %v4238
        %vm4546 = vweird.f32 %v4540
        %vm4547 = vmor %vm4545, %vm4546
        %v4548 = vsel %vm4547, %v4540, %v4544
        %v4549 = vand.u32 2147483647, %v4238
        %vm4550 = vcmp.eq.f32.partialorder %v4549, 8.507059e+37
        %v4551 = vand.u32 %v4238, 2147483648
        %v4552 = vor.u32 1.1754944e-38, %v4551
        %v4553 = vsel %vm4550, %v4552, %v4548
        %v4554 = vmul.f32 1.0, %v4553
        %v4555 = vrcp.pop %v4239
        %v4556 = vmul.f32 %v4239, %v4555
        %v4557 = vsub.f32 1.0, %v4556
        %v4558 = vmul.f32 %v4555, %v4557
        %v4559 = vadd.f32 %v4555, %v4558
        %vm4560 = vweird.f32 %v4239
        %vm4561 = vweird.f32 %v4555
        %vm4562 = vmor %vm4560, %vm4561
        %v4563 = vsel %vm4562, %v4555, %v4559
        %v4564 = vand.u32 2147483647, %v4239
        %vm4565 = vcmp.eq.f32.partialorder %v4564, 8.507059e+37
        %v4566 = vand.u32 %v4239, 2147483648
        %v4567 = vor.u32 1.1754944e-38, %v4566
        %v4568 = vsel %vm4565, %v4567, %v4563
        %v4569 = vmul.f32 1.0, %v4568
        %v4570 = vrcp.pop %v4240
        %v4571 = vmul.f32 %v4240, %v4570
        %v4572 = vsub.f32 1.0, %v4571
        %v4573 = vmul.f32 %v4570, %v4572
        %v4574 = vadd.f32 %v4570, %v4573
        %vm4575 = vweird.f32 %v4240
        %vm4576 = vweird.f32 %v4570
        %vm4577 = vmor %vm4575, %vm4576
        %v4578 = vsel %vm4577, %v4570, %v4574
        %v4579 = vand.u32 2147483647, %v4240
        %vm4580 = vcmp.eq.f32.partialorder %v4579, 8.507059e+37
        %v4581 = vand.u32 %v4240, 2147483648
        %v4582 = vor.u32 1.1754944e-38, %v4581
        %v4583 = vsel %vm4580, %v4582, %v4578
        %v4584 = vmul.f32 1.0, %v4583
        %v4585 = vrcp.pop %v4241
        %v4586 = vmul.f32 %v4241, %v4585
        %v4587 = vsub.f32 1.0, %v4586
        %v4588 = vmul.f32 %v4585, %v4587
        %v4589 = vadd.f32 %v4585, %v4588
        %vm4590 = vweird.f32 %v4241
        %vm4591 = vweird.f32 %v4585
        %vm4592 = vmor %vm4590, %vm4591
        %v4593 = vsel %vm4592, %v4585, %v4589
        %v4594 = vand.u32 2147483647, %v4241
        %vm4595 = vcmp.eq.f32.partialorder %v4594, 8.507059e+37
        %v4596 = vand.u32 %v4241, 2147483648
        %v4597 = vor.u32 1.1754944e-38, %v4596
        %v4598 = vsel %vm4595, %v4597, %v4593
        %v4599 = vmul.f32 1.0, %v4598
        %v4600 = vrcp.pop %v4242
        %v4601 = vmul.f32 %v4242, %v4600
        %v4602 = vsub.f32 1.0, %v4601
        %v4603 = vmul.f32 %v4600, %v4602
        %v4604 = vadd.f32 %v4600, %v4603
        %vm4605 = vweird.f32 %v4242
        %vm4606 = vweird.f32 %v4600
        %vm4607 = vmor %vm4605, %vm4606
        %v4608 = vsel %vm4607, %v4600, %v4604
        %v4609 = vand.u32 2147483647, %v4242
        %vm4610 = vcmp.eq.f32.partialorder %v4609, 8.507059e+37
        %v4611 = vand.u32 %v4242, 2147483648
        %v4612 = vor.u32 1.1754944e-38, %v4611
        %v4613 = vsel %vm4610, %v4612, %v4608
        %v4614 = vmul.f32 1.0, %v4613
        %v4615 = vrcp.pop %v4243
        %v4616 = vmul.f32 %v4243, %v4615
        %v4617 = vsub.f32 1.0, %v4616
        %v4618 = vmul.f32 %v4615, %v4617
        %v4619 = vadd.f32 %v4615, %v4618
        %vm4620 = vweird.f32 %v4243
        %vm4621 = vweird.f32 %v4615
        %vm4622 = vmor %vm4620, %vm4621
        %v4623 = vsel %vm4622, %v4615, %v4619
        %v4624 = vand.u32 2147483647, %v4243
        %vm4625 = vcmp.eq.f32.partialorder %v4624, 8.507059e+37
        %v4626 = vand.u32 %v4243, 2147483648
        %v4627 = vor.u32 1.1754944e-38, %v4626
        %v4628 = vsel %vm4625, %v4627, %v4623
        %v4629 = vmul.f32 1.0, %v4628
        %v4630 = vrcp.pop %v4244
        %v4631 = vmul.f32 %v4244, %v4630
        %v4632 = vsub.f32 1.0, %v4631
        %v4633 = vmul.f32 %v4630, %v4632
        %v4634 = vadd.f32 %v4630, %v4633
        %vm4635 = vweird.f32 %v4244
        %vm4636 = vweird.f32 %v4630
        %vm4637 = vmor %vm4635, %vm4636
        %v4638 = vsel %vm4637, %v4630, %v4634
        %v4639 = vand.u32 2147483647, %v4244
        %vm4640 = vcmp.eq.f32.partialorder %v4639, 8.507059e+37
        %v4641 = vand.u32 %v4244, 2147483648
        %v4642 = vor.u32 1.1754944e-38, %v4641
        %v4643 = vsel %vm4640, %v4642, %v4638
        %v4644 = vmul.f32 1.0, %v4643
        %v4645 = vrcp.pop %v4245
        %v4646 = vmul.f32 %v4245, %v4645
        %v4647 = vsub.f32 1.0, %v4646
        %v4648 = vmul.f32 %v4645, %v4647
        %v4649 = vadd.f32 %v4645, %v4648
        %vm4650 = vweird.f32 %v4245
        %vm4651 = vweird.f32 %v4645
        %vm4652 = vmor %vm4650, %vm4651
        %v4653 = vsel %vm4652, %v4645, %v4649
        %v4654 = vand.u32 2147483647, %v4245
        %vm4655 = vcmp.eq.f32.partialorder %v4654, 8.507059e+37
        %v4656 = vand.u32 %v4245, 2147483648
        %v4657 = vor.u32 1.1754944e-38, %v4656
        %v4658 = vsel %vm4655, %v4657, %v4653
        %v4659 = vmul.f32 1.0, %v4658
        %v4660 = vrcp.pop %v4246
        %v4661 = vmul.f32 %v4246, %v4660
        %v4662 = vsub.f32 1.0, %v4661
        %v4663 = vmul.f32 %v4660, %v4662
        %v4664 = vadd.f32 %v4660, %v4663
        %vm4665 = vweird.f32 %v4246
        %vm4666 = vweird.f32 %v4660
        %vm4667 = vmor %vm4665, %vm4666
        %v4668 = vsel %vm4667, %v4660, %v4664
        %v4669 = vand.u32 2147483647, %v4246
        %vm4670 = vcmp.eq.f32.partialorder %v4669, 8.507059e+37
        %v4671 = vand.u32 %v4246, 2147483648
        %v4672 = vor.u32 1.1754944e-38, %v4671
        %v4673 = vsel %vm4670, %v4672, %v4668
        %v4674 = vmul.f32 1.0, %v4673
        %v4675 = vrcp.pop %v4247
        %v4676 = vmul.f32 %v4247, %v4675
        %v4677 = vsub.f32 1.0, %v4676
        %v4678 = vmul.f32 %v4675, %v4677
        %v4679 = vadd.f32 %v4675, %v4678
        %vm4680 = vweird.f32 %v4247
        %vm4681 = vweird.f32 %v4675
        %vm4682 = vmor %vm4680, %vm4681
        %v4683 = vsel %vm4682, %v4675, %v4679
        %v4684 = vand.u32 2147483647, %v4247
        %vm4685 = vcmp.eq.f32.partialorder %v4684, 8.507059e+37
        %v4686 = vand.u32 %v4247, 2147483648
        %v4687 = vor.u32 1.1754944e-38, %v4686
        %v4688 = vsel %vm4685, %v4687, %v4683
        %v4689 = vmul.f32 1.0, %v4688
        %v4690 = vrcp.pop %v4248
        %v4691 = vmul.f32 %v4248, %v4690
        %v4692 = vsub.f32 1.0, %v4691
        %v4693 = vmul.f32 %v4690, %v4692
        %v4694 = vadd.f32 %v4690, %v4693
        %vm4695 = vweird.f32 %v4248
        %vm4696 = vweird.f32 %v4690
        %vm4697 = vmor %vm4695, %vm4696
        %v4698 = vsel %vm4697, %v4690, %v4694
        %v4699 = vand.u32 2147483647, %v4248
        %vm4700 = vcmp.eq.f32.partialorder %v4699, 8.507059e+37
        %v4701 = vand.u32 %v4248, 2147483648
        %v4702 = vor.u32 1.1754944e-38, %v4701
        %v4703 = vsel %vm4700, %v4702, %v4698
        %v4704 = vmul.f32 1.0, %v4703
        %v4705 = vrcp.pop %v4249
        %v4706 = vmul.f32 %v4249, %v4705
        %v4707 = vsub.f32 1.0, %v4706
        %v4708 = vmul.f32 %v4705, %v4707
        %v4709 = vadd.f32 %v4705, %v4708
        %vm4710 = vweird.f32 %v4249
        %vm4711 = vweird.f32 %v4705
        %vm4712 = vmor %vm4710, %vm4711
        %v4713 = vsel %vm4712, %v4705, %v4709
        %v4714 = vand.u32 2147483647, %v4249
        %vm4715 = vcmp.eq.f32.partialorder %v4714, 8.507059e+37
        %v4716 = vand.u32 %v4249, 2147483648
        %v4717 = vor.u32 1.1754944e-38, %v4716
        %v4718 = vsel %vm4715, %v4717, %v4713
        %v4719 = vmul.f32 1.0, %v4718
        %v4720 = vrcp.pop %v4250
        %v4721 = vmul.f32 %v4250, %v4720
        %v4722 = vsub.f32 1.0, %v4721
        %v4723 = vmul.f32 %v4720, %v4722
        %v4724 = vadd.f32 %v4720, %v4723
        %vm4725 = vweird.f32 %v4250
        %vm4726 = vweird.f32 %v4720
        %vm4727 = vmor %vm4725, %vm4726
        %v4728 = vsel %vm4727, %v4720, %v4724
        %v4729 = vand.u32 2147483647, %v4250
        %vm4730 = vcmp.eq.f32.partialorder %v4729, 8.507059e+37
        %v4731 = vand.u32 %v4250, 2147483648
        %v4732 = vor.u32 1.1754944e-38, %v4731
        %v4733 = vsel %vm4730, %v4732, %v4728
        %v4734 = vmul.f32 1.0, %v4733
        %v4735 = vrcp.pop %v4251
        %v4736 = vmul.f32 %v4251, %v4735
        %v4737 = vsub.f32 1.0, %v4736
        %v4738 = vmul.f32 %v4735, %v4737
        %v4739 = vadd.f32 %v4735, %v4738
        %vm4740 = vweird.f32 %v4251
        %vm4741 = vweird.f32 %v4735
        %vm4742 = vmor %vm4740, %vm4741
        %v4743 = vsel %vm4742, %v4735, %v4739
        %v4744 = vand.u32 2147483647, %v4251
        %vm4745 = vcmp.eq.f32.partialorder %v4744, 8.507059e+37
        %v4746 = vand.u32 %v4251, 2147483648
        %v4747 = vor.u32 1.1754944e-38, %v4746
        %v4748 = vsel %vm4745, %v4747, %v4743
        %v4749 = vmul.f32 1.0, %v4748
        %v4750 = vrcp.pop %v4252
        %v4751 = vmul.f32 %v4252, %v4750
        %v4752 = vsub.f32 1.0, %v4751
        %v4753 = vmul.f32 %v4750, %v4752
        %v4754 = vadd.f32 %v4750, %v4753
        %vm4755 = vweird.f32 %v4252
        %vm4756 = vweird.f32 %v4750
        %vm4757 = vmor %vm4755, %vm4756
        %v4758 = vsel %vm4757, %v4750, %v4754
        %v4759 = vand.u32 2147483647, %v4252
        %vm4760 = vcmp.eq.f32.partialorder %v4759, 8.507059e+37
        %v4761 = vand.u32 %v4252, 2147483648
        %v4762 = vor.u32 1.1754944e-38, %v4761
        %v4763 = vsel %vm4760, %v4762, %v4758
        %v4764 = vmul.f32 1.0, %v4763
        %v4765 = vrcp.pop %v4253
        %v4766 = vmul.f32 %v4253, %v4765
        %v4767 = vsub.f32 1.0, %v4766
        %v4768 = vmul.f32 %v4765, %v4767
        %v4769 = vadd.f32 %v4765, %v4768
        %vm4770 = vweird.f32 %v4253
        %vm4771 = vweird.f32 %v4765
        %vm4772 = vmor %vm4770, %vm4771
        %v4773 = vsel %vm4772, %v4765, %v4769
        %v4774 = vand.u32 2147483647, %v4253
        %vm4775 = vcmp.eq.f32.partialorder %v4774, 8.507059e+37
        %v4776 = vand.u32 %v4253, 2147483648
        %v4777 = vor.u32 1.1754944e-38, %v4776
        %v4778 = vsel %vm4775, %v4777, %v4773
        %v4779 = vmul.f32 1.0, %v4778
        %v4780 = vrcp.pop %v4254
        %v4781 = vmul.f32 %v4254, %v4780
        %v4782 = vsub.f32 1.0, %v4781
        %v4783 = vmul.f32 %v4780, %v4782
        %v4784 = vadd.f32 %v4780, %v4783
        %vm4785 = vweird.f32 %v4254
        %vm4786 = vweird.f32 %v4780
        %vm4787 = vmor %vm4785, %vm4786
        %v4788 = vsel %vm4787, %v4780, %v4784
        %v4789 = vand.u32 2147483647, %v4254
        %vm4790 = vcmp.eq.f32.partialorder %v4789, 8.507059e+37
        %v4791 = vand.u32 %v4254, 2147483648
        %v4792 = vor.u32 1.1754944e-38, %v4791
        %v4793 = vsel %vm4790, %v4792, %v4788
        %v4794 = vmul.f32 1.0, %v4793
        %v4795 = vrcp.pop %v4255
        %v4796 = vmul.f32 %v4255, %v4795
        %v4797 = vsub.f32 1.0, %v4796
        %v4798 = vmul.f32 %v4795, %v4797
        %v4799 = vadd.f32 %v4795, %v4798
        %vm4800 = vweird.f32 %v4255
        %vm4801 = vweird.f32 %v4795
        %vm4802 = vmor %vm4800, %vm4801
        %v4803 = vsel %vm4802, %v4795, %v4799
        %v4804 = vand.u32 2147483647, %v4255
        %vm4805 = vcmp.eq.f32.partialorder %v4804, 8.507059e+37
        %v4806 = vand.u32 %v4255, 2147483648
        %v4807 = vor.u32 1.1754944e-38, %v4806
        %v4808 = vsel %vm4805, %v4807, %v4803
        %v4809 = vmul.f32 1.0, %v4808
        %v4810 = vrcp.pop %v4256
        %v4811 = vmul.f32 %v4256, %v4810
        %v4812 = vsub.f32 1.0, %v4811
        %v4813 = vmul.f32 %v4810, %v4812
        %v4814 = vadd.f32 %v4810, %v4813
        %vm4815 = vweird.f32 %v4256
        %vm4816 = vweird.f32 %v4810
        %vm4817 = vmor %vm4815, %vm4816
        %v4818 = vsel %vm4817, %v4810, %v4814
        %v4819 = vand.u32 2147483647, %v4256
        %vm4820 = vcmp.eq.f32.partialorder %v4819, 8.507059e+37
        %v4821 = vand.u32 %v4256, 2147483648
        %v4822 = vor.u32 1.1754944e-38, %v4821
        %v4823 = vsel %vm4820, %v4822, %v4818
        %v4824 = vmul.f32 1.0, %v4823
        %v4825 = vrcp.pop %v4257
        %v4826 = vmul.f32 %v4257, %v4825
        %v4827 = vsub.f32 1.0, %v4826
        %v4828 = vmul.f32 %v4825, %v4827
        %v4829 = vadd.f32 %v4825, %v4828
        %vm4830 = vweird.f32 %v4257
        %vm4831 = vweird.f32 %v4825
        %vm4832 = vmor %vm4830, %vm4831
        %v4833 = vsel %vm4832, %v4825, %v4829
        %v4834 = vand.u32 2147483647, %v4257
        %vm4835 = vcmp.eq.f32.partialorder %v4834, 8.507059e+37
        %v4836 = vand.u32 %v4257, 2147483648
        %v4837 = vor.u32 1.1754944e-38, %v4836
        %v4838 = vsel %vm4835, %v4837, %v4833
        %v4839 = vmul.f32 1.0, %v4838
        %v4840 = vrcp.pop %v4258
        %v4841 = vmul.f32 %v4258, %v4840
        %v4842 = vsub.f32 1.0, %v4841
        %v4843 = vmul.f32 %v4840, %v4842
        %v4844 = vadd.f32 %v4840, %v4843
        %vm4845 = vweird.f32 %v4258
        %vm4846 = vweird.f32 %v4840
        %vm4847 = vmor %vm4845, %vm4846
        %v4848 = vsel %vm4847, %v4840, %v4844
        %v4849 = vand.u32 2147483647, %v4258
        %vm4850 = vcmp.eq.f32.partialorder %v4849, 8.507059e+37
        %v4851 = vand.u32 %v4258, 2147483648
        %v4852 = vor.u32 1.1754944e-38, %v4851
        %v4853 = vsel %vm4850, %v4852, %v4848
        %v4854 = vmul.f32 1.0, %v4853
        %v4855 = vrcp.pop %v4259
        %v4856 = vmul.f32 %v4259, %v4855
        %v4857 = vsub.f32 1.0, %v4856
        %v4858 = vmul.f32 %v4855, %v4857
        %v4859 = vadd.f32 %v4855, %v4858
        %vm4860 = vweird.f32 %v4259
        %vm4861 = vweird.f32 %v4855
        %vm4862 = vmor %vm4860, %vm4861
        %v4863 = vsel %vm4862, %v4855, %v4859
        %v4864 = vand.u32 2147483647, %v4259
        %vm4865 = vcmp.eq.f32.partialorder %v4864, 8.507059e+37
        %v4866 = vand.u32 %v4259, 2147483648
        %v4867 = vor.u32 1.1754944e-38, %v4866
        %v4868 = vsel %vm4865, %v4867, %v4863
        %v4869 = vmul.f32 1.0, %v4868
        %v4870 = vrcp.pop %v4260
        %v4871 = vmul.f32 %v4260, %v4870
        %v4872 = vsub.f32 1.0, %v4871
        %v4873 = vmul.f32 %v4870, %v4872
        %v4874 = vadd.f32 %v4870, %v4873
        %vm4875 = vweird.f32 %v4260
        %vm4876 = vweird.f32 %v4870
        %vm4877 = vmor %vm4875, %vm4876
        %v4878 = vsel %vm4877, %v4870, %v4874
        %v4879 = vand.u32 2147483647, %v4260
        %vm4880 = vcmp.eq.f32.partialorder %v4879, 8.507059e+37
        %v4881 = vand.u32 %v4260, 2147483648
        %v4882 = vor.u32 1.1754944e-38, %v4881
        %v4883 = vsel %vm4880, %v4882, %v4878
        %v4884 = vmul.f32 1.0, %v4883
        %v4885 = vrcp.pop %v4261
        %v4886 = vmul.f32 %v4261, %v4885
        %v4887 = vsub.f32 1.0, %v4886
        %v4888 = vmul.f32 %v4885, %v4887
        %v4889 = vadd.f32 %v4885, %v4888
        %vm4890 = vweird.f32 %v4261
        %vm4891 = vweird.f32 %v4885
        %vm4892 = vmor %vm4890, %vm4891
        %v4893 = vsel %vm4892, %v4885, %v4889
        %v4894 = vand.u32 2147483647, %v4261
        %vm4895 = vcmp.eq.f32.partialorder %v4894, 8.507059e+37
        %v4896 = vand.u32 %v4261, 2147483648
        %v4897 = vor.u32 1.1754944e-38, %v4896
        %v4898 = vsel %vm4895, %v4897, %v4893
        %v4899 = vmul.f32 1.0, %v4898
        %v4900 = vrcp.pop %v4262
        %v4901 = vmul.f32 %v4262, %v4900
        %v4902 = vsub.f32 1.0, %v4901
        %v4903 = vmul.f32 %v4900, %v4902
        %v4904 = vadd.f32 %v4900, %v4903
        %vm4905 = vweird.f32 %v4262
        %vm4906 = vweird.f32 %v4900
        %vm4907 = vmor %vm4905, %vm4906
        %v4908 = vsel %vm4907, %v4900, %v4904
        %v4909 = vand.u32 2147483647, %v4262
        %vm4910 = vcmp.eq.f32.partialorder %v4909, 8.507059e+37
        %v4911 = vand.u32 %v4262, 2147483648
        %v4912 = vor.u32 1.1754944e-38, %v4911
        %v4913 = vsel %vm4910, %v4912, %v4908
        %v4914 = vmul.f32 1.0, %v4913
        %v4915 = vrcp.pop %v4263
        %v4916 = vmul.f32 %v4263, %v4915
        %v4917 = vsub.f32 1.0, %v4916
        %v4918 = vmul.f32 %v4915, %v4917
        %v4919 = vadd.f32 %v4915, %v4918
        %vm4920 = vweird.f32 %v4263
        %vm4921 = vweird.f32 %v4915
        %vm4922 = vmor %vm4920, %vm4921
        %v4923 = vsel %vm4922, %v4915, %v4919
        %v4924 = vand.u32 2147483647, %v4263
        %vm4925 = vcmp.eq.f32.partialorder %v4924, 8.507059e+37
        %v4926 = vand.u32 %v4263, 2147483648
        %v4927 = vor.u32 1.1754944e-38, %v4926
        %v4928 = vsel %vm4925, %v4927, %v4923
        %v4929 = vmul.f32 1.0, %v4928
        %v4930 = vrcp.pop %v4264
        %v4931 = vmul.f32 %v4264, %v4930
        %v4932 = vsub.f32 1.0, %v4931
        %v4933 = vmul.f32 %v4930, %v4932
        %v4934 = vadd.f32 %v4930, %v4933
        %vm4935 = vweird.f32 %v4264
        %vm4936 = vweird.f32 %v4930
        %vm4937 = vmor %vm4935, %vm4936
        %v4938 = vsel %vm4937, %v4930, %v4934
        %v4939 = vand.u32 2147483647, %v4264
        %vm4940 = vcmp.eq.f32.partialorder %v4939, 8.507059e+37
        %v4941 = vand.u32 %v4264, 2147483648
        %v4942 = vor.u32 1.1754944e-38, %v4941
        %v4943 = vsel %vm4940, %v4942, %v4938
        %v4944 = vmul.f32 1.0, %v4943
        %v4945 = vrcp.pop %v4265
        %v4946 = vmul.f32 %v4265, %v4945
        %v4947 = vsub.f32 1.0, %v4946
        %v4948 = vmul.f32 %v4945, %v4947
        %v4949 = vadd.f32 %v4945, %v4948
        %vm4950 = vweird.f32 %v4265
        %vm4951 = vweird.f32 %v4945
        %vm4952 = vmor %vm4950, %vm4951
        %v4953 = vsel %vm4952, %v4945, %v4949
        %v4954 = vand.u32 2147483647, %v4265
        %vm4955 = vcmp.eq.f32.partialorder %v4954, 8.507059e+37
        %v4956 = vand.u32 %v4265, 2147483648
        %v4957 = vor.u32 1.1754944e-38, %v4956
        %v4958 = vsel %vm4955, %v4957, %v4953
        %v4959 = vmul.f32 1.0, %v4958
        %v4960 = vrcp.pop %v4266
        %v4961 = vmul.f32 %v4266, %v4960
        %v4962 = vsub.f32 1.0, %v4961
        %v4963 = vmul.f32 %v4960, %v4962
        %v4964 = vadd.f32 %v4960, %v4963
        %vm4965 = vweird.f32 %v4266
        %vm4966 = vweird.f32 %v4960
        %vm4967 = vmor %vm4965, %vm4966
        %v4968 = vsel %vm4967, %v4960, %v4964
        %v4969 = vand.u32 2147483647, %v4266
        %vm4970 = vcmp.eq.f32.partialorder %v4969, 8.507059e+37
        %v4971 = vand.u32 %v4266, 2147483648
        %v4972 = vor.u32 1.1754944e-38, %v4971
        %v4973 = vsel %vm4970, %v4972, %v4968
        %v4974 = vmul.f32 1.0, %v4973
        %v4975 = vrcp.pop %v4267
        %v4976 = vmul.f32 %v4267, %v4975
        %v4977 = vsub.f32 1.0, %v4976
        %v4978 = vmul.f32 %v4975, %v4977
        %v4979 = vadd.f32 %v4975, %v4978
        %vm4980 = vweird.f32 %v4267
        %vm4981 = vweird.f32 %v4975
        %vm4982 = vmor %vm4980, %vm4981
        %v4983 = vsel %vm4982, %v4975, %v4979
        %v4984 = vand.u32 2147483647, %v4267
        %vm4985 = vcmp.eq.f32.partialorder %v4984, 8.507059e+37
        %v4986 = vand.u32 %v4267, 2147483648
        %v4987 = vor.u32 1.1754944e-38, %v4986
        %v4988 = vsel %vm4985, %v4987, %v4983
        %v4989 = vmul.f32 1.0, %v4988
        %v4990 = vrcp.pop %v4268
        %v4991 = vmul.f32 %v4268, %v4990
        %v4992 = vsub.f32 1.0, %v4991
        %v4993 = vmul.f32 %v4990, %v4992
        %v4994 = vadd.f32 %v4990, %v4993
        %vm4995 = vweird.f32 %v4268
        %vm4996 = vweird.f32 %v4990
        %vm4997 = vmor %vm4995, %vm4996
        %v4998 = vsel %vm4997, %v4990, %v4994
        %v4999 = vand.u32 2147483647, %v4268
        %vm5000 = vcmp.eq.f32.partialorder %v4999, 8.507059e+37
        %v5001 = vand.u32 %v4268, 2147483648
        %v5002 = vor.u32 1.1754944e-38, %v5001
        %v5003 = vsel %vm5000, %v5002, %v4998
        %v5004 = vmul.f32 1.0, %v5003
        %v5005 = vrcp.pop %v4269
        %v5006 = vmul.f32 %v4269, %v5005
        %v5007 = vsub.f32 1.0, %v5006
        %v5008 = vmul.f32 %v5005, %v5007
        %v5009 = vadd.f32 %v5005, %v5008
        %vm5010 = vweird.f32 %v4269
        %vm5011 = vweird.f32 %v5005
        %vm5012 = vmor %vm5010, %vm5011
        %v5013 = vsel %vm5012, %v5005, %v5009
        %v5014 = vand.u32 2147483647, %v4269
        %vm5015 = vcmp.eq.f32.partialorder %v5014, 8.507059e+37
        %v5016 = vand.u32 %v4269, 2147483648
        %v5017 = vor.u32 1.1754944e-38, %v5016
        %v5018 = vsel %vm5015, %v5017, %v5013
        %v5019 = vmul.f32 1.0, %v5018
        %v5020 = vrcp.pop %v4270
        %v5021 = vmul.f32 %v4270, %v5020
        %v5022 = vsub.f32 1.0, %v5021
        %v5023 = vmul.f32 %v5020, %v5022
        %v5024 = vadd.f32 %v5020, %v5023
        %vm5025 = vweird.f32 %v4270
        %vm5026 = vweird.f32 %v5020
        %vm5027 = vmor %vm5025, %vm5026
        %v5028 = vsel %vm5027, %v5020, %v5024
        %v5029 = vand.u32 2147483647, %v4270
        %vm5030 = vcmp.eq.f32.partialorder %v5029, 8.507059e+37
        %v5031 = vand.u32 %v4270, 2147483648
        %v5032 = vor.u32 1.1754944e-38, %v5031
        %v5033 = vsel %vm5030, %v5032, %v5028
        %v5034 = vmul.f32 1.0, %v5033
        %v5035 = vrcp.pop %v4271
        %v5036 = vmul.f32 %v4271, %v5035
        %v5037 = vsub.f32 1.0, %v5036
        %v5038 = vmul.f32 %v5035, %v5037
        %v5039 = vadd.f32 %v5035, %v5038
        %vm5040 = vweird.f32 %v4271
        %vm5041 = vweird.f32 %v5035
        %vm5042 = vmor %vm5040, %vm5041
        %v5043 = vsel %vm5042, %v5035, %v5039
        %v5044 = vand.u32 2147483647, %v4271
        %vm5045 = vcmp.eq.f32.partialorder %v5044, 8.507059e+37
        %v5046 = vand.u32 %v4271, 2147483648
        %v5047 = vor.u32 1.1754944e-38, %v5046
        %v5048 = vsel %vm5045, %v5047, %v5043
        %v5049 = vmul.f32 1.0, %v5048
        %v5050 = vrcp.pop %v4272
        %v5051 = vmul.f32 %v4272, %v5050
        %v5052 = vsub.f32 1.0, %v5051
        %v5053 = vmul.f32 %v5050, %v5052
        %v5054 = vadd.f32 %v5050, %v5053
        %vm5055 = vweird.f32 %v4272
        %vm5056 = vweird.f32 %v5050
        %vm5057 = vmor %vm5055, %vm5056
        %v5058 = vsel %vm5057, %v5050, %v5054
        %v5059 = vand.u32 2147483647, %v4272
        %vm5060 = vcmp.eq.f32.partialorder %v5059, 8.507059e+37
        %v5061 = vand.u32 %v4272, 2147483648
        %v5062 = vor.u32 1.1754944e-38, %v5061
        %v5063 = vsel %vm5060, %v5062, %v5058
        %v5064 = vmul.f32 1.0, %v5063
        %v5065 = vrcp.pop %v4273
        %v5066 = vmul.f32 %v4273, %v5065
        %v5067 = vsub.f32 1.0, %v5066
        %v5068 = vmul.f32 %v5065, %v5067
        %v5069 = vadd.f32 %v5065, %v5068
        %vm5070 = vweird.f32 %v4273
        %vm5071 = vweird.f32 %v5065
        %vm5072 = vmor %vm5070, %vm5071
        %v5073 = vsel %vm5072, %v5065, %v5069
        %v5074 = vand.u32 2147483647, %v4273
        %vm5075 = vcmp.eq.f32.partialorder %v5074, 8.507059e+37
        %v5076 = vand.u32 %v4273, 2147483648
        %v5077 = vor.u32 1.1754944e-38, %v5076
        %v5078 = vsel %vm5075, %v5077, %v5073
        %v5079 = vmul.f32 1.0, %v5078
        %v5080 = vrcp.pop %v4274
        %v5081 = vmul.f32 %v4274, %v5080
        %v5082 = vsub.f32 1.0, %v5081
        %v5083 = vmul.f32 %v5080, %v5082
        %v5084 = vadd.f32 %v5080, %v5083
        %vm5085 = vweird.f32 %v4274
        %vm5086 = vweird.f32 %v5080
        %vm5087 = vmor %vm5085, %vm5086
        %v5088 = vsel %vm5087, %v5080, %v5084
        %v5089 = vand.u32 2147483647, %v4274
        %vm5090 = vcmp.eq.f32.partialorder %v5089, 8.507059e+37
        %v5091 = vand.u32 %v4274, 2147483648
        %v5092 = vor.u32 1.1754944e-38, %v5091
        %v5093 = vsel %vm5090, %v5092, %v5088
        %v5094 = vmul.f32 1.0, %v5093
        %v5095 = vrcp.pop %v4275
        %v5096 = vmul.f32 %v4275, %v5095
        %v5097 = vsub.f32 1.0, %v5096
        %v5098 = vmul.f32 %v5095, %v5097
        %v5099 = vadd.f32 %v5095, %v5098
        %vm5100 = vweird.f32 %v4275
        %vm5101 = vweird.f32 %v5095
        %vm5102 = vmor %vm5100, %vm5101
        %v5103 = vsel %vm5102, %v5095, %v5099
        %v5104 = vand.u32 2147483647, %v4275
        %vm5105 = vcmp.eq.f32.partialorder %v5104, 8.507059e+37
        %v5106 = vand.u32 %v4275, 2147483648
        %v5107 = vor.u32 1.1754944e-38, %v5106
        %v5108 = vsel %vm5105, %v5107, %v5103
        %v5109 = vmul.f32 1.0, %v5108
        %v5110 = vrcp.pop %v4276
        %v5111 = vmul.f32 %v4276, %v5110
        %v5112 = vsub.f32 1.0, %v5111
        %v5113 = vmul.f32 %v5110, %v5112
        %v5114 = vadd.f32 %v5110, %v5113
        %vm5115 = vweird.f32 %v4276
        %vm5116 = vweird.f32 %v5110
        %vm5117 = vmor %vm5115, %vm5116
        %v5118 = vsel %vm5117, %v5110, %v5114
        %v5119 = vand.u32 2147483647, %v4276
        %vm5120 = vcmp.eq.f32.partialorder %v5119, 8.507059e+37
        %v5121 = vand.u32 %v4276, 2147483648
        %v5122 = vor.u32 1.1754944e-38, %v5121
        %v5123 = vsel %vm5120, %v5122, %v5118
        %v5124 = vmul.f32 1.0, %v5123
        %v5125 = vrcp.pop %v4277
        %v5126 = vmul.f32 %v4277, %v5125
        %v5127 = vsub.f32 1.0, %v5126
        %v5128 = vmul.f32 %v5125, %v5127
        %v5129 = vadd.f32 %v5125, %v5128
        %vm5130 = vweird.f32 %v4277
        %vm5131 = vweird.f32 %v5125
        %vm5132 = vmor %vm5130, %vm5131
        %v5133 = vsel %vm5132, %v5125, %v5129
        %v5134 = vand.u32 2147483647, %v4277
        %vm5135 = vcmp.eq.f32.partialorder %v5134, 8.507059e+37
        %v5136 = vand.u32 %v4277, 2147483648
        %v5137 = vor.u32 1.1754944e-38, %v5136
        %v5138 = vsel %vm5135, %v5137, %v5133
        %v5139 = vmul.f32 1.0, %v5138
        %v5140 = vrcp.pop %v4278
        %v5141 = vmul.f32 %v4278, %v5140
        %v5142 = vsub.f32 1.0, %v5141
        %v5143 = vmul.f32 %v5140, %v5142
        %v5144 = vadd.f32 %v5140, %v5143
        %vm5145 = vweird.f32 %v4278
        %vm5146 = vweird.f32 %v5140
        %vm5147 = vmor %vm5145, %vm5146
        %v5148 = vsel %vm5147, %v5140, %v5144
        %v5149 = vand.u32 2147483647, %v4278
        %vm5150 = vcmp.eq.f32.partialorder %v5149, 8.507059e+37
        %v5151 = vand.u32 %v4278, 2147483648
        %v5152 = vor.u32 1.1754944e-38, %v5151
        %v5153 = vsel %vm5150, %v5152, %v5148
        %v5154 = vmul.f32 1.0, %v5153
        %v5155 = vrcp.pop %v4279
        %v5156 = vmul.f32 %v4279, %v5155
        %v5157 = vsub.f32 1.0, %v5156
        %v5158 = vmul.f32 %v5155, %v5157
        %v5159 = vadd.f32 %v5155, %v5158
        %vm5160 = vweird.f32 %v4279
        %vm5161 = vweird.f32 %v5155
        %vm5162 = vmor %vm5160, %vm5161
        %v5163 = vsel %vm5162, %v5155, %v5159
        %v5164 = vand.u32 2147483647, %v4279
        %vm5165 = vcmp.eq.f32.partialorder %v5164, 8.507059e+37
        %v5166 = vand.u32 %v4279, 2147483648
        %v5167 = vor.u32 1.1754944e-38, %v5166
        %v5168 = vsel %vm5165, %v5167, %v5163
        %v5169 = vmul.f32 1.0, %v5168
        %v5170 = vrcp.pop %v4280
        %v5171 = vmul.f32 %v4280, %v5170
        %v5172 = vsub.f32 1.0, %v5171
        %v5173 = vmul.f32 %v5170, %v5172
        %v5174 = vadd.f32 %v5170, %v5173
        %vm5175 = vweird.f32 %v4280
        %vm5176 = vweird.f32 %v5170
        %vm5177 = vmor %vm5175, %vm5176
        %v5178 = vsel %vm5177, %v5170, %v5174
        %v5179 = vand.u32 2147483647, %v4280
        %vm5180 = vcmp.eq.f32.partialorder %v5179, 8.507059e+37
        %v5181 = vand.u32 %v4280, 2147483648
        %v5182 = vor.u32 1.1754944e-38, %v5181
        %v5183 = vsel %vm5180, %v5182, %v5178
        %v5184 = vmul.f32 1.0, %v5183
        %v5185 = vrcp.pop %v4281
        %v5186 = vmul.f32 %v4281, %v5185
        %v5187 = vsub.f32 1.0, %v5186
        %v5188 = vmul.f32 %v5185, %v5187
        %v5189 = vadd.f32 %v5185, %v5188
        %vm5190 = vweird.f32 %v4281
        %vm5191 = vweird.f32 %v5185
        %vm5192 = vmor %vm5190, %vm5191
        %v5193 = vsel %vm5192, %v5185, %v5189
        %v5194 = vand.u32 2147483647, %v4281
        %vm5195 = vcmp.eq.f32.partialorder %v5194, 8.507059e+37
        %v5196 = vand.u32 %v4281, 2147483648
        %v5197 = vor.u32 1.1754944e-38, %v5196
        %v5198 = vsel %vm5195, %v5197, %v5193
        %v5199 = vmul.f32 1.0, %v5198
        %v5200 = vrcp.pop %v4282
        %v5201 = vmul.f32 %v4282, %v5200
        %v5202 = vsub.f32 1.0, %v5201
        %v5203 = vmul.f32 %v5200, %v5202
        %v5204 = vadd.f32 %v5200, %v5203
        %vm5205 = vweird.f32 %v4282
        %vm5206 = vweird.f32 %v5200
        %vm5207 = vmor %vm5205, %vm5206
        %v5208 = vsel %vm5207, %v5200, %v5204
        %v5209 = vand.u32 2147483647, %v4282
        %vm5210 = vcmp.eq.f32.partialorder %v5209, 8.507059e+37
        %v5211 = vand.u32 %v4282, 2147483648
        %v5212 = vor.u32 1.1754944e-38, %v5211
        %v5213 = vsel %vm5210, %v5212, %v5208
        %v5214 = vmul.f32 1.0, %v5213
        %v5215 = vrcp.pop %v4283
        %v5216 = vmul.f32 %v4283, %v5215
        %v5217 = vsub.f32 1.0, %v5216
        %v5218 = vmul.f32 %v5215, %v5217
        %v5219 = vadd.f32 %v5215, %v5218
        %vm5220 = vweird.f32 %v4283
        %vm5221 = vweird.f32 %v5215
        %vm5222 = vmor %vm5220, %vm5221
        %v5223 = vsel %vm5222, %v5215, %v5219
        %v5224 = vand.u32 2147483647, %v4283
        %vm5225 = vcmp.eq.f32.partialorder %v5224, 8.507059e+37
        %v5226 = vand.u32 %v4283, 2147483648
        %v5227 = vor.u32 1.1754944e-38, %v5226
        %v5228 = vsel %vm5225, %v5227, %v5223
        %v5229 = vmul.f32 1.0, %v5228
        %v5230 = vrcp.pop %v4284
        %v5231 = vmul.f32 %v4284, %v5230
        %v5232 = vsub.f32 1.0, %v5231
        %v5233 = vmul.f32 %v5230, %v5232
        %v5234 = vadd.f32 %v5230, %v5233
        %vm5235 = vweird.f32 %v4284
        %vm5236 = vweird.f32 %v5230
        %vm5237 = vmor %vm5235, %vm5236
        %v5238 = vsel %vm5237, %v5230, %v5234
        %v5239 = vand.u32 2147483647, %v4284
        %vm5240 = vcmp.eq.f32.partialorder %v5239, 8.507059e+37
        %v5241 = vand.u32 %v4284, 2147483648
        %v5242 = vor.u32 1.1754944e-38, %v5241
        %v5243 = vsel %vm5240, %v5242, %v5238
        %v5244 = vmul.f32 1.0, %v5243
        %v5309 = vrot.slane %v3872, 7
        %vm5310 = vcmask 1041409
        %v5311 = vsel %vm5310, %v5309, %v3870
        %v5312 = vrot.slane %v3875, 6
        %vm5313 = vcmask 1042434
        %v5314 = vsel %vm5313, %v5312, %v5311
        %v5315 = vrot.slane %v3877, 5
        %vm5316 = vcmask 1043459
        %v5317 = vsel %vm5316, %v5315, %v5314
        %v5318 = vrot.slane %v3880, 4
        %vm5319 = vcmask 1044484
        %v5320 = vsel %vm5319, %v5318, %v5317
        %v5321 = vrot.slane %v3882, 3
        %vm5322 = vcmask 1045509
        %v5323 = vsel %vm5322, %v5321, %v5320
        %v5324 = vrot.slane %v3885, 2
        %vm5325 = vcmask 1046534
        %v5326 = vsel %vm5325, %v5324, %v5323
        %v5327 = vrot.slane %v3887, 1
        %vm5328 = vcmask 1047559
        %v5329 = vsel %vm5328, %v5327, %v5326
        %v5330 = vrot.slane %v3892, 7
        %v5331 = vsel %vm5310, %v5330, %v3890
        %v5332 = vrot.slane %v3895, 6
        %v5333 = vsel %vm5313, %v5332, %v5331
        %v5334 = vrot.slane %v3897, 5
        %v5335 = vsel %vm5316, %v5334, %v5333
        %v5336 = vrot.slane %v3900, 4
        %v5337 = vsel %vm5319, %v5336, %v5335
        %v5338 = vrot.slane %v3902, 3
        %v5339 = vsel %vm5322, %v5338, %v5337
        %v5340 = vrot.slane %v3905, 2
        %v5341 = vsel %vm5325, %v5340, %v5339
        %v5342 = vrot.slane %v3907, 1
        %v5343 = vsel %vm5328, %v5342, %v5341
        %v5344 = vrot.slane %v3912, 7
        %v5345 = vsel %vm5310, %v5344, %v3910
        %v5346 = vrot.slane %v3915, 6
        %v5347 = vsel %vm5313, %v5346, %v5345
        %v5348 = vrot.slane %v3917, 5
        %v5349 = vsel %vm5316, %v5348, %v5347
        %v5350 = vrot.slane %v3920, 4
        %v5351 = vsel %vm5319, %v5350, %v5349
        %v5352 = vrot.slane %v3922, 3
        %v5353 = vsel %vm5322, %v5352, %v5351
        %v5354 = vrot.slane %v3925, 2
        %v5355 = vsel %vm5325, %v5354, %v5353
        %v5356 = vrot.slane %v3927, 1
        %v5357 = vsel %vm5328, %v5356, %v5355
        %v5358 = vrot.slane %v3932, 7
        %v5359 = vsel %vm5310, %v5358, %v3930
        %v5360 = vrot.slane %v3935, 6
        %v5361 = vsel %vm5313, %v5360, %v5359
        %v5362 = vrot.slane %v3937, 5
        %v5363 = vsel %vm5316, %v5362, %v5361
        %v5364 = vrot.slane %v3940, 4
        %v5365 = vsel %vm5319, %v5364, %v5363
        %v5366 = vrot.slane %v3942, 3
        %v5367 = vsel %vm5322, %v5366, %v5365
        %v5368 = vrot.slane %v3945, 2
        %v5369 = vsel %vm5325, %v5368, %v5367
        %v5370 = vrot.slane %v3947, 1
        %v5371 = vsel %vm5328, %v5370, %v5369
        %v5372 = vrot.slane %v3952, 7
        %v5373 = vsel %vm5310, %v5372, %v3950
        %v5374 = vrot.slane %v3955, 6
        %v5375 = vsel %vm5313, %v5374, %v5373
        %v5376 = vrot.slane %v3957, 5
        %v5377 = vsel %vm5316, %v5376, %v5375
        %v5378 = vrot.slane %v3960, 4
        %v5379 = vsel %vm5319, %v5378, %v5377
        %v5380 = vrot.slane %v3962, 3
        %v5381 = vsel %vm5322, %v5380, %v5379
        %v5382 = vrot.slane %v3965, 2
        %v5383 = vsel %vm5325, %v5382, %v5381
        %v5384 = vrot.slane %v3967, 1
        %v5385 = vsel %vm5328, %v5384, %v5383
        %v5386 = vrot.slane %v3972, 7
        %v5387 = vsel %vm5310, %v5386, %v3970
        %v5388 = vrot.slane %v3975, 6
        %v5389 = vsel %vm5313, %v5388, %v5387
        %v5390 = vrot.slane %v3977, 5
        %v5391 = vsel %vm5316, %v5390, %v5389
        %v5392 = vrot.slane %v3980, 4
        %v5393 = vsel %vm5319, %v5392, %v5391
        %v5394 = vrot.slane %v3982, 3
        %v5395 = vsel %vm5322, %v5394, %v5393
        %v5396 = vrot.slane %v3985, 2
        %v5397 = vsel %vm5325, %v5396, %v5395
        %v5398 = vrot.slane %v3987, 1
        %v5399 = vsel %vm5328, %v5398, %v5397
        %v5400 = vrot.slane %v3992, 7
        %v5401 = vsel %vm5310, %v5400, %v3990
        %v5402 = vrot.slane %v3995, 6
        %v5403 = vsel %vm5313, %v5402, %v5401
        %v5404 = vrot.slane %v3997, 5
        %v5405 = vsel %vm5316, %v5404, %v5403
        %v5406 = vrot.slane %v4000, 4
        %v5407 = vsel %vm5319, %v5406, %v5405
        %v5408 = vrot.slane %v4002, 3
        %v5409 = vsel %vm5322, %v5408, %v5407
        %v5410 = vrot.slane %v4005, 2
        %v5411 = vsel %vm5325, %v5410, %v5409
        %v5412 = vrot.slane %v4007, 1
        %v5413 = vsel %vm5328, %v5412, %v5411
        %v5414 = vrot.slane %v4012, 7
        %v5415 = vsel %vm5310, %v5414, %v4010
        %v5416 = vrot.slane %v4015, 6
        %v5417 = vsel %vm5313, %v5416, %v5415
        %v5418 = vrot.slane %v4017, 5
        %v5419 = vsel %vm5316, %v5418, %v5417
        %v5420 = vrot.slane %v4020, 4
        %v5421 = vsel %vm5319, %v5420, %v5419
        %v5422 = vrot.slane %v4022, 3
        %v5423 = vsel %vm5322, %v5422, %v5421
        %v5424 = vrot.slane %v4025, 2
        %v5425 = vsel %vm5325, %v5424, %v5423
        %v5426 = vrot.slane %v4027, 1
        %v5427 = vsel %vm5328, %v5426, %v5425
        %5428 = vrot.lane.b32.xlu0 %v5329, 93
        %v5429 = vpop.permute.xlu0 %5428
        %5430 = vrot.lane.b32.xlu0 %v5343, 93
        %v5431 = vpop.permute.xlu0 %5430
        %5432 = vrot.lane.b32.xlu0 %v5357, 93
        %v5433 = vpop.permute.xlu0 %5432
        %5434 = vrot.lane.b32.xlu0 %v5371, 93
        %v5435 = vpop.permute.xlu0 %5434
        %5436 = vrot.lane.b32.xlu0 %v5385, 93
        %v5437 = vpop.permute.xlu0 %5436
        %5438 = vrot.lane.b32.xlu0 %v5399, 93
        %v5439 = vpop.permute.xlu0 %5438
        %5440 = vrot.lane.b32.xlu0 %v5413, 93
        %v5441 = vpop.permute.xlu0 %5440
        %5442 = vrot.lane.b32.xlu0 %v5427, 93
        %v5443 = vpop.permute.xlu0 %5442
        %v5452 = vrot.slane %v3870, 1
        %v5453 = vsel %vm5310, %v3872, %v5452
        %v5454 = vrot.slane %v3875, 7
        %v5455 = vsel %vm5313, %v5454, %v5453
        %v5456 = vrot.slane %v3877, 6
        %v5457 = vsel %vm5316, %v5456, %v5455
        %v5458 = vrot.slane %v3880, 5
        %v5459 = vsel %vm5319, %v5458, %v5457
        %v5460 = vrot.slane %v3882, 4
        %v5461 = vsel %vm5322, %v5460, %v5459
        %v5462 = vrot.slane %v3885, 3
        %v5463 = vsel %vm5325, %v5462, %v5461
        %v5464 = vrot.slane %v3887, 2
        %v5465 = vsel %vm5328, %v5464, %v5463
        %v5466 = vrot.slane %v3890, 1
        %v5467 = vsel %vm5310, %v3892, %v5466
        %v5468 = vrot.slane %v3895, 7
        %v5469 = vsel %vm5313, %v5468, %v5467
        %v5470 = vrot.slane %v3897, 6
        %v5471 = vsel %vm5316, %v5470, %v5469
        %v5472 = vrot.slane %v3900, 5
        %v5473 = vsel %vm5319, %v5472, %v5471
        %v5474 = vrot.slane %v3902, 4
        %v5475 = vsel %vm5322, %v5474, %v5473
        %v5476 = vrot.slane %v3905, 3
        %v5477 = vsel %vm5325, %v5476, %v5475
        %v5478 = vrot.slane %v3907, 2
        %v5479 = vsel %vm5328, %v5478, %v5477
        %v5480 = vrot.slane %v3910, 1
        %v5481 = vsel %vm5310, %v3912, %v5480
        %v5482 = vrot.slane %v3915, 7
        %v5483 = vsel %vm5313, %v5482, %v5481
        %v5484 = vrot.slane %v3917, 6
        %v5485 = vsel %vm5316, %v5484, %v5483
        %v5486 = vrot.slane %v3920, 5
        %v5487 = vsel %vm5319, %v5486, %v5485
        %v5488 = vrot.slane %v3922, 4
        %v5489 = vsel %vm5322, %v5488, %v5487
        %v5490 = vrot.slane %v3925, 3
        %v5491 = vsel %vm5325, %v5490, %v5489
        %v5492 = vrot.slane %v3927, 2
        %v5493 = vsel %vm5328, %v5492, %v5491
        %v5494 = vrot.slane %v3930, 1
        %v5495 = vsel %vm5310, %v3932, %v5494
        %v5496 = vrot.slane %v3935, 7
        %v5497 = vsel %vm5313, %v5496, %v5495
        %v5498 = vrot.slane %v3937, 6
        %v5499 = vsel %vm5316, %v5498, %v5497
        %v5500 = vrot.slane %v3940, 5
        %v5501 = vsel %vm5319, %v5500, %v5499
        %v5502 = vrot.slane %v3942, 4
        %v5503 = vsel %vm5322, %v5502, %v5501
        %v5504 = vrot.slane %v3945, 3
        %v5505 = vsel %vm5325, %v5504, %v5503
        %v5506 = vrot.slane %v3947, 2
        %v5507 = vsel %vm5328, %v5506, %v5505
        %v5508 = vrot.slane %v3950, 1
        %v5509 = vsel %vm5310, %v3952, %v5508
        %v5510 = vrot.slane %v3955, 7
        %v5511 = vsel %vm5313, %v5510, %v5509
        %v5512 = vrot.slane %v3957, 6
        %v5513 = vsel %vm5316, %v5512, %v5511
        %v5514 = vrot.slane %v3960, 5
        %v5515 = vsel %vm5319, %v5514, %v5513
        %v5516 = vrot.slane %v3962, 4
        %v5517 = vsel %vm5322, %v5516, %v5515
        %v5518 = vrot.slane %v3965, 3
        %v5519 = vsel %vm5325, %v5518, %v5517
        %v5520 = vrot.slane %v3967, 2
        %v5521 = vsel %vm5328, %v5520, %v5519
        %v5522 = vrot.slane %v3970, 1
        %v5523 = vsel %vm5310, %v3972, %v5522
        %v5524 = vrot.slane %v3975, 7
        %v5525 = vsel %vm5313, %v5524, %v5523
        %v5526 = vrot.slane %v3977, 6
        %v5527 = vsel %vm5316, %v5526, %v5525
        %v5528 = vrot.slane %v3980, 5
        %v5529 = vsel %vm5319, %v5528, %v5527
        %v5530 = vrot.slane %v3982, 4
        %v5531 = vsel %vm5322, %v5530, %v5529
        %v5532 = vrot.slane %v3985, 3
        %v5533 = vsel %vm5325, %v5532, %v5531
        %v5534 = vrot.slane %v3987, 2
        %v5535 = vsel %vm5328, %v5534, %v5533
        %v5536 = vrot.slane %v3990, 1
        %v5537 = vsel %vm5310, %v3992, %v5536
        %v5538 = vrot.slane %v3995, 7
        %v5539 = vsel %vm5313, %v5538, %v5537
        %v5540 = vrot.slane %v3997, 6
        %v5541 = vsel %vm5316, %v5540, %v5539
        %v5542 = vrot.slane %v4000, 5
        %v5543 = vsel %vm5319, %v5542, %v5541
        %v5544 = vrot.slane %v4002, 4
        %v5545 = vsel %vm5322, %v5544, %v5543
        %v5546 = vrot.slane %v4005, 3
        %v5547 = vsel %vm5325, %v5546, %v5545
        %v5548 = vrot.slane %v4007, 2
        %v5549 = vsel %vm5328, %v5548, %v5547
        %v5550 = vrot.slane %v4010, 1
        %v5551 = vsel %vm5310, %v4012, %v5550
        %v5552 = vrot.slane %v4015, 7
        %v5553 = vsel %vm5313, %v5552, %v5551
        %v5554 = vrot.slane %v4017, 6
        %v5555 = vsel %vm5316, %v5554, %v5553
        %v5556 = vrot.slane %v4020, 5
        %v5557 = vsel %vm5319, %v5556, %v5555
        %v5558 = vrot.slane %v4022, 4
        %v5559 = vsel %vm5322, %v5558, %v5557
        %v5560 = vrot.slane %v4025, 3
        %v5561 = vsel %vm5325, %v5560, %v5559
        %v5562 = vrot.slane %v4027, 2
        %v5563 = vsel %vm5328, %v5562, %v5561
        %5564 = vrot.lane.b32.xlu0 %v5465, 94
        %v5565 = vpop.permute.xlu0 %5564
        %5566 = vrot.lane.b32.xlu0 %v5479, 94
        %v5567 = vpop.permute.xlu0 %5566
        %5568 = vrot.lane.b32.xlu0 %v5493, 94
        %v5569 = vpop.permute.xlu0 %5568
        %5570 = vrot.lane.b32.xlu0 %v5507, 94
        %v5571 = vpop.permute.xlu0 %5570
        %5572 = vrot.lane.b32.xlu0 %v5521, 94
        %v5573 = vpop.permute.xlu0 %5572
        %5574 = vrot.lane.b32.xlu0 %v5535, 94
        %v5575 = vpop.permute.xlu0 %5574
        %5576 = vrot.lane.b32.xlu0 %v5549, 94
        %v5577 = vpop.permute.xlu0 %5576
        %5578 = vrot.lane.b32.xlu0 %v5563, 94
        %v5579 = vpop.permute.xlu0 %5578
        %v5588 = vrot.slane %v3870, 2
        %v5589 = vrot.slane %v3872, 1
        %v5590 = vsel %vm5310, %v5589, %v5588
        %v5591 = vsel %vm5313, %v3875, %v5590
        %v5592 = vrot.slane %v3877, 7
        %v5593 = vsel %vm5316, %v5592, %v5591
        %v5594 = vrot.slane %v3880, 6
        %v5595 = vsel %vm5319, %v5594, %v5593
        %v5596 = vrot.slane %v3882, 5
        %v5597 = vsel %vm5322, %v5596, %v5595
        %v5598 = vrot.slane %v3885, 4
        %v5599 = vsel %vm5325, %v5598, %v5597
        %v5600 = vrot.slane %v3887, 3
        %v5601 = vsel %vm5328, %v5600, %v5599
        %v5602 = vrot.slane %v3890, 2
        %v5603 = vrot.slane %v3892, 1
        %v5604 = vsel %vm5310, %v5603, %v5602
        %v5605 = vsel %vm5313, %v3895, %v5604
        %v5606 = vrot.slane %v3897, 7
        %v5607 = vsel %vm5316, %v5606, %v5605
        %v5608 = vrot.slane %v3900, 6
        %v5609 = vsel %vm5319, %v5608, %v5607
        %v5610 = vrot.slane %v3902, 5
        %v5611 = vsel %vm5322, %v5610, %v5609
        %v5612 = vrot.slane %v3905, 4
        %v5613 = vsel %vm5325, %v5612, %v5611
        %v5614 = vrot.slane %v3907, 3
        %v5615 = vsel %vm5328, %v5614, %v5613
        %v5616 = vrot.slane %v3910, 2
        %v5617 = vrot.slane %v3912, 1
        %v5618 = vsel %vm5310, %v5617, %v5616
        %v5619 = vsel %vm5313, %v3915, %v5618
        %v5620 = vrot.slane %v3917, 7
        %v5621 = vsel %vm5316, %v5620, %v5619
        %v5622 = vrot.slane %v3920, 6
        %v5623 = vsel %vm5319, %v5622, %v5621
        %v5624 = vrot.slane %v3922, 5
        %v5625 = vsel %vm5322, %v5624, %v5623
        %v5626 = vrot.slane %v3925, 4
        %v5627 = vsel %vm5325, %v5626, %v5625
        %v5628 = vrot.slane %v3927, 3
        %v5629 = vsel %vm5328, %v5628, %v5627
        %v5630 = vrot.slane %v3930, 2
        %v5631 = vrot.slane %v3932, 1
        %v5632 = vsel %vm5310, %v5631, %v5630
        %v5633 = vsel %vm5313, %v3935, %v5632
        %v5634 = vrot.slane %v3937, 7
        %v5635 = vsel %vm5316, %v5634, %v5633
        %v5636 = vrot.slane %v3940, 6
        %v5637 = vsel %vm5319, %v5636, %v5635
        %v5638 = vrot.slane %v3942, 5
        %v5639 = vsel %vm5322, %v5638, %v5637
        %v5640 = vrot.slane %v3945, 4
        %v5641 = vsel %vm5325, %v5640, %v5639
        %v5642 = vrot.slane %v3947, 3
        %v5643 = vsel %vm5328, %v5642, %v5641
        %v5644 = vrot.slane %v3950, 2
        %v5645 = vrot.slane %v3952, 1
        %v5646 = vsel %vm5310, %v5645, %v5644
        %v5647 = vsel %vm5313, %v3955, %v5646
        %v5648 = vrot.slane %v3957, 7
        %v5649 = vsel %vm5316, %v5648, %v5647
        %v5650 = vrot.slane %v3960, 6
        %v5651 = vsel %vm5319, %v5650, %v5649
        %v5652 = vrot.slane %v3962, 5
        %v5653 = vsel %vm5322, %v5652, %v5651
        %v5654 = vrot.slane %v3965, 4
        %v5655 = vsel %vm5325, %v5654, %v5653
        %v5656 = vrot.slane %v3967, 3
        %v5657 = vsel %vm5328, %v5656, %v5655
        %v5658 = vrot.slane %v3970, 2
        %v5659 = vrot.slane %v3972, 1
        %v5660 = vsel %vm5310, %v5659, %v5658
        %v5661 = vsel %vm5313, %v3975, %v5660
        %v5662 = vrot.slane %v3977, 7
        %v5663 = vsel %vm5316, %v5662, %v5661
        %v5664 = vrot.slane %v3980, 6
        %v5665 = vsel %vm5319, %v5664, %v5663
        %v5666 = vrot.slane %v3982, 5
        %v5667 = vsel %vm5322, %v5666, %v5665
        %v5668 = vrot.slane %v3985, 4
        %v5669 = vsel %vm5325, %v5668, %v5667
        %v5670 = vrot.slane %v3987, 3
        %v5671 = vsel %vm5328, %v5670, %v5669
        %v5672 = vrot.slane %v3990, 2
        %v5673 = vrot.slane %v3992, 1
        %v5674 = vsel %vm5310, %v5673, %v5672
        %v5675 = vsel %vm5313, %v3995, %v5674
        %v5676 = vrot.slane %v3997, 7
        %v5677 = vsel %vm5316, %v5676, %v5675
        %v5678 = vrot.slane %v4000, 6
        %v5679 = vsel %vm5319, %v5678, %v5677
        %v5680 = vrot.slane %v4002, 5
        %v5681 = vsel %vm5322, %v5680, %v5679
        %v5682 = vrot.slane %v4005, 4
        %v5683 = vsel %vm5325, %v5682, %v5681
        %v5684 = vrot.slane %v4007, 3
        %v5685 = vsel %vm5328, %v5684, %v5683
        %v5686 = vrot.slane %v4010, 2
        %v5687 = vrot.slane %v4012, 1
        %v5688 = vsel %vm5310, %v5687, %v5686
        %v5689 = vsel %vm5313, %v4015, %v5688
        %v5690 = vrot.slane %v4017, 7
        %v5691 = vsel %vm5316, %v5690, %v5689
        %v5692 = vrot.slane %v4020, 6
        %v5693 = vsel %vm5319, %v5692, %v5691
        %v5694 = vrot.slane %v4022, 5
        %v5695 = vsel %vm5322, %v5694, %v5693
        %v5696 = vrot.slane %v4025, 4
        %v5697 = vsel %vm5325, %v5696, %v5695
        %v5698 = vrot.slane %v4027, 3
        %v5699 = vsel %vm5328, %v5698, %v5697
        %5700 = vrot.lane.b32.xlu0 %v5601, 95
        %v5701 = vpop.permute.xlu0 %5700
        %5702 = vrot.lane.b32.xlu0 %v5615, 95
        %v5703 = vpop.permute.xlu0 %5702
        %5704 = vrot.lane.b32.xlu0 %v5629, 95
        %v5705 = vpop.permute.xlu0 %5704
        %5706 = vrot.lane.b32.xlu0 %v5643, 95
        %v5707 = vpop.permute.xlu0 %5706
        %5708 = vrot.lane.b32.xlu0 %v5657, 95
        %v5709 = vpop.permute.xlu0 %5708
        %5710 = vrot.lane.b32.xlu0 %v5671, 95
        %v5711 = vpop.permute.xlu0 %5710
        %5712 = vrot.lane.b32.xlu0 %v5685, 95
        %v5713 = vpop.permute.xlu0 %5712
        %5714 = vrot.lane.b32.xlu0 %v5699, 95
        %v5715 = vpop.permute.xlu0 %5714
        %v5724 = vrot.slane %v3870, 3
        %v5725 = vrot.slane %v3872, 2
        %v5726 = vsel %vm5310, %v5725, %v5724
        %v5727 = vrot.slane %v3875, 1
        %v5728 = vsel %vm5313, %v5727, %v5726
        %v5729 = vsel %vm5316, %v3877, %v5728
        %v5730 = vrot.slane %v3880, 7
        %v5731 = vsel %vm5319, %v5730, %v5729
        %v5732 = vrot.slane %v3882, 6
        %v5733 = vsel %vm5322, %v5732, %v5731
        %v5734 = vrot.slane %v3885, 5
        %v5735 = vsel %vm5325, %v5734, %v5733
        %v5736 = vrot.slane %v3887, 4
        %v5737 = vsel %vm5328, %v5736, %v5735
        %v5738 = vrot.slane %v3890, 3
        %v5739 = vrot.slane %v3892, 2
        %v5740 = vsel %vm5310, %v5739, %v5738
        %v5741 = vrot.slane %v3895, 1
        %v5742 = vsel %vm5313, %v5741, %v5740
        %v5743 = vsel %vm5316, %v3897, %v5742
        %v5744 = vrot.slane %v3900, 7
        %v5745 = vsel %vm5319, %v5744, %v5743
        %v5746 = vrot.slane %v3902, 6
        %v5747 = vsel %vm5322, %v5746, %v5745
        %v5748 = vrot.slane %v3905, 5
        %v5749 = vsel %vm5325, %v5748, %v5747
        %v5750 = vrot.slane %v3907, 4
        %v5751 = vsel %vm5328, %v5750, %v5749
        %v5752 = vrot.slane %v3910, 3
        %v5753 = vrot.slane %v3912, 2
        %v5754 = vsel %vm5310, %v5753, %v5752
        %v5755 = vrot.slane %v3915, 1
        %v5756 = vsel %vm5313, %v5755, %v5754
        %v5757 = vsel %vm5316, %v3917, %v5756
        %v5758 = vrot.slane %v3920, 7
        %v5759 = vsel %vm5319, %v5758, %v5757
        %v5760 = vrot.slane %v3922, 6
        %v5761 = vsel %vm5322, %v5760, %v5759
        %v5762 = vrot.slane %v3925, 5
        %v5763 = vsel %vm5325, %v5762, %v5761
        %v5764 = vrot.slane %v3927, 4
        %v5765 = vsel %vm5328, %v5764, %v5763
        %v5766 = vrot.slane %v3930, 3
        %v5767 = vrot.slane %v3932, 2
        %v5768 = vsel %vm5310, %v5767, %v5766
        %v5769 = vrot.slane %v3935, 1
        %v5770 = vsel %vm5313, %v5769, %v5768
        %v5771 = vsel %vm5316, %v3937, %v5770
        %v5772 = vrot.slane %v3940, 7
        %v5773 = vsel %vm5319, %v5772, %v5771
        %v5774 = vrot.slane %v3942, 6
        %v5775 = vsel %vm5322, %v5774, %v5773
        %v5776 = vrot.slane %v3945, 5
        %v5777 = vsel %vm5325, %v5776, %v5775
        %v5778 = vrot.slane %v3947, 4
        %v5779 = vsel %vm5328, %v5778, %v5777
        %v5780 = vrot.slane %v3950, 3
        %v5781 = vrot.slane %v3952, 2
        %v5782 = vsel %vm5310, %v5781, %v5780
        %v5783 = vrot.slane %v3955, 1
        %v5784 = vsel %vm5313, %v5783, %v5782
        %v5785 = vsel %vm5316, %v3957, %v5784
        %v5786 = vrot.slane %v3960, 7
        %v5787 = vsel %vm5319, %v5786, %v5785
        %v5788 = vrot.slane %v3962, 6
        %v5789 = vsel %vm5322, %v5788, %v5787
        %v5790 = vrot.slane %v3965, 5
        %v5791 = vsel %vm5325, %v5790, %v5789
        %v5792 = vrot.slane %v3967, 4
        %v5793 = vsel %vm5328, %v5792, %v5791
        %v5794 = vrot.slane %v3970, 3
        %v5795 = vrot.slane %v3972, 2
        %v5796 = vsel %vm5310, %v5795, %v5794
        %v5797 = vrot.slane %v3975, 1
        %v5798 = vsel %vm5313, %v5797, %v5796
        %v5799 = vsel %vm5316, %v3977, %v5798
        %v5800 = vrot.slane %v3980, 7
        %v5801 = vsel %vm5319, %v5800, %v5799
        %v5802 = vrot.slane %v3982, 6
        %v5803 = vsel %vm5322, %v5802, %v5801
        %v5804 = vrot.slane %v3985, 5
        %v5805 = vsel %vm5325, %v5804, %v5803
        %v5806 = vrot.slane %v3987, 4
        %v5807 = vsel %vm5328, %v5806, %v5805
        %v5808 = vrot.slane %v3990, 3
        %v5809 = vrot.slane %v3992, 2
        %v5810 = vsel %vm5310, %v5809, %v5808
        %v5811 = vrot.slane %v3995, 1
        %v5812 = vsel %vm5313, %v5811, %v5810
        %v5813 = vsel %vm5316, %v3997, %v5812
        %v5814 = vrot.slane %v4000, 7
        %v5815 = vsel %vm5319, %v5814, %v5813
        %v5816 = vrot.slane %v4002, 6
        %v5817 = vsel %vm5322, %v5816, %v5815
        %v5818 = vrot.slane %v4005, 5
        %v5819 = vsel %vm5325, %v5818, %v5817
        %v5820 = vrot.slane %v4007, 4
        %v5821 = vsel %vm5328, %v5820, %v5819
        %v5822 = vrot.slane %v4010, 3
        %v5823 = vrot.slane %v4012, 2
        %v5824 = vsel %vm5310, %v5823, %v5822
        %v5825 = vrot.slane %v4015, 1
        %v5826 = vsel %vm5313, %v5825, %v5824
        %v5827 = vsel %vm5316, %v4017, %v5826
        %v5828 = vrot.slane %v4020, 7
        %v5829 = vsel %vm5319, %v5828, %v5827
        %v5830 = vrot.slane %v4022, 6
        %v5831 = vsel %vm5322, %v5830, %v5829
        %v5832 = vrot.slane %v4025, 5
        %v5833 = vsel %vm5325, %v5832, %v5831
        %v5834 = vrot.slane %v4027, 4
        %v5835 = vsel %vm5328, %v5834, %v5833
        %5836 = vrot.lane.b32.xlu0 %v5737, 96
        %v5837 = vpop.permute.xlu0 %5836
        %5838 = vrot.lane.b32.xlu0 %v5751, 96
        %v5839 = vpop.permute.xlu0 %5838
        %5840 = vrot.lane.b32.xlu0 %v5765, 96
        %v5841 = vpop.permute.xlu0 %5840
        %5842 = vrot.lane.b32.xlu0 %v5779, 96
        %v5843 = vpop.permute.xlu0 %5842
        %5844 = vrot.lane.b32.xlu0 %v5793, 96
        %v5845 = vpop.permute.xlu0 %5844
        %5846 = vrot.lane.b32.xlu0 %v5807, 96
        %v5847 = vpop.permute.xlu0 %5846
        %5848 = vrot.lane.b32.xlu0 %v5821, 96
        %v5849 = vpop.permute.xlu0 %5848
        %5850 = vrot.lane.b32.xlu0 %v5835, 96
        %v5851 = vpop.permute.xlu0 %5850
        %v5860 = vrot.slane %v3870, 4
        %v5861 = vrot.slane %v3872, 3
        %v5862 = vsel %vm5310, %v5861, %v5860
        %v5863 = vrot.slane %v3875, 2
        %v5864 = vsel %vm5313, %v5863, %v5862
        %v5865 = vrot.slane %v3877, 1
        %v5866 = vsel %vm5316, %v5865, %v5864
        %v5867 = vsel %vm5319, %v3880, %v5866
        %v5868 = vrot.slane %v3882, 7
        %v5869 = vsel %vm5322, %v5868, %v5867
        %v5870 = vrot.slane %v3885, 6
        %v5871 = vsel %vm5325, %v5870, %v5869
        %v5872 = vrot.slane %v3887, 5
        %v5873 = vsel %vm5328, %v5872, %v5871
        %v5874 = vrot.slane %v3890, 4
        %v5875 = vrot.slane %v3892, 3
        %v5876 = vsel %vm5310, %v5875, %v5874
        %v5877 = vrot.slane %v3895, 2
        %v5878 = vsel %vm5313, %v5877, %v5876
        %v5879 = vrot.slane %v3897, 1
        %v5880 = vsel %vm5316, %v5879, %v5878
        %v5881 = vsel %vm5319, %v3900, %v5880
        %v5882 = vrot.slane %v3902, 7
        %v5883 = vsel %vm5322, %v5882, %v5881
        %v5884 = vrot.slane %v3905, 6
        %v5885 = vsel %vm5325, %v5884, %v5883
        %v5886 = vrot.slane %v3907, 5
        %v5887 = vsel %vm5328, %v5886, %v5885
        %v5888 = vrot.slane %v3910, 4
        %v5889 = vrot.slane %v3912, 3
        %v5890 = vsel %vm5310, %v5889, %v5888
        %v5891 = vrot.slane %v3915, 2
        %v5892 = vsel %vm5313, %v5891, %v5890
        %v5893 = vrot.slane %v3917, 1
        %v5894 = vsel %vm5316, %v5893, %v5892
        %v5895 = vsel %vm5319, %v3920, %v5894
        %v5896 = vrot.slane %v3922, 7
        %v5897 = vsel %vm5322, %v5896, %v5895
        %v5898 = vrot.slane %v3925, 6
        %v5899 = vsel %vm5325, %v5898, %v5897
        %v5900 = vrot.slane %v3927, 5
        %v5901 = vsel %vm5328, %v5900, %v5899
        %v5902 = vrot.slane %v3930, 4
        %v5903 = vrot.slane %v3932, 3
        %v5904 = vsel %vm5310, %v5903, %v5902
        %v5905 = vrot.slane %v3935, 2
        %v5906 = vsel %vm5313, %v5905, %v5904
        %v5907 = vrot.slane %v3937, 1
        %v5908 = vsel %vm5316, %v5907, %v5906
        %v5909 = vsel %vm5319, %v3940, %v5908
        %v5910 = vrot.slane %v3942, 7
        %v5911 = vsel %vm5322, %v5910, %v5909
        %v5912 = vrot.slane %v3945, 6
        %v5913 = vsel %vm5325, %v5912, %v5911
        %v5914 = vrot.slane %v3947, 5
        %v5915 = vsel %vm5328, %v5914, %v5913
        %v5916 = vrot.slane %v3950, 4
        %v5917 = vrot.slane %v3952, 3
        %v5918 = vsel %vm5310, %v5917, %v5916
        %v5919 = vrot.slane %v3955, 2
        %v5920 = vsel %vm5313, %v5919, %v5918
        %v5921 = vrot.slane %v3957, 1
        %v5922 = vsel %vm5316, %v5921, %v5920
        %v5923 = vsel %vm5319, %v3960, %v5922
        %v5924 = vrot.slane %v3962, 7
        %v5925 = vsel %vm5322, %v5924, %v5923
        %v5926 = vrot.slane %v3965, 6
        %v5927 = vsel %vm5325, %v5926, %v5925
        %v5928 = vrot.slane %v3967, 5
        %v5929 = vsel %vm5328, %v5928, %v5927
        %v5930 = vrot.slane %v3970, 4
        %v5931 = vrot.slane %v3972, 3
        %v5932 = vsel %vm5310, %v5931, %v5930
        %v5933 = vrot.slane %v3975, 2
        %v5934 = vsel %vm5313, %v5933, %v5932
        %v5935 = vrot.slane %v3977, 1
        %v5936 = vsel %vm5316, %v5935, %v5934
        %v5937 = vsel %vm5319, %v3980, %v5936
        %v5938 = vrot.slane %v3982, 7
        %v5939 = vsel %vm5322, %v5938, %v5937
        %v5940 = vrot.slane %v3985, 6
        %v5941 = vsel %vm5325, %v5940, %v5939
        %v5942 = vrot.slane %v3987, 5
        %v5943 = vsel %vm5328, %v5942, %v5941
        %v5944 = vrot.slane %v3990, 4
        %v5945 = vrot.slane %v3992, 3
        %v5946 = vsel %vm5310, %v5945, %v5944
        %v5947 = vrot.slane %v3995, 2
        %v5948 = vsel %vm5313, %v5947, %v5946
        %v5949 = vrot.slane %v3997, 1
        %v5950 = vsel %vm5316, %v5949, %v5948
        %v5951 = vsel %vm5319, %v4000, %v5950
        %v5952 = vrot.slane %v4002, 7
        %v5953 = vsel %vm5322, %v5952, %v5951
        %v5954 = vrot.slane %v4005, 6
        %v5955 = vsel %vm5325, %v5954, %v5953
        %v5956 = vrot.slane %v4007, 5
        %v5957 = vsel %vm5328, %v5956, %v5955
        %v5958 = vrot.slane %v4010, 4
        %v5959 = vrot.slane %v4012, 3
        %v5960 = vsel %vm5310, %v5959, %v5958
        %v5961 = vrot.slane %v4015, 2
        %v5962 = vsel %vm5313, %v5961, %v5960
        %v5963 = vrot.slane %v4017, 1
        %v5964 = vsel %vm5316, %v5963, %v5962
        %v5965 = vsel %vm5319, %v4020, %v5964
        %v5966 = vrot.slane %v4022, 7
        %v5967 = vsel %vm5322, %v5966, %v5965
        %v5968 = vrot.slane %v4025, 6
        %v5969 = vsel %vm5325, %v5968, %v5967
        %v5970 = vrot.slane %v4027, 5
        %v5971 = vsel %vm5328, %v5970, %v5969
        %5972 = vrot.lane.b32.xlu0 %v5873, 97
        %v5973 = vpop.permute.xlu0 %5972
        %5974 = vrot.lane.b32.xlu0 %v5887, 97
        %v5975 = vpop.permute.xlu0 %5974
        %5976 = vrot.lane.b32.xlu0 %v5901, 97
        %v5977 = vpop.permute.xlu0 %5976
        %5978 = vrot.lane.b32.xlu0 %v5915, 97
        %v5979 = vpop.permute.xlu0 %5978
        %5980 = vrot.lane.b32.xlu0 %v5929, 97
        %v5981 = vpop.permute.xlu0 %5980
        %5982 = vrot.lane.b32.xlu0 %v5943, 97
        %v5983 = vpop.permute.xlu0 %5982
        %5984 = vrot.lane.b32.xlu0 %v5957, 97
        %v5985 = vpop.permute.xlu0 %5984
        %5986 = vrot.lane.b32.xlu0 %v5971, 97
        %v5987 = vpop.permute.xlu0 %5986
        %v5996 = vrot.slane %v3870, 5
        %v5997 = vrot.slane %v3872, 4
        %v5998 = vsel %vm5310, %v5997, %v5996
        %v5999 = vrot.slane %v3875, 3
        %v6000 = vsel %vm5313, %v5999, %v5998
        %v6001 = vrot.slane %v3877, 2
        %v6002 = vsel %vm5316, %v6001, %v6000
        %v6003 = vrot.slane %v3880, 1
        %v6004 = vsel %vm5319, %v6003, %v6002
        %v6005 = vsel %vm5322, %v3882, %v6004
        %v6006 = vrot.slane %v3885, 7
        %v6007 = vsel %vm5325, %v6006, %v6005
        %v6008 = vrot.slane %v3887, 6
        %v6009 = vsel %vm5328, %v6008, %v6007
        %v6010 = vrot.slane %v3890, 5
        %v6011 = vrot.slane %v3892, 4
        %v6012 = vsel %vm5310, %v6011, %v6010
        %v6013 = vrot.slane %v3895, 3
        %v6014 = vsel %vm5313, %v6013, %v6012
        %v6015 = vrot.slane %v3897, 2
        %v6016 = vsel %vm5316, %v6015, %v6014
        %v6017 = vrot.slane %v3900, 1
        %v6018 = vsel %vm5319, %v6017, %v6016
        %v6019 = vsel %vm5322, %v3902, %v6018
        %v6020 = vrot.slane %v3905, 7
        %v6021 = vsel %vm5325, %v6020, %v6019
        %v6022 = vrot.slane %v3907, 6
        %v6023 = vsel %vm5328, %v6022, %v6021
        %v6024 = vrot.slane %v3910, 5
        %v6025 = vrot.slane %v3912, 4
        %v6026 = vsel %vm5310, %v6025, %v6024
        %v6027 = vrot.slane %v3915, 3
        %v6028 = vsel %vm5313, %v6027, %v6026
        %v6029 = vrot.slane %v3917, 2
        %v6030 = vsel %vm5316, %v6029, %v6028
        %v6031 = vrot.slane %v3920, 1
        %v6032 = vsel %vm5319, %v6031, %v6030
        %v6033 = vsel %vm5322, %v3922, %v6032
        %v6034 = vrot.slane %v3925, 7
        %v6035 = vsel %vm5325, %v6034, %v6033
        %v6036 = vrot.slane %v3927, 6
        %v6037 = vsel %vm5328, %v6036, %v6035
        %v6038 = vrot.slane %v3930, 5
        %v6039 = vrot.slane %v3932, 4
        %v6040 = vsel %vm5310, %v6039, %v6038
        %v6041 = vrot.slane %v3935, 3
        %v6042 = vsel %vm5313, %v6041, %v6040
        %v6043 = vrot.slane %v3937, 2
        %v6044 = vsel %vm5316, %v6043, %v6042
        %v6045 = vrot.slane %v3940, 1
        %v6046 = vsel %vm5319, %v6045, %v6044
        %v6047 = vsel %vm5322, %v3942, %v6046
        %v6048 = vrot.slane %v3945, 7
        %v6049 = vsel %vm5325, %v6048, %v6047
        %v6050 = vrot.slane %v3947, 6
        %v6051 = vsel %vm5328, %v6050, %v6049
        %v6052 = vrot.slane %v3950, 5
        %v6053 = vrot.slane %v3952, 4
        %v6054 = vsel %vm5310, %v6053, %v6052
        %v6055 = vrot.slane %v3955, 3
        %v6056 = vsel %vm5313, %v6055, %v6054
        %v6057 = vrot.slane %v3957, 2
        %v6058 = vsel %vm5316, %v6057, %v6056
        %v6059 = vrot.slane %v3960, 1
        %v6060 = vsel %vm5319, %v6059, %v6058
        %v6061 = vsel %vm5322, %v3962, %v6060
        %v6062 = vrot.slane %v3965, 7
        %v6063 = vsel %vm5325, %v6062, %v6061
        %v6064 = vrot.slane %v3967, 6
        %v6065 = vsel %vm5328, %v6064, %v6063
        %v6066 = vrot.slane %v3970, 5
        %v6067 = vrot.slane %v3972, 4
        %v6068 = vsel %vm5310, %v6067, %v6066
        %v6069 = vrot.slane %v3975, 3
        %v6070 = vsel %vm5313, %v6069, %v6068
        %v6071 = vrot.slane %v3977, 2
        %v6072 = vsel %vm5316, %v6071, %v6070
        %v6073 = vrot.slane %v3980, 1
        %v6074 = vsel %vm5319, %v6073, %v6072
        %v6075 = vsel %vm5322, %v3982, %v6074
        %v6076 = vrot.slane %v3985, 7
        %v6077 = vsel %vm5325, %v6076, %v6075
        %v6078 = vrot.slane %v3987, 6
        %v6079 = vsel %vm5328, %v6078, %v6077
        %v6080 = vrot.slane %v3990, 5
        %v6081 = vrot.slane %v3992, 4
        %v6082 = vsel %vm5310, %v6081, %v6080
        %v6083 = vrot.slane %v3995, 3
        %v6084 = vsel %vm5313, %v6083, %v6082
        %v6085 = vrot.slane %v3997, 2
        %v6086 = vsel %vm5316, %v6085, %v6084
        %v6087 = vrot.slane %v4000, 1
        %v6088 = vsel %vm5319, %v6087, %v6086
        %v6089 = vsel %vm5322, %v4002, %v6088
        %v6090 = vrot.slane %v4005, 7
        %v6091 = vsel %vm5325, %v6090, %v6089
        %v6092 = vrot.slane %v4007, 6
        %v6093 = vsel %vm5328, %v6092, %v6091
        %v6094 = vrot.slane %v4010, 5
        %v6095 = vrot.slane %v4012, 4
        %v6096 = vsel %vm5310, %v6095, %v6094
        %v6097 = vrot.slane %v4015, 3
        %v6098 = vsel %vm5313, %v6097, %v6096
        %v6099 = vrot.slane %v4017, 2
        %v6100 = vsel %vm5316, %v6099, %v6098
        %v6101 = vrot.slane %v4020, 1
        %v6102 = vsel %vm5319, %v6101, %v6100
        %v6103 = vsel %vm5322, %v4022, %v6102
        %v6104 = vrot.slane %v4025, 7
        %v6105 = vsel %vm5325, %v6104, %v6103
        %v6106 = vrot.slane %v4027, 6
        %v6107 = vsel %vm5328, %v6106, %v6105
        %6108 = vrot.lane.b32.xlu0 %v6009, 98
        %v6109 = vpop.permute.xlu0 %6108
        %6110 = vrot.lane.b32.xlu0 %v6023, 98
        %v6111 = vpop.permute.xlu0 %6110
        %6112 = vrot.lane.b32.xlu0 %v6037, 98
        %v6113 = vpop.permute.xlu0 %6112
        %6114 = vrot.lane.b32.xlu0 %v6051, 98
        %v6115 = vpop.permute.xlu0 %6114
        %6116 = vrot.lane.b32.xlu0 %v6065, 98
        %v6117 = vpop.permute.xlu0 %6116
        %6118 = vrot.lane.b32.xlu0 %v6079, 98
        %v6119 = vpop.permute.xlu0 %6118
        %6120 = vrot.lane.b32.xlu0 %v6093, 98
        %v6121 = vpop.permute.xlu0 %6120
        %6122 = vrot.lane.b32.xlu0 %v6107, 98
        %v6123 = vpop.permute.xlu0 %6122
        %v6132 = vrot.slane %v3870, 6
        %v6133 = vrot.slane %v3872, 5
        %v6134 = vsel %vm5310, %v6133, %v6132
        %v6135 = vrot.slane %v3875, 4
        %v6136 = vsel %vm5313, %v6135, %v6134
        %v6137 = vrot.slane %v3877, 3
        %v6138 = vsel %vm5316, %v6137, %v6136
        %v6139 = vrot.slane %v3880, 2
        %v6140 = vsel %vm5319, %v6139, %v6138
        %v6141 = vrot.slane %v3882, 1
        %v6142 = vsel %vm5322, %v6141, %v6140
        %v6143 = vsel %vm5325, %v3885, %v6142
        %v6144 = vrot.slane %v3887, 7
        %v6145 = vsel %vm5328, %v6144, %v6143
        %v6146 = vrot.slane %v3890, 6
        %v6147 = vrot.slane %v3892, 5
        %v6148 = vsel %vm5310, %v6147, %v6146
        %v6149 = vrot.slane %v3895, 4
        %v6150 = vsel %vm5313, %v6149, %v6148
        %v6151 = vrot.slane %v3897, 3
        %v6152 = vsel %vm5316, %v6151, %v6150
        %v6153 = vrot.slane %v3900, 2
        %v6154 = vsel %vm5319, %v6153, %v6152
        %v6155 = vrot.slane %v3902, 1
        %v6156 = vsel %vm5322, %v6155, %v6154
        %v6157 = vsel %vm5325, %v3905, %v6156
        %v6158 = vrot.slane %v3907, 7
        %v6159 = vsel %vm5328, %v6158, %v6157
        %v6160 = vrot.slane %v3910, 6
        %v6161 = vrot.slane %v3912, 5
        %v6162 = vsel %vm5310, %v6161, %v6160
        %v6163 = vrot.slane %v3915, 4
        %v6164 = vsel %vm5313, %v6163, %v6162
        %v6165 = vrot.slane %v3917, 3
        %v6166 = vsel %vm5316, %v6165, %v6164
        %v6167 = vrot.slane %v3920, 2
        %v6168 = vsel %vm5319, %v6167, %v6166
        %v6169 = vrot.slane %v3922, 1
        %v6170 = vsel %vm5322, %v6169, %v6168
        %v6171 = vsel %vm5325, %v3925, %v6170
        %v6172 = vrot.slane %v3927, 7
        %v6173 = vsel %vm5328, %v6172, %v6171
        %v6174 = vrot.slane %v3930, 6
        %v6175 = vrot.slane %v3932, 5
        %v6176 = vsel %vm5310, %v6175, %v6174
        %v6177 = vrot.slane %v3935, 4
        %v6178 = vsel %vm5313, %v6177, %v6176
        %v6179 = vrot.slane %v3937, 3
        %v6180 = vsel %vm5316, %v6179, %v6178
        %v6181 = vrot.slane %v3940, 2
        %v6182 = vsel %vm5319, %v6181, %v6180
        %v6183 = vrot.slane %v3942, 1
        %v6184 = vsel %vm5322, %v6183, %v6182
        %v6185 = vsel %vm5325, %v3945, %v6184
        %v6186 = vrot.slane %v3947, 7
        %v6187 = vsel %vm5328, %v6186, %v6185
        %v6188 = vrot.slane %v3950, 6
        %v6189 = vrot.slane %v3952, 5
        %v6190 = vsel %vm5310, %v6189, %v6188
        %v6191 = vrot.slane %v3955, 4
        %v6192 = vsel %vm5313, %v6191, %v6190
        %v6193 = vrot.slane %v3957, 3
        %v6194 = vsel %vm5316, %v6193, %v6192
        %v6195 = vrot.slane %v3960, 2
        %v6196 = vsel %vm5319, %v6195, %v6194
        %v6197 = vrot.slane %v3962, 1
        %v6198 = vsel %vm5322, %v6197, %v6196
        %v6199 = vsel %vm5325, %v3965, %v6198
        %v6200 = vrot.slane %v3967, 7
        %v6201 = vsel %vm5328, %v6200, %v6199
        %v6202 = vrot.slane %v3970, 6
        %v6203 = vrot.slane %v3972, 5
        %v6204 = vsel %vm5310, %v6203, %v6202
        %v6205 = vrot.slane %v3975, 4
        %v6206 = vsel %vm5313, %v6205, %v6204
        %v6207 = vrot.slane %v3977, 3
        %v6208 = vsel %vm5316, %v6207, %v6206
        %v6209 = vrot.slane %v3980, 2
        %v6210 = vsel %vm5319, %v6209, %v6208
        %v6211 = vrot.slane %v3982, 1
        %v6212 = vsel %vm5322, %v6211, %v6210
        %v6213 = vsel %vm5325, %v3985, %v6212
        %v6214 = vrot.slane %v3987, 7
        %v6215 = vsel %vm5328, %v6214, %v6213
        %v6216 = vrot.slane %v3990, 6
        %v6217 = vrot.slane %v3992, 5
        %v6218 = vsel %vm5310, %v6217, %v6216
        %v6219 = vrot.slane %v3995, 4
        %v6220 = vsel %vm5313, %v6219, %v6218
        %v6221 = vrot.slane %v3997, 3
        %v6222 = vsel %vm5316, %v6221, %v6220
        %v6223 = vrot.slane %v4000, 2
        %v6224 = vsel %vm5319, %v6223, %v6222
        %v6225 = vrot.slane %v4002, 1
        %v6226 = vsel %vm5322, %v6225, %v6224
        %v6227 = vsel %vm5325, %v4005, %v6226
        %v6228 = vrot.slane %v4007, 7
        %v6229 = vsel %vm5328, %v6228, %v6227
        %v6230 = vrot.slane %v4010, 6
        %v6231 = vrot.slane %v4012, 5
        %v6232 = vsel %vm5310, %v6231, %v6230
        %v6233 = vrot.slane %v4015, 4
        %v6234 = vsel %vm5313, %v6233, %v6232
        %v6235 = vrot.slane %v4017, 3
        %v6236 = vsel %vm5316, %v6235, %v6234
        %v6237 = vrot.slane %v4020, 2
        %v6238 = vsel %vm5319, %v6237, %v6236
        %v6239 = vrot.slane %v4022, 1
        %v6240 = vsel %vm5322, %v6239, %v6238
        %v6241 = vsel %vm5325, %v4025, %v6240
        %v6242 = vrot.slane %v4027, 7
        %v6243 = vsel %vm5328, %v6242, %v6241
        %6244 = vrot.lane.b32.xlu0 %v6145, 99
        %v6245 = vpop.permute.xlu0 %6244
        %6246 = vrot.lane.b32.xlu0 %v6159, 99
        %v6247 = vpop.permute.xlu0 %6246
        %6248 = vrot.lane.b32.xlu0 %v6173, 99
        %v6249 = vpop.permute.xlu0 %6248
        %6250 = vrot.lane.b32.xlu0 %v6187, 99
        %v6251 = vpop.permute.xlu0 %6250
        %6252 = vrot.lane.b32.xlu0 %v6201, 99
        %v6253 = vpop.permute.xlu0 %6252
        %6254 = vrot.lane.b32.xlu0 %v6215, 99
        %v6255 = vpop.permute.xlu0 %6254
        %6256 = vrot.lane.b32.xlu0 %v6229, 99
        %v6257 = vpop.permute.xlu0 %6256
        %6258 = vrot.lane.b32.xlu0 %v6243, 99
        %v6259 = vpop.permute.xlu0 %6258
        %v6268 = vrot.slane %v3870, 7
        %v6269 = vrot.slane %v3872, 6
        %v6270 = vsel %vm5310, %v6269, %v6268
        %v6271 = vrot.slane %v3875, 5
        %v6272 = vsel %vm5313, %v6271, %v6270
        %v6273 = vrot.slane %v3877, 4
        %v6274 = vsel %vm5316, %v6273, %v6272
        %v6275 = vrot.slane %v3880, 3
        %v6276 = vsel %vm5319, %v6275, %v6274
        %v6277 = vrot.slane %v3882, 2
        %v6278 = vsel %vm5322, %v6277, %v6276
        %v6279 = vrot.slane %v3885, 1
        %v6280 = vsel %vm5325, %v6279, %v6278
        %v6281 = vsel %vm5328, %v3887, %v6280
        %v6282 = vrot.slane %v3890, 7
        %v6283 = vrot.slane %v3892, 6
        %v6284 = vsel %vm5310, %v6283, %v6282
        %v6285 = vrot.slane %v3895, 5
        %v6286 = vsel %vm5313, %v6285, %v6284
        %v6287 = vrot.slane %v3897, 4
        %v6288 = vsel %vm5316, %v6287, %v6286
        %v6289 = vrot.slane %v3900, 3
        %v6290 = vsel %vm5319, %v6289, %v6288
        %v6291 = vrot.slane %v3902, 2
        %v6292 = vsel %vm5322, %v6291, %v6290
        %v6293 = vrot.slane %v3905, 1
        %v6294 = vsel %vm5325, %v6293, %v6292
        %v6295 = vsel %vm5328, %v3907, %v6294
        %v6296 = vrot.slane %v3910, 7
        %v6297 = vrot.slane %v3912, 6
        %v6298 = vsel %vm5310, %v6297, %v6296
        %v6299 = vrot.slane %v3915, 5
        %v6300 = vsel %vm5313, %v6299, %v6298
        %v6301 = vrot.slane %v3917, 4
        %v6302 = vsel %vm5316, %v6301, %v6300
        %v6303 = vrot.slane %v3920, 3
        %v6304 = vsel %vm5319, %v6303, %v6302
        %v6305 = vrot.slane %v3922, 2
        %v6306 = vsel %vm5322, %v6305, %v6304
        %v6307 = vrot.slane %v3925, 1
        %v6308 = vsel %vm5325, %v6307, %v6306
        %v6309 = vsel %vm5328, %v3927, %v6308
        %v6310 = vrot.slane %v3930, 7
        %v6311 = vrot.slane %v3932, 6
        %v6312 = vsel %vm5310, %v6311, %v6310
        %v6313 = vrot.slane %v3935, 5
        %v6314 = vsel %vm5313, %v6313, %v6312
        %v6315 = vrot.slane %v3937, 4
        %v6316 = vsel %vm5316, %v6315, %v6314
        %v6317 = vrot.slane %v3940, 3
        %v6318 = vsel %vm5319, %v6317, %v6316
        %v6319 = vrot.slane %v3942, 2
        %v6320 = vsel %vm5322, %v6319, %v6318
        %v6321 = vrot.slane %v3945, 1
        %v6322 = vsel %vm5325, %v6321, %v6320
        %v6323 = vsel %vm5328, %v3947, %v6322
        %v6324 = vrot.slane %v3950, 7
        %v6325 = vrot.slane %v3952, 6
        %v6326 = vsel %vm5310, %v6325, %v6324
        %v6327 = vrot.slane %v3955, 5
        %v6328 = vsel %vm5313, %v6327, %v6326
        %v6329 = vrot.slane %v3957, 4
        %v6330 = vsel %vm5316, %v6329, %v6328
        %v6331 = vrot.slane %v3960, 3
        %v6332 = vsel %vm5319, %v6331, %v6330
        %v6333 = vrot.slane %v3962, 2
        %v6334 = vsel %vm5322, %v6333, %v6332
        %v6335 = vrot.slane %v3965, 1
        %v6336 = vsel %vm5325, %v6335, %v6334
        %v6337 = vsel %vm5328, %v3967, %v6336
        %v6338 = vrot.slane %v3970, 7
        %v6339 = vrot.slane %v3972, 6
        %v6340 = vsel %vm5310, %v6339, %v6338
        %v6341 = vrot.slane %v3975, 5
        %v6342 = vsel %vm5313, %v6341, %v6340
        %v6343 = vrot.slane %v3977, 4
        %v6344 = vsel %vm5316, %v6343, %v6342
        %v6345 = vrot.slane %v3980, 3
        %v6346 = vsel %vm5319, %v6345, %v6344
        %v6347 = vrot.slane %v3982, 2
        %v6348 = vsel %vm5322, %v6347, %v6346
        %v6349 = vrot.slane %v3985, 1
        %v6350 = vsel %vm5325, %v6349, %v6348
        %v6351 = vsel %vm5328, %v3987, %v6350
        %v6352 = vrot.slane %v3990, 7
        %v6353 = vrot.slane %v3992, 6
        %v6354 = vsel %vm5310, %v6353, %v6352
        %v6355 = vrot.slane %v3995, 5
        %v6356 = vsel %vm5313, %v6355, %v6354
        %v6357 = vrot.slane %v3997, 4
        %v6358 = vsel %vm5316, %v6357, %v6356
        %v6359 = vrot.slane %v4000, 3
        %v6360 = vsel %vm5319, %v6359, %v6358
        %v6361 = vrot.slane %v4002, 2
        %v6362 = vsel %vm5322, %v6361, %v6360
        %v6363 = vrot.slane %v4005, 1
        %v6364 = vsel %vm5325, %v6363, %v6362
        %v6365 = vsel %vm5328, %v4007, %v6364
        %v6366 = vrot.slane %v4010, 7
        %v6367 = vrot.slane %v4012, 6
        %v6368 = vsel %vm5310, %v6367, %v6366
        %v6369 = vrot.slane %v4015, 5
        %v6370 = vsel %vm5313, %v6369, %v6368
        %v6371 = vrot.slane %v4017, 4
        %v6372 = vsel %vm5316, %v6371, %v6370
        %v6373 = vrot.slane %v4020, 3
        %v6374 = vsel %vm5319, %v6373, %v6372
        %v6375 = vrot.slane %v4022, 2
        %v6376 = vsel %vm5322, %v6375, %v6374
        %v6377 = vrot.slane %v4025, 1
        %v6378 = vsel %vm5325, %v6377, %v6376
        %v6379 = vsel %vm5328, %v4027, %v6378
        %6380 = vrot.lane.b32.xlu0 %v6281, 100
        %v6381 = vpop.permute.xlu0 %6380
        %6382 = vrot.lane.b32.xlu0 %v6295, 100
        %v6383 = vpop.permute.xlu0 %6382
        %6384 = vrot.lane.b32.xlu0 %v6309, 100
        %v6385 = vpop.permute.xlu0 %6384
        %6386 = vrot.lane.b32.xlu0 %v6323, 100
        %v6387 = vpop.permute.xlu0 %6386
        %6388 = vrot.lane.b32.xlu0 %v6337, 100
        %v6389 = vpop.permute.xlu0 %6388
        %6390 = vrot.lane.b32.xlu0 %v6351, 100
        %v6391 = vpop.permute.xlu0 %6390
        %6392 = vrot.lane.b32.xlu0 %v6365, 100
        %v6393 = vpop.permute.xlu0 %6392
        %6394 = vrot.lane.b32.xlu0 %v6379, 100
        %v6395 = vpop.permute.xlu0 %6394
        %vm6404 = vcmask 7168
        %v6405 = vsel %vm6404, %v5429, %v5565
        %v6406 = vsel %vm6404, %v5431, %v5567
        %v6407 = vsel %vm6404, %v5433, %v5569
        %v6408 = vsel %vm6404, %v5435, %v5571
        %v6409 = vsel %vm6404, %v5437, %v5573
        %v6410 = vsel %vm6404, %v5439, %v5575
        %v6411 = vsel %vm6404, %v5441, %v5577
        %v6412 = vsel %vm6404, %v5443, %v5579
        %vm6413 = vcmask 15360
        %v6414 = vsel %vm6413, %v6405, %v5701
        %v6415 = vsel %vm6413, %v6406, %v5703
        %v6416 = vsel %vm6413, %v6407, %v5705
        %v6417 = vsel %vm6413, %v6408, %v5707
        %v6418 = vsel %vm6413, %v6409, %v5709
        %v6419 = vsel %vm6413, %v6410, %v5711
        %v6420 = vsel %vm6413, %v6411, %v5713
        %v6421 = vsel %vm6413, %v6412, %v5715
        %v6422 = vsel %vm399, %v6414, %v5837
        %v6423 = vsel %vm399, %v6415, %v5839
        %v6424 = vsel %vm399, %v6416, %v5841
        %v6425 = vsel %vm399, %v6417, %v5843
        %v6426 = vsel %vm399, %v6418, %v5845
        %v6427 = vsel %vm399, %v6419, %v5847
        %v6428 = vsel %vm399, %v6420, %v5849
        %v6429 = vsel %vm399, %v6421, %v5851
        %vm6430 = vcmask 31744
        %v6431 = vsel %vm6430, %v6422, %v5973
        %v6432 = vsel %vm6430, %v6423, %v5975
        %v6433 = vsel %vm6430, %v6424, %v5977
        %v6434 = vsel %vm6430, %v6425, %v5979
        %v6435 = vsel %vm6430, %v6426, %v5981
        %v6436 = vsel %vm6430, %v6427, %v5983
        %v6437 = vsel %vm6430, %v6428, %v5985
        %v6438 = vsel %vm6430, %v6429, %v5987
        %vm6439 = vcmask 39936
        %v6440 = vsel %vm6439, %v6431, %v6109
        %v6441 = vsel %vm6439, %v6432, %v6111
        %v6442 = vsel %vm6439, %v6433, %v6113
        %v6443 = vsel %vm6439, %v6434, %v6115
        %v6444 = vsel %vm6439, %v6435, %v6117
        %v6445 = vsel %vm6439, %v6436, %v6119
        %v6446 = vsel %vm6439, %v6437, %v6121
        %v6447 = vsel %vm6439, %v6438, %v6123
        %vm6448 = vcmask 48128
        %v6449 = vsel %vm6448, %v6440, %v6245
        %v6450 = vsel %vm6448, %v6441, %v6247
        %v6451 = vsel %vm6448, %v6442, %v6249
        %v6452 = vsel %vm6448, %v6443, %v6251
        %v6453 = vsel %vm6448, %v6444, %v6253
        %v6454 = vsel %vm6448, %v6445, %v6255
        %v6455 = vsel %vm6448, %v6446, %v6257
        %v6456 = vsel %vm6448, %v6447, %v6259
        %vm6457 = vcmask 56320
        %v6458 = vsel %vm6457, %v6449, %v6381
        %v6459 = vsel %vm6457, %v6450, %v6383
        %v6460 = vsel %vm6457, %v6451, %v6385
        %v6461 = vsel %vm6457, %v6452, %v6387
        %v6462 = vsel %vm6457, %v6453, %v6389
        %v6463 = vsel %vm6457, %v6454, %v6391
        %v6464 = vsel %vm6457, %v6455, %v6393
        %v6465 = vsel %vm6457, %v6456, %v6395
        %v6466 = vld [vmem:[#allocation2] sm:$0x1]
        %s6467 = vtos %v6466
        %v6468 = vsub.f32 0.0, %v6458
        %v6469 = vsub.f32 0.0, %v6459
        %v6470 = vsub.f32 0.0, %v6460
        %v6471 = vsub.f32 0.0, %v6461
        %v6472 = vsub.f32 0.0, %v6462
        %v6473 = vsub.f32 0.0, %v6463
        %v6474 = vsub.f32 0.0, %v6464
        %v6475 = vsub.f32 0.0, %v6465
        %v6476 = vstv %s6467
        %v6477 = vrcp.pop %v6476
        %v6478 = vmul.f32 %v6476, %v6477
        %v6479 = vsub.f32 1.0, %v6478
        %v6480 = vmul.f32 %v6477, %v6479
        %v6481 = vadd.f32 %v6477, %v6480
        %vm6482 = vweird.f32 %v6476
        %vm6483 = vweird.f32 %v6477
        %vm6484 = vmor %vm6482, %vm6483
        %v6485 = vsel %vm6484, %v6477, %v6481
        %v6486 = vand.u32 2147483647, %v6476
        %vm6487 = vcmp.eq.f32.partialorder %v6486, 8.507059e+37
        %v6488 = vand.u32 %v6476, 2147483648
        %v6489 = vor.u32 1.1754944e-38, %v6488
        %v6490 = vsel %vm6487, %v6489, %v6485
        %v6491 = vmul.f32 %v6468, %v6490
        %v6492 = vmul.f32 %v6469, %v6490
        %v6493 = vmul.f32 %v6470, %v6490
        %v6494 = vmul.f32 %v6471, %v6490
        %v6495 = vmul.f32 %v6472, %v6490
        %v6496 = vmul.f32 %v6473, %v6490
        %v6497 = vmul.f32 %v6474, %v6490
        %v6498 = vmul.f32 %v6475, %v6490
        %v6499 = vxor.u32 %v6491, 2147483648
        %v6500 = vxor.u32 %v6492, 2147483648
        %v6501 = vxor.u32 %v6493, 2147483648
        %v6502 = vxor.u32 %v6494, 2147483648
        %v6503 = vxor.u32 %v6495, 2147483648
        %v6504 = vxor.u32 %v6496, 2147483648
        %v6505 = vxor.u32 %v6497, 2147483648
        %v6506 = vxor.u32 %v6498, 2147483648
        %v6507 = vmul.f32 %v6499, 1.442695
        %v6508 = vpow.pop %v6507
        %v6509 = vmul.f32 %v6500, 1.442695
        %v6510 = vpow.pop %v6509
        %v6511 = vmul.f32 %v6501, 1.442695
        %v6512 = vpow.pop %v6511
        %v6513 = vmul.f32 %v6502, 1.442695
        %v6514 = vpow.pop %v6513
        %v6515 = vmul.f32 %v6503, 1.442695
        %v6516 = vpow.pop %v6515
        %v6517 = vmul.f32 %v6504, 1.442695
        %v6518 = vpow.pop %v6517
        %v6519 = vmul.f32 %v6505, 1.442695
        %v6520 = vpow.pop %v6519
        %v6521 = vmul.f32 %v6506, 1.442695
        %v6522 = vpow.pop %v6521
        %v6523 = vadd.f32 %v6508, 1.0
        %v6524 = vadd.f32 %v6510, 1.0
        %v6525 = vadd.f32 %v6512, 1.0
        %v6526 = vadd.f32 %v6514, 1.0
        %v6527 = vadd.f32 %v6516, 1.0
        %v6528 = vadd.f32 %v6518, 1.0
        %v6529 = vadd.f32 %v6520, 1.0
        %v6530 = vadd.f32 %v6522, 1.0
        %v6531 = vrcp.pop %v6523
        %v6532 = vmul.f32 %v6523, %v6531
        %v6533 = vsub.f32 1.0, %v6532
        %v6534 = vmul.f32 %v6531, %v6533
        %v6535 = vadd.f32 %v6531, %v6534
        %vm6536 = vweird.f32 %v6523
        %vm6537 = vweird.f32 %v6531
        %vm6538 = vmor %vm6536, %vm6537
        %v6539 = vsel %vm6538, %v6531, %v6535
        %v6540 = vand.u32 2147483647, %v6523
        %vm6541 = vcmp.eq.f32.partialorder %v6540, 8.507059e+37
        %v6542 = vand.u32 %v6523, 2147483648
        %v6543 = vor.u32 1.1754944e-38, %v6542
        %v6544 = vsel %vm6541, %v6543, %v6539
        %v6545 = vmul.f32 1.0, %v6544
        %v6546 = vrcp.pop %v6524
        %v6547 = vmul.f32 %v6524, %v6546
        %v6548 = vsub.f32 1.0, %v6547
        %v6549 = vmul.f32 %v6546, %v6548
        %v6550 = vadd.f32 %v6546, %v6549
        %vm6551 = vweird.f32 %v6524
        %vm6552 = vweird.f32 %v6546
        %vm6553 = vmor %vm6551, %vm6552
        %v6554 = vsel %vm6553, %v6546, %v6550
        %v6555 = vand.u32 2147483647, %v6524
        %vm6556 = vcmp.eq.f32.partialorder %v6555, 8.507059e+37
        %v6557 = vand.u32 %v6524, 2147483648
        %v6558 = vor.u32 1.1754944e-38, %v6557
        %v6559 = vsel %vm6556, %v6558, %v6554
        %v6560 = vmul.f32 1.0, %v6559
        %v6561 = vrcp.pop %v6525
        %v6562 = vmul.f32 %v6525, %v6561
        %v6563 = vsub.f32 1.0, %v6562
        %v6564 = vmul.f32 %v6561, %v6563
        %v6565 = vadd.f32 %v6561, %v6564
        %vm6566 = vweird.f32 %v6525
        %vm6567 = vweird.f32 %v6561
        %vm6568 = vmor %vm6566, %vm6567
        %v6569 = vsel %vm6568, %v6561, %v6565
        %v6570 = vand.u32 2147483647, %v6525
        %vm6571 = vcmp.eq.f32.partialorder %v6570, 8.507059e+37
        %v6572 = vand.u32 %v6525, 2147483648
        %v6573 = vor.u32 1.1754944e-38, %v6572
        %v6574 = vsel %vm6571, %v6573, %v6569
        %v6575 = vmul.f32 1.0, %v6574
        %v6576 = vrcp.pop %v6526
        %v6577 = vmul.f32 %v6526, %v6576
        %v6578 = vsub.f32 1.0, %v6577
        %v6579 = vmul.f32 %v6576, %v6578
        %v6580 = vadd.f32 %v6576, %v6579
        %vm6581 = vweird.f32 %v6526
        %vm6582 = vweird.f32 %v6576
        %vm6583 = vmor %vm6581, %vm6582
        %v6584 = vsel %vm6583, %v6576, %v6580
        %v6585 = vand.u32 2147483647, %v6526
        %vm6586 = vcmp.eq.f32.partialorder %v6585, 8.507059e+37
        %v6587 = vand.u32 %v6526, 2147483648
        %v6588 = vor.u32 1.1754944e-38, %v6587
        %v6589 = vsel %vm6586, %v6588, %v6584
        %v6590 = vmul.f32 1.0, %v6589
        %v6591 = vrcp.pop %v6527
        %v6592 = vmul.f32 %v6527, %v6591
        %v6593 = vsub.f32 1.0, %v6592
        %v6594 = vmul.f32 %v6591, %v6593
        %v6595 = vadd.f32 %v6591, %v6594
        %vm6596 = vweird.f32 %v6527
        %vm6597 = vweird.f32 %v6591
        %vm6598 = vmor %vm6596, %vm6597
        %v6599 = vsel %vm6598, %v6591, %v6595
        %v6600 = vand.u32 2147483647, %v6527
        %vm6601 = vcmp.eq.f32.partialorder %v6600, 8.507059e+37
        %v6602 = vand.u32 %v6527, 2147483648
        %v6603 = vor.u32 1.1754944e-38, %v6602
        %v6604 = vsel %vm6601, %v6603, %v6599
        %v6605 = vmul.f32 1.0, %v6604
        %v6606 = vrcp.pop %v6528
        %v6607 = vmul.f32 %v6528, %v6606
        %v6608 = vsub.f32 1.0, %v6607
        %v6609 = vmul.f32 %v6606, %v6608
        %v6610 = vadd.f32 %v6606, %v6609
        %vm6611 = vweird.f32 %v6528
        %vm6612 = vweird.f32 %v6606
        %vm6613 = vmor %vm6611, %vm6612
        %v6614 = vsel %vm6613, %v6606, %v6610
        %v6615 = vand.u32 2147483647, %v6528
        %vm6616 = vcmp.eq.f32.partialorder %v6615, 8.507059e+37
        %v6617 = vand.u32 %v6528, 2147483648
        %v6618 = vor.u32 1.1754944e-38, %v6617
        %v6619 = vsel %vm6616, %v6618, %v6614
        %v6620 = vmul.f32 1.0, %v6619
        %v6621 = vrcp.pop %v6529
        %v6622 = vmul.f32 %v6529, %v6621
        %v6623 = vsub.f32 1.0, %v6622
        %v6624 = vmul.f32 %v6621, %v6623
        %v6625 = vadd.f32 %v6621, %v6624
        %vm6626 = vweird.f32 %v6529
        %vm6627 = vweird.f32 %v6621
        %vm6628 = vmor %vm6626, %vm6627
        %v6629 = vsel %vm6628, %v6621, %v6625
        %v6630 = vand.u32 2147483647, %v6529
        %vm6631 = vcmp.eq.f32.partialorder %v6630, 8.507059e+37
        %v6632 = vand.u32 %v6529, 2147483648
        %v6633 = vor.u32 1.1754944e-38, %v6632
        %v6634 = vsel %vm6631, %v6633, %v6629
        %v6635 = vmul.f32 1.0, %v6634
        %v6636 = vrcp.pop %v6530
        %v6637 = vmul.f32 %v6530, %v6636
        %v6638 = vsub.f32 1.0, %v6637
        %v6639 = vmul.f32 %v6636, %v6638
        %v6640 = vadd.f32 %v6636, %v6639
        %vm6641 = vweird.f32 %v6530
        %vm6642 = vweird.f32 %v6636
        %vm6643 = vmor %vm6641, %vm6642
        %v6644 = vsel %vm6643, %v6636, %v6640
        %v6645 = vand.u32 2147483647, %v6530
        %vm6646 = vcmp.eq.f32.partialorder %v6645, 8.507059e+37
        %v6647 = vand.u32 %v6530, 2147483648
        %v6648 = vor.u32 1.1754944e-38, %v6647
        %v6649 = vsel %vm6646, %v6648, %v6644
        %v6650 = vmul.f32 1.0, %v6649
        %v6651 = vmul.f32 %v6545, %v6490
        %v6652 = vmul.f32 %v6560, %v6490
        %v6653 = vmul.f32 %v6575, %v6490
        %v6654 = vmul.f32 %v6590, %v6490
        %v6655 = vmul.f32 %v6605, %v6490
        %v6656 = vmul.f32 %v6620, %v6490
        %v6657 = vmul.f32 %v6635, %v6490
        %v6658 = vmul.f32 %v6650, %v6490
        %v6659 = vsub.f32 0.0, %v6651
        %v6660 = vsub.f32 0.0, %v6652
        %v6661 = vsub.f32 0.0, %v6653
        %v6662 = vsub.f32 0.0, %v6654
        %v6663 = vsub.f32 0.0, %v6655
        %v6664 = vsub.f32 0.0, %v6656
        %v6665 = vsub.f32 0.0, %v6657
        %v6666 = vsub.f32 0.0, %v6658
        %6667 = vrot.lane.b32.xlu0 %v386, 111
        %v6668 = vpop.permute.xlu0 %6667
        %6669 = vrot.lane.b32.xlu0 %v387, 111
        %v6670 = vpop.permute.xlu0 %6669
        %6671 = vrot.lane.b32.xlu0 %v388, 111
        %v6672 = vpop.permute.xlu0 %6671
        %6673 = vrot.lane.b32.xlu0 %v389, 111
        %v6674 = vpop.permute.xlu0 %6673
        %6675 = vrot.lane.b32.xlu0 %v390, 111
        %v6676 = vpop.permute.xlu0 %6675
        %6677 = vrot.lane.b32.xlu0 %v391, 111
        %v6678 = vpop.permute.xlu0 %6677
        %6679 = vrot.lane.b32.xlu0 %v392, 111
        %v6680 = vpop.permute.xlu0 %6679
        %6681 = vrot.lane.b32.xlu0 %v393, 111
        %v6682 = vpop.permute.xlu0 %6681
        %v6691 = vmul.f32 %v6659, %v6668
        %v6692 = vmul.f32 %v6660, %v6670
        %v6693 = vmul.f32 %v6661, %v6672
        %v6694 = vmul.f32 %v6662, %v6674
        %v6695 = vmul.f32 %v6663, %v6676
        %v6696 = vmul.f32 %v6664, %v6678
        %v6697 = vmul.f32 %v6665, %v6680
        %v6698 = vmul.f32 %v6666, %v6682
        %v6699 = vmul.f32 %v6691, 1.442695
        %v6700 = vpow.pop %v6699
        %v6701 = vmul.f32 %v6692, 1.442695
        %v6702 = vpow.pop %v6701
        %v6703 = vmul.f32 %v6693, 1.442695
        %v6704 = vpow.pop %v6703
        %v6705 = vmul.f32 %v6694, 1.442695
        %v6706 = vpow.pop %v6705
        %v6707 = vmul.f32 %v6695, 1.442695
        %v6708 = vpow.pop %v6707
        %v6709 = vmul.f32 %v6696, 1.442695
        %v6710 = vpow.pop %v6709
        %v6711 = vmul.f32 %v6697, 1.442695
        %v6712 = vpow.pop %v6711
        %v6713 = vmul.f32 %v6698, 1.442695
        %v6714 = vpow.pop %v6713
        %v6715 = vsub.f32 1.0, %v6700
        %v6716 = vsub.f32 1.0, %v6702
        %v6717 = vsub.f32 1.0, %v6704
        %v6718 = vsub.f32 1.0, %v6706
        %v6719 = vsub.f32 1.0, %v6708
        %v6720 = vsub.f32 1.0, %v6710
        %v6721 = vsub.f32 1.0, %v6712
        %v6722 = vsub.f32 1.0, %v6714
        %v6723 = vsub.f32 1.0, %v6715
        %v6724 = vsub.f32 1.0, %v6716
        %v6725 = vsub.f32 1.0, %v6717
        %v6726 = vsub.f32 1.0, %v6718
        %v6727 = vsub.f32 1.0, %v6719
        %v6728 = vsub.f32 1.0, %v6720
        %v6729 = vsub.f32 1.0, %v6721
        %v6730 = vsub.f32 1.0, %v6722
        %v6731 = vadd.f32 %v6723, 1e-10
        %v6732 = vadd.f32 %v6724, 1e-10
        %v6733 = vadd.f32 %v6725, 1e-10
        %v6734 = vadd.f32 %v6726, 1e-10
        %v6735 = vadd.f32 %v6727, 1e-10
        %v6736 = vadd.f32 %v6728, 1e-10
        %v6737 = vadd.f32 %v6729, 1e-10
        %v6738 = vadd.f32 %v6730, 1e-10
        %6740 = vset.pattern.permute.xlu0 0
        %6741 = vperm.xlu0 %6740, %v6715
        %v6742 = vpop.permute.xlu0 %6741
        %6745 = vset.pattern.permute.xlu0 0
        %6746 = vperm.xlu0 %6745, %v6716
        %v6747 = vpop.permute.xlu0 %6746
        %6750 = vset.pattern.permute.xlu0 0
        %6751 = vperm.xlu0 %6750, %v6717
        %v6752 = vpop.permute.xlu0 %6751
        %6755 = vset.pattern.permute.xlu0 0
        %6756 = vperm.xlu0 %6755, %v6718
        %v6757 = vpop.permute.xlu0 %6756
        %6760 = vset.pattern.permute.xlu0 0
        %6761 = vperm.xlu0 %6760, %v6719
        %v6762 = vpop.permute.xlu0 %6761
        %6765 = vset.pattern.permute.xlu0 0
        %6766 = vperm.xlu0 %6765, %v6720
        %v6767 = vpop.permute.xlu0 %6766
        %6770 = vset.pattern.permute.xlu0 0
        %6771 = vperm.xlu0 %6770, %v6721
        %v6772 = vpop.permute.xlu0 %6771
        %6775 = vset.pattern.permute.xlu0 0
        %6776 = vperm.xlu0 %6775, %v6722
        %v6777 = vpop.permute.xlu0 %6776
        %v6843 = vrot.slane %v4314, 7
        %v6844 = vsel %vm5310, %v6843, %v4299
        %v6845 = vrot.slane %v4329, 6
        %v6846 = vsel %vm5313, %v6845, %v6844
        %v6847 = vrot.slane %v4344, 5
        %v6848 = vsel %vm5316, %v6847, %v6846
        %v6849 = vrot.slane %v4359, 4
        %v6850 = vsel %vm5319, %v6849, %v6848
        %v6851 = vrot.slane %v4374, 3
        %v6852 = vsel %vm5322, %v6851, %v6850
        %v6853 = vrot.slane %v4389, 2
        %v6854 = vsel %vm5325, %v6853, %v6852
        %v6855 = vrot.slane %v4404, 1
        %v6856 = vsel %vm5328, %v6855, %v6854
        %v6857 = vrot.slane %v4434, 7
        %v6858 = vsel %vm5310, %v6857, %v4419
        %v6859 = vrot.slane %v4449, 6
        %v6860 = vsel %vm5313, %v6859, %v6858
        %v6861 = vrot.slane %v4464, 5
        %v6862 = vsel %vm5316, %v6861, %v6860
        %v6863 = vrot.slane %v4479, 4
        %v6864 = vsel %vm5319, %v6863, %v6862
        %v6865 = vrot.slane %v4494, 3
        %v6866 = vsel %vm5322, %v6865, %v6864
        %v6867 = vrot.slane %v4509, 2
        %v6868 = vsel %vm5325, %v6867, %v6866
        %v6869 = vrot.slane %v4524, 1
        %v6870 = vsel %vm5328, %v6869, %v6868
        %v6871 = vrot.slane %v4554, 7
        %v6872 = vsel %vm5310, %v6871, %v4539
        %v6873 = vrot.slane %v4569, 6
        %v6874 = vsel %vm5313, %v6873, %v6872
        %v6875 = vrot.slane %v4584, 5
        %v6876 = vsel %vm5316, %v6875, %v6874
        %v6877 = vrot.slane %v4599, 4
        %v6878 = vsel %vm5319, %v6877, %v6876
        %v6879 = vrot.slane %v4614, 3
        %v6880 = vsel %vm5322, %v6879, %v6878
        %v6881 = vrot.slane %v4629, 2
        %v6882 = vsel %vm5325, %v6881, %v6880
        %v6883 = vrot.slane %v4644, 1
        %v6884 = vsel %vm5328, %v6883, %v6882
        %v6885 = vrot.slane %v4674, 7
        %v6886 = vsel %vm5310, %v6885, %v4659
        %v6887 = vrot.slane %v4689, 6
        %v6888 = vsel %vm5313, %v6887, %v6886
        %v6889 = vrot.slane %v4704, 5
        %v6890 = vsel %vm5316, %v6889, %v6888
        %v6891 = vrot.slane %v4719, 4
        %v6892 = vsel %vm5319, %v6891, %v6890
        %v6893 = vrot.slane %v4734, 3
        %v6894 = vsel %vm5322, %v6893, %v6892
        %v6895 = vrot.slane %v4749, 2
        %v6896 = vsel %vm5325, %v6895, %v6894
        %v6897 = vrot.slane %v4764, 1
        %v6898 = vsel %vm5328, %v6897, %v6896
        %v6899 = vrot.slane %v4794, 7
        %v6900 = vsel %vm5310, %v6899, %v4779
        %v6901 = vrot.slane %v4809, 6
        %v6902 = vsel %vm5313, %v6901, %v6900
        %v6903 = vrot.slane %v4824, 5
        %v6904 = vsel %vm5316, %v6903, %v6902
        %v6905 = vrot.slane %v4839, 4
        %v6906 = vsel %vm5319, %v6905, %v6904
        %v6907 = vrot.slane %v4854, 3
        %v6908 = vsel %vm5322, %v6907, %v6906
        %v6909 = vrot.slane %v4869, 2
        %v6910 = vsel %vm5325, %v6909, %v6908
        %v6911 = vrot.slane %v4884, 1
        %v6912 = vsel %vm5328, %v6911, %v6910
        %v6913 = vrot.slane %v4914, 7
        %v6914 = vsel %vm5310, %v6913, %v4899
        %v6915 = vrot.slane %v4929, 6
        %v6916 = vsel %vm5313, %v6915, %v6914
        %v6917 = vrot.slane %v4944, 5
        %v6918 = vsel %vm5316, %v6917, %v6916
        %v6919 = vrot.slane %v4959, 4
        %v6920 = vsel %vm5319, %v6919, %v6918
        %v6921 = vrot.slane %v4974, 3
        %v6922 = vsel %vm5322, %v6921, %v6920
        %v6923 = vrot.slane %v4989, 2
        %v6924 = vsel %vm5325, %v6923, %v6922
        %v6925 = vrot.slane %v5004, 1
        %v6926 = vsel %vm5328, %v6925, %v6924
        %v6927 = vrot.slane %v5034, 7
        %v6928 = vsel %vm5310, %v6927, %v5019
        %v6929 = vrot.slane %v5049, 6
        %v6930 = vsel %vm5313, %v6929, %v6928
        %v6931 = vrot.slane %v5064, 5
        %v6932 = vsel %vm5316, %v6931, %v6930
        %v6933 = vrot.slane %v5079, 4
        %v6934 = vsel %vm5319, %v6933, %v6932
        %v6935 = vrot.slane %v5094, 3
        %v6936 = vsel %vm5322, %v6935, %v6934
        %v6937 = vrot.slane %v5109, 2
        %v6938 = vsel %vm5325, %v6937, %v6936
        %v6939 = vrot.slane %v5124, 1
        %v6940 = vsel %vm5328, %v6939, %v6938
        %v6941 = vrot.slane %v5154, 7
        %v6942 = vsel %vm5310, %v6941, %v5139
        %v6943 = vrot.slane %v5169, 6
        %v6944 = vsel %vm5313, %v6943, %v6942
        %v6945 = vrot.slane %v5184, 5
        %v6946 = vsel %vm5316, %v6945, %v6944
        %v6947 = vrot.slane %v5199, 4
        %v6948 = vsel %vm5319, %v6947, %v6946
        %v6949 = vrot.slane %v5214, 3
        %v6950 = vsel %vm5322, %v6949, %v6948
        %v6951 = vrot.slane %v5229, 2
        %v6952 = vsel %vm5325, %v6951, %v6950
        %v6953 = vrot.slane %v5244, 1
        %v6954 = vsel %vm5328, %v6953, %v6952
        %6955 = vrot.lane.b32.xlu0 %v6856, 96
        %v6956 = vpop.permute.xlu0 %6955
        %6957 = vrot.lane.b32.xlu0 %v6870, 96
        %v6958 = vpop.permute.xlu0 %6957
        %6959 = vrot.lane.b32.xlu0 %v6884, 96
        %v6960 = vpop.permute.xlu0 %6959
        %6961 = vrot.lane.b32.xlu0 %v6898, 96
        %v6962 = vpop.permute.xlu0 %6961
        %6963 = vrot.lane.b32.xlu0 %v6912, 96
        %v6964 = vpop.permute.xlu0 %6963
        %6965 = vrot.lane.b32.xlu0 %v6926, 96
        %v6966 = vpop.permute.xlu0 %6965
        %6967 = vrot.lane.b32.xlu0 %v6940, 96
        %v6968 = vpop.permute.xlu0 %6967
        %6969 = vrot.lane.b32.xlu0 %v6954, 96
        %v6970 = vpop.permute.xlu0 %6969
        %v6979 = vmul.f32 %v6742, %v6956
        %v6980 = vmul.f32 %v6747, %v6958
        %v6981 = vmul.f32 %v6752, %v6960
        %v6982 = vmul.f32 %v6757, %v6962
        %v6983 = vmul.f32 %v6762, %v6964
        %v6984 = vmul.f32 %v6767, %v6966
        %v6985 = vmul.f32 %v6772, %v6968
        %v6986 = vmul.f32 %v6777, %v6970
        %v6987 = vadd.f32 %v6979, 0.0
        %v6988 = vadd.f32 %v6980, 0.0
        %v6989 = vadd.f32 %v6981, 0.0
        %v6990 = vadd.f32 %v6982, 0.0
        %v6991 = vadd.f32 %v6983, 0.0
        %v6992 = vadd.f32 %v6984, 0.0
        %v6993 = vadd.f32 %v6985, 0.0
        %v6994 = vadd.f32 %v6986, 0.0
        %v7003 = vmul.f32 %v6742, %v5329
        %v7004 = vmul.f32 %v6747, %v5343
        %v7005 = vmul.f32 %v6752, %v5357
        %v7006 = vmul.f32 %v6757, %v5371
        %v7007 = vmul.f32 %v6762, %v5385
        %v7008 = vmul.f32 %v6767, %v5399
        %v7009 = vmul.f32 %v6772, %v5413
        %v7010 = vmul.f32 %v6777, %v5427
        %v7011 = vadd.f32 %v7003, 0.0
        %v7012 = vadd.f32 %v7004, 0.0
        %v7013 = vadd.f32 %v7005, 0.0
        %v7014 = vadd.f32 %v7006, 0.0
        %v7015 = vadd.f32 %v7007, 0.0
        %v7016 = vadd.f32 %v7008, 0.0
        %v7017 = vadd.f32 %v7009, 0.0
        %v7018 = vadd.f32 %v7010, 0.0
        %v7019 = vadd.f32 %v6715, 0.0
        %v7020 = vadd.f32 %v6716, 0.0
        %v7021 = vadd.f32 %v6717, 0.0
        %v7022 = vadd.f32 %v6718, 0.0
        %v7023 = vadd.f32 %v6719, 0.0
        %v7024 = vadd.f32 %v6720, 0.0
        %v7025 = vadd.f32 %v6721, 0.0
        %v7026 = vadd.f32 %v6722, 0.0
        %7027 = vrot.lane.b32.xlu0 %v386, 119
        %v7028 = vpop.permute.xlu0 %7027
        %7029 = vrot.lane.b32.xlu0 %v387, 119
        %v7030 = vpop.permute.xlu0 %7029
        %7031 = vrot.lane.b32.xlu0 %v388, 119
        %v7032 = vpop.permute.xlu0 %7031
        %7033 = vrot.lane.b32.xlu0 %v389, 119
        %v7034 = vpop.permute.xlu0 %7033
        %7035 = vrot.lane.b32.xlu0 %v390, 119
        %v7036 = vpop.permute.xlu0 %7035
        %7037 = vrot.lane.b32.xlu0 %v391, 119
        %v7038 = vpop.permute.xlu0 %7037
        %7039 = vrot.lane.b32.xlu0 %v392, 119
        %v7040 = vpop.permute.xlu0 %7039
        %7041 = vrot.lane.b32.xlu0 %v393, 119
        %v7042 = vpop.permute.xlu0 %7041
        %v7051 = vmul.f32 %v6715, %v7028
        %v7052 = vmul.f32 %v6716, %v7030
        %v7053 = vmul.f32 %v6717, %v7032
        %v7054 = vmul.f32 %v6718, %v7034
        %v7055 = vmul.f32 %v6719, %v7036
        %v7056 = vmul.f32 %v6720, %v7038
        %v7057 = vmul.f32 %v6721, %v7040
        %v7058 = vmul.f32 %v6722, %v7042
        %v7059 = vadd.f32 %v7051, 0.0
        %v7060 = vadd.f32 %v7052, 0.0
        %v7061 = vadd.f32 %v7053, 0.0
        %v7062 = vadd.f32 %v7054, 0.0
        %v7063 = vadd.f32 %v7055, 0.0
        %v7064 = vadd.f32 %v7056, 0.0
        %v7065 = vadd.f32 %v7057, 0.0
        %v7066 = vadd.f32 %v7058, 0.0
        %7075 = vrot.lane.b32.xlu0 %v6731, 1
        %v7076 = vpop.permute.xlu0 %7075
        %7077 = vrot.lane.b32.xlu0 %v6732, 1
        %v7078 = vpop.permute.xlu0 %7077
        %7079 = vrot.lane.b32.xlu0 %v6733, 1
        %v7080 = vpop.permute.xlu0 %7079
        %7081 = vrot.lane.b32.xlu0 %v6734, 1
        %v7082 = vpop.permute.xlu0 %7081
        %7083 = vrot.lane.b32.xlu0 %v6735, 1
        %v7084 = vpop.permute.xlu0 %7083
        %7085 = vrot.lane.b32.xlu0 %v6736, 1
        %v7086 = vpop.permute.xlu0 %7085
        %7087 = vrot.lane.b32.xlu0 %v6737, 1
        %v7088 = vpop.permute.xlu0 %7087
        %7089 = vrot.lane.b32.xlu0 %v6738, 1
        %v7090 = vpop.permute.xlu0 %7089
        %v7099 = vmul.f32 %v6715, %v7076
        %v7100 = vmul.f32 %v6716, %v7078
        %v7101 = vmul.f32 %v6717, %v7080
        %v7102 = vmul.f32 %v6718, %v7082
        %v7103 = vmul.f32 %v6719, %v7084
        %v7104 = vmul.f32 %v6720, %v7086
        %v7105 = vmul.f32 %v6721, %v7088
        %v7106 = vmul.f32 %v6722, %v7090
        %7107 = vrot.lane.b32.xlu0 %v6731, 127
        %v7108 = vpop.permute.xlu0 %7107
        %7109 = vrot.lane.b32.xlu0 %v6732, 127
        %v7110 = vpop.permute.xlu0 %7109
        %7111 = vrot.lane.b32.xlu0 %v6733, 127
        %v7112 = vpop.permute.xlu0 %7111
        %7113 = vrot.lane.b32.xlu0 %v6734, 127
        %v7114 = vpop.permute.xlu0 %7113
        %7115 = vrot.lane.b32.xlu0 %v6735, 127
        %v7116 = vpop.permute.xlu0 %7115
        %7117 = vrot.lane.b32.xlu0 %v6736, 127
        %v7118 = vpop.permute.xlu0 %7117
        %7119 = vrot.lane.b32.xlu0 %v6737, 127
        %v7120 = vpop.permute.xlu0 %7119
        %7121 = vrot.lane.b32.xlu0 %v6738, 127
        %v7122 = vpop.permute.xlu0 %7121
        %v7131 = vmul.f32 %v6731, %v7108
        %v7132 = vmul.f32 %v6732, %v7110
        %v7133 = vmul.f32 %v6733, %v7112
        %v7134 = vmul.f32 %v6734, %v7114
        %v7135 = vmul.f32 %v6735, %v7116
        %v7136 = vmul.f32 %v6736, %v7118
        %v7137 = vmul.f32 %v6737, %v7120
        %v7138 = vmul.f32 %v6738, %v7122
        %7140 = vset.pattern.permute.xlu0 1
        %7141 = vperm.xlu0 %7140, %v7099
        %v7142 = vpop.permute.xlu0 %7141
        %7145 = vset.pattern.permute.xlu0 1
        %7146 = vperm.xlu0 %7145, %v7100
        %v7147 = vpop.permute.xlu0 %7146
        %7150 = vset.pattern.permute.xlu0 1
        %7151 = vperm.xlu0 %7150, %v7101
        %v7152 = vpop.permute.xlu0 %7151
        %7155 = vset.pattern.permute.xlu0 1
        %7156 = vperm.xlu0 %7155, %v7102
        %v7157 = vpop.permute.xlu0 %7156
        %7160 = vset.pattern.permute.xlu0 1
        %7161 = vperm.xlu0 %7160, %v7103
        %v7162 = vpop.permute.xlu0 %7161
        %7165 = vset.pattern.permute.xlu0 1
        %7166 = vperm.xlu0 %7165, %v7104
        %v7167 = vpop.permute.xlu0 %7166
        %7170 = vset.pattern.permute.xlu0 1
        %7171 = vperm.xlu0 %7170, %v7105
        %v7172 = vpop.permute.xlu0 %7171
        %7175 = vset.pattern.permute.xlu0 1
        %7176 = vperm.xlu0 %7175, %v7106
        %v7177 = vpop.permute.xlu0 %7176
        %v7179 = vrot.slane %v4299, 1
        %v7180 = vsel %vm5310, %v4314, %v7179
        %v7181 = vrot.slane %v4329, 7
        %v7182 = vsel %vm5313, %v7181, %v7180
        %v7183 = vrot.slane %v4344, 6
        %v7184 = vsel %vm5316, %v7183, %v7182
        %v7185 = vrot.slane %v4359, 5
        %v7186 = vsel %vm5319, %v7185, %v7184
        %v7187 = vrot.slane %v4374, 4
        %v7188 = vsel %vm5322, %v7187, %v7186
        %v7189 = vrot.slane %v4389, 3
        %v7190 = vsel %vm5325, %v7189, %v7188
        %v7191 = vrot.slane %v4404, 2
        %v7192 = vsel %vm5328, %v7191, %v7190
        %v7193 = vrot.slane %v4419, 1
        %v7194 = vsel %vm5310, %v4434, %v7193
        %v7195 = vrot.slane %v4449, 7
        %v7196 = vsel %vm5313, %v7195, %v7194
        %v7197 = vrot.slane %v4464, 6
        %v7198 = vsel %vm5316, %v7197, %v7196
        %v7199 = vrot.slane %v4479, 5
        %v7200 = vsel %vm5319, %v7199, %v7198
        %v7201 = vrot.slane %v4494, 4
        %v7202 = vsel %vm5322, %v7201, %v7200
        %v7203 = vrot.slane %v4509, 3
        %v7204 = vsel %vm5325, %v7203, %v7202
        %v7205 = vrot.slane %v4524, 2
        %v7206 = vsel %vm5328, %v7205, %v7204
        %v7207 = vrot.slane %v4539, 1
        %v7208 = vsel %vm5310, %v4554, %v7207
        %v7209 = vrot.slane %v4569, 7
        %v7210 = vsel %vm5313, %v7209, %v7208
        %v7211 = vrot.slane %v4584, 6
        %v7212 = vsel %vm5316, %v7211, %v7210
        %v7213 = vrot.slane %v4599, 5
        %v7214 = vsel %vm5319, %v7213, %v7212
        %v7215 = vrot.slane %v4614, 4
        %v7216 = vsel %vm5322, %v7215, %v7214
        %v7217 = vrot.slane %v4629, 3
        %v7218 = vsel %vm5325, %v7217, %v7216
        %v7219 = vrot.slane %v4644, 2
        %v7220 = vsel %vm5328, %v7219, %v7218
        %v7221 = vrot.slane %v4659, 1
        %v7222 = vsel %vm5310, %v4674, %v7221
        %v7223 = vrot.slane %v4689, 7
        %v7224 = vsel %vm5313, %v7223, %v7222
        %v7225 = vrot.slane %v4704, 6
        %v7226 = vsel %vm5316, %v7225, %v7224
        %v7227 = vrot.slane %v4719, 5
        %v7228 = vsel %vm5319, %v7227, %v7226
        %v7229 = vrot.slane %v4734, 4
        %v7230 = vsel %vm5322, %v7229, %v7228
        %v7231 = vrot.slane %v4749, 3
        %v7232 = vsel %vm5325, %v7231, %v7230
        %v7233 = vrot.slane %v4764, 2
        %v7234 = vsel %vm5328, %v7233, %v7232
        %v7235 = vrot.slane %v4779, 1
        %v7236 = vsel %vm5310, %v4794, %v7235
        %v7237 = vrot.slane %v4809, 7
        %v7238 = vsel %vm5313, %v7237, %v7236
        %v7239 = vrot.slane %v4824, 6
        %v7240 = vsel %vm5316, %v7239, %v7238
        %v7241 = vrot.slane %v4839, 5
        %v7242 = vsel %vm5319, %v7241, %v7240
        %v7243 = vrot.slane %v4854, 4
        %v7244 = vsel %vm5322, %v7243, %v7242
        %v7245 = vrot.slane %v4869, 3
        %v7246 = vsel %vm5325, %v7245, %v7244
        %v7247 = vrot.slane %v4884, 2
        %v7248 = vsel %vm5328, %v7247, %v7246
        %v7249 = vrot.slane %v4899, 1
        %v7250 = vsel %vm5310, %v4914, %v7249
        %v7251 = vrot.slane %v4929, 7
        %v7252 = vsel %vm5313, %v7251, %v7250
        %v7253 = vrot.slane %v4944, 6
        %v7254 = vsel %vm5316, %v7253, %v7252
        %v7255 = vrot.slane %v4959, 5
        %v7256 = vsel %vm5319, %v7255, %v7254
        %v7257 = vrot.slane %v4974, 4
        %v7258 = vsel %vm5322, %v7257, %v7256
        %v7259 = vrot.slane %v4989, 3
        %v7260 = vsel %vm5325, %v7259, %v7258
        %v7261 = vrot.slane %v5004, 2
        %v7262 = vsel %vm5328, %v7261, %v7260
        %v7263 = vrot.slane %v5019, 1
        %v7264 = vsel %vm5310, %v5034, %v7263
        %v7265 = vrot.slane %v5049, 7
        %v7266 = vsel %vm5313, %v7265, %v7264
        %v7267 = vrot.slane %v5064, 6
        %v7268 = vsel %vm5316, %v7267, %v7266
        %v7269 = vrot.slane %v5079, 5
        %v7270 = vsel %vm5319, %v7269, %v7268
        %v7271 = vrot.slane %v5094, 4
        %v7272 = vsel %vm5322, %v7271, %v7270
        %v7273 = vrot.slane %v5109, 3
        %v7274 = vsel %vm5325, %v7273, %v7272
        %v7275 = vrot.slane %v5124, 2
        %v7276 = vsel %vm5328, %v7275, %v7274
        %v7277 = vrot.slane %v5139, 1
        %v7278 = vsel %vm5310, %v5154, %v7277
        %v7279 = vrot.slane %v5169, 7
        %v7280 = vsel %vm5313, %v7279, %v7278
        %v7281 = vrot.slane %v5184, 6
        %v7282 = vsel %vm5316, %v7281, %v7280
        %v7283 = vrot.slane %v5199, 5
        %v7284 = vsel %vm5319, %v7283, %v7282
        %v7285 = vrot.slane %v5214, 4
        %v7286 = vsel %vm5322, %v7285, %v7284
        %v7287 = vrot.slane %v5229, 3
        %v7288 = vsel %vm5325, %v7287, %v7286
        %v7289 = vrot.slane %v5244, 2
        %v7290 = vsel %vm5328, %v7289, %v7288
        %7291 = vrot.lane.b32.xlu0 %v7192, 96
        %v7292 = vpop.permute.xlu0 %7291
        %7293 = vrot.lane.b32.xlu0 %v7206, 96
        %v7294 = vpop.permute.xlu0 %7293
        %7295 = vrot.lane.b32.xlu0 %v7220, 96
        %v7296 = vpop.permute.xlu0 %7295
        %7297 = vrot.lane.b32.xlu0 %v7234, 96
        %v7298 = vpop.permute.xlu0 %7297
        %7299 = vrot.lane.b32.xlu0 %v7248, 96
        %v7300 = vpop.permute.xlu0 %7299
        %7301 = vrot.lane.b32.xlu0 %v7262, 96
        %v7302 = vpop.permute.xlu0 %7301
        %7303 = vrot.lane.b32.xlu0 %v7276, 96
        %v7304 = vpop.permute.xlu0 %7303
        %7305 = vrot.lane.b32.xlu0 %v7290, 96
        %v7306 = vpop.permute.xlu0 %7305
        %v7315 = vmul.f32 %v7142, %v7292
        %v7316 = vmul.f32 %v7147, %v7294
        %v7317 = vmul.f32 %v7152, %v7296
        %v7318 = vmul.f32 %v7157, %v7298
        %v7319 = vmul.f32 %v7162, %v7300
        %v7320 = vmul.f32 %v7167, %v7302
        %v7321 = vmul.f32 %v7172, %v7304
        %v7322 = vmul.f32 %v7177, %v7306
        %v7323 = vadd.f32 %v6987, %v7315
        %v7324 = vadd.f32 %v6988, %v7316
        %v7325 = vadd.f32 %v6989, %v7317
        %v7326 = vadd.f32 %v6990, %v7318
        %v7327 = vadd.f32 %v6991, %v7319
        %v7328 = vadd.f32 %v6992, %v7320
        %v7329 = vadd.f32 %v6993, %v7321
        %v7330 = vadd.f32 %v6994, %v7322
        %v7339 = vmul.f32 %v7142, %v5465
        %v7340 = vmul.f32 %v7147, %v5479
        %v7341 = vmul.f32 %v7152, %v5493
        %v7342 = vmul.f32 %v7157, %v5507
        %v7343 = vmul.f32 %v7162, %v5521
        %v7344 = vmul.f32 %v7167, %v5535
        %v7345 = vmul.f32 %v7172, %v5549
        %v7346 = vmul.f32 %v7177, %v5563
        %v7347 = vadd.f32 %v7011, %v7339
        %v7348 = vadd.f32 %v7012, %v7340
        %v7349 = vadd.f32 %v7013, %v7341
        %v7350 = vadd.f32 %v7014, %v7342
        %v7351 = vadd.f32 %v7015, %v7343
        %v7352 = vadd.f32 %v7016, %v7344
        %v7353 = vadd.f32 %v7017, %v7345
        %v7354 = vadd.f32 %v7018, %v7346
        %7355 = vrot.lane.b32.xlu0 %v7099, 127
        %v7356 = vpop.permute.xlu0 %7355
        %7357 = vrot.lane.b32.xlu0 %v7100, 127
        %v7358 = vpop.permute.xlu0 %7357
        %7359 = vrot.lane.b32.xlu0 %v7101, 127
        %v7360 = vpop.permute.xlu0 %7359
        %7361 = vrot.lane.b32.xlu0 %v7102, 127
        %v7362 = vpop.permute.xlu0 %7361
        %7363 = vrot.lane.b32.xlu0 %v7103, 127
        %v7364 = vpop.permute.xlu0 %7363
        %7365 = vrot.lane.b32.xlu0 %v7104, 127
        %v7366 = vpop.permute.xlu0 %7365
        %7367 = vrot.lane.b32.xlu0 %v7105, 127
        %v7368 = vpop.permute.xlu0 %7367
        %7369 = vrot.lane.b32.xlu0 %v7106, 127
        %v7370 = vpop.permute.xlu0 %7369
        %v7379 = vadd.f32 %v7019, %v7356
        %v7380 = vadd.f32 %v7020, %v7358
        %v7381 = vadd.f32 %v7021, %v7360
        %v7382 = vadd.f32 %v7022, %v7362
        %v7383 = vadd.f32 %v7023, %v7364
        %v7384 = vadd.f32 %v7024, %v7366
        %v7385 = vadd.f32 %v7025, %v7368
        %v7386 = vadd.f32 %v7026, %v7370
        %v7387 = vmul.f32 %v7099, %v7028
        %v7388 = vmul.f32 %v7100, %v7030
        %v7389 = vmul.f32 %v7101, %v7032
        %v7390 = vmul.f32 %v7102, %v7034
        %v7391 = vmul.f32 %v7103, %v7036
        %v7392 = vmul.f32 %v7104, %v7038
        %v7393 = vmul.f32 %v7105, %v7040
        %v7394 = vmul.f32 %v7106, %v7042
        %7403 = vrot.lane.b32.xlu0 %v7387, 127
        %v7404 = vpop.permute.xlu0 %7403
        %7405 = vrot.lane.b32.xlu0 %v7388, 127
        %v7406 = vpop.permute.xlu0 %7405
        %7407 = vrot.lane.b32.xlu0 %v7389, 127
        %v7408 = vpop.permute.xlu0 %7407
        %7409 = vrot.lane.b32.xlu0 %v7390, 127
        %v7410 = vpop.permute.xlu0 %7409
        %7411 = vrot.lane.b32.xlu0 %v7391, 127
        %v7412 = vpop.permute.xlu0 %7411
        %7413 = vrot.lane.b32.xlu0 %v7392, 127
        %v7414 = vpop.permute.xlu0 %7413
        %7415 = vrot.lane.b32.xlu0 %v7393, 127
        %v7416 = vpop.permute.xlu0 %7415
        %7417 = vrot.lane.b32.xlu0 %v7394, 127
        %v7418 = vpop.permute.xlu0 %7417
        %v7427 = vadd.f32 %v7059, %v7404
        %v7428 = vadd.f32 %v7060, %v7406
        %v7429 = vadd.f32 %v7061, %v7408
        %v7430 = vadd.f32 %v7062, %v7410
        %v7431 = vadd.f32 %v7063, %v7412
        %v7432 = vadd.f32 %v7064, %v7414
        %v7433 = vadd.f32 %v7065, %v7416
        %v7434 = vadd.f32 %v7066, %v7418
        %7443 = vrot.lane.b32.xlu0 %v7131, 2
        %v7444 = vpop.permute.xlu0 %7443
        %7445 = vrot.lane.b32.xlu0 %v7132, 2
        %v7446 = vpop.permute.xlu0 %7445
        %7447 = vrot.lane.b32.xlu0 %v7133, 2
        %v7448 = vpop.permute.xlu0 %7447
        %7449 = vrot.lane.b32.xlu0 %v7134, 2
        %v7450 = vpop.permute.xlu0 %7449
        %7451 = vrot.lane.b32.xlu0 %v7135, 2
        %v7452 = vpop.permute.xlu0 %7451
        %7453 = vrot.lane.b32.xlu0 %v7136, 2
        %v7454 = vpop.permute.xlu0 %7453
        %7455 = vrot.lane.b32.xlu0 %v7137, 2
        %v7456 = vpop.permute.xlu0 %7455
        %7457 = vrot.lane.b32.xlu0 %v7138, 2
        %v7458 = vpop.permute.xlu0 %7457
        %v7467 = vmul.f32 %v6715, %v7444
        %v7468 = vmul.f32 %v6716, %v7446
        %v7469 = vmul.f32 %v6717, %v7448
        %v7470 = vmul.f32 %v6718, %v7450
        %v7471 = vmul.f32 %v6719, %v7452
        %v7472 = vmul.f32 %v6720, %v7454
        %v7473 = vmul.f32 %v6721, %v7456
        %v7474 = vmul.f32 %v6722, %v7458
        %7475 = vrot.lane.b32.xlu0 %v6731, 126
        %v7476 = vpop.permute.xlu0 %7475
        %7477 = vrot.lane.b32.xlu0 %v6732, 126
        %v7478 = vpop.permute.xlu0 %7477
        %7479 = vrot.lane.b32.xlu0 %v6733, 126
        %v7480 = vpop.permute.xlu0 %7479
        %7481 = vrot.lane.b32.xlu0 %v6734, 126
        %v7482 = vpop.permute.xlu0 %7481
        %7483 = vrot.lane.b32.xlu0 %v6735, 126
        %v7484 = vpop.permute.xlu0 %7483
        %7485 = vrot.lane.b32.xlu0 %v6736, 126
        %v7486 = vpop.permute.xlu0 %7485
        %7487 = vrot.lane.b32.xlu0 %v6737, 126
        %v7488 = vpop.permute.xlu0 %7487
        %7489 = vrot.lane.b32.xlu0 %v6738, 126
        %v7490 = vpop.permute.xlu0 %7489
        %v7499 = vmul.f32 %v7131, %v7476
        %v7500 = vmul.f32 %v7132, %v7478
        %v7501 = vmul.f32 %v7133, %v7480
        %v7502 = vmul.f32 %v7134, %v7482
        %v7503 = vmul.f32 %v7135, %v7484
        %v7504 = vmul.f32 %v7136, %v7486
        %v7505 = vmul.f32 %v7137, %v7488
        %v7506 = vmul.f32 %v7138, %v7490
        %7508 = vset.pattern.permute.xlu0 2
        %7509 = vperm.xlu0 %7508, %v7467
        %v7510 = vpop.permute.xlu0 %7509
        %7513 = vset.pattern.permute.xlu0 2
        %7514 = vperm.xlu0 %7513, %v7468
        %v7515 = vpop.permute.xlu0 %7514
        %7518 = vset.pattern.permute.xlu0 2
        %7519 = vperm.xlu0 %7518, %v7469
        %v7520 = vpop.permute.xlu0 %7519
        %7523 = vset.pattern.permute.xlu0 2
        %7524 = vperm.xlu0 %7523, %v7470
        %v7525 = vpop.permute.xlu0 %7524
        %7528 = vset.pattern.permute.xlu0 2
        %7529 = vperm.xlu0 %7528, %v7471
        %v7530 = vpop.permute.xlu0 %7529
        %7533 = vset.pattern.permute.xlu0 2
        %7534 = vperm.xlu0 %7533, %v7472
        %v7535 = vpop.permute.xlu0 %7534
        %7538 = vset.pattern.permute.xlu0 2
        %7539 = vperm.xlu0 %7538, %v7473
        %v7540 = vpop.permute.xlu0 %7539
        %7543 = vset.pattern.permute.xlu0 2
        %7544 = vperm.xlu0 %7543, %v7474
        %v7545 = vpop.permute.xlu0 %7544
        %v7547 = vrot.slane %v4299, 2
        %v7548 = vrot.slane %v4314, 1
        %v7549 = vsel %vm5310, %v7548, %v7547
        %v7550 = vsel %vm5313, %v4329, %v7549
        %v7551 = vrot.slane %v4344, 7
        %v7552 = vsel %vm5316, %v7551, %v7550
        %v7553 = vrot.slane %v4359, 6
        %v7554 = vsel %vm5319, %v7553, %v7552
        %v7555 = vrot.slane %v4374, 5
        %v7556 = vsel %vm5322, %v7555, %v7554
        %v7557 = vrot.slane %v4389, 4
        %v7558 = vsel %vm5325, %v7557, %v7556
        %v7559 = vrot.slane %v4404, 3
        %v7560 = vsel %vm5328, %v7559, %v7558
        %v7561 = vrot.slane %v4419, 2
        %v7562 = vrot.slane %v4434, 1
        %v7563 = vsel %vm5310, %v7562, %v7561
        %v7564 = vsel %vm5313, %v4449, %v7563
        %v7565 = vrot.slane %v4464, 7
        %v7566 = vsel %vm5316, %v7565, %v7564
        %v7567 = vrot.slane %v4479, 6
        %v7568 = vsel %vm5319, %v7567, %v7566
        %v7569 = vrot.slane %v4494, 5
        %v7570 = vsel %vm5322, %v7569, %v7568
        %v7571 = vrot.slane %v4509, 4
        %v7572 = vsel %vm5325, %v7571, %v7570
        %v7573 = vrot.slane %v4524, 3
        %v7574 = vsel %vm5328, %v7573, %v7572
        %v7575 = vrot.slane %v4539, 2
        %v7576 = vrot.slane %v4554, 1
        %v7577 = vsel %vm5310, %v7576, %v7575
        %v7578 = vsel %vm5313, %v4569, %v7577
        %v7579 = vrot.slane %v4584, 7
        %v7580 = vsel %vm5316, %v7579, %v7578
        %v7581 = vrot.slane %v4599, 6
        %v7582 = vsel %vm5319, %v7581, %v7580
        %v7583 = vrot.slane %v4614, 5
        %v7584 = vsel %vm5322, %v7583, %v7582
        %v7585 = vrot.slane %v4629, 4
        %v7586 = vsel %vm5325, %v7585, %v7584
        %v7587 = vrot.slane %v4644, 3
        %v7588 = vsel %vm5328, %v7587, %v7586
        %v7589 = vrot.slane %v4659, 2
        %v7590 = vrot.slane %v4674, 1
        %v7591 = vsel %vm5310, %v7590, %v7589
        %v7592 = vsel %vm5313, %v4689, %v7591
        %v7593 = vrot.slane %v4704, 7
        %v7594 = vsel %vm5316, %v7593, %v7592
        %v7595 = vrot.slane %v4719, 6
        %v7596 = vsel %vm5319, %v7595, %v7594
        %v7597 = vrot.slane %v4734, 5
        %v7598 = vsel %vm5322, %v7597, %v7596
        %v7599 = vrot.slane %v4749, 4
        %v7600 = vsel %vm5325, %v7599, %v7598
        %v7601 = vrot.slane %v4764, 3
        %v7602 = vsel %vm5328, %v7601, %v7600
        %v7603 = vrot.slane %v4779, 2
        %v7604 = vrot.slane %v4794, 1
        %v7605 = vsel %vm5310, %v7604, %v7603
        %v7606 = vsel %vm5313, %v4809, %v7605
        %v7607 = vrot.slane %v4824, 7
        %v7608 = vsel %vm5316, %v7607, %v7606
        %v7609 = vrot.slane %v4839, 6
        %v7610 = vsel %vm5319, %v7609, %v7608
        %v7611 = vrot.slane %v4854, 5
        %v7612 = vsel %vm5322, %v7611, %v7610
        %v7613 = vrot.slane %v4869, 4
        %v7614 = vsel %vm5325, %v7613, %v7612
        %v7615 = vrot.slane %v4884, 3
        %v7616 = vsel %vm5328, %v7615, %v7614
        %v7617 = vrot.slane %v4899, 2
        %v7618 = vrot.slane %v4914, 1
        %v7619 = vsel %vm5310, %v7618, %v7617
        %v7620 = vsel %vm5313, %v4929, %v7619
        %v7621 = vrot.slane %v4944, 7
        %v7622 = vsel %vm5316, %v7621, %v7620
        %v7623 = vrot.slane %v4959, 6
        %v7624 = vsel %vm5319, %v7623, %v7622
        %v7625 = vrot.slane %v4974, 5
        %v7626 = vsel %vm5322, %v7625, %v7624
        %v7627 = vrot.slane %v4989, 4
        %v7628 = vsel %vm5325, %v7627, %v7626
        %v7629 = vrot.slane %v5004, 3
        %v7630 = vsel %vm5328, %v7629, %v7628
        %v7631 = vrot.slane %v5019, 2
        %v7632 = vrot.slane %v5034, 1
        %v7633 = vsel %vm5310, %v7632, %v7631
        %v7634 = vsel %vm5313, %v5049, %v7633
        %v7635 = vrot.slane %v5064, 7
        %v7636 = vsel %vm5316, %v7635, %v7634
        %v7637 = vrot.slane %v5079, 6
        %v7638 = vsel %vm5319, %v7637, %v7636
        %v7639 = vrot.slane %v5094, 5
        %v7640 = vsel %vm5322, %v7639, %v7638
        %v7641 = vrot.slane %v5109, 4
        %v7642 = vsel %vm5325, %v7641, %v7640
        %v7643 = vrot.slane %v5124, 3
        %v7644 = vsel %vm5328, %v7643, %v7642
        %v7645 = vrot.slane %v5139, 2
        %v7646 = vrot.slane %v5154, 1
        %v7647 = vsel %vm5310, %v7646, %v7645
        %v7648 = vsel %vm5313, %v5169, %v7647
        %v7649 = vrot.slane %v5184, 7
        %v7650 = vsel %vm5316, %v7649, %v7648
        %v7651 = vrot.slane %v5199, 6
        %v7652 = vsel %vm5319, %v7651, %v7650
        %v7653 = vrot.slane %v5214, 5
        %v7654 = vsel %vm5322, %v7653, %v7652
        %v7655 = vrot.slane %v5229, 4
        %v7656 = vsel %vm5325, %v7655, %v7654
        %v7657 = vrot.slane %v5244, 3
        %v7658 = vsel %vm5328, %v7657, %v7656
        %7659 = vrot.lane.b32.xlu0 %v7560, 96
        %v7660 = vpop.permute.xlu0 %7659
        %7661 = vrot.lane.b32.xlu0 %v7574, 96
        %v7662 = vpop.permute.xlu0 %7661
        %7663 = vrot.lane.b32.xlu0 %v7588, 96
        %v7664 = vpop.permute.xlu0 %7663
        %7665 = vrot.lane.b32.xlu0 %v7602, 96
        %v7666 = vpop.permute.xlu0 %7665
        %7667 = vrot.lane.b32.xlu0 %v7616, 96
        %v7668 = vpop.permute.xlu0 %7667
        %7669 = vrot.lane.b32.xlu0 %v7630, 96
        %v7670 = vpop.permute.xlu0 %7669
        %7671 = vrot.lane.b32.xlu0 %v7644, 96
        %v7672 = vpop.permute.xlu0 %7671
        %7673 = vrot.lane.b32.xlu0 %v7658, 96
        %v7674 = vpop.permute.xlu0 %7673
        %v7683 = vmul.f32 %v7510, %v7660
        %v7684 = vmul.f32 %v7515, %v7662
        %v7685 = vmul.f32 %v7520, %v7664
        %v7686 = vmul.f32 %v7525, %v7666
        %v7687 = vmul.f32 %v7530, %v7668
        %v7688 = vmul.f32 %v7535, %v7670
        %v7689 = vmul.f32 %v7540, %v7672
        %v7690 = vmul.f32 %v7545, %v7674
        %v7691 = vadd.f32 %v7323, %v7683
        %v7692 = vadd.f32 %v7324, %v7684
        %v7693 = vadd.f32 %v7325, %v7685
        %v7694 = vadd.f32 %v7326, %v7686
        %v7695 = vadd.f32 %v7327, %v7687
        %v7696 = vadd.f32 %v7328, %v7688
        %v7697 = vadd.f32 %v7329, %v7689
        %v7698 = vadd.f32 %v7330, %v7690
        %v7707 = vmul.f32 %v7510, %v5601
        %v7708 = vmul.f32 %v7515, %v5615
        %v7709 = vmul.f32 %v7520, %v5629
        %v7710 = vmul.f32 %v7525, %v5643
        %v7711 = vmul.f32 %v7530, %v5657
        %v7712 = vmul.f32 %v7535, %v5671
        %v7713 = vmul.f32 %v7540, %v5685
        %v7714 = vmul.f32 %v7545, %v5699
        %v7715 = vadd.f32 %v7347, %v7707
        %v7716 = vadd.f32 %v7348, %v7708
        %v7717 = vadd.f32 %v7349, %v7709
        %v7718 = vadd.f32 %v7350, %v7710
        %v7719 = vadd.f32 %v7351, %v7711
        %v7720 = vadd.f32 %v7352, %v7712
        %v7721 = vadd.f32 %v7353, %v7713
        %v7722 = vadd.f32 %v7354, %v7714
        %7723 = vrot.lane.b32.xlu0 %v7467, 126
        %v7724 = vpop.permute.xlu0 %7723
        %7725 = vrot.lane.b32.xlu0 %v7468, 126
        %v7726 = vpop.permute.xlu0 %7725
        %7727 = vrot.lane.b32.xlu0 %v7469, 126
        %v7728 = vpop.permute.xlu0 %7727
        %7729 = vrot.lane.b32.xlu0 %v7470, 126
        %v7730 = vpop.permute.xlu0 %7729
        %7731 = vrot.lane.b32.xlu0 %v7471, 126
        %v7732 = vpop.permute.xlu0 %7731
        %7733 = vrot.lane.b32.xlu0 %v7472, 126
        %v7734 = vpop.permute.xlu0 %7733
        %7735 = vrot.lane.b32.xlu0 %v7473, 126
        %v7736 = vpop.permute.xlu0 %7735
        %7737 = vrot.lane.b32.xlu0 %v7474, 126
        %v7738 = vpop.permute.xlu0 %7737
        %v7747 = vadd.f32 %v7379, %v7724
        %v7748 = vadd.f32 %v7380, %v7726
        %v7749 = vadd.f32 %v7381, %v7728
        %v7750 = vadd.f32 %v7382, %v7730
        %v7751 = vadd.f32 %v7383, %v7732
        %v7752 = vadd.f32 %v7384, %v7734
        %v7753 = vadd.f32 %v7385, %v7736
        %v7754 = vadd.f32 %v7386, %v7738
        %v7755 = vmul.f32 %v7467, %v7028
        %v7756 = vmul.f32 %v7468, %v7030
        %v7757 = vmul.f32 %v7469, %v7032
        %v7758 = vmul.f32 %v7470, %v7034
        %v7759 = vmul.f32 %v7471, %v7036
        %v7760 = vmul.f32 %v7472, %v7038
        %v7761 = vmul.f32 %v7473, %v7040
        %v7762 = vmul.f32 %v7474, %v7042
        %7771 = vrot.lane.b32.xlu0 %v7755, 126
        %v7772 = vpop.permute.xlu0 %7771
        %7773 = vrot.lane.b32.xlu0 %v7756, 126
        %v7774 = vpop.permute.xlu0 %7773
        %7775 = vrot.lane.b32.xlu0 %v7757, 126
        %v7776 = vpop.permute.xlu0 %7775
        %7777 = vrot.lane.b32.xlu0 %v7758, 126
        %v7778 = vpop.permute.xlu0 %7777
        %7779 = vrot.lane.b32.xlu0 %v7759, 126
        %v7780 = vpop.permute.xlu0 %7779
        %7781 = vrot.lane.b32.xlu0 %v7760, 126
        %v7782 = vpop.permute.xlu0 %7781
        %7783 = vrot.lane.b32.xlu0 %v7761, 126
        %v7784 = vpop.permute.xlu0 %7783
        %7785 = vrot.lane.b32.xlu0 %v7762, 126
        %v7786 = vpop.permute.xlu0 %7785
        %v7795 = vadd.f32 %v7427, %v7772
        %v7796 = vadd.f32 %v7428, %v7774
        %v7797 = vadd.f32 %v7429, %v7776
        %v7798 = vadd.f32 %v7430, %v7778
        %v7799 = vadd.f32 %v7431, %v7780
        %v7800 = vadd.f32 %v7432, %v7782
        %v7801 = vadd.f32 %v7433, %v7784
        %v7802 = vadd.f32 %v7434, %v7786
        %7811 = vrot.lane.b32.xlu0 %v7499, 3
        %v7812 = vpop.permute.xlu0 %7811
        %7813 = vrot.lane.b32.xlu0 %v7500, 3
        %v7814 = vpop.permute.xlu0 %7813
        %7815 = vrot.lane.b32.xlu0 %v7501, 3
        %v7816 = vpop.permute.xlu0 %7815
        %7817 = vrot.lane.b32.xlu0 %v7502, 3
        %v7818 = vpop.permute.xlu0 %7817
        %7819 = vrot.lane.b32.xlu0 %v7503, 3
        %v7820 = vpop.permute.xlu0 %7819
        %7821 = vrot.lane.b32.xlu0 %v7504, 3
        %v7822 = vpop.permute.xlu0 %7821
        %7823 = vrot.lane.b32.xlu0 %v7505, 3
        %v7824 = vpop.permute.xlu0 %7823
        %7825 = vrot.lane.b32.xlu0 %v7506, 3
        %v7826 = vpop.permute.xlu0 %7825
        %v7835 = vmul.f32 %v6715, %v7812
        %v7836 = vmul.f32 %v6716, %v7814
        %v7837 = vmul.f32 %v6717, %v7816
        %v7838 = vmul.f32 %v6718, %v7818
        %v7839 = vmul.f32 %v6719, %v7820
        %v7840 = vmul.f32 %v6720, %v7822
        %v7841 = vmul.f32 %v6721, %v7824
        %v7842 = vmul.f32 %v6722, %v7826
        %7843 = vrot.lane.b32.xlu0 %v6731, 125
        %v7844 = vpop.permute.xlu0 %7843
        %7845 = vrot.lane.b32.xlu0 %v6732, 125
        %v7846 = vpop.permute.xlu0 %7845
        %7847 = vrot.lane.b32.xlu0 %v6733, 125
        %v7848 = vpop.permute.xlu0 %7847
        %7849 = vrot.lane.b32.xlu0 %v6734, 125
        %v7850 = vpop.permute.xlu0 %7849
        %7851 = vrot.lane.b32.xlu0 %v6735, 125
        %v7852 = vpop.permute.xlu0 %7851
        %7853 = vrot.lane.b32.xlu0 %v6736, 125
        %v7854 = vpop.permute.xlu0 %7853
        %7855 = vrot.lane.b32.xlu0 %v6737, 125
        %v7856 = vpop.permute.xlu0 %7855
        %7857 = vrot.lane.b32.xlu0 %v6738, 125
        %v7858 = vpop.permute.xlu0 %7857
        %v7867 = vmul.f32 %v7499, %v7844
        %v7868 = vmul.f32 %v7500, %v7846
        %v7869 = vmul.f32 %v7501, %v7848
        %v7870 = vmul.f32 %v7502, %v7850
        %v7871 = vmul.f32 %v7503, %v7852
        %v7872 = vmul.f32 %v7504, %v7854
        %v7873 = vmul.f32 %v7505, %v7856
        %v7874 = vmul.f32 %v7506, %v7858
        %7876 = vset.pattern.permute.xlu0 3
        %7877 = vperm.xlu0 %7876, %v7835
        %v7878 = vpop.permute.xlu0 %7877
        %7881 = vset.pattern.permute.xlu0 3
        %7882 = vperm.xlu0 %7881, %v7836
        %v7883 = vpop.permute.xlu0 %7882
        %7886 = vset.pattern.permute.xlu0 3
        %7887 = vperm.xlu0 %7886, %v7837
        %v7888 = vpop.permute.xlu0 %7887
        %7891 = vset.pattern.permute.xlu0 3
        %7892 = vperm.xlu0 %7891, %v7838
        %v7893 = vpop.permute.xlu0 %7892
        %7896 = vset.pattern.permute.xlu0 3
        %7897 = vperm.xlu0 %7896, %v7839
        %v7898 = vpop.permute.xlu0 %7897
        %7901 = vset.pattern.permute.xlu0 3
        %7902 = vperm.xlu0 %7901, %v7840
        %v7903 = vpop.permute.xlu0 %7902
        %7906 = vset.pattern.permute.xlu0 3
        %7907 = vperm.xlu0 %7906, %v7841
        %v7908 = vpop.permute.xlu0 %7907
        %7911 = vset.pattern.permute.xlu0 3
        %7912 = vperm.xlu0 %7911, %v7842
        %v7913 = vpop.permute.xlu0 %7912
        %v7915 = vrot.slane %v4299, 3
        %v7916 = vrot.slane %v4314, 2
        %v7917 = vsel %vm5310, %v7916, %v7915
        %v7918 = vrot.slane %v4329, 1
        %v7919 = vsel %vm5313, %v7918, %v7917
        %v7920 = vsel %vm5316, %v4344, %v7919
        %v7921 = vrot.slane %v4359, 7
        %v7922 = vsel %vm5319, %v7921, %v7920
        %v7923 = vrot.slane %v4374, 6
        %v7924 = vsel %vm5322, %v7923, %v7922
        %v7925 = vrot.slane %v4389, 5
        %v7926 = vsel %vm5325, %v7925, %v7924
        %v7927 = vrot.slane %v4404, 4
        %v7928 = vsel %vm5328, %v7927, %v7926
        %v7929 = vrot.slane %v4419, 3
        %v7930 = vrot.slane %v4434, 2
        %v7931 = vsel %vm5310, %v7930, %v7929
        %v7932 = vrot.slane %v4449, 1
        %v7933 = vsel %vm5313, %v7932, %v7931
        %v7934 = vsel %vm5316, %v4464, %v7933
        %v7935 = vrot.slane %v4479, 7
        %v7936 = vsel %vm5319, %v7935, %v7934
        %v7937 = vrot.slane %v4494, 6
        %v7938 = vsel %vm5322, %v7937, %v7936
        %v7939 = vrot.slane %v4509, 5
        %v7940 = vsel %vm5325, %v7939, %v7938
        %v7941 = vrot.slane %v4524, 4
        %v7942 = vsel %vm5328, %v7941, %v7940
        %v7943 = vrot.slane %v4539, 3
        %v7944 = vrot.slane %v4554, 2
        %v7945 = vsel %vm5310, %v7944, %v7943
        %v7946 = vrot.slane %v4569, 1
        %v7947 = vsel %vm5313, %v7946, %v7945
        %v7948 = vsel %vm5316, %v4584, %v7947
        %v7949 = vrot.slane %v4599, 7
        %v7950 = vsel %vm5319, %v7949, %v7948
        %v7951 = vrot.slane %v4614, 6
        %v7952 = vsel %vm5322, %v7951, %v7950
        %v7953 = vrot.slane %v4629, 5
        %v7954 = vsel %vm5325, %v7953, %v7952
        %v7955 = vrot.slane %v4644, 4
        %v7956 = vsel %vm5328, %v7955, %v7954
        %v7957 = vrot.slane %v4659, 3
        %v7958 = vrot.slane %v4674, 2
        %v7959 = vsel %vm5310, %v7958, %v7957
        %v7960 = vrot.slane %v4689, 1
        %v7961 = vsel %vm5313, %v7960, %v7959
        %v7962 = vsel %vm5316, %v4704, %v7961
        %v7963 = vrot.slane %v4719, 7
        %v7964 = vsel %vm5319, %v7963, %v7962
        %v7965 = vrot.slane %v4734, 6
        %v7966 = vsel %vm5322, %v7965, %v7964
        %v7967 = vrot.slane %v4749, 5
        %v7968 = vsel %vm5325, %v7967, %v7966
        %v7969 = vrot.slane %v4764, 4
        %v7970 = vsel %vm5328, %v7969, %v7968
        %v7971 = vrot.slane %v4779, 3
        %v7972 = vrot.slane %v4794, 2
        %v7973 = vsel %vm5310, %v7972, %v7971
        %v7974 = vrot.slane %v4809, 1
        %v7975 = vsel %vm5313, %v7974, %v7973
        %v7976 = vsel %vm5316, %v4824, %v7975
        %v7977 = vrot.slane %v4839, 7
        %v7978 = vsel %vm5319, %v7977, %v7976
        %v7979 = vrot.slane %v4854, 6
        %v7980 = vsel %vm5322, %v7979, %v7978
        %v7981 = vrot.slane %v4869, 5
        %v7982 = vsel %vm5325, %v7981, %v7980
        %v7983 = vrot.slane %v4884, 4
        %v7984 = vsel %vm5328, %v7983, %v7982
        %v7985 = vrot.slane %v4899, 3
        %v7986 = vrot.slane %v4914, 2
        %v7987 = vsel %vm5310, %v7986, %v7985
        %v7988 = vrot.slane %v4929, 1
        %v7989 = vsel %vm5313, %v7988, %v7987
        %v7990 = vsel %vm5316, %v4944, %v7989
        %v7991 = vrot.slane %v4959, 7
        %v7992 = vsel %vm5319, %v7991, %v7990
        %v7993 = vrot.slane %v4974, 6
        %v7994 = vsel %vm5322, %v7993, %v7992
        %v7995 = vrot.slane %v4989, 5
        %v7996 = vsel %vm5325, %v7995, %v7994
        %v7997 = vrot.slane %v5004, 4
        %v7998 = vsel %vm5328, %v7997, %v7996
        %v7999 = vrot.slane %v5019, 3
        %v8000 = vrot.slane %v5034, 2
        %v8001 = vsel %vm5310, %v8000, %v7999
        %v8002 = vrot.slane %v5049, 1
        %v8003 = vsel %vm5313, %v8002, %v8001
        %v8004 = vsel %vm5316, %v5064, %v8003
        %v8005 = vrot.slane %v5079, 7
        %v8006 = vsel %vm5319, %v8005, %v8004
        %v8007 = vrot.slane %v5094, 6
        %v8008 = vsel %vm5322, %v8007, %v8006
        %v8009 = vrot.slane %v5109, 5
        %v8010 = vsel %vm5325, %v8009, %v8008
        %v8011 = vrot.slane %v5124, 4
        %v8012 = vsel %vm5328, %v8011, %v8010
        %v8013 = vrot.slane %v5139, 3
        %v8014 = vrot.slane %v5154, 2
        %v8015 = vsel %vm5310, %v8014, %v8013
        %v8016 = vrot.slane %v5169, 1
        %v8017 = vsel %vm5313, %v8016, %v8015
        %v8018 = vsel %vm5316, %v5184, %v8017
        %v8019 = vrot.slane %v5199, 7
        %v8020 = vsel %vm5319, %v8019, %v8018
        %v8021 = vrot.slane %v5214, 6
        %v8022 = vsel %vm5322, %v8021, %v8020
        %v8023 = vrot.slane %v5229, 5
        %v8024 = vsel %vm5325, %v8023, %v8022
        %v8025 = vrot.slane %v5244, 4
        %v8026 = vsel %vm5328, %v8025, %v8024
        %8027 = vrot.lane.b32.xlu0 %v7928, 96
        %v8028 = vpop.permute.xlu0 %8027
        %8029 = vrot.lane.b32.xlu0 %v7942, 96
        %v8030 = vpop.permute.xlu0 %8029
        %8031 = vrot.lane.b32.xlu0 %v7956, 96
        %v8032 = vpop.permute.xlu0 %8031
        %8033 = vrot.lane.b32.xlu0 %v7970, 96
        %v8034 = vpop.permute.xlu0 %8033
        %8035 = vrot.lane.b32.xlu0 %v7984, 96
        %v8036 = vpop.permute.xlu0 %8035
        %8037 = vrot.lane.b32.xlu0 %v7998, 96
        %v8038 = vpop.permute.xlu0 %8037
        %8039 = vrot.lane.b32.xlu0 %v8012, 96
        %v8040 = vpop.permute.xlu0 %8039
        %8041 = vrot.lane.b32.xlu0 %v8026, 96
        %v8042 = vpop.permute.xlu0 %8041
        %v8051 = vmul.f32 %v7878, %v8028
        %v8052 = vmul.f32 %v7883, %v8030
        %v8053 = vmul.f32 %v7888, %v8032
        %v8054 = vmul.f32 %v7893, %v8034
        %v8055 = vmul.f32 %v7898, %v8036
        %v8056 = vmul.f32 %v7903, %v8038
        %v8057 = vmul.f32 %v7908, %v8040
        %v8058 = vmul.f32 %v7913, %v8042
        %v8059 = vadd.f32 %v7691, %v8051
        %v8060 = vadd.f32 %v7692, %v8052
        %v8061 = vadd.f32 %v7693, %v8053
        %v8062 = vadd.f32 %v7694, %v8054
        %v8063 = vadd.f32 %v7695, %v8055
        %v8064 = vadd.f32 %v7696, %v8056
        %v8065 = vadd.f32 %v7697, %v8057
        %v8066 = vadd.f32 %v7698, %v8058
        %v8075 = vmul.f32 %v7878, %v5737
        %v8076 = vmul.f32 %v7883, %v5751
        %v8077 = vmul.f32 %v7888, %v5765
        %v8078 = vmul.f32 %v7893, %v5779
        %v8079 = vmul.f32 %v7898, %v5793
        %v8080 = vmul.f32 %v7903, %v5807
        %v8081 = vmul.f32 %v7908, %v5821
        %v8082 = vmul.f32 %v7913, %v5835
        %v8083 = vadd.f32 %v7715, %v8075
        %v8084 = vadd.f32 %v7716, %v8076
        %v8085 = vadd.f32 %v7717, %v8077
        %v8086 = vadd.f32 %v7718, %v8078
        %v8087 = vadd.f32 %v7719, %v8079
        %v8088 = vadd.f32 %v7720, %v8080
        %v8089 = vadd.f32 %v7721, %v8081
        %v8090 = vadd.f32 %v7722, %v8082
        %8091 = vrot.lane.b32.xlu0 %v7835, 125
        %v8092 = vpop.permute.xlu0 %8091
        %8093 = vrot.lane.b32.xlu0 %v7836, 125
        %v8094 = vpop.permute.xlu0 %8093
        %8095 = vrot.lane.b32.xlu0 %v7837, 125
        %v8096 = vpop.permute.xlu0 %8095
        %8097 = vrot.lane.b32.xlu0 %v7838, 125
        %v8098 = vpop.permute.xlu0 %8097
        %8099 = vrot.lane.b32.xlu0 %v7839, 125
        %v8100 = vpop.permute.xlu0 %8099
        %8101 = vrot.lane.b32.xlu0 %v7840, 125
        %v8102 = vpop.permute.xlu0 %8101
        %8103 = vrot.lane.b32.xlu0 %v7841, 125
        %v8104 = vpop.permute.xlu0 %8103
        %8105 = vrot.lane.b32.xlu0 %v7842, 125
        %v8106 = vpop.permute.xlu0 %8105
        %v8115 = vadd.f32 %v7747, %v8092
        %v8116 = vadd.f32 %v7748, %v8094
        %v8117 = vadd.f32 %v7749, %v8096
        %v8118 = vadd.f32 %v7750, %v8098
        %v8119 = vadd.f32 %v7751, %v8100
        %v8120 = vadd.f32 %v7752, %v8102
        %v8121 = vadd.f32 %v7753, %v8104
        %v8122 = vadd.f32 %v7754, %v8106
        %v8123 = vmul.f32 %v7835, %v7028
        %v8124 = vmul.f32 %v7836, %v7030
        %v8125 = vmul.f32 %v7837, %v7032
        %v8126 = vmul.f32 %v7838, %v7034
        %v8127 = vmul.f32 %v7839, %v7036
        %v8128 = vmul.f32 %v7840, %v7038
        %v8129 = vmul.f32 %v7841, %v7040
        %v8130 = vmul.f32 %v7842, %v7042
        %8139 = vrot.lane.b32.xlu0 %v8123, 125
        %v8140 = vpop.permute.xlu0 %8139
        %8141 = vrot.lane.b32.xlu0 %v8124, 125
        %v8142 = vpop.permute.xlu0 %8141
        %8143 = vrot.lane.b32.xlu0 %v8125, 125
        %v8144 = vpop.permute.xlu0 %8143
        %8145 = vrot.lane.b32.xlu0 %v8126, 125
        %v8146 = vpop.permute.xlu0 %8145
        %8147 = vrot.lane.b32.xlu0 %v8127, 125
        %v8148 = vpop.permute.xlu0 %8147
        %8149 = vrot.lane.b32.xlu0 %v8128, 125
        %v8150 = vpop.permute.xlu0 %8149
        %8151 = vrot.lane.b32.xlu0 %v8129, 125
        %v8152 = vpop.permute.xlu0 %8151
        %8153 = vrot.lane.b32.xlu0 %v8130, 125
        %v8154 = vpop.permute.xlu0 %8153
        %v8163 = vadd.f32 %v7795, %v8140
        %v8164 = vadd.f32 %v7796, %v8142
        %v8165 = vadd.f32 %v7797, %v8144
        %v8166 = vadd.f32 %v7798, %v8146
        %v8167 = vadd.f32 %v7799, %v8148
        %v8168 = vadd.f32 %v7800, %v8150
        %v8169 = vadd.f32 %v7801, %v8152
        %v8170 = vadd.f32 %v7802, %v8154
        %8179 = vrot.lane.b32.xlu0 %v7867, 4
        %v8180 = vpop.permute.xlu0 %8179
        %8181 = vrot.lane.b32.xlu0 %v7868, 4
        %v8182 = vpop.permute.xlu0 %8181
        %8183 = vrot.lane.b32.xlu0 %v7869, 4
        %v8184 = vpop.permute.xlu0 %8183
        %8185 = vrot.lane.b32.xlu0 %v7870, 4
        %v8186 = vpop.permute.xlu0 %8185
        %8187 = vrot.lane.b32.xlu0 %v7871, 4
        %v8188 = vpop.permute.xlu0 %8187
        %8189 = vrot.lane.b32.xlu0 %v7872, 4
        %v8190 = vpop.permute.xlu0 %8189
        %8191 = vrot.lane.b32.xlu0 %v7873, 4
        %v8192 = vpop.permute.xlu0 %8191
        %8193 = vrot.lane.b32.xlu0 %v7874, 4
        %v8194 = vpop.permute.xlu0 %8193
        %v8203 = vmul.f32 %v6715, %v8180
        %v8204 = vmul.f32 %v6716, %v8182
        %v8205 = vmul.f32 %v6717, %v8184
        %v8206 = vmul.f32 %v6718, %v8186
        %v8207 = vmul.f32 %v6719, %v8188
        %v8208 = vmul.f32 %v6720, %v8190
        %v8209 = vmul.f32 %v6721, %v8192
        %v8210 = vmul.f32 %v6722, %v8194
        %8211 = vrot.lane.b32.xlu0 %v6731, 124
        %v8212 = vpop.permute.xlu0 %8211
        %8213 = vrot.lane.b32.xlu0 %v6732, 124
        %v8214 = vpop.permute.xlu0 %8213
        %8215 = vrot.lane.b32.xlu0 %v6733, 124
        %v8216 = vpop.permute.xlu0 %8215
        %8217 = vrot.lane.b32.xlu0 %v6734, 124
        %v8218 = vpop.permute.xlu0 %8217
        %8219 = vrot.lane.b32.xlu0 %v6735, 124
        %v8220 = vpop.permute.xlu0 %8219
        %8221 = vrot.lane.b32.xlu0 %v6736, 124
        %v8222 = vpop.permute.xlu0 %8221
        %8223 = vrot.lane.b32.xlu0 %v6737, 124
        %v8224 = vpop.permute.xlu0 %8223
        %8225 = vrot.lane.b32.xlu0 %v6738, 124
        %v8226 = vpop.permute.xlu0 %8225
        %v8235 = vmul.f32 %v7867, %v8212
        %v8236 = vmul.f32 %v7868, %v8214
        %v8237 = vmul.f32 %v7869, %v8216
        %v8238 = vmul.f32 %v7870, %v8218
        %v8239 = vmul.f32 %v7871, %v8220
        %v8240 = vmul.f32 %v7872, %v8222
        %v8241 = vmul.f32 %v7873, %v8224
        %v8242 = vmul.f32 %v7874, %v8226
        %8244 = vset.pattern.permute.xlu0 4
        %8245 = vperm.xlu0 %8244, %v8203
        %v8246 = vpop.permute.xlu0 %8245
        %8249 = vset.pattern.permute.xlu0 4
        %8250 = vperm.xlu0 %8249, %v8204
        %v8251 = vpop.permute.xlu0 %8250
        %8254 = vset.pattern.permute.xlu0 4
        %8255 = vperm.xlu0 %8254, %v8205
        %v8256 = vpop.permute.xlu0 %8255
        %8259 = vset.pattern.permute.xlu0 4
        %8260 = vperm.xlu0 %8259, %v8206
        %v8261 = vpop.permute.xlu0 %8260
        %8264 = vset.pattern.permute.xlu0 4
        %8265 = vperm.xlu0 %8264, %v8207
        %v8266 = vpop.permute.xlu0 %8265
        %8269 = vset.pattern.permute.xlu0 4
        %8270 = vperm.xlu0 %8269, %v8208
        %v8271 = vpop.permute.xlu0 %8270
        %8274 = vset.pattern.permute.xlu0 4
        %8275 = vperm.xlu0 %8274, %v8209
        %v8276 = vpop.permute.xlu0 %8275
        %8279 = vset.pattern.permute.xlu0 4
        %8280 = vperm.xlu0 %8279, %v8210
        %v8281 = vpop.permute.xlu0 %8280
        %v8283 = vrot.slane %v4299, 4
        %v8284 = vrot.slane %v4314, 3
        %v8285 = vsel %vm5310, %v8284, %v8283
        %v8286 = vrot.slane %v4329, 2
        %v8287 = vsel %vm5313, %v8286, %v8285
        %v8288 = vrot.slane %v4344, 1
        %v8289 = vsel %vm5316, %v8288, %v8287
        %v8290 = vsel %vm5319, %v4359, %v8289
        %v8291 = vrot.slane %v4374, 7
        %v8292 = vsel %vm5322, %v8291, %v8290
        %v8293 = vrot.slane %v4389, 6
        %v8294 = vsel %vm5325, %v8293, %v8292
        %v8295 = vrot.slane %v4404, 5
        %v8296 = vsel %vm5328, %v8295, %v8294
        %v8297 = vrot.slane %v4419, 4
        %v8298 = vrot.slane %v4434, 3
        %v8299 = vsel %vm5310, %v8298, %v8297
        %v8300 = vrot.slane %v4449, 2
        %v8301 = vsel %vm5313, %v8300, %v8299
        %v8302 = vrot.slane %v4464, 1
        %v8303 = vsel %vm5316, %v8302, %v8301
        %v8304 = vsel %vm5319, %v4479, %v8303
        %v8305 = vrot.slane %v4494, 7
        %v8306 = vsel %vm5322, %v8305, %v8304
        %v8307 = vrot.slane %v4509, 6
        %v8308 = vsel %vm5325, %v8307, %v8306
        %v8309 = vrot.slane %v4524, 5
        %v8310 = vsel %vm5328, %v8309, %v8308
        %v8311 = vrot.slane %v4539, 4
        %v8312 = vrot.slane %v4554, 3
        %v8313 = vsel %vm5310, %v8312, %v8311
        %v8314 = vrot.slane %v4569, 2
        %v8315 = vsel %vm5313, %v8314, %v8313
        %v8316 = vrot.slane %v4584, 1
        %v8317 = vsel %vm5316, %v8316, %v8315
        %v8318 = vsel %vm5319, %v4599, %v8317
        %v8319 = vrot.slane %v4614, 7
        %v8320 = vsel %vm5322, %v8319, %v8318
        %v8321 = vrot.slane %v4629, 6
        %v8322 = vsel %vm5325, %v8321, %v8320
        %v8323 = vrot.slane %v4644, 5
        %v8324 = vsel %vm5328, %v8323, %v8322
        %v8325 = vrot.slane %v4659, 4
        %v8326 = vrot.slane %v4674, 3
        %v8327 = vsel %vm5310, %v8326, %v8325
        %v8328 = vrot.slane %v4689, 2
        %v8329 = vsel %vm5313, %v8328, %v8327
        %v8330 = vrot.slane %v4704, 1
        %v8331 = vsel %vm5316, %v8330, %v8329
        %v8332 = vsel %vm5319, %v4719, %v8331
        %v8333 = vrot.slane %v4734, 7
        %v8334 = vsel %vm5322, %v8333, %v8332
        %v8335 = vrot.slane %v4749, 6
        %v8336 = vsel %vm5325, %v8335, %v8334
        %v8337 = vrot.slane %v4764, 5
        %v8338 = vsel %vm5328, %v8337, %v8336
        %v8339 = vrot.slane %v4779, 4
        %v8340 = vrot.slane %v4794, 3
        %v8341 = vsel %vm5310, %v8340, %v8339
        %v8342 = vrot.slane %v4809, 2
        %v8343 = vsel %vm5313, %v8342, %v8341
        %v8344 = vrot.slane %v4824, 1
        %v8345 = vsel %vm5316, %v8344, %v8343
        %v8346 = vsel %vm5319, %v4839, %v8345
        %v8347 = vrot.slane %v4854, 7
        %v8348 = vsel %vm5322, %v8347, %v8346
        %v8349 = vrot.slane %v4869, 6
        %v8350 = vsel %vm5325, %v8349, %v8348
        %v8351 = vrot.slane %v4884, 5
        %v8352 = vsel %vm5328, %v8351, %v8350
        %v8353 = vrot.slane %v4899, 4
        %v8354 = vrot.slane %v4914, 3
        %v8355 = vsel %vm5310, %v8354, %v8353
        %v8356 = vrot.slane %v4929, 2
        %v8357 = vsel %vm5313, %v8356, %v8355
        %v8358 = vrot.slane %v4944, 1
        %v8359 = vsel %vm5316, %v8358, %v8357
        %v8360 = vsel %vm5319, %v4959, %v8359
        %v8361 = vrot.slane %v4974, 7
        %v8362 = vsel %vm5322, %v8361, %v8360
        %v8363 = vrot.slane %v4989, 6
        %v8364 = vsel %vm5325, %v8363, %v8362
        %v8365 = vrot.slane %v5004, 5
        %v8366 = vsel %vm5328, %v8365, %v8364
        %v8367 = vrot.slane %v5019, 4
        %v8368 = vrot.slane %v5034, 3
        %v8369 = vsel %vm5310, %v8368, %v8367
        %v8370 = vrot.slane %v5049, 2
        %v8371 = vsel %vm5313, %v8370, %v8369
        %v8372 = vrot.slane %v5064, 1
        %v8373 = vsel %vm5316, %v8372, %v8371
        %v8374 = vsel %vm5319, %v5079, %v8373
        %v8375 = vrot.slane %v5094, 7
        %v8376 = vsel %vm5322, %v8375, %v8374
        %v8377 = vrot.slane %v5109, 6
        %v8378 = vsel %vm5325, %v8377, %v8376
        %v8379 = vrot.slane %v5124, 5
        %v8380 = vsel %vm5328, %v8379, %v8378
        %v8381 = vrot.slane %v5139, 4
        %v8382 = vrot.slane %v5154, 3
        %v8383 = vsel %vm5310, %v8382, %v8381
        %v8384 = vrot.slane %v5169, 2
        %v8385 = vsel %vm5313, %v8384, %v8383
        %v8386 = vrot.slane %v5184, 1
        %v8387 = vsel %vm5316, %v8386, %v8385
        %v8388 = vsel %vm5319, %v5199, %v8387
        %v8389 = vrot.slane %v5214, 7
        %v8390 = vsel %vm5322, %v8389, %v8388
        %v8391 = vrot.slane %v5229, 6
        %v8392 = vsel %vm5325, %v8391, %v8390
        %v8393 = vrot.slane %v5244, 5
        %v8394 = vsel %vm5328, %v8393, %v8392
        %8395 = vrot.lane.b32.xlu0 %v8296, 96
        %v8396 = vpop.permute.xlu0 %8395
        %8397 = vrot.lane.b32.xlu0 %v8310, 96
        %v8398 = vpop.permute.xlu0 %8397
        %8399 = vrot.lane.b32.xlu0 %v8324, 96
        %v8400 = vpop.permute.xlu0 %8399
        %8401 = vrot.lane.b32.xlu0 %v8338, 96
        %v8402 = vpop.permute.xlu0 %8401
        %8403 = vrot.lane.b32.xlu0 %v8352, 96
        %v8404 = vpop.permute.xlu0 %8403
        %8405 = vrot.lane.b32.xlu0 %v8366, 96
        %v8406 = vpop.permute.xlu0 %8405
        %8407 = vrot.lane.b32.xlu0 %v8380, 96
        %v8408 = vpop.permute.xlu0 %8407
        %8409 = vrot.lane.b32.xlu0 %v8394, 96
        %v8410 = vpop.permute.xlu0 %8409
        %v8419 = vmul.f32 %v8246, %v8396
        %v8420 = vmul.f32 %v8251, %v8398
        %v8421 = vmul.f32 %v8256, %v8400
        %v8422 = vmul.f32 %v8261, %v8402
        %v8423 = vmul.f32 %v8266, %v8404
        %v8424 = vmul.f32 %v8271, %v8406
        %v8425 = vmul.f32 %v8276, %v8408
        %v8426 = vmul.f32 %v8281, %v8410
        %v8427 = vadd.f32 %v8059, %v8419
        %v8428 = vadd.f32 %v8060, %v8420
        %v8429 = vadd.f32 %v8061, %v8421
        %v8430 = vadd.f32 %v8062, %v8422
        %v8431 = vadd.f32 %v8063, %v8423
        %v8432 = vadd.f32 %v8064, %v8424
        %v8433 = vadd.f32 %v8065, %v8425
        %v8434 = vadd.f32 %v8066, %v8426
        %v8443 = vmul.f32 %v8246, %v5873
        %v8444 = vmul.f32 %v8251, %v5887
        %v8445 = vmul.f32 %v8256, %v5901
        %v8446 = vmul.f32 %v8261, %v5915
        %v8447 = vmul.f32 %v8266, %v5929
        %v8448 = vmul.f32 %v8271, %v5943
        %v8449 = vmul.f32 %v8276, %v5957
        %v8450 = vmul.f32 %v8281, %v5971
        %v8451 = vadd.f32 %v8083, %v8443
        %v8452 = vadd.f32 %v8084, %v8444
        %v8453 = vadd.f32 %v8085, %v8445
        %v8454 = vadd.f32 %v8086, %v8446
        %v8455 = vadd.f32 %v8087, %v8447
        %v8456 = vadd.f32 %v8088, %v8448
        %v8457 = vadd.f32 %v8089, %v8449
        %v8458 = vadd.f32 %v8090, %v8450
        %8459 = vrot.lane.b32.xlu0 %v8203, 124
        %v8460 = vpop.permute.xlu0 %8459
        %8461 = vrot.lane.b32.xlu0 %v8204, 124
        %v8462 = vpop.permute.xlu0 %8461
        %8463 = vrot.lane.b32.xlu0 %v8205, 124
        %v8464 = vpop.permute.xlu0 %8463
        %8465 = vrot.lane.b32.xlu0 %v8206, 124
        %v8466 = vpop.permute.xlu0 %8465
        %8467 = vrot.lane.b32.xlu0 %v8207, 124
        %v8468 = vpop.permute.xlu0 %8467
        %8469 = vrot.lane.b32.xlu0 %v8208, 124
        %v8470 = vpop.permute.xlu0 %8469
        %8471 = vrot.lane.b32.xlu0 %v8209, 124
        %v8472 = vpop.permute.xlu0 %8471
        %8473 = vrot.lane.b32.xlu0 %v8210, 124
        %v8474 = vpop.permute.xlu0 %8473
        %v8483 = vadd.f32 %v8115, %v8460
        %v8484 = vadd.f32 %v8116, %v8462
        %v8485 = vadd.f32 %v8117, %v8464
        %v8486 = vadd.f32 %v8118, %v8466
        %v8487 = vadd.f32 %v8119, %v8468
        %v8488 = vadd.f32 %v8120, %v8470
        %v8489 = vadd.f32 %v8121, %v8472
        %v8490 = vadd.f32 %v8122, %v8474
        %v8491 = vmul.f32 %v8203, %v7028
        %v8492 = vmul.f32 %v8204, %v7030
        %v8493 = vmul.f32 %v8205, %v7032
        %v8494 = vmul.f32 %v8206, %v7034
        %v8495 = vmul.f32 %v8207, %v7036
        %v8496 = vmul.f32 %v8208, %v7038
        %v8497 = vmul.f32 %v8209, %v7040
        %v8498 = vmul.f32 %v8210, %v7042
        %8507 = vrot.lane.b32.xlu0 %v8491, 124
        %v8508 = vpop.permute.xlu0 %8507
        %8509 = vrot.lane.b32.xlu0 %v8492, 124
        %v8510 = vpop.permute.xlu0 %8509
        %8511 = vrot.lane.b32.xlu0 %v8493, 124
        %v8512 = vpop.permute.xlu0 %8511
        %8513 = vrot.lane.b32.xlu0 %v8494, 124
        %v8514 = vpop.permute.xlu0 %8513
        %8515 = vrot.lane.b32.xlu0 %v8495, 124
        %v8516 = vpop.permute.xlu0 %8515
        %8517 = vrot.lane.b32.xlu0 %v8496, 124
        %v8518 = vpop.permute.xlu0 %8517
        %8519 = vrot.lane.b32.xlu0 %v8497, 124
        %v8520 = vpop.permute.xlu0 %8519
        %8521 = vrot.lane.b32.xlu0 %v8498, 124
        %v8522 = vpop.permute.xlu0 %8521
        %v8531 = vadd.f32 %v8163, %v8508
        %v8532 = vadd.f32 %v8164, %v8510
        %v8533 = vadd.f32 %v8165, %v8512
        %v8534 = vadd.f32 %v8166, %v8514
        %v8535 = vadd.f32 %v8167, %v8516
        %v8536 = vadd.f32 %v8168, %v8518
        %v8537 = vadd.f32 %v8169, %v8520
        %v8538 = vadd.f32 %v8170, %v8522
        %8547 = vrot.lane.b32.xlu0 %v8235, 5
        %v8548 = vpop.permute.xlu0 %8547
        %8549 = vrot.lane.b32.xlu0 %v8236, 5
        %v8550 = vpop.permute.xlu0 %8549
        %8551 = vrot.lane.b32.xlu0 %v8237, 5
        %v8552 = vpop.permute.xlu0 %8551
        %8553 = vrot.lane.b32.xlu0 %v8238, 5
        %v8554 = vpop.permute.xlu0 %8553
        %8555 = vrot.lane.b32.xlu0 %v8239, 5
        %v8556 = vpop.permute.xlu0 %8555
        %8557 = vrot.lane.b32.xlu0 %v8240, 5
        %v8558 = vpop.permute.xlu0 %8557
        %8559 = vrot.lane.b32.xlu0 %v8241, 5
        %v8560 = vpop.permute.xlu0 %8559
        %8561 = vrot.lane.b32.xlu0 %v8242, 5
        %v8562 = vpop.permute.xlu0 %8561
        %v8571 = vmul.f32 %v6715, %v8548
        %v8572 = vmul.f32 %v6716, %v8550
        %v8573 = vmul.f32 %v6717, %v8552
        %v8574 = vmul.f32 %v6718, %v8554
        %v8575 = vmul.f32 %v6719, %v8556
        %v8576 = vmul.f32 %v6720, %v8558
        %v8577 = vmul.f32 %v6721, %v8560
        %v8578 = vmul.f32 %v6722, %v8562
        %8579 = vrot.lane.b32.xlu0 %v6731, 123
        %v8580 = vpop.permute.xlu0 %8579
        %8581 = vrot.lane.b32.xlu0 %v6732, 123
        %v8582 = vpop.permute.xlu0 %8581
        %8583 = vrot.lane.b32.xlu0 %v6733, 123
        %v8584 = vpop.permute.xlu0 %8583
        %8585 = vrot.lane.b32.xlu0 %v6734, 123
        %v8586 = vpop.permute.xlu0 %8585
        %8587 = vrot.lane.b32.xlu0 %v6735, 123
        %v8588 = vpop.permute.xlu0 %8587
        %8589 = vrot.lane.b32.xlu0 %v6736, 123
        %v8590 = vpop.permute.xlu0 %8589
        %8591 = vrot.lane.b32.xlu0 %v6737, 123
        %v8592 = vpop.permute.xlu0 %8591
        %8593 = vrot.lane.b32.xlu0 %v6738, 123
        %v8594 = vpop.permute.xlu0 %8593
        %v8603 = vmul.f32 %v8235, %v8580
        %v8604 = vmul.f32 %v8236, %v8582
        %v8605 = vmul.f32 %v8237, %v8584
        %v8606 = vmul.f32 %v8238, %v8586
        %v8607 = vmul.f32 %v8239, %v8588
        %v8608 = vmul.f32 %v8240, %v8590
        %v8609 = vmul.f32 %v8241, %v8592
        %v8610 = vmul.f32 %v8242, %v8594
        %8612 = vset.pattern.permute.xlu0 5
        %8613 = vperm.xlu0 %8612, %v8571
        %v8614 = vpop.permute.xlu0 %8613
        %8617 = vset.pattern.permute.xlu0 5
        %8618 = vperm.xlu0 %8617, %v8572
        %v8619 = vpop.permute.xlu0 %8618
        %8622 = vset.pattern.permute.xlu0 5
        %8623 = vperm.xlu0 %8622, %v8573
        %v8624 = vpop.permute.xlu0 %8623
        %8627 = vset.pattern.permute.xlu0 5
        %8628 = vperm.xlu0 %8627, %v8574
        %v8629 = vpop.permute.xlu0 %8628
        %8632 = vset.pattern.permute.xlu0 5
        %8633 = vperm.xlu0 %8632, %v8575
        %v8634 = vpop.permute.xlu0 %8633
        %8637 = vset.pattern.permute.xlu0 5
        %8638 = vperm.xlu0 %8637, %v8576
        %v8639 = vpop.permute.xlu0 %8638
        %8642 = vset.pattern.permute.xlu0 5
        %8643 = vperm.xlu0 %8642, %v8577
        %v8644 = vpop.permute.xlu0 %8643
        %8647 = vset.pattern.permute.xlu0 5
        %8648 = vperm.xlu0 %8647, %v8578
        %v8649 = vpop.permute.xlu0 %8648
        %v8651 = vrot.slane %v4299, 5
        %v8652 = vrot.slane %v4314, 4
        %v8653 = vsel %vm5310, %v8652, %v8651
        %v8654 = vrot.slane %v4329, 3
        %v8655 = vsel %vm5313, %v8654, %v8653
        %v8656 = vrot.slane %v4344, 2
        %v8657 = vsel %vm5316, %v8656, %v8655
        %v8658 = vrot.slane %v4359, 1
        %v8659 = vsel %vm5319, %v8658, %v8657
        %v8660 = vsel %vm5322, %v4374, %v8659
        %v8661 = vrot.slane %v4389, 7
        %v8662 = vsel %vm5325, %v8661, %v8660
        %v8663 = vrot.slane %v4404, 6
        %v8664 = vsel %vm5328, %v8663, %v8662
        %v8665 = vrot.slane %v4419, 5
        %v8666 = vrot.slane %v4434, 4
        %v8667 = vsel %vm5310, %v8666, %v8665
        %v8668 = vrot.slane %v4449, 3
        %v8669 = vsel %vm5313, %v8668, %v8667
        %v8670 = vrot.slane %v4464, 2
        %v8671 = vsel %vm5316, %v8670, %v8669
        %v8672 = vrot.slane %v4479, 1
        %v8673 = vsel %vm5319, %v8672, %v8671
        %v8674 = vsel %vm5322, %v4494, %v8673
        %v8675 = vrot.slane %v4509, 7
        %v8676 = vsel %vm5325, %v8675, %v8674
        %v8677 = vrot.slane %v4524, 6
        %v8678 = vsel %vm5328, %v8677, %v8676
        %v8679 = vrot.slane %v4539, 5
        %v8680 = vrot.slane %v4554, 4
        %v8681 = vsel %vm5310, %v8680, %v8679
        %v8682 = vrot.slane %v4569, 3
        %v8683 = vsel %vm5313, %v8682, %v8681
        %v8684 = vrot.slane %v4584, 2
        %v8685 = vsel %vm5316, %v8684, %v8683
        %v8686 = vrot.slane %v4599, 1
        %v8687 = vsel %vm5319, %v8686, %v8685
        %v8688 = vsel %vm5322, %v4614, %v8687
        %v8689 = vrot.slane %v4629, 7
        %v8690 = vsel %vm5325, %v8689, %v8688
        %v8691 = vrot.slane %v4644, 6
        %v8692 = vsel %vm5328, %v8691, %v8690
        %v8693 = vrot.slane %v4659, 5
        %v8694 = vrot.slane %v4674, 4
        %v8695 = vsel %vm5310, %v8694, %v8693
        %v8696 = vrot.slane %v4689, 3
        %v8697 = vsel %vm5313, %v8696, %v8695
        %v8698 = vrot.slane %v4704, 2
        %v8699 = vsel %vm5316, %v8698, %v8697
        %v8700 = vrot.slane %v4719, 1
        %v8701 = vsel %vm5319, %v8700, %v8699
        %v8702 = vsel %vm5322, %v4734, %v8701
        %v8703 = vrot.slane %v4749, 7
        %v8704 = vsel %vm5325, %v8703, %v8702
        %v8705 = vrot.slane %v4764, 6
        %v8706 = vsel %vm5328, %v8705, %v8704
        %v8707 = vrot.slane %v4779, 5
        %v8708 = vrot.slane %v4794, 4
        %v8709 = vsel %vm5310, %v8708, %v8707
        %v8710 = vrot.slane %v4809, 3
        %v8711 = vsel %vm5313, %v8710, %v8709
        %v8712 = vrot.slane %v4824, 2
        %v8713 = vsel %vm5316, %v8712, %v8711
        %v8714 = vrot.slane %v4839, 1
        %v8715 = vsel %vm5319, %v8714, %v8713
        %v8716 = vsel %vm5322, %v4854, %v8715
        %v8717 = vrot.slane %v4869, 7
        %v8718 = vsel %vm5325, %v8717, %v8716
        %v8719 = vrot.slane %v4884, 6
        %v8720 = vsel %vm5328, %v8719, %v8718
        %v8721 = vrot.slane %v4899, 5
        %v8722 = vrot.slane %v4914, 4
        %v8723 = vsel %vm5310, %v8722, %v8721
        %v8724 = vrot.slane %v4929, 3
        %v8725 = vsel %vm5313, %v8724, %v8723
        %v8726 = vrot.slane %v4944, 2
        %v8727 = vsel %vm5316, %v8726, %v8725
        %v8728 = vrot.slane %v4959, 1
        %v8729 = vsel %vm5319, %v8728, %v8727
        %v8730 = vsel %vm5322, %v4974, %v8729
        %v8731 = vrot.slane %v4989, 7
        %v8732 = vsel %vm5325, %v8731, %v8730
        %v8733 = vrot.slane %v5004, 6
        %v8734 = vsel %vm5328, %v8733, %v8732
        %v8735 = vrot.slane %v5019, 5
        %v8736 = vrot.slane %v5034, 4
        %v8737 = vsel %vm5310, %v8736, %v8735
        %v8738 = vrot.slane %v5049, 3
        %v8739 = vsel %vm5313, %v8738, %v8737
        %v8740 = vrot.slane %v5064, 2
        %v8741 = vsel %vm5316, %v8740, %v8739
        %v8742 = vrot.slane %v5079, 1
        %v8743 = vsel %vm5319, %v8742, %v8741
        %v8744 = vsel %vm5322, %v5094, %v8743
        %v8745 = vrot.slane %v5109, 7
        %v8746 = vsel %vm5325, %v8745, %v8744
        %v8747 = vrot.slane %v5124, 6
        %v8748 = vsel %vm5328, %v8747, %v8746
        %v8749 = vrot.slane %v5139, 5
        %v8750 = vrot.slane %v5154, 4
        %v8751 = vsel %vm5310, %v8750, %v8749
        %v8752 = vrot.slane %v5169, 3
        %v8753 = vsel %vm5313, %v8752, %v8751
        %v8754 = vrot.slane %v5184, 2
        %v8755 = vsel %vm5316, %v8754, %v8753
        %v8756 = vrot.slane %v5199, 1
        %v8757 = vsel %vm5319, %v8756, %v8755
        %v8758 = vsel %vm5322, %v5214, %v8757
        %v8759 = vrot.slane %v5229, 7
        %v8760 = vsel %vm5325, %v8759, %v8758
        %v8761 = vrot.slane %v5244, 6
        %v8762 = vsel %vm5328, %v8761, %v8760
        %8763 = vrot.lane.b32.xlu0 %v8664, 96
        %v8764 = vpop.permute.xlu0 %8763
        %8765 = vrot.lane.b32.xlu0 %v8678, 96
        %v8766 = vpop.permute.xlu0 %8765
        %8767 = vrot.lane.b32.xlu0 %v8692, 96
        %v8768 = vpop.permute.xlu0 %8767
        %8769 = vrot.lane.b32.xlu0 %v8706, 96
        %v8770 = vpop.permute.xlu0 %8769
        %8771 = vrot.lane.b32.xlu0 %v8720, 96
        %v8772 = vpop.permute.xlu0 %8771
        %8773 = vrot.lane.b32.xlu0 %v8734, 96
        %v8774 = vpop.permute.xlu0 %8773
        %8775 = vrot.lane.b32.xlu0 %v8748, 96
        %v8776 = vpop.permute.xlu0 %8775
        %8777 = vrot.lane.b32.xlu0 %v8762, 96
        %v8778 = vpop.permute.xlu0 %8777
        %v8787 = vmul.f32 %v8614, %v8764
        %v8788 = vmul.f32 %v8619, %v8766
        %v8789 = vmul.f32 %v8624, %v8768
        %v8790 = vmul.f32 %v8629, %v8770
        %v8791 = vmul.f32 %v8634, %v8772
        %v8792 = vmul.f32 %v8639, %v8774
        %v8793 = vmul.f32 %v8644, %v8776
        %v8794 = vmul.f32 %v8649, %v8778
        %v8795 = vadd.f32 %v8427, %v8787
        %v8796 = vadd.f32 %v8428, %v8788
        %v8797 = vadd.f32 %v8429, %v8789
        %v8798 = vadd.f32 %v8430, %v8790
        %v8799 = vadd.f32 %v8431, %v8791
        %v8800 = vadd.f32 %v8432, %v8792
        %v8801 = vadd.f32 %v8433, %v8793
        %v8802 = vadd.f32 %v8434, %v8794
        %v8811 = vmul.f32 %v8614, %v6009
        %v8812 = vmul.f32 %v8619, %v6023
        %v8813 = vmul.f32 %v8624, %v6037
        %v8814 = vmul.f32 %v8629, %v6051
        %v8815 = vmul.f32 %v8634, %v6065
        %v8816 = vmul.f32 %v8639, %v6079
        %v8817 = vmul.f32 %v8644, %v6093
        %v8818 = vmul.f32 %v8649, %v6107
        %v8819 = vadd.f32 %v8451, %v8811
        %v8820 = vadd.f32 %v8452, %v8812
        %v8821 = vadd.f32 %v8453, %v8813
        %v8822 = vadd.f32 %v8454, %v8814
        %v8823 = vadd.f32 %v8455, %v8815
        %v8824 = vadd.f32 %v8456, %v8816
        %v8825 = vadd.f32 %v8457, %v8817
        %v8826 = vadd.f32 %v8458, %v8818
        %8827 = vrot.lane.b32.xlu0 %v8571, 123
        %v8828 = vpop.permute.xlu0 %8827
        %8829 = vrot.lane.b32.xlu0 %v8572, 123
        %v8830 = vpop.permute.xlu0 %8829
        %8831 = vrot.lane.b32.xlu0 %v8573, 123
        %v8832 = vpop.permute.xlu0 %8831
        %8833 = vrot.lane.b32.xlu0 %v8574, 123
        %v8834 = vpop.permute.xlu0 %8833
        %8835 = vrot.lane.b32.xlu0 %v8575, 123
        %v8836 = vpop.permute.xlu0 %8835
        %8837 = vrot.lane.b32.xlu0 %v8576, 123
        %v8838 = vpop.permute.xlu0 %8837
        %8839 = vrot.lane.b32.xlu0 %v8577, 123
        %v8840 = vpop.permute.xlu0 %8839
        %8841 = vrot.lane.b32.xlu0 %v8578, 123
        %v8842 = vpop.permute.xlu0 %8841
        %v8851 = vadd.f32 %v8483, %v8828
        %v8852 = vadd.f32 %v8484, %v8830
        %v8853 = vadd.f32 %v8485, %v8832
        %v8854 = vadd.f32 %v8486, %v8834
        %v8855 = vadd.f32 %v8487, %v8836
        %v8856 = vadd.f32 %v8488, %v8838
        %v8857 = vadd.f32 %v8489, %v8840
        %v8858 = vadd.f32 %v8490, %v8842
        %v8859 = vmul.f32 %v8571, %v7028
        %v8860 = vmul.f32 %v8572, %v7030
        %v8861 = vmul.f32 %v8573, %v7032
        %v8862 = vmul.f32 %v8574, %v7034
        %v8863 = vmul.f32 %v8575, %v7036
        %v8864 = vmul.f32 %v8576, %v7038
        %v8865 = vmul.f32 %v8577, %v7040
        %v8866 = vmul.f32 %v8578, %v7042
        %8875 = vrot.lane.b32.xlu0 %v8859, 123
        %v8876 = vpop.permute.xlu0 %8875
        %8877 = vrot.lane.b32.xlu0 %v8860, 123
        %v8878 = vpop.permute.xlu0 %8877
        %8879 = vrot.lane.b32.xlu0 %v8861, 123
        %v8880 = vpop.permute.xlu0 %8879
        %8881 = vrot.lane.b32.xlu0 %v8862, 123
        %v8882 = vpop.permute.xlu0 %8881
        %8883 = vrot.lane.b32.xlu0 %v8863, 123
        %v8884 = vpop.permute.xlu0 %8883
        %8885 = vrot.lane.b32.xlu0 %v8864, 123
        %v8886 = vpop.permute.xlu0 %8885
        %8887 = vrot.lane.b32.xlu0 %v8865, 123
        %v8888 = vpop.permute.xlu0 %8887
        %8889 = vrot.lane.b32.xlu0 %v8866, 123
        %v8890 = vpop.permute.xlu0 %8889
        %v8899 = vadd.f32 %v8531, %v8876
        %v8900 = vadd.f32 %v8532, %v8878
        %v8901 = vadd.f32 %v8533, %v8880
        %v8902 = vadd.f32 %v8534, %v8882
        %v8903 = vadd.f32 %v8535, %v8884
        %v8904 = vadd.f32 %v8536, %v8886
        %v8905 = vadd.f32 %v8537, %v8888
        %v8906 = vadd.f32 %v8538, %v8890
        %8915 = vrot.lane.b32.xlu0 %v8603, 6
        %v8916 = vpop.permute.xlu0 %8915
        %8917 = vrot.lane.b32.xlu0 %v8604, 6
        %v8918 = vpop.permute.xlu0 %8917
        %8919 = vrot.lane.b32.xlu0 %v8605, 6
        %v8920 = vpop.permute.xlu0 %8919
        %8921 = vrot.lane.b32.xlu0 %v8606, 6
        %v8922 = vpop.permute.xlu0 %8921
        %8923 = vrot.lane.b32.xlu0 %v8607, 6
        %v8924 = vpop.permute.xlu0 %8923
        %8925 = vrot.lane.b32.xlu0 %v8608, 6
        %v8926 = vpop.permute.xlu0 %8925
        %8927 = vrot.lane.b32.xlu0 %v8609, 6
        %v8928 = vpop.permute.xlu0 %8927
        %8929 = vrot.lane.b32.xlu0 %v8610, 6
        %v8930 = vpop.permute.xlu0 %8929
        %v8939 = vmul.f32 %v6715, %v8916
        %v8940 = vmul.f32 %v6716, %v8918
        %v8941 = vmul.f32 %v6717, %v8920
        %v8942 = vmul.f32 %v6718, %v8922
        %v8943 = vmul.f32 %v6719, %v8924
        %v8944 = vmul.f32 %v6720, %v8926
        %v8945 = vmul.f32 %v6721, %v8928
        %v8946 = vmul.f32 %v6722, %v8930
        %8947 = vrot.lane.b32.xlu0 %v6731, 122
        %v8948 = vpop.permute.xlu0 %8947
        %8949 = vrot.lane.b32.xlu0 %v6732, 122
        %v8950 = vpop.permute.xlu0 %8949
        %8951 = vrot.lane.b32.xlu0 %v6733, 122
        %v8952 = vpop.permute.xlu0 %8951
        %8953 = vrot.lane.b32.xlu0 %v6734, 122
        %v8954 = vpop.permute.xlu0 %8953
        %8955 = vrot.lane.b32.xlu0 %v6735, 122
        %v8956 = vpop.permute.xlu0 %8955
        %8957 = vrot.lane.b32.xlu0 %v6736, 122
        %v8958 = vpop.permute.xlu0 %8957
        %8959 = vrot.lane.b32.xlu0 %v6737, 122
        %v8960 = vpop.permute.xlu0 %8959
        %8961 = vrot.lane.b32.xlu0 %v6738, 122
        %v8962 = vpop.permute.xlu0 %8961
        %v8971 = vmul.f32 %v8603, %v8948
        %v8972 = vmul.f32 %v8604, %v8950
        %v8973 = vmul.f32 %v8605, %v8952
        %v8974 = vmul.f32 %v8606, %v8954
        %v8975 = vmul.f32 %v8607, %v8956
        %v8976 = vmul.f32 %v8608, %v8958
        %v8977 = vmul.f32 %v8609, %v8960
        %v8978 = vmul.f32 %v8610, %v8962
        %8980 = vset.pattern.permute.xlu0 6
        %8981 = vperm.xlu0 %8980, %v8939
        %v8982 = vpop.permute.xlu0 %8981
        %8985 = vset.pattern.permute.xlu0 6
        %8986 = vperm.xlu0 %8985, %v8940
        %v8987 = vpop.permute.xlu0 %8986
        %8990 = vset.pattern.permute.xlu0 6
        %8991 = vperm.xlu0 %8990, %v8941
        %v8992 = vpop.permute.xlu0 %8991
        %8995 = vset.pattern.permute.xlu0 6
        %8996 = vperm.xlu0 %8995, %v8942
        %v8997 = vpop.permute.xlu0 %8996
        %9000 = vset.pattern.permute.xlu0 6
        %9001 = vperm.xlu0 %9000, %v8943
        %v9002 = vpop.permute.xlu0 %9001
        %9005 = vset.pattern.permute.xlu0 6
        %9006 = vperm.xlu0 %9005, %v8944
        %v9007 = vpop.permute.xlu0 %9006
        %9010 = vset.pattern.permute.xlu0 6
        %9011 = vperm.xlu0 %9010, %v8945
        %v9012 = vpop.permute.xlu0 %9011
        %9015 = vset.pattern.permute.xlu0 6
        %9016 = vperm.xlu0 %9015, %v8946
        %v9017 = vpop.permute.xlu0 %9016
        %v9019 = vrot.slane %v4299, 6
        %v9020 = vrot.slane %v4314, 5
        %v9021 = vsel %vm5310, %v9020, %v9019
        %v9022 = vrot.slane %v4329, 4
        %v9023 = vsel %vm5313, %v9022, %v9021
        %v9024 = vrot.slane %v4344, 3
        %v9025 = vsel %vm5316, %v9024, %v9023
        %v9026 = vrot.slane %v4359, 2
        %v9027 = vsel %vm5319, %v9026, %v9025
        %v9028 = vrot.slane %v4374, 1
        %v9029 = vsel %vm5322, %v9028, %v9027
        %v9030 = vsel %vm5325, %v4389, %v9029
        %v9031 = vrot.slane %v4404, 7
        %v9032 = vsel %vm5328, %v9031, %v9030
        %v9033 = vrot.slane %v4419, 6
        %v9034 = vrot.slane %v4434, 5
        %v9035 = vsel %vm5310, %v9034, %v9033
        %v9036 = vrot.slane %v4449, 4
        %v9037 = vsel %vm5313, %v9036, %v9035
        %v9038 = vrot.slane %v4464, 3
        %v9039 = vsel %vm5316, %v9038, %v9037
        %v9040 = vrot.slane %v4479, 2
        %v9041 = vsel %vm5319, %v9040, %v9039
        %v9042 = vrot.slane %v4494, 1
        %v9043 = vsel %vm5322, %v9042, %v9041
        %v9044 = vsel %vm5325, %v4509, %v9043
        %v9045 = vrot.slane %v4524, 7
        %v9046 = vsel %vm5328, %v9045, %v9044
        %v9047 = vrot.slane %v4539, 6
        %v9048 = vrot.slane %v4554, 5
        %v9049 = vsel %vm5310, %v9048, %v9047
        %v9050 = vrot.slane %v4569, 4
        %v9051 = vsel %vm5313, %v9050, %v9049
        %v9052 = vrot.slane %v4584, 3
        %v9053 = vsel %vm5316, %v9052, %v9051
        %v9054 = vrot.slane %v4599, 2
        %v9055 = vsel %vm5319, %v9054, %v9053
        %v9056 = vrot.slane %v4614, 1
        %v9057 = vsel %vm5322, %v9056, %v9055
        %v9058 = vsel %vm5325, %v4629, %v9057
        %v9059 = vrot.slane %v4644, 7
        %v9060 = vsel %vm5328, %v9059, %v9058
        %v9061 = vrot.slane %v4659, 6
        %v9062 = vrot.slane %v4674, 5
        %v9063 = vsel %vm5310, %v9062, %v9061
        %v9064 = vrot.slane %v4689, 4
        %v9065 = vsel %vm5313, %v9064, %v9063
        %v9066 = vrot.slane %v4704, 3
        %v9067 = vsel %vm5316, %v9066, %v9065
        %v9068 = vrot.slane %v4719, 2
        %v9069 = vsel %vm5319, %v9068, %v9067
        %v9070 = vrot.slane %v4734, 1
        %v9071 = vsel %vm5322, %v9070, %v9069
        %v9072 = vsel %vm5325, %v4749, %v9071
        %v9073 = vrot.slane %v4764, 7
        %v9074 = vsel %vm5328, %v9073, %v9072
        %v9075 = vrot.slane %v4779, 6
        %v9076 = vrot.slane %v4794, 5
        %v9077 = vsel %vm5310, %v9076, %v9075
        %v9078 = vrot.slane %v4809, 4
        %v9079 = vsel %vm5313, %v9078, %v9077
        %v9080 = vrot.slane %v4824, 3
        %v9081 = vsel %vm5316, %v9080, %v9079
        %v9082 = vrot.slane %v4839, 2
        %v9083 = vsel %vm5319, %v9082, %v9081
        %v9084 = vrot.slane %v4854, 1
        %v9085 = vsel %vm5322, %v9084, %v9083
        %v9086 = vsel %vm5325, %v4869, %v9085
        %v9087 = vrot.slane %v4884, 7
        %v9088 = vsel %vm5328, %v9087, %v9086
        %v9089 = vrot.slane %v4899, 6
        %v9090 = vrot.slane %v4914, 5
        %v9091 = vsel %vm5310, %v9090, %v9089
        %v9092 = vrot.slane %v4929, 4
        %v9093 = vsel %vm5313, %v9092, %v9091
        %v9094 = vrot.slane %v4944, 3
        %v9095 = vsel %vm5316, %v9094, %v9093
        %v9096 = vrot.slane %v4959, 2
        %v9097 = vsel %vm5319, %v9096, %v9095
        %v9098 = vrot.slane %v4974, 1
        %v9099 = vsel %vm5322, %v9098, %v9097
        %v9100 = vsel %vm5325, %v4989, %v9099
        %v9101 = vrot.slane %v5004, 7
        %v9102 = vsel %vm5328, %v9101, %v9100
        %v9103 = vrot.slane %v5019, 6
        %v9104 = vrot.slane %v5034, 5
        %v9105 = vsel %vm5310, %v9104, %v9103
        %v9106 = vrot.slane %v5049, 4
        %v9107 = vsel %vm5313, %v9106, %v9105
        %v9108 = vrot.slane %v5064, 3
        %v9109 = vsel %vm5316, %v9108, %v9107
        %v9110 = vrot.slane %v5079, 2
        %v9111 = vsel %vm5319, %v9110, %v9109
        %v9112 = vrot.slane %v5094, 1
        %v9113 = vsel %vm5322, %v9112, %v9111
        %v9114 = vsel %vm5325, %v5109, %v9113
        %v9115 = vrot.slane %v5124, 7
        %v9116 = vsel %vm5328, %v9115, %v9114
        %v9117 = vrot.slane %v5139, 6
        %v9118 = vrot.slane %v5154, 5
        %v9119 = vsel %vm5310, %v9118, %v9117
        %v9120 = vrot.slane %v5169, 4
        %v9121 = vsel %vm5313, %v9120, %v9119
        %v9122 = vrot.slane %v5184, 3
        %v9123 = vsel %vm5316, %v9122, %v9121
        %v9124 = vrot.slane %v5199, 2
        %v9125 = vsel %vm5319, %v9124, %v9123
        %v9126 = vrot.slane %v5214, 1
        %v9127 = vsel %vm5322, %v9126, %v9125
        %v9128 = vsel %vm5325, %v5229, %v9127
        %v9129 = vrot.slane %v5244, 7
        %v9130 = vsel %vm5328, %v9129, %v9128
        %9131 = vrot.lane.b32.xlu0 %v9032, 96
        %v9132 = vpop.permute.xlu0 %9131
        %9133 = vrot.lane.b32.xlu0 %v9046, 96
        %v9134 = vpop.permute.xlu0 %9133
        %9135 = vrot.lane.b32.xlu0 %v9060, 96
        %v9136 = vpop.permute.xlu0 %9135
        %9137 = vrot.lane.b32.xlu0 %v9074, 96
        %v9138 = vpop.permute.xlu0 %9137
        %9139 = vrot.lane.b32.xlu0 %v9088, 96
        %v9140 = vpop.permute.xlu0 %9139
        %9141 = vrot.lane.b32.xlu0 %v9102, 96
        %v9142 = vpop.permute.xlu0 %9141
        %9143 = vrot.lane.b32.xlu0 %v9116, 96
        %v9144 = vpop.permute.xlu0 %9143
        %9145 = vrot.lane.b32.xlu0 %v9130, 96
        %v9146 = vpop.permute.xlu0 %9145
        %v9155 = vmul.f32 %v8982, %v9132
        %v9156 = vmul.f32 %v8987, %v9134
        %v9157 = vmul.f32 %v8992, %v9136
        %v9158 = vmul.f32 %v8997, %v9138
        %v9159 = vmul.f32 %v9002, %v9140
        %v9160 = vmul.f32 %v9007, %v9142
        %v9161 = vmul.f32 %v9012, %v9144
        %v9162 = vmul.f32 %v9017, %v9146
        %v9163 = vadd.f32 %v8795, %v9155
        %v9164 = vadd.f32 %v8796, %v9156
        %v9165 = vadd.f32 %v8797, %v9157
        %v9166 = vadd.f32 %v8798, %v9158
        %v9167 = vadd.f32 %v8799, %v9159
        %v9168 = vadd.f32 %v8800, %v9160
        %v9169 = vadd.f32 %v8801, %v9161
        %v9170 = vadd.f32 %v8802, %v9162
        %v9179 = vmul.f32 %v8982, %v6145
        %v9180 = vmul.f32 %v8987, %v6159
        %v9181 = vmul.f32 %v8992, %v6173
        %v9182 = vmul.f32 %v8997, %v6187
        %v9183 = vmul.f32 %v9002, %v6201
        %v9184 = vmul.f32 %v9007, %v6215
        %v9185 = vmul.f32 %v9012, %v6229
        %v9186 = vmul.f32 %v9017, %v6243
        %v9187 = vadd.f32 %v8819, %v9179
        %v9188 = vadd.f32 %v8820, %v9180
        %v9189 = vadd.f32 %v8821, %v9181
        %v9190 = vadd.f32 %v8822, %v9182
        %v9191 = vadd.f32 %v8823, %v9183
        %v9192 = vadd.f32 %v8824, %v9184
        %v9193 = vadd.f32 %v8825, %v9185
        %v9194 = vadd.f32 %v8826, %v9186
        %9195 = vrot.lane.b32.xlu0 %v8939, 122
        %v9196 = vpop.permute.xlu0 %9195
        %9197 = vrot.lane.b32.xlu0 %v8940, 122
        %v9198 = vpop.permute.xlu0 %9197
        %9199 = vrot.lane.b32.xlu0 %v8941, 122
        %v9200 = vpop.permute.xlu0 %9199
        %9201 = vrot.lane.b32.xlu0 %v8942, 122
        %v9202 = vpop.permute.xlu0 %9201
        %9203 = vrot.lane.b32.xlu0 %v8943, 122
        %v9204 = vpop.permute.xlu0 %9203
        %9205 = vrot.lane.b32.xlu0 %v8944, 122
        %v9206 = vpop.permute.xlu0 %9205
        %9207 = vrot.lane.b32.xlu0 %v8945, 122
        %v9208 = vpop.permute.xlu0 %9207
        %9209 = vrot.lane.b32.xlu0 %v8946, 122
        %v9210 = vpop.permute.xlu0 %9209
        %v9219 = vadd.f32 %v8851, %v9196
        %v9220 = vadd.f32 %v8852, %v9198
        %v9221 = vadd.f32 %v8853, %v9200
        %v9222 = vadd.f32 %v8854, %v9202
        %v9223 = vadd.f32 %v8855, %v9204
        %v9224 = vadd.f32 %v8856, %v9206
        %v9225 = vadd.f32 %v8857, %v9208
        %v9226 = vadd.f32 %v8858, %v9210
        %v9227 = vmul.f32 %v8939, %v7028
        %v9228 = vmul.f32 %v8940, %v7030
        %v9229 = vmul.f32 %v8941, %v7032
        %v9230 = vmul.f32 %v8942, %v7034
        %v9231 = vmul.f32 %v8943, %v7036
        %v9232 = vmul.f32 %v8944, %v7038
        %v9233 = vmul.f32 %v8945, %v7040
        %v9234 = vmul.f32 %v8946, %v7042
        %9243 = vrot.lane.b32.xlu0 %v9227, 122
        %v9244 = vpop.permute.xlu0 %9243
        %9245 = vrot.lane.b32.xlu0 %v9228, 122
        %v9246 = vpop.permute.xlu0 %9245
        %9247 = vrot.lane.b32.xlu0 %v9229, 122
        %v9248 = vpop.permute.xlu0 %9247
        %9249 = vrot.lane.b32.xlu0 %v9230, 122
        %v9250 = vpop.permute.xlu0 %9249
        %9251 = vrot.lane.b32.xlu0 %v9231, 122
        %v9252 = vpop.permute.xlu0 %9251
        %9253 = vrot.lane.b32.xlu0 %v9232, 122
        %v9254 = vpop.permute.xlu0 %9253
        %9255 = vrot.lane.b32.xlu0 %v9233, 122
        %v9256 = vpop.permute.xlu0 %9255
        %9257 = vrot.lane.b32.xlu0 %v9234, 122
        %v9258 = vpop.permute.xlu0 %9257
        %v9267 = vadd.f32 %v8899, %v9244
        %v9268 = vadd.f32 %v8900, %v9246
        %v9269 = vadd.f32 %v8901, %v9248
        %v9270 = vadd.f32 %v8902, %v9250
        %v9271 = vadd.f32 %v8903, %v9252
        %v9272 = vadd.f32 %v8904, %v9254
        %v9273 = vadd.f32 %v8905, %v9256
        %v9274 = vadd.f32 %v8906, %v9258
        %9283 = vrot.lane.b32.xlu0 %v8971, 7
        %v9284 = vpop.permute.xlu0 %9283
        %9285 = vrot.lane.b32.xlu0 %v8972, 7
        %v9286 = vpop.permute.xlu0 %9285
        %9287 = vrot.lane.b32.xlu0 %v8973, 7
        %v9288 = vpop.permute.xlu0 %9287
        %9289 = vrot.lane.b32.xlu0 %v8974, 7
        %v9290 = vpop.permute.xlu0 %9289
        %9291 = vrot.lane.b32.xlu0 %v8975, 7
        %v9292 = vpop.permute.xlu0 %9291
        %9293 = vrot.lane.b32.xlu0 %v8976, 7
        %v9294 = vpop.permute.xlu0 %9293
        %9295 = vrot.lane.b32.xlu0 %v8977, 7
        %v9296 = vpop.permute.xlu0 %9295
        %9297 = vrot.lane.b32.xlu0 %v8978, 7
        %v9298 = vpop.permute.xlu0 %9297
        %v9307 = vmul.f32 %v6715, %v9284
        %v9308 = vmul.f32 %v6716, %v9286
        %v9309 = vmul.f32 %v6717, %v9288
        %v9310 = vmul.f32 %v6718, %v9290
        %v9311 = vmul.f32 %v6719, %v9292
        %v9312 = vmul.f32 %v6720, %v9294
        %v9313 = vmul.f32 %v6721, %v9296
        %v9314 = vmul.f32 %v6722, %v9298
        %9316 = vset.pattern.permute.xlu0 7
        %9317 = vperm.xlu0 %9316, %v9307
        %v9318 = vpop.permute.xlu0 %9317
        %9321 = vset.pattern.permute.xlu0 7
        %9322 = vperm.xlu0 %9321, %v9308
        %v9323 = vpop.permute.xlu0 %9322
        %9326 = vset.pattern.permute.xlu0 7
        %9327 = vperm.xlu0 %9326, %v9309
        %v9328 = vpop.permute.xlu0 %9327
        %9331 = vset.pattern.permute.xlu0 7
        %9332 = vperm.xlu0 %9331, %v9310
        %v9333 = vpop.permute.xlu0 %9332
        %9336 = vset.pattern.permute.xlu0 7
        %9337 = vperm.xlu0 %9336, %v9311
        %v9338 = vpop.permute.xlu0 %9337
        %9341 = vset.pattern.permute.xlu0 7
        %9342 = vperm.xlu0 %9341, %v9312
        %v9343 = vpop.permute.xlu0 %9342
        %9346 = vset.pattern.permute.xlu0 7
        %9347 = vperm.xlu0 %9346, %v9313
        %v9348 = vpop.permute.xlu0 %9347
        %9351 = vset.pattern.permute.xlu0 7
        %9352 = vperm.xlu0 %9351, %v9314
        %v9353 = vpop.permute.xlu0 %9352
        %v9355 = vrot.slane %v4299, 7
        %v9356 = vrot.slane %v4314, 6
        %v9357 = vsel %vm5310, %v9356, %v9355
        %v9358 = vrot.slane %v4329, 5
        %v9359 = vsel %vm5313, %v9358, %v9357
        %v9360 = vrot.slane %v4344, 4
        %v9361 = vsel %vm5316, %v9360, %v9359
        %v9362 = vrot.slane %v4359, 3
        %v9363 = vsel %vm5319, %v9362, %v9361
        %v9364 = vrot.slane %v4374, 2
        %v9365 = vsel %vm5322, %v9364, %v9363
        %v9366 = vrot.slane %v4389, 1
        %v9367 = vsel %vm5325, %v9366, %v9365
        %v9368 = vsel %vm5328, %v4404, %v9367
        %v9369 = vrot.slane %v4419, 7
        %v9370 = vrot.slane %v4434, 6
        %v9371 = vsel %vm5310, %v9370, %v9369
        %v9372 = vrot.slane %v4449, 5
        %v9373 = vsel %vm5313, %v9372, %v9371
        %v9374 = vrot.slane %v4464, 4
        %v9375 = vsel %vm5316, %v9374, %v9373
        %v9376 = vrot.slane %v4479, 3
        %v9377 = vsel %vm5319, %v9376, %v9375
        %v9378 = vrot.slane %v4494, 2
        %v9379 = vsel %vm5322, %v9378, %v9377
        %v9380 = vrot.slane %v4509, 1
        %v9381 = vsel %vm5325, %v9380, %v9379
        %v9382 = vsel %vm5328, %v4524, %v9381
        %v9383 = vrot.slane %v4539, 7
        %v9384 = vrot.slane %v4554, 6
        %v9385 = vsel %vm5310, %v9384, %v9383
        %v9386 = vrot.slane %v4569, 5
        %v9387 = vsel %vm5313, %v9386, %v9385
        %v9388 = vrot.slane %v4584, 4
        %v9389 = vsel %vm5316, %v9388, %v9387
        %v9390 = vrot.slane %v4599, 3
        %v9391 = vsel %vm5319, %v9390, %v9389
        %v9392 = vrot.slane %v4614, 2
        %v9393 = vsel %vm5322, %v9392, %v9391
        %v9394 = vrot.slane %v4629, 1
        %v9395 = vsel %vm5325, %v9394, %v9393
        %v9396 = vsel %vm5328, %v4644, %v9395
        %v9397 = vrot.slane %v4659, 7
        %v9398 = vrot.slane %v4674, 6
        %v9399 = vsel %vm5310, %v9398, %v9397
        %v9400 = vrot.slane %v4689, 5
        %v9401 = vsel %vm5313, %v9400, %v9399
        %v9402 = vrot.slane %v4704, 4
        %v9403 = vsel %vm5316, %v9402, %v9401
        %v9404 = vrot.slane %v4719, 3
        %v9405 = vsel %vm5319, %v9404, %v9403
        %v9406 = vrot.slane %v4734, 2
        %v9407 = vsel %vm5322, %v9406, %v9405
        %v9408 = vrot.slane %v4749, 1
        %v9409 = vsel %vm5325, %v9408, %v9407
        %v9410 = vsel %vm5328, %v4764, %v9409
        %v9411 = vrot.slane %v4779, 7
        %v9412 = vrot.slane %v4794, 6
        %v9413 = vsel %vm5310, %v9412, %v9411
        %v9414 = vrot.slane %v4809, 5
        %v9415 = vsel %vm5313, %v9414, %v9413
        %v9416 = vrot.slane %v4824, 4
        %v9417 = vsel %vm5316, %v9416, %v9415
        %v9418 = vrot.slane %v4839, 3
        %v9419 = vsel %vm5319, %v9418, %v9417
        %v9420 = vrot.slane %v4854, 2
        %v9421 = vsel %vm5322, %v9420, %v9419
        %v9422 = vrot.slane %v4869, 1
        %v9423 = vsel %vm5325, %v9422, %v9421
        %v9424 = vsel %vm5328, %v4884, %v9423
        %v9425 = vrot.slane %v4899, 7
        %v9426 = vrot.slane %v4914, 6
        %v9427 = vsel %vm5310, %v9426, %v9425
        %v9428 = vrot.slane %v4929, 5
        %v9429 = vsel %vm5313, %v9428, %v9427
        %v9430 = vrot.slane %v4944, 4
        %v9431 = vsel %vm5316, %v9430, %v9429
        %v9432 = vrot.slane %v4959, 3
        %v9433 = vsel %vm5319, %v9432, %v9431
        %v9434 = vrot.slane %v4974, 2
        %v9435 = vsel %vm5322, %v9434, %v9433
        %v9436 = vrot.slane %v4989, 1
        %v9437 = vsel %vm5325, %v9436, %v9435
        %v9438 = vsel %vm5328, %v5004, %v9437
        %v9439 = vrot.slane %v5019, 7
        %v9440 = vrot.slane %v5034, 6
        %v9441 = vsel %vm5310, %v9440, %v9439
        %v9442 = vrot.slane %v5049, 5
        %v9443 = vsel %vm5313, %v9442, %v9441
        %v9444 = vrot.slane %v5064, 4
        %v9445 = vsel %vm5316, %v9444, %v9443
        %v9446 = vrot.slane %v5079, 3
        %v9447 = vsel %vm5319, %v9446, %v9445
        %v9448 = vrot.slane %v5094, 2
        %v9449 = vsel %vm5322, %v9448, %v9447
        %v9450 = vrot.slane %v5109, 1
        %v9451 = vsel %vm5325, %v9450, %v9449
        %v9452 = vsel %vm5328, %v5124, %v9451
        %v9453 = vrot.slane %v5139, 7
        %v9454 = vrot.slane %v5154, 6
        %v9455 = vsel %vm5310, %v9454, %v9453
        %v9456 = vrot.slane %v5169, 5
        %v9457 = vsel %vm5313, %v9456, %v9455
        %v9458 = vrot.slane %v5184, 4
        %v9459 = vsel %vm5316, %v9458, %v9457
        %v9460 = vrot.slane %v5199, 3
        %v9461 = vsel %vm5319, %v9460, %v9459
        %v9462 = vrot.slane %v5214, 2
        %v9463 = vsel %vm5322, %v9462, %v9461
        %v9464 = vrot.slane %v5229, 1
        %v9465 = vsel %vm5325, %v9464, %v9463
        %v9466 = vsel %vm5328, %v5244, %v9465
        %9467 = vrot.lane.b32.xlu0 %v9368, 96
        %v9468 = vpop.permute.xlu0 %9467
        %9469 = vrot.lane.b32.xlu0 %v9382, 96
        %v9470 = vpop.permute.xlu0 %9469
        %9471 = vrot.lane.b32.xlu0 %v9396, 96
        %v9472 = vpop.permute.xlu0 %9471
        %9473 = vrot.lane.b32.xlu0 %v9410, 96
        %v9474 = vpop.permute.xlu0 %9473
        %9475 = vrot.lane.b32.xlu0 %v9424, 96
        %v9476 = vpop.permute.xlu0 %9475
        %9477 = vrot.lane.b32.xlu0 %v9438, 96
        %v9478 = vpop.permute.xlu0 %9477
        %9479 = vrot.lane.b32.xlu0 %v9452, 96
        %v9480 = vpop.permute.xlu0 %9479
        %9481 = vrot.lane.b32.xlu0 %v9466, 96
        %v9482 = vpop.permute.xlu0 %9481
        %v9491 = vmul.f32 %v9318, %v9468
        %v9492 = vmul.f32 %v9323, %v9470
        %v9493 = vmul.f32 %v9328, %v9472
        %v9494 = vmul.f32 %v9333, %v9474
        %v9495 = vmul.f32 %v9338, %v9476
        %v9496 = vmul.f32 %v9343, %v9478
        %v9497 = vmul.f32 %v9348, %v9480
        %v9498 = vmul.f32 %v9353, %v9482
        %v9499 = vadd.f32 %v9163, %v9491
        %v9500 = vadd.f32 %v9164, %v9492
        %v9501 = vadd.f32 %v9165, %v9493
        %v9502 = vadd.f32 %v9166, %v9494
        %v9503 = vadd.f32 %v9167, %v9495
        %v9504 = vadd.f32 %v9168, %v9496
        %v9505 = vadd.f32 %v9169, %v9497
        %v9506 = vadd.f32 %v9170, %v9498
        %v9515 = vmul.f32 %v9318, %v6281
        %v9516 = vmul.f32 %v9323, %v6295
        %v9517 = vmul.f32 %v9328, %v6309
        %v9518 = vmul.f32 %v9333, %v6323
        %v9519 = vmul.f32 %v9338, %v6337
        %v9520 = vmul.f32 %v9343, %v6351
        %v9521 = vmul.f32 %v9348, %v6365
        %v9522 = vmul.f32 %v9353, %v6379
        %v9523 = vadd.f32 %v9187, %v9515
        %v9524 = vadd.f32 %v9188, %v9516
        %v9525 = vadd.f32 %v9189, %v9517
        %v9526 = vadd.f32 %v9190, %v9518
        %v9527 = vadd.f32 %v9191, %v9519
        %v9528 = vadd.f32 %v9192, %v9520
        %v9529 = vadd.f32 %v9193, %v9521
        %v9530 = vadd.f32 %v9194, %v9522
        %9531 = vrot.lane.b32.xlu0 %v9307, 121
        %v9532 = vpop.permute.xlu0 %9531
        %9533 = vrot.lane.b32.xlu0 %v9308, 121
        %v9534 = vpop.permute.xlu0 %9533
        %9535 = vrot.lane.b32.xlu0 %v9309, 121
        %v9536 = vpop.permute.xlu0 %9535
        %9537 = vrot.lane.b32.xlu0 %v9310, 121
        %v9538 = vpop.permute.xlu0 %9537
        %9539 = vrot.lane.b32.xlu0 %v9311, 121
        %v9540 = vpop.permute.xlu0 %9539
        %9541 = vrot.lane.b32.xlu0 %v9312, 121
        %v9542 = vpop.permute.xlu0 %9541
        %9543 = vrot.lane.b32.xlu0 %v9313, 121
        %v9544 = vpop.permute.xlu0 %9543
        %9545 = vrot.lane.b32.xlu0 %v9314, 121
        %v9546 = vpop.permute.xlu0 %9545
        %v9555 = vadd.f32 %v9219, %v9532
        %v9556 = vadd.f32 %v9220, %v9534
        %v9557 = vadd.f32 %v9221, %v9536
        %v9558 = vadd.f32 %v9222, %v9538
        %v9559 = vadd.f32 %v9223, %v9540
        %v9560 = vadd.f32 %v9224, %v9542
        %v9561 = vadd.f32 %v9225, %v9544
        %v9562 = vadd.f32 %v9226, %v9546
        %v9563 = vmul.f32 %v9307, %v7028
        %v9564 = vmul.f32 %v9308, %v7030
        %v9565 = vmul.f32 %v9309, %v7032
        %v9566 = vmul.f32 %v9310, %v7034
        %v9567 = vmul.f32 %v9311, %v7036
        %v9568 = vmul.f32 %v9312, %v7038
        %v9569 = vmul.f32 %v9313, %v7040
        %v9570 = vmul.f32 %v9314, %v7042
        %9579 = vrot.lane.b32.xlu0 %v9563, 121
        %v9580 = vpop.permute.xlu0 %9579
        %9581 = vrot.lane.b32.xlu0 %v9564, 121
        %v9582 = vpop.permute.xlu0 %9581
        %9583 = vrot.lane.b32.xlu0 %v9565, 121
        %v9584 = vpop.permute.xlu0 %9583
        %9585 = vrot.lane.b32.xlu0 %v9566, 121
        %v9586 = vpop.permute.xlu0 %9585
        %9587 = vrot.lane.b32.xlu0 %v9567, 121
        %v9588 = vpop.permute.xlu0 %9587
        %9589 = vrot.lane.b32.xlu0 %v9568, 121
        %v9590 = vpop.permute.xlu0 %9589
        %9591 = vrot.lane.b32.xlu0 %v9569, 121
        %v9592 = vpop.permute.xlu0 %9591
        %9593 = vrot.lane.b32.xlu0 %v9570, 121
        %v9594 = vpop.permute.xlu0 %9593
        %v9603 = vadd.f32 %v9267, %v9580
        %v9604 = vadd.f32 %v9268, %v9582
        %v9605 = vadd.f32 %v9269, %v9584
        %v9606 = vadd.f32 %v9270, %v9586
        %v9607 = vadd.f32 %v9271, %v9588
        %v9608 = vadd.f32 %v9272, %v9590
        %v9609 = vadd.f32 %v9273, %v9592
        %v9610 = vadd.f32 %v9274, %v9594
        %9612 = vset.pattern.permute.xlu0 0
        %9613 = vperm.xlu0 %9612, %v9555
        %v9614 = vpop.permute.xlu0 %9613
        %9617 = vset.pattern.permute.xlu0 0
        %9618 = vperm.xlu0 %9617, %v9556
        %v9619 = vpop.permute.xlu0 %9618
        %9622 = vset.pattern.permute.xlu0 0
        %9623 = vperm.xlu0 %9622, %v9557
        %v9624 = vpop.permute.xlu0 %9623
        %9627 = vset.pattern.permute.xlu0 0
        %9628 = vperm.xlu0 %9627, %v9558
        %v9629 = vpop.permute.xlu0 %9628
        %9632 = vset.pattern.permute.xlu0 0
        %9633 = vperm.xlu0 %9632, %v9559
        %v9634 = vpop.permute.xlu0 %9633
        %9637 = vset.pattern.permute.xlu0 0
        %9638 = vperm.xlu0 %9637, %v9560
        %v9639 = vpop.permute.xlu0 %9638
        %9642 = vset.pattern.permute.xlu0 0
        %9643 = vperm.xlu0 %9642, %v9561
        %v9644 = vpop.permute.xlu0 %9643
        %9647 = vset.pattern.permute.xlu0 0
        %9648 = vperm.xlu0 %9647, %v9562
        %v9649 = vpop.permute.xlu0 %9648
        %v9651 = vmul.f32 %v386, %v9614
        %v9652 = vmul.f32 %v387, %v9619
        %v9653 = vmul.f32 %v388, %v9624
        %v9654 = vmul.f32 %v389, %v9629
        %v9655 = vmul.f32 %v390, %v9634
        %v9656 = vmul.f32 %v391, %v9639
        %v9657 = vmul.f32 %v392, %v9644
        %v9658 = vmul.f32 %v393, %v9649
        %9660 = vset.pattern.permute.xlu0 0
        %9661 = vperm.xlu0 %9660, %v9603
        %v9662 = vpop.permute.xlu0 %9661
        %9665 = vset.pattern.permute.xlu0 0
        %9666 = vperm.xlu0 %9665, %v9604
        %v9667 = vpop.permute.xlu0 %9666
        %9670 = vset.pattern.permute.xlu0 0
        %9671 = vperm.xlu0 %9670, %v9605
        %v9672 = vpop.permute.xlu0 %9671
        %9675 = vset.pattern.permute.xlu0 0
        %9676 = vperm.xlu0 %9675, %v9606
        %v9677 = vpop.permute.xlu0 %9676
        %9680 = vset.pattern.permute.xlu0 0
        %9681 = vperm.xlu0 %9680, %v9607
        %v9682 = vpop.permute.xlu0 %9681
        %9685 = vset.pattern.permute.xlu0 0
        %9686 = vperm.xlu0 %9685, %v9608
        %v9687 = vpop.permute.xlu0 %9686
        %9690 = vset.pattern.permute.xlu0 0
        %9691 = vperm.xlu0 %9690, %v9609
        %v9692 = vpop.permute.xlu0 %9691
        %9695 = vset.pattern.permute.xlu0 0
        %9696 = vperm.xlu0 %9695, %v9610
        %v9697 = vpop.permute.xlu0 %9696
        %v9699 = vmul.f32 %v386, %v9662
        %v9700 = vmul.f32 %v387, %v9667
        %v9701 = vmul.f32 %v388, %v9672
        %v9702 = vmul.f32 %v389, %v9677
        %v9703 = vmul.f32 %v390, %v9682
        %v9704 = vmul.f32 %v391, %v9687
        %v9705 = vmul.f32 %v392, %v9692
        %v9706 = vmul.f32 %v393, %v9697
        %9715 = vrot.lane.b32.xlu0 %v9699, 3
        %v9716 = vpop.permute.xlu0 %9715
        %9717 = vrot.lane.b32.xlu0 %v9700, 3
        %v9718 = vpop.permute.xlu0 %9717
        %9719 = vrot.lane.b32.xlu0 %v9701, 3
        %v9720 = vpop.permute.xlu0 %9719
        %9721 = vrot.lane.b32.xlu0 %v9702, 3
        %v9722 = vpop.permute.xlu0 %9721
        %9723 = vrot.lane.b32.xlu0 %v9703, 3
        %v9724 = vpop.permute.xlu0 %9723
        %9725 = vrot.lane.b32.xlu0 %v9704, 3
        %v9726 = vpop.permute.xlu0 %9725
        %9727 = vrot.lane.b32.xlu0 %v9705, 3
        %v9728 = vpop.permute.xlu0 %9727
        %9729 = vrot.lane.b32.xlu0 %v9706, 3
        %v9730 = vpop.permute.xlu0 %9729
        %v9739 = vadd.f32 %v9651, %v9716
        %v9740 = vadd.f32 %v9652, %v9718
        %v9741 = vadd.f32 %v9653, %v9720
        %v9742 = vadd.f32 %v9654, %v9722
        %v9743 = vadd.f32 %v9655, %v9724
        %v9744 = vadd.f32 %v9656, %v9726
        %v9745 = vadd.f32 %v9657, %v9728
        %v9746 = vadd.f32 %v9658, %v9730
        %v9747 = vmul.f32 %v9499, 2.0
        %v9748 = vmul.f32 %v9500, 2.0
        %v9749 = vmul.f32 %v9501, 2.0
        %v9750 = vmul.f32 %v9502, 2.0
        %v9751 = vmul.f32 %v9503, 2.0
        %v9752 = vmul.f32 %v9504, 2.0
        %v9753 = vmul.f32 %v9505, 2.0
        %v9754 = vmul.f32 %v9506, 2.0
        %v9755 = vadd.f32 %v9747, -1.0
        %v9756 = vadd.f32 %v9748, -1.0
        %v9757 = vadd.f32 %v9749, -1.0
        %v9758 = vadd.f32 %v9750, -1.0
        %v9759 = vadd.f32 %v9751, -1.0
        %v9760 = vadd.f32 %v9752, -1.0
        %v9761 = vadd.f32 %v9753, -1.0
        %v9762 = vadd.f32 %v9754, -1.0
        %9771 = vrot.lane.b32.xlu0 %v9755, 32
        %v9772 = vpop.permute.xlu0 %9771
        %9773 = vrot.lane.b32.xlu0 %v9756, 32
        %v9774 = vpop.permute.xlu0 %9773
        %9775 = vrot.lane.b32.xlu0 %v9757, 32
        %v9776 = vpop.permute.xlu0 %9775
        %9777 = vrot.lane.b32.xlu0 %v9758, 32
        %v9778 = vpop.permute.xlu0 %9777
        %9779 = vrot.lane.b32.xlu0 %v9759, 32
        %v9780 = vpop.permute.xlu0 %9779
        %9781 = vrot.lane.b32.xlu0 %v9760, 32
        %v9782 = vpop.permute.xlu0 %9781
        %9783 = vrot.lane.b32.xlu0 %v9761, 32
        %v9784 = vpop.permute.xlu0 %9783
        %9785 = vrot.lane.b32.xlu0 %v9762, 32
        %v9786 = vpop.permute.xlu0 %9785
        %9803 = vrot.lane.b32.xlu0 %v9739, 29
        %v9804 = vpop.permute.xlu0 %9803
        %9805 = vrot.lane.b32.xlu0 %v9740, 29
        %v9806 = vpop.permute.xlu0 %9805
        %9807 = vrot.lane.b32.xlu0 %v9741, 29
        %v9808 = vpop.permute.xlu0 %9807
        %9809 = vrot.lane.b32.xlu0 %v9742, 29
        %v9810 = vpop.permute.xlu0 %9809
        %9811 = vrot.lane.b32.xlu0 %v9743, 29
        %v9812 = vpop.permute.xlu0 %9811
        %9813 = vrot.lane.b32.xlu0 %v9744, 29
        %v9814 = vpop.permute.xlu0 %9813
        %9815 = vrot.lane.b32.xlu0 %v9745, 29
        %v9816 = vpop.permute.xlu0 %9815
        %9817 = vrot.lane.b32.xlu0 %v9746, 29
        %v9818 = vpop.permute.xlu0 %9817
        %9827 = vrot.lane.b32.xlu0 %v9307, 31
        %v9828 = vpop.permute.xlu0 %9827
        %9829 = vrot.lane.b32.xlu0 %v9308, 31
        %v9830 = vpop.permute.xlu0 %9829
        %9831 = vrot.lane.b32.xlu0 %v9309, 31
        %v9832 = vpop.permute.xlu0 %9831
        %9833 = vrot.lane.b32.xlu0 %v9310, 31
        %v9834 = vpop.permute.xlu0 %9833
        %9835 = vrot.lane.b32.xlu0 %v9311, 31
        %v9836 = vpop.permute.xlu0 %9835
        %9837 = vrot.lane.b32.xlu0 %v9312, 31
        %v9838 = vpop.permute.xlu0 %9837
        %9839 = vrot.lane.b32.xlu0 %v9313, 31
        %v9840 = vpop.permute.xlu0 %9839
        %9841 = vrot.lane.b32.xlu0 %v9314, 31
        %v9842 = vpop.permute.xlu0 %9841
        %9859 = vrot.lane.b32.xlu0 %v6458, 39
        %v9860 = vpop.permute.xlu0 %9859
        %9861 = vrot.lane.b32.xlu0 %v6459, 39
        %v9862 = vpop.permute.xlu0 %9861
        %9863 = vrot.lane.b32.xlu0 %v6460, 39
        %v9864 = vpop.permute.xlu0 %9863
        %9865 = vrot.lane.b32.xlu0 %v6461, 39
        %v9866 = vpop.permute.xlu0 %9865
        %9867 = vrot.lane.b32.xlu0 %v6462, 39
        %v9868 = vpop.permute.xlu0 %9867
        %9869 = vrot.lane.b32.xlu0 %v6463, 39
        %v9870 = vpop.permute.xlu0 %9869
        %9871 = vrot.lane.b32.xlu0 %v6464, 39
        %v9872 = vpop.permute.xlu0 %9871
        %9873 = vrot.lane.b32.xlu0 %v6465, 39
        %v9874 = vpop.permute.xlu0 %9873
        %vm9883 = vcmask 261120
        %v9884 = vsel %vm9883, %v9523, %v9772
        %v9885 = vsel %vm9883, %v9524, %v9774
        %v9886 = vsel %vm9883, %v9525, %v9776
        %v9887 = vsel %vm9883, %v9526, %v9778
        %v9888 = vsel %vm9883, %v9527, %v9780
        %v9889 = vsel %vm9883, %v9528, %v9782
        %v9890 = vsel %vm9883, %v9529, %v9784
        %v9891 = vsel %vm9883, %v9530, %v9786
        %vm9892 = vcmask 285696
        %v9893 = vsel %vm9892, %v9884, %v9804
        %v9894 = vsel %vm9892, %v9885, %v9806
        %v9895 = vsel %vm9892, %v9886, %v9808
        %v9896 = vsel %vm9892, %v9887, %v9810
        %v9897 = vsel %vm9892, %v9888, %v9812
        %v9898 = vsel %vm9892, %v9889, %v9814
        %v9899 = vsel %vm9892, %v9890, %v9816
        %v9900 = vsel %vm9892, %v9891, %v9818
        %vm9901 = vcmask 310272
        %v9902 = vsel %vm9901, %v9893, %v9828
        %v9903 = vsel %vm9901, %v9894, %v9830
        %v9904 = vsel %vm9901, %v9895, %v9832
        %v9905 = vsel %vm9901, %v9896, %v9834
        %v9906 = vsel %vm9901, %v9897, %v9836
        %v9907 = vsel %vm9901, %v9898, %v9838
        %v9908 = vsel %vm9901, %v9899, %v9840
        %v9909 = vsel %vm9901, %v9900, %v9842
        %vm9910 = vcmask 318464
        %v9911 = vsel %vm9910, %v9902, %v9860
        %v9912 = vsel %vm9910, %v9903, %v9862
        %v9913 = vsel %vm9910, %v9904, %v9864
        %v9914 = vsel %vm9910, %v9905, %v9866
        %v9915 = vsel %vm9910, %v9906, %v9868
        %v9916 = vsel %vm9910, %v9907, %v9870
        %v9917 = vsel %vm9910, %v9908, %v9872
        %v9918 = vsel %vm9910, %v9909, %v9874
        %vm9919 = vcmask 384000
        %v9920 = vsel %vm9919, %v9911, 0.0
        %v9921 = vsel %vm9919, %v9912, 0.0
        %v9922 = vsel %vm9919, %v9913, 0.0
        %v9923 = vsel %vm9919, %v9914, 0.0
        %v9924 = vsel %vm9919, %v9915, 0.0
        %v9925 = vsel %vm9919, %v9916, 0.0
        %v9926 = vsel %vm9919, %v9917, 0.0
        %v9927 = vsel %vm9919, %v9918, 0.0
        %9928 = vst [vmem:[%s371] sm:$0xff] %v9920
        %9929 = vst [vmem:[%s371 + $0x8] sm:$0xff] %v9921
        %9930 = vst [vmem:[%s371 + $0x10] sm:$0xff] %v9922
        %9931 = vst [vmem:[%s371 + $0x18] sm:$0xff] %v9923
        %9932 = vst [vmem:[%s371 + $0x20] sm:$0xff] %v9924
        %9933 = vst [vmem:[%s371 + $0x28] sm:$0xff] %v9925
        %9934 = vst [vmem:[%s371 + $0x30] sm:$0xff] %v9926
        %9935 = vst [vmem:[%s371 + $0x38] sm:$0xff] %v9927
        %s9936 = sand.u32 %s254, 1
        %s9937 = scalar_lea.sflag [#allocation4], %s9936
        %s9938 = sand.u32 %s254, 1
        %s9939 = smul.addr %s9938, 64
        %s9940 = scalar_lea.vmem [#allocation3], %s9939
        // Predicated region
        $region61: #{tpu_custom_call.1} parent=59 // pred_check
          %p9941 = pneg %p264
        $region62: #{tpu_custom_call.1} parent=59 // pred_check_branch
          %9943 = sbr.rel (%p9941) target = $region64
        $region63: #{tpu_custom_call.1} parent=59 // pred_region
          %s9944 = smul.u32 8, %s26
          %9946 = vsyncadd %s9937, 0
          %s9947 = smul.addr %s9944, 8
          %s9948 = scalar_lea.hbm %s10, %s9947
          %s9949 = sshll.u32 %s9940, 4
          %s9950 = int_to_ptr.vmem [resolvable:$true] %s9949
          %s9951 = sshll.u32 %s9948, 4
          %s9952 = int_to_ptr.hbm [resolvable:$true] %s9951
          %9957 = dma.vmem_to_hbm [thread:$0]  %s9950, 1024, %s9952, %s9937, 128, 128, 8
        $region64: #{tpu_custom_call.1} parent=59 // pred_fallthru
          _
      $region60: #{tpu_custom_call.1} parent=5 // pred_fallthru
        _
      %p9958 = scmp.le.s32.totalorder 2, %s21
      // Predicated region
      $region65: #{tpu_custom_call.1} parent=5 // pred_check
        %p9959 = pneg %p9958
      $region66: #{tpu_custom_call.1} parent=5 // pred_check_branch
        %9961 = sbr.rel (%p9959) target = $region68
      $region67: #{tpu_custom_call.1} parent=5 // pred_region
        %s9962 = ssub.s32 %s21, 2
        // Predicated region
        $region69: #{tpu_custom_call.1} parent=67 // pred_check
          %p9963 = pneg %p270
        $region70: #{tpu_custom_call.1} parent=67 // pred_check_branch
          %9965 = sbr.rel (%p9963) target = $region72
        $region71: #{tpu_custom_call.1} parent=67 // pred_region
          %s9966 = sand.u32 %s255, 1
          %s9967 = scalar_lea.sflag [#allocation4], %s9966
          %s9968 = sand.u32 %s255, 1
          %s9969 = smul.addr %s9968, 64
          %s9970 = scalar_lea.vmem [#allocation3], %s9969
          %9972 = dma.done %s9967, 1024
        $region72: #{tpu_custom_call.1} parent=67 // pred_fallthru
          _
      $region68: #{tpu_custom_call.1} parent=5 // pred_fallthru
        _
    $region6: #{tpu_custom_call.1} parent=1 // loop_footer
      %s25 = sadd.s32 1, %s21
    $region7: #{tpu_custom_call.1} parent=1 // loop_footer_branch
      %20 = sbr.rel target = $region3
    $region8: #{tpu_custom_call.1} parent=1 // loop_exit
      _
    %9973 = vsyncpa [#allocation4], 1
    %s9974 = scalar_lea.sflag [#allocation4], 1
    %9975 = vsyncpa %s9974, 1

</llo_original>
